<compile_context>
chip_gen: v7x
topology: tpu7x:2x2x1
jax: 0.10.0
libtpu: 0.0.40
codegen_flags: <defaults>
</compile_context>

<pallas_src>
import functools

import jax
import jax.numpy as jnp
from jax.experimental import pallas as pl
from jax.experimental.pallas import tpu as pltpu


def _branch_kernel(x_ref, wred_ref, fc1_ref, fc2_ref, mem_ref,
                   x1_ref, catt_ref, out_ref, matt_ref, *, hw, bblk):
    """One grid step == `bblk` batch elements (R = bblk*HW rows).

    x_ref    : (R, N*C)     bf16   flattened frames, channels last
    wred_ref : (N*C, C)     bf16   1x1 'reduce' conv weight (transposed)
    fc1_ref  : (C, C//r)    bf16   channel-attention fc1 (1x1 conv, no bias)
    fc2_ref  : (C//r, C)    bf16   channel-attention fc2 (1x1 conv, no bias)
    mem_ref  : (M, C)       bf16   memory prototypes
    x1_ref   : (R, C)       f32    reduce-conv output
    catt_ref : (bblk, 1, C) f32    channel attention
    out_ref  : (R, C)       f32    memory-read output
    matt_ref : (R, M)       f32    memory attention
    """
    x = x_ref[...]                                            # (R, NC) bf16

    # ---- 1x1 reduce conv: one big MXU matmul over all bblk*HW rows ----
    x1 = jnp.dot(x, wred_ref[...],
                 preferred_element_type=jnp.float32)          # (R, C) f32
    x1_ref[...] = x1

    # ---- channel attention (CBAM): per-image avg/max pool over HW, then the
    #      shared MLP is run ONCE on the stacked (2*bblk, C) pooled matrix ----
    avg_rows, max_rows = [], []
    for b in range(bblk):
        xb = x1[b * hw:(b + 1) * hw]                          # (HW, C) static slice
        avg_rows.append(jnp.mean(xb, axis=0, keepdims=True))
        max_rows.append(jnp.max(xb, axis=0, keepdims=True))
    pooled = jnp.concatenate(avg_rows + max_rows, axis=0)     # (2*bblk, C) f32

    h = jnp.dot(pooled.astype(jnp.bfloat16), fc1_ref[...],
                preferred_element_type=jnp.float32)
    h = jnp.maximum(h, 0.0)
    mlp = jnp.dot(h.astype(jnp.bfloat16), fc2_ref[...],
                  preferred_element_type=jnp.float32)         # (2*bblk, C)
    att = jax.nn.sigmoid(mlp[:bblk] + mlp[bblk:])             # (bblk, C) f32
    catt_ref[...] = att.reshape(bblk, 1, att.shape[-1])

    # ---- apply channel attention per image, then merge rows again so the
    #      memory-read matmuls also run on bblk*HW rows ----
    xa_parts = [
        (x1[b * hw:(b + 1) * hw] * att[b:b + 1, :]).astype(jnp.bfloat16)
        for b in range(bblk)
    ]
    xa = xa_parts[0] if bblk == 1 else jnp.concatenate(xa_parts, axis=0)

    # ---- memory read: softmax(xa @ mem^T) @ mem ----
    mem = mem_ref[...]                                        # (M, C) bf16
    scores = jax.lax.dot_general(
        xa, mem, (((1,), (1,)), ((), ())),
        preferred_element_type=jnp.float32)                   # (R, M) f32
    smax = jnp.max(scores, axis=-1, keepdims=True)
    e = jnp.exp(scores - smax)
    p = e * pl.reciprocal(jnp.sum(e, axis=-1, keepdims=True), approx=True)
    matt_ref[...] = p
    out_ref[...] = jnp.dot(p.astype(jnp.bfloat16), mem,
                           preferred_element_type=jnp.float32)  # (R, C) f32


def _pick_block_batch(batch, hw, nc, c, m, *, target_rows=256,
                      vmem_cap=20 * 1024 * 1024):
    """Smallest divisor of `batch` whose rows fill the MXU M dim, VMEM-capped."""
    def step_bytes(bb):
        r = bb * hw
        # double-buffered per-step input + output blocks (bf16 in, f32 out)
        return 2 * (r * nc * 2 + 2 * r * c * 4 + r * m * 4 + bb * c * 4)

    best = 1
    for d in range(1, batch + 1):
        if batch % d:
            continue
        if d > 1 and step_bytes(d) > vmem_cap:
            break
        best = d
        if d * hw >= target_rows:
            break
    return best


@functools.partial(jax.jit, static_argnames=("num_frames",))
def new_spatial_branch(x_nchw, w_reduce, fc1_w, fc2_w, mem, *, num_frames=4):
    """Forward pass matching NewSpatialBranch.forward.

    x_nchw : (B*N, C, H, W) float32  (PyTorch NCHW convention)
    returns (y_dict, att, x1) with
       y_dict['output'] : (B, C, H, W)
       y_dict['att']    : (B, H*W, num_protos)
       att              : (B, C, 1, 1)
       x1               : (B, C, H, W)
    """
    BN, C, H, W = x_nchw.shape
    N = num_frames
    B = BN // N
    HW = H * W
    NC = N * C
    M = mem.shape[0]
    Cr = fc1_w.shape[0]

    bblk = _pick_block_batch(B, HW, NC, C, M)
    grid = (B // bblk,)
    rows = bblk * HW

    # '(B N) C H W -> B (N C) H W' is a pure reshape; go channels-last and
    # flatten batch into rows so every grid step sees (bblk*HW, NC) (bf16).
    x_flat = (x_nchw.reshape(B, NC, HW)
              .transpose(0, 2, 1)
              .reshape(B * HW, NC)
              .astype(jnp.bfloat16))

    # 1x1 conv weights (C_out, C_in, 1, 1) -> (C_in, C_out) for right-matmul.
    wred_t = w_reduce.reshape(C, NC).T.astype(jnp.bfloat16)    # (NC, C)
    fc1_t = fc1_w.reshape(Cr, C).T.astype(jnp.bfloat16)        # (C, Cr)
    fc2_t = fc2_w.reshape(C, Cr).T.astype(jnp.bfloat16)        # (Cr, C)
    mem_b = mem.astype(jnp.bfloat16)                           # (M, C)

    out_shapes = (
        jax.ShapeDtypeStruct((B * HW, C), jnp.float32),   # x1 (flat rows)
        jax.ShapeDtypeStruct((B, 1, C), jnp.float32),     # channel attention
        jax.ShapeDtypeStruct((B * HW, C), jnp.float32),   # memory output
        jax.ShapeDtypeStruct((B * HW, M), jnp.float32),   # memory attention
    )

    const = lambda shape: pl.BlockSpec(shape, lambda g: (0, 0))
    kernel = functools.partial(_branch_kernel, hw=HW, bblk=bblk)

    x1_flat, catt, mem_out_flat, mem_att_flat = pl.pallas_call(
        kernel,
        out_shape=out_shapes,
        grid_spec=pltpu.PrefetchScalarGridSpec(
            num_scalar_prefetch=0,
            grid=grid,
            in_specs=[
                pl.BlockSpec((rows, NC), lambda g: (g, 0)),
                const((NC, C)),
                const((C, Cr)),
                const((Cr, C)),
                const((M, C)),
            ],
            out_specs=[
                pl.BlockSpec((rows, C), lambda g: (g, 0)),
                pl.BlockSpec((bblk, 1, C), lambda g: (g, 0, 0)),
                pl.BlockSpec((rows, C), lambda g: (g, 0)),
                pl.BlockSpec((rows, M), lambda g: (g, 0)),
            ],
        ),
        compiler_params=pltpu.CompilerParams(
            dimension_semantics=("parallel",),
            vmem_limit_bytes=32 * 1024 * 1024),
    )(x_flat, wred_t, fc1_t, fc2_t, mem_b)

    # back to the module's NCHW conventions (cheap layout glue at these sizes)
    x1 = x1_flat.reshape(B, H, W, C).transpose(0, 3, 1, 2)           # (B,C,H,W)
    y_out = mem_out_flat.reshape(B, H, W, C).transpose(0, 3, 1, 2)   # (B,C,H,W)
    att = catt.reshape(B, C, 1, 1)
    mem_att = mem_att_flat.reshape(B, HW, M)

    y = {"output": y_out, "att": mem_att}
    return y, att, x1


if __name__ == "__main__":
    # small deterministic config consistent with the module
    num_frames = 4
    B = 2
    C = 512                  # hard-coded by the module (reduce: 512*N -> 512)
    H = W = 8
    num_protos = 128
    ratio = 16

    key = jax.random.PRNGKey(0)
    k_x, k_red, k_fc1, k_fc2, k_mem = jax.random.split(key, 5)

    x = jax.random.normal(k_x, (B * num_frames, C, H, W), dtype=jnp.float32)

    # parameter shapes from __init__ (deterministic synthetic init)
    w_reduce = 0.02 * jax.random.normal(k_red, (C, C * num_frames, 1, 1), jnp.float32)
    fc1_w = 0.05 * jax.random.normal(k_fc1, (C // ratio, C, 1, 1), jnp.float32)
    fc2_w = 0.05 * jax.random.normal(k_fc2, (C, C // ratio, 1, 1), jnp.float32)
    mem = jax.random.normal(k_mem, (num_protos, C), jnp.float32)

    y, att, x1 = new_spatial_branch(
        x, w_reduce, fc1_w, fc2_w, mem, num_frames=num_frames)
    jax.block_until_ready((y["output"], y["att"], att, x1))

    assert y["output"].shape == (B, C, H, W)
    assert y["att"].shape == (B, H * W, num_protos)
    assert att.shape == (B, C, 1, 1)
    assert x1.shape == (B, C, H, W)
    # memory attention rows are a softmax (sum ~ 1) and outputs are finite
    assert bool(jnp.all(jnp.isfinite(y["output"])))
    assert bool(jnp.allclose(jnp.sum(y["att"], axis=-1), 1.0, atol=5e-2))
    print("KERNEL_OK")
</pallas_src>

<mosaic_0001>
module attributes {stable_mosaic.version = 11 : i64} {
  func.func @_branch_kernel(%arg0: i32, %arg1: memref<128x2048xbf16, #tpu.memory_space<vmem>>, %arg2: memref<2048x512xbf16, #tpu.memory_space<vmem>>, %arg3: memref<512x32xbf16, #tpu.memory_space<vmem>>, %arg4: memref<32x512xbf16, #tpu.memory_space<vmem>>, %arg5: memref<128x512xbf16, #tpu.memory_space<vmem>>, %arg6: memref<128x512xf32, #tpu.memory_space<vmem>>, %arg7: memref<2x1x512xf32, #tpu.memory_space<vmem>>, %arg8: memref<128x512xf32, #tpu.memory_space<vmem>>, %arg9: memref<128x128xf32, #tpu.memory_space<vmem>>) attributes {dimension_semantics = [#tpu.dimension_semantics<parallel>], iteration_bounds = array<i64: 1>, scalar_prefetch = 0 : i64, scratch_operands = 0 : i64, tpu.core_type = #tpu.core_type<tc>, window_params = [{transform_indices = @transform_0, window_bounds = array<i64: 128, 2048>}, {pipeline_mode = #tpu.pipeline_mode<synchronous>, transform_indices = @transform_1, window_bounds = array<i64: 2048, 512>}, {pipeline_mode = #tpu.pipeline_mode<synchronous>, transform_indices = @transform_2, window_bounds = array<i64: 512, 32>}, {pipeline_mode = #tpu.pipeline_mode<synchronous>, transform_indices = @transform_3, window_bounds = array<i64: 32, 512>}, {pipeline_mode = #tpu.pipeline_mode<synchronous>, transform_indices = @transform_4, window_bounds = array<i64: 128, 512>}, {transform_indices = @transform_5, window_bounds = array<i64: 128, 512>}, {transform_indices = @transform_6, window_bounds = array<i64: 2, 1, 512>}, {transform_indices = @transform_7, window_bounds = array<i64: 128, 512>}, {transform_indices = @transform_8, window_bounds = array<i64: 128, 128>}]} {
    %c0 = arith.constant 0 : index
    %c0_0 = arith.constant 0 : index
    %0 = vector.load %arg1[%c0, %c0_0] : memref<128x2048xbf16, #tpu.memory_space<vmem>>, vector<128x2048xbf16>
    %c0_1 = arith.constant 0 : index
    %c0_2 = arith.constant 0 : index
    %1 = vector.load %arg2[%c0_1, %c0_2] : memref<2048x512xbf16, #tpu.memory_space<vmem>>, vector<2048x512xbf16>
    %cst = arith.constant dense<0.000000e+00> : vector<128x512xf32>
    %2 = tpu.matmul %0, %1, %cst {dimension_numbers = #tpu.dot_dimension_numbers<[1], [0], [0], [1], [0, 0, 1, 1], [], []>} : vector<128x2048xbf16>, vector<2048x512xbf16>, vector<128x512xf32> -> vector<128x512xf32>
    %c0_3 = arith.constant 0 : index
    %c0_4 = arith.constant 0 : index
    %3 = vector.load %arg6[%c0_3, %c0_4] : memref<128x512xf32, #tpu.memory_space<vmem>>, vector<128x512xf32>
    tpu.vector_store %arg6[%c0_3, %c0_4], %2 {strides = array<i32>} : memref<128x512xf32, #tpu.memory_space<vmem>>, vector<128x512xf32>,
    %4 = vector.extract_strided_slice %2 {offsets = [0, 0], sizes = [64, 512], strides = [1, 1]} : vector<128x512xf32> to vector<64x512xf32>
    %cst_5 = arith.constant dense<0.000000e+00> : vector<512xf32>
    %5 = vector.multi_reduction <add>, %4, %cst_5 [0] : vector<64x512xf32> to vector<512xf32>
    %6 = vector.shape_cast %5 : vector<512xf32> to vector<1x512xf32>
    %cst_6 = arith.constant 6.400000e+01 : f32
    %7 = vector.broadcast %cst_6 : f32 to vector<1x512xf32>
    %8 = arith.divf %6, %7 : vector<1x512xf32>
    %cst_7 = arith.constant dense<0xFF800000> : vector<512xf32>
    %9 = vector.multi_reduction <maximumf>, %4, %cst_7 [0] : vector<64x512xf32> to vector<512xf32>
    %10 = vector.shape_cast %9 : vector<512xf32> to vector<1x512xf32>
    %11 = vector.extract_strided_slice %2 {offsets = [64, 0], sizes = [64, 512], strides = [1, 1]} : vector<128x512xf32> to vector<64x512xf32>
    %cst_8 = arith.constant dense<0.000000e+00> : vector<512xf32>
    %12 = vector.multi_reduction <add>, %11, %cst_8 [0] : vector<64x512xf32> to vector<512xf32>
    %13 = vector.shape_cast %12 : vector<512xf32> to vector<1x512xf32>
    %cst_9 = arith.constant 6.400000e+01 : f32
    %14 = vector.broadcast %cst_9 : f32 to vector<1x512xf32>
    %15 = arith.divf %13, %14 : vector<1x512xf32>
    %cst_10 = arith.constant dense<0xFF800000> : vector<512xf32>
    %16 = vector.multi_reduction <maximumf>, %11, %cst_10 [0] : vector<64x512xf32> to vector<512xf32>
    %17 = vector.shape_cast %16 : vector<512xf32> to vector<1x512xf32>
    %18 = tpu.concatenate %8, %15, %10, %17 in 0 : vector<1x512xf32>, vector<1x512xf32>, vector<1x512xf32>, vector<1x512xf32> -> vector<4x512xf32>
    %19 = arith.truncf %18 : vector<4x512xf32> to vector<4x512xbf16>
    %c0_11 = arith.constant 0 : index
    %c0_12 = arith.constant 0 : index
    %20 = vector.load %arg3[%c0_11, %c0_12] : memref<512x32xbf16, #tpu.memory_space<vmem>>, vector<512x32xbf16>
    %cst_13 = arith.constant dense<0.000000e+00> : vector<4x32xf32>
    %21 = tpu.matmul %19, %20, %cst_13 {dimension_numbers = #tpu.dot_dimension_numbers<[1], [0], [0], [1], [0, 0, 1, 1], [], []>} : vector<4x512xbf16>, vector<512x32xbf16>, vector<4x32xf32> -> vector<4x32xf32>
    %cst_14 = arith.constant 0.000000e+00 : f32
    %22 = vector.broadcast %cst_14 : f32 to vector<4x32xf32>
    %23 = arith.maximumf %21, %22 : vector<4x32xf32>
    %24 = arith.truncf %23 : vector<4x32xf32> to vector<4x32xbf16>
    %c0_15 = arith.constant 0 : index
    %c0_16 = arith.constant 0 : index
    %25 = vector.load %arg4[%c0_15, %c0_16] : memref<32x512xbf16, #tpu.memory_space<vmem>>, vector<32x512xbf16>
    %cst_17 = arith.constant dense<0.000000e+00> : vector<4x512xf32>
    %26 = tpu.matmul %24, %25, %cst_17 {dimension_numbers = #tpu.dot_dimension_numbers<[1], [0], [0], [1], [0, 0, 1, 1], [], []>} : vector<4x32xbf16>, vector<32x512xbf16>, vector<4x512xf32> -> vector<4x512xf32>
    %27 = vector.extract_strided_slice %26 {offsets = [0, 0], sizes = [2, 512], strides = [1, 1]} : vector<4x512xf32> to vector<2x512xf32>
    %28 = vector.extract_strided_slice %26 {offsets = [2, 0], sizes = [2, 512], strides = [1, 1]} : vector<4x512xf32> to vector<2x512xf32>
    %29 = arith.addf %27, %28 : vector<2x512xf32>
    %30 = arith.negf %29 : vector<2x512xf32>
    %31 = math.exp %30 : vector<2x512xf32>
    %cst_18 = arith.constant 1.000000e+00 : f32
    %32 = vector.broadcast %cst_18 : f32 to vector<2x512xf32>
    %33 = arith.addf %32, %31 : vector<2x512xf32>
    %34 = arith.divf %32, %33 : vector<2x512xf32>
    %35 = vector.shape_cast %34 : vector<2x512xf32> to vector<2x1x512xf32>
    %c0_19 = arith.constant 0 : index
    %c0_20 = arith.constant 0 : index
    %c0_21 = arith.constant 0 : index
    %36 = vector.load %arg7[%c0_19, %c0_20, %c0_21] : memref<2x1x512xf32, #tpu.memory_space<vmem>>, vector<2x1x512xf32>
    tpu.vector_store %arg7[%c0_19, %c0_20, %c0_21], %35 {strides = array<i32>} : memref<2x1x512xf32, #tpu.memory_space<vmem>>, vector<2x1x512xf32>,
    %37 = vector.extract_strided_slice %2 {offsets = [0, 0], sizes = [64, 512], strides = [1, 1]} : vector<128x512xf32> to vector<64x512xf32>
    %38 = vector.extract_strided_slice %34 {offsets = [0, 0], sizes = [1, 512], strides = [1, 1]} : vector<2x512xf32> to vector<1x512xf32>
    %39 = vector.broadcast %38 : vector<1x512xf32> to vector<64x512xf32>
    %40 = arith.mulf %37, %39 : vector<64x512xf32>
    %41 = arith.truncf %40 : vector<64x512xf32> to vector<64x512xbf16>
    %42 = vector.extract_strided_slice %2 {offsets = [64, 0], sizes = [64, 512], strides = [1, 1]} : vector<128x512xf32> to vector<64x512xf32>
    %43 = vector.extract_strided_slice %34 {offsets = [1, 0], sizes = [1, 512], strides = [1, 1]} : vector<2x512xf32> to vector<1x512xf32>
    %44 = vector.broadcast %43 : vector<1x512xf32> to vector<64x512xf32>
    %45 = arith.mulf %42, %44 : vector<64x512xf32>
    %46 = arith.truncf %45 : vector<64x512xf32> to vector<64x512xbf16>
    %47 = tpu.concatenate %41, %46 in 0 : vector<64x512xbf16>, vector<64x512xbf16> -> vector<128x512xbf16>
    %c0_22 = arith.constant 0 : index
    %c0_23 = arith.constant 0 : index
    %48 = vector.load %arg5[%c0_22, %c0_23] : memref<128x512xbf16, #tpu.memory_space<vmem>>, vector<128x512xbf16>
    %cst_24 = arith.constant dense<0.000000e+00> : vector<128x128xf32>
    %49 = tpu.matmul %47, %48, %cst_24 {dimension_numbers = #tpu.dot_dimension_numbers<[1], [1], [0], [0], [0, 0, 1, 0], [], []>} : vector<128x512xbf16>, vector<128x512xbf16>, vector<128x128xf32> -> vector<128x128xf32>
    %cst_25 = arith.constant dense<0xFF800000> : vector<128xf32>
    %50 = vector.multi_reduction <maximumf>, %49, %cst_25 [1] : vector<128x128xf32> to vector<128xf32>
    %51 = vector.shape_cast %50 : vector<128xf32> to vector<128x1xf32>
    %52 = vector.broadcast %51 : vector<128x1xf32> to vector<128x128xf32>
    %53 = arith.subf %49, %52 : vector<128x128xf32>
    %54 = math.exp %53 : vector<128x128xf32>
    %cst_26 = arith.constant dense<0.000000e+00> : vector<128xf32>
    %55 = vector.multi_reduction <add>, %54, %cst_26 [1] : vector<128x128xf32> to vector<128xf32>
    %56 = vector.shape_cast %55 : vector<128xf32> to vector<128x1xf32>
    %57 = tpu.reciprocal %56 {approx = true} : vector<128x1xf32> -> vector<128x1xf32>
    %58 = vector.broadcast %57 : vector<128x1xf32> to vector<128x128xf32>
    %59 = arith.mulf %54, %58 : vector<128x128xf32>
    %c0_27 = arith.constant 0 : index
    %c0_28 = arith.constant 0 : index
    %60 = vector.load %arg9[%c0_27, %c0_28] : memref<128x128xf32, #tpu.memory_space<vmem>>, vector<128x128xf32>
    tpu.vector_store %arg9[%c0_27, %c0_28], %59 {strides = array<i32>} : memref<128x128xf32, #tpu.memory_space<vmem>>, vector<128x128xf32>,
    %61 = arith.truncf %59 : vector<128x128xf32> to vector<128x128xbf16>
    %cst_29 = arith.constant dense<0.000000e+00> : vector<128x512xf32>
    %62 = tpu.matmul %61, %48, %cst_29 {dimension_numbers = #tpu.dot_dimension_numbers<[1], [0], [0], [1], [0, 0, 1, 1], [], []>} : vector<128x128xbf16>, vector<128x512xbf16>, vector<128x512xf32> -> vector<128x512xf32>
    %c0_30 = arith.constant 0 : index
    %c0_31 = arith.constant 0 : index
    %63 = vector.load %arg8[%c0_30, %c0_31] : memref<128x512xf32, #tpu.memory_space<vmem>>, vector<128x512xf32>
    tpu.vector_store %arg8[%c0_30, %c0_31], %62 {strides = array<i32>} : memref<128x512xf32, #tpu.memory_space<vmem>>, vector<128x512xf32>,
    return
  }
  func.func @transform_0(%arg0: i32) -> (i32, i32) {
    %c0_i32 = arith.constant 0 : i32
    %c0_i32_0 = arith.constant 0 : i32
    return %arg0, %c0_i32 : i32, i32
  }
  func.func @transform_1(%arg0: i32) -> (i32, i32) {
    %c0_i32 = arith.constant 0 : i32
    %c0_i32_0 = arith.constant 0 : i32
    %c0_i32_1 = arith.constant 0 : i32
    return %c0_i32, %c0_i32_0 : i32, i32
  }
  func.func @transform_2(%arg0: i32) -> (i32, i32) {
    %c0_i32 = arith.constant 0 : i32
    %c0_i32_0 = arith.constant 0 : i32
    %c0_i32_1 = arith.constant 0 : i32
    return %c0_i32, %c0_i32_0 : i32, i32
  }
  func.func @transform_3(%arg0: i32) -> (i32, i32) {
    %c0_i32 = arith.constant 0 : i32
    %c0_i32_0 = arith.constant 0 : i32
    %c0_i32_1 = arith.constant 0 : i32
    return %c0_i32, %c0_i32_0 : i32, i32
  }
  func.func @transform_4(%arg0: i32) -> (i32, i32) {
    %c0_i32 = arith.constant 0 : i32
    %c0_i32_0 = arith.constant 0 : i32
    %c0_i32_1 = arith.constant 0 : i32
    return %c0_i32, %c0_i32_0 : i32, i32
  }
  func.func @transform_5(%arg0: i32) -> (i32, i32) {
    %c0_i32 = arith.constant 0 : i32
    %c0_i32_0 = arith.constant 0 : i32
    return %arg0, %c0_i32 : i32, i32
  }
  func.func @transform_6(%arg0: i32) -> (i32, i32, i32) {
    %c0_i32 = arith.constant 0 : i32
    %c0_i32_0 = arith.constant 0 : i32
    %c0_i32_1 = arith.constant 0 : i32
    return %arg0, %c0_i32, %c0_i32_0 : i32, i32, i32
  }
  func.func @transform_7(%arg0: i32) -> (i32, i32) {
    %c0_i32 = arith.constant 0 : i32
    %c0_i32_0 = arith.constant 0 : i32
    return %arg0, %c0_i32 : i32, i32
  }
  func.func @transform_8(%arg0: i32) -> (i32, i32) {
    %c0_i32 = arith.constant 0 : i32
    %c0_i32_0 = arith.constant 0 : i32
    return %arg0, %c0_i32 : i32, i32
  }
}

</mosaic_0001>

<llo_original>
// kernel: new_spatial_branch.1
$region0: #{new_spatial_branch.1}
  #allocation0 [shape = 'u32[]', space=smem, size = 0x4, offset = 0x4, fixed_abs, tag = 'smem constant byte address 0x4 - core index']
  #allocation1 [shape = 'u32[144,128]{1,0:T(1,128)}', space=vmem, size = 0x12000, scoped, tag = 'internal scratch']
  %s0 = inlined_call_operand.vmem [shape: bf16[128,2048], index: 0, kind: input, shape index: {}]
  %s1 = inlined_call_operand.vmem [shape: bf16[2048,512], index: 1, kind: input, shape index: {}]
  %s2 = inlined_call_operand.vmem [shape: bf16[512,32], index: 2, kind: input, shape index: {}]
  %s3 = inlined_call_operand.vmem [shape: bf16[32,512], index: 3, kind: input, shape index: {}]
  %s4 = inlined_call_operand.vmem [shape: bf16[128,512], index: 4, kind: input, shape index: {}]
  %s5 = inlined_call_operand.hbm [shape: f32[128,512], index: 5, kind: output, shape index: {0}]
  %s6 = inlined_call_operand.hbm [shape: f32[2,1,512], index: 6, kind: output, shape index: {1}]
  %s7 = inlined_call_operand.hbm [shape: f32[128,512], index: 7, kind: output, shape index: {2}]
  %s8 = inlined_call_operand.hbm [shape: f32[128,128], index: 8, kind: output, shape index: {3}]
  %9 = xla_tuple %s5, %s6, %s7, %s8
  %s10 = sld [smem:[#allocation0]]
  $region54: #{new_spatial_branch.1} parent=0
    _
  %s12 = ssub.s32 1, %s10
  %s13 = scalar_select 0, %s12, %s10
  $region1: #{new_spatial_branch.1} parent=0
    #allocation2 [shape = 'u8[262144]{0}', space=vmem, size = 0x40000, scoped, tag = 'output window, operand 0, single buffered']
    #allocation3 [shape = 's32[1]{0}', space=sflag, size = 0x4, scoped, tag = 'scoped memory for new_spatial_branch.1']
    #allocation4 [shape = 'u8[4096]{0}', space=vmem, size = 0x1000, scoped, tag = 'output window, operand 1, single buffered']
    #allocation5 [shape = 's32[1]{0}', space=sflag, size = 0x4, scoped, tag = 'scoped memory for new_spatial_branch.1']
    #allocation6 [shape = 'u8[262144]{0}', space=vmem, size = 0x40000, scoped, tag = 'output window, operand 2, single buffered']
    #allocation7 [shape = 'u8[65536]{0}', space=vmem, size = 0x10000, scoped, tag = 'output window, operand 3, single buffered']
    #allocation8 [shape = 's32[1]{0}', space=sflag, size = 0x4, scoped, tag = 'scoped memory for new_spatial_branch.1']
    %14 = vsyncpa [#allocation3], 0
    %15 = vsyncpa [#allocation5], 0
    %16 = vsyncpa [#allocation8], 0
    // Predicated region
    $region2: #{new_spatial_branch.1} parent=1 // pred_check
      _
    $region3: #{new_spatial_branch.1} parent=1 // pred_check_branch
      %18 = sbr.rel (0) target = $region5
    $region4: #{new_spatial_branch.1} parent=1 // pred_region
      _
    $region5: #{new_spatial_branch.1} parent=1 // pred_fallthru
      _
    // Predicated region
    $region6: #{new_spatial_branch.1} parent=1 // pred_check
      _
    $region7: #{new_spatial_branch.1} parent=1 // pred_check_branch
      %20 = sbr.rel (0) target = $region9
    $region8: #{new_spatial_branch.1} parent=1 // pred_region
      _
    $region9: #{new_spatial_branch.1} parent=1 // pred_fallthru
      _
    // Predicated region
    $region10: #{new_spatial_branch.1} parent=1 // pred_check
      _
    $region11: #{new_spatial_branch.1} parent=1 // pred_check_branch
      %22 = sbr.rel (0) target = $region13
    $region12: #{new_spatial_branch.1} parent=1 // pred_region
      _
    $region13: #{new_spatial_branch.1} parent=1 // pred_fallthru
      _
    // Predicated region
    $region14: #{new_spatial_branch.1} parent=1 // pred_check
      _
    $region15: #{new_spatial_branch.1} parent=1 // pred_check_branch
      %24 = sbr.rel (0) target = $region17
    $region16: #{new_spatial_branch.1} parent=1 // pred_region
      _
    $region17: #{new_spatial_branch.1} parent=1 // pred_fallthru
      _
    // Predicated region
    $region18: #{new_spatial_branch.1} parent=1 // pred_check
      _
    $region19: #{new_spatial_branch.1} parent=1 // pred_check_branch
      %26 = sbr.rel (0) target = $region21
    $region20: #{new_spatial_branch.1} parent=1 // pred_region
      _
    $region21: #{new_spatial_branch.1} parent=1 // pred_fallthru
      _
    %v28 = vld [vmem:[%s0] sm:$0xff]
    %v29 = vld [vmem:[%s0 + $0x8] sm:$0xff]
    %v30 = vld [vmem:[%s0 + $0x10] sm:$0xff]
    %v31 = vld [vmem:[%s0 + $0x18] sm:$0xff]
    %v32 = vld [vmem:[%s0 + $0x20] sm:$0xff]
    %v33 = vld [vmem:[%s0 + $0x28] sm:$0xff]
    %v34 = vld [vmem:[%s0 + $0x30] sm:$0xff]
    %v35 = vld [vmem:[%s0 + $0x38] sm:$0xff]
    %v36 = vld [vmem:[%s0 + $0x40] sm:$0xff]
    %v37 = vld [vmem:[%s0 + $0x48] sm:$0xff]
    %v38 = vld [vmem:[%s0 + $0x50] sm:$0xff]
    %v39 = vld [vmem:[%s0 + $0x58] sm:$0xff]
    %v40 = vld [vmem:[%s0 + $0x60] sm:$0xff]
    %v41 = vld [vmem:[%s0 + $0x68] sm:$0xff]
    %v42 = vld [vmem:[%s0 + $0x70] sm:$0xff]
    %v43 = vld [vmem:[%s0 + $0x78] sm:$0xff]
    %v44 = vld [vmem:[%s0 + $0x80] sm:$0xff]
    %v45 = vld [vmem:[%s0 + $0x88] sm:$0xff]
    %v46 = vld [vmem:[%s0 + $0x90] sm:$0xff]
    %v47 = vld [vmem:[%s0 + $0x98] sm:$0xff]
    %v48 = vld [vmem:[%s0 + $0xa0] sm:$0xff]
    %v49 = vld [vmem:[%s0 + $0xa8] sm:$0xff]
    %v50 = vld [vmem:[%s0 + $0xb0] sm:$0xff]
    %v51 = vld [vmem:[%s0 + $0xb8] sm:$0xff]
    %v52 = vld [vmem:[%s0 + $0xc0] sm:$0xff]
    %v53 = vld [vmem:[%s0 + $0xc8] sm:$0xff]
    %v54 = vld [vmem:[%s0 + $0xd0] sm:$0xff]
    %v55 = vld [vmem:[%s0 + $0xd8] sm:$0xff]
    %v56 = vld [vmem:[%s0 + $0xe0] sm:$0xff]
    %v57 = vld [vmem:[%s0 + $0xe8] sm:$0xff]
    %v58 = vld [vmem:[%s0 + $0xf0] sm:$0xff]
    %v59 = vld [vmem:[%s0 + $0xf8] sm:$0xff]
    %v60 = vld [vmem:[%s0 + $0x100] sm:$0xff]
    %v61 = vld [vmem:[%s0 + $0x108] sm:$0xff]
    %v62 = vld [vmem:[%s0 + $0x110] sm:$0xff]
    %v63 = vld [vmem:[%s0 + $0x118] sm:$0xff]
    %v64 = vld [vmem:[%s0 + $0x120] sm:$0xff]
    %v65 = vld [vmem:[%s0 + $0x128] sm:$0xff]
    %v66 = vld [vmem:[%s0 + $0x130] sm:$0xff]
    %v67 = vld [vmem:[%s0 + $0x138] sm:$0xff]
    %v68 = vld [vmem:[%s0 + $0x140] sm:$0xff]
    %v69 = vld [vmem:[%s0 + $0x148] sm:$0xff]
    %v70 = vld [vmem:[%s0 + $0x150] sm:$0xff]
    %v71 = vld [vmem:[%s0 + $0x158] sm:$0xff]
    %v72 = vld [vmem:[%s0 + $0x160] sm:$0xff]
    %v73 = vld [vmem:[%s0 + $0x168] sm:$0xff]
    %v74 = vld [vmem:[%s0 + $0x170] sm:$0xff]
    %v75 = vld [vmem:[%s0 + $0x178] sm:$0xff]
    %v76 = vld [vmem:[%s0 + $0x180] sm:$0xff]
    %v77 = vld [vmem:[%s0 + $0x188] sm:$0xff]
    %v78 = vld [vmem:[%s0 + $0x190] sm:$0xff]
    %v79 = vld [vmem:[%s0 + $0x198] sm:$0xff]
    %v80 = vld [vmem:[%s0 + $0x1a0] sm:$0xff]
    %v81 = vld [vmem:[%s0 + $0x1a8] sm:$0xff]
    %v82 = vld [vmem:[%s0 + $0x1b0] sm:$0xff]
    %v83 = vld [vmem:[%s0 + $0x1b8] sm:$0xff]
    %v84 = vld [vmem:[%s0 + $0x1c0] sm:$0xff]
    %v85 = vld [vmem:[%s0 + $0x1c8] sm:$0xff]
    %v86 = vld [vmem:[%s0 + $0x1d0] sm:$0xff]
    %v87 = vld [vmem:[%s0 + $0x1d8] sm:$0xff]
    %v88 = vld [vmem:[%s0 + $0x1e0] sm:$0xff]
    %v89 = vld [vmem:[%s0 + $0x1e8] sm:$0xff]
    %v90 = vld [vmem:[%s0 + $0x1f0] sm:$0xff]
    %v91 = vld [vmem:[%s0 + $0x1f8] sm:$0xff]
    %v92 = vld [vmem:[%s0 + $0x200] sm:$0xff]
    %v93 = vld [vmem:[%s0 + $0x208] sm:$0xff]
    %v94 = vld [vmem:[%s0 + $0x210] sm:$0xff]
    %v95 = vld [vmem:[%s0 + $0x218] sm:$0xff]
    %v96 = vld [vmem:[%s0 + $0x220] sm:$0xff]
    %v97 = vld [vmem:[%s0 + $0x228] sm:$0xff]
    %v98 = vld [vmem:[%s0 + $0x230] sm:$0xff]
    %v99 = vld [vmem:[%s0 + $0x238] sm:$0xff]
    %v100 = vld [vmem:[%s0 + $0x240] sm:$0xff]
    %v101 = vld [vmem:[%s0 + $0x248] sm:$0xff]
    %v102 = vld [vmem:[%s0 + $0x250] sm:$0xff]
    %v103 = vld [vmem:[%s0 + $0x258] sm:$0xff]
    %v104 = vld [vmem:[%s0 + $0x260] sm:$0xff]
    %v105 = vld [vmem:[%s0 + $0x268] sm:$0xff]
    %v106 = vld [vmem:[%s0 + $0x270] sm:$0xff]
    %v107 = vld [vmem:[%s0 + $0x278] sm:$0xff]
    %v108 = vld [vmem:[%s0 + $0x280] sm:$0xff]
    %v109 = vld [vmem:[%s0 + $0x288] sm:$0xff]
    %v110 = vld [vmem:[%s0 + $0x290] sm:$0xff]
    %v111 = vld [vmem:[%s0 + $0x298] sm:$0xff]
    %v112 = vld [vmem:[%s0 + $0x2a0] sm:$0xff]
    %v113 = vld [vmem:[%s0 + $0x2a8] sm:$0xff]
    %v114 = vld [vmem:[%s0 + $0x2b0] sm:$0xff]
    %v115 = vld [vmem:[%s0 + $0x2b8] sm:$0xff]
    %v116 = vld [vmem:[%s0 + $0x2c0] sm:$0xff]
    %v117 = vld [vmem:[%s0 + $0x2c8] sm:$0xff]
    %v118 = vld [vmem:[%s0 + $0x2d0] sm:$0xff]
    %v119 = vld [vmem:[%s0 + $0x2d8] sm:$0xff]
    %v120 = vld [vmem:[%s0 + $0x2e0] sm:$0xff]
    %v121 = vld [vmem:[%s0 + $0x2e8] sm:$0xff]
    %v122 = vld [vmem:[%s0 + $0x2f0] sm:$0xff]
    %v123 = vld [vmem:[%s0 + $0x2f8] sm:$0xff]
    %v124 = vld [vmem:[%s0 + $0x300] sm:$0xff]
    %v125 = vld [vmem:[%s0 + $0x308] sm:$0xff]
    %v126 = vld [vmem:[%s0 + $0x310] sm:$0xff]
    %v127 = vld [vmem:[%s0 + $0x318] sm:$0xff]
    %v128 = vld [vmem:[%s0 + $0x320] sm:$0xff]
    %v129 = vld [vmem:[%s0 + $0x328] sm:$0xff]
    %v130 = vld [vmem:[%s0 + $0x330] sm:$0xff]
    %v131 = vld [vmem:[%s0 + $0x338] sm:$0xff]
    %v132 = vld [vmem:[%s0 + $0x340] sm:$0xff]
    %v133 = vld [vmem:[%s0 + $0x348] sm:$0xff]
    %v134 = vld [vmem:[%s0 + $0x350] sm:$0xff]
    %v135 = vld [vmem:[%s0 + $0x358] sm:$0xff]
    %v136 = vld [vmem:[%s0 + $0x360] sm:$0xff]
    %v137 = vld [vmem:[%s0 + $0x368] sm:$0xff]
    %v138 = vld [vmem:[%s0 + $0x370] sm:$0xff]
    %v139 = vld [vmem:[%s0 + $0x378] sm:$0xff]
    %v140 = vld [vmem:[%s0 + $0x380] sm:$0xff]
    %v141 = vld [vmem:[%s0 + $0x388] sm:$0xff]
    %v142 = vld [vmem:[%s0 + $0x390] sm:$0xff]
    %v143 = vld [vmem:[%s0 + $0x398] sm:$0xff]
    %v144 = vld [vmem:[%s0 + $0x3a0] sm:$0xff]
    %v145 = vld [vmem:[%s0 + $0x3a8] sm:$0xff]
    %v146 = vld [vmem:[%s0 + $0x3b0] sm:$0xff]
    %v147 = vld [vmem:[%s0 + $0x3b8] sm:$0xff]
    %v148 = vld [vmem:[%s0 + $0x3c0] sm:$0xff]
    %v149 = vld [vmem:[%s0 + $0x3c8] sm:$0xff]
    %v150 = vld [vmem:[%s0 + $0x3d0] sm:$0xff]
    %v151 = vld [vmem:[%s0 + $0x3d8] sm:$0xff]
    %v152 = vld [vmem:[%s0 + $0x3e0] sm:$0xff]
    %v153 = vld [vmem:[%s0 + $0x3e8] sm:$0xff]
    %v154 = vld [vmem:[%s0 + $0x3f0] sm:$0xff]
    %v155 = vld [vmem:[%s0 + $0x3f8] sm:$0xff]
    %v156 = vld [vmem:[%s1] sm:$0xff]
    %v157 = vld [vmem:[%s1 + $0x8] sm:$0xff]
    %v158 = vld [vmem:[%s1 + $0x10] sm:$0xff]
    %v159 = vld [vmem:[%s1 + $0x18] sm:$0xff]
    %v160 = vld [vmem:[%s1 + $0x20] sm:$0xff]
    %v161 = vld [vmem:[%s1 + $0x28] sm:$0xff]
    %v162 = vld [vmem:[%s1 + $0x30] sm:$0xff]
    %v163 = vld [vmem:[%s1 + $0x38] sm:$0xff]
    %v164 = vld [vmem:[%s1 + $0x40] sm:$0xff]
    %v165 = vld [vmem:[%s1 + $0x48] sm:$0xff]
    %v166 = vld [vmem:[%s1 + $0x50] sm:$0xff]
    %v167 = vld [vmem:[%s1 + $0x58] sm:$0xff]
    %v168 = vld [vmem:[%s1 + $0x60] sm:$0xff]
    %v169 = vld [vmem:[%s1 + $0x68] sm:$0xff]
    %v170 = vld [vmem:[%s1 + $0x70] sm:$0xff]
    %v171 = vld [vmem:[%s1 + $0x78] sm:$0xff]
    %v172 = vld [vmem:[%s1 + $0x80] sm:$0xff]
    %v173 = vld [vmem:[%s1 + $0x88] sm:$0xff]
    %v174 = vld [vmem:[%s1 + $0x90] sm:$0xff]
    %v175 = vld [vmem:[%s1 + $0x98] sm:$0xff]
    %v176 = vld [vmem:[%s1 + $0xa0] sm:$0xff]
    %v177 = vld [vmem:[%s1 + $0xa8] sm:$0xff]
    %v178 = vld [vmem:[%s1 + $0xb0] sm:$0xff]
    %v179 = vld [vmem:[%s1 + $0xb8] sm:$0xff]
    %v180 = vld [vmem:[%s1 + $0xc0] sm:$0xff]
    %v181 = vld [vmem:[%s1 + $0xc8] sm:$0xff]
    %v182 = vld [vmem:[%s1 + $0xd0] sm:$0xff]
    %v183 = vld [vmem:[%s1 + $0xd8] sm:$0xff]
    %v184 = vld [vmem:[%s1 + $0xe0] sm:$0xff]
    %v185 = vld [vmem:[%s1 + $0xe8] sm:$0xff]
    %v186 = vld [vmem:[%s1 + $0xf0] sm:$0xff]
    %v187 = vld [vmem:[%s1 + $0xf8] sm:$0xff]
    %v188 = vld [vmem:[%s1 + $0x100] sm:$0xff]
    %v189 = vld [vmem:[%s1 + $0x108] sm:$0xff]
    %v190 = vld [vmem:[%s1 + $0x110] sm:$0xff]
    %v191 = vld [vmem:[%s1 + $0x118] sm:$0xff]
    %v192 = vld [vmem:[%s1 + $0x120] sm:$0xff]
    %v193 = vld [vmem:[%s1 + $0x128] sm:$0xff]
    %v194 = vld [vmem:[%s1 + $0x130] sm:$0xff]
    %v195 = vld [vmem:[%s1 + $0x138] sm:$0xff]
    %v196 = vld [vmem:[%s1 + $0x140] sm:$0xff]
    %v197 = vld [vmem:[%s1 + $0x148] sm:$0xff]
    %v198 = vld [vmem:[%s1 + $0x150] sm:$0xff]
    %v199 = vld [vmem:[%s1 + $0x158] sm:$0xff]
    %v200 = vld [vmem:[%s1 + $0x160] sm:$0xff]
    %v201 = vld [vmem:[%s1 + $0x168] sm:$0xff]
    %v202 = vld [vmem:[%s1 + $0x170] sm:$0xff]
    %v203 = vld [vmem:[%s1 + $0x178] sm:$0xff]
    %v204 = vld [vmem:[%s1 + $0x180] sm:$0xff]
    %v205 = vld [vmem:[%s1 + $0x188] sm:$0xff]
    %v206 = vld [vmem:[%s1 + $0x190] sm:$0xff]
    %v207 = vld [vmem:[%s1 + $0x198] sm:$0xff]
    %v208 = vld [vmem:[%s1 + $0x1a0] sm:$0xff]
    %v209 = vld [vmem:[%s1 + $0x1a8] sm:$0xff]
    %v210 = vld [vmem:[%s1 + $0x1b0] sm:$0xff]
    %v211 = vld [vmem:[%s1 + $0x1b8] sm:$0xff]
    %v212 = vld [vmem:[%s1 + $0x1c0] sm:$0xff]
    %v213 = vld [vmem:[%s1 + $0x1c8] sm:$0xff]
    %v214 = vld [vmem:[%s1 + $0x1d0] sm:$0xff]
    %v215 = vld [vmem:[%s1 + $0x1d8] sm:$0xff]
    %v216 = vld [vmem:[%s1 + $0x1e0] sm:$0xff]
    %v217 = vld [vmem:[%s1 + $0x1e8] sm:$0xff]
    %v218 = vld [vmem:[%s1 + $0x1f0] sm:$0xff]
    %v219 = vld [vmem:[%s1 + $0x1f8] sm:$0xff]
    %v220 = vld [vmem:[%s1 + $0x200] sm:$0xff]
    %v221 = vld [vmem:[%s1 + $0x208] sm:$0xff]
    %v222 = vld [vmem:[%s1 + $0x210] sm:$0xff]
    %v223 = vld [vmem:[%s1 + $0x218] sm:$0xff]
    %v224 = vld [vmem:[%s1 + $0x220] sm:$0xff]
    %v225 = vld [vmem:[%s1 + $0x228] sm:$0xff]
    %v226 = vld [vmem:[%s1 + $0x230] sm:$0xff]
    %v227 = vld [vmem:[%s1 + $0x238] sm:$0xff]
    %v228 = vld [vmem:[%s1 + $0x240] sm:$0xff]
    %v229 = vld [vmem:[%s1 + $0x248] sm:$0xff]
    %v230 = vld [vmem:[%s1 + $0x250] sm:$0xff]
    %v231 = vld [vmem:[%s1 + $0x258] sm:$0xff]
    %v232 = vld [vmem:[%s1 + $0x260] sm:$0xff]
    %v233 = vld [vmem:[%s1 + $0x268] sm:$0xff]
    %v234 = vld [vmem:[%s1 + $0x270] sm:$0xff]
    %v235 = vld [vmem:[%s1 + $0x278] sm:$0xff]
    %v236 = vld [vmem:[%s1 + $0x280] sm:$0xff]
    %v237 = vld [vmem:[%s1 + $0x288] sm:$0xff]
    %v238 = vld [vmem:[%s1 + $0x290] sm:$0xff]
    %v239 = vld [vmem:[%s1 + $0x298] sm:$0xff]
    %v240 = vld [vmem:[%s1 + $0x2a0] sm:$0xff]
    %v241 = vld [vmem:[%s1 + $0x2a8] sm:$0xff]
    %v242 = vld [vmem:[%s1 + $0x2b0] sm:$0xff]
    %v243 = vld [vmem:[%s1 + $0x2b8] sm:$0xff]
    %v244 = vld [vmem:[%s1 + $0x2c0] sm:$0xff]
    %v245 = vld [vmem:[%s1 + $0x2c8] sm:$0xff]
    %v246 = vld [vmem:[%s1 + $0x2d0] sm:$0xff]
    %v247 = vld [vmem:[%s1 + $0x2d8] sm:$0xff]
    %v248 = vld [vmem:[%s1 + $0x2e0] sm:$0xff]
    %v249 = vld [vmem:[%s1 + $0x2e8] sm:$0xff]
    %v250 = vld [vmem:[%s1 + $0x2f0] sm:$0xff]
    %v251 = vld [vmem:[%s1 + $0x2f8] sm:$0xff]
    %v252 = vld [vmem:[%s1 + $0x300] sm:$0xff]
    %v253 = vld [vmem:[%s1 + $0x308] sm:$0xff]
    %v254 = vld [vmem:[%s1 + $0x310] sm:$0xff]
    %v255 = vld [vmem:[%s1 + $0x318] sm:$0xff]
    %v256 = vld [vmem:[%s1 + $0x320] sm:$0xff]
    %v257 = vld [vmem:[%s1 + $0x328] sm:$0xff]
    %v258 = vld [vmem:[%s1 + $0x330] sm:$0xff]
    %v259 = vld [vmem:[%s1 + $0x338] sm:$0xff]
    %v260 = vld [vmem:[%s1 + $0x340] sm:$0xff]
    %v261 = vld [vmem:[%s1 + $0x348] sm:$0xff]
    %v262 = vld [vmem:[%s1 + $0x350] sm:$0xff]
    %v263 = vld [vmem:[%s1 + $0x358] sm:$0xff]
    %v264 = vld [vmem:[%s1 + $0x360] sm:$0xff]
    %v265 = vld [vmem:[%s1 + $0x368] sm:$0xff]
    %v266 = vld [vmem:[%s1 + $0x370] sm:$0xff]
    %v267 = vld [vmem:[%s1 + $0x378] sm:$0xff]
    %v268 = vld [vmem:[%s1 + $0x380] sm:$0xff]
    %v269 = vld [vmem:[%s1 + $0x388] sm:$0xff]
    %v270 = vld [vmem:[%s1 + $0x390] sm:$0xff]
    %v271 = vld [vmem:[%s1 + $0x398] sm:$0xff]
    %v272 = vld [vmem:[%s1 + $0x3a0] sm:$0xff]
    %v273 = vld [vmem:[%s1 + $0x3a8] sm:$0xff]
    %v274 = vld [vmem:[%s1 + $0x3b0] sm:$0xff]
    %v275 = vld [vmem:[%s1 + $0x3b8] sm:$0xff]
    %v276 = vld [vmem:[%s1 + $0x3c0] sm:$0xff]
    %v277 = vld [vmem:[%s1 + $0x3c8] sm:$0xff]
    %v278 = vld [vmem:[%s1 + $0x3d0] sm:$0xff]
    %v279 = vld [vmem:[%s1 + $0x3d8] sm:$0xff]
    %v280 = vld [vmem:[%s1 + $0x3e0] sm:$0xff]
    %v281 = vld [vmem:[%s1 + $0x3e8] sm:$0xff]
    %v282 = vld [vmem:[%s1 + $0x3f0] sm:$0xff]
    %v283 = vld [vmem:[%s1 + $0x3f8] sm:$0xff]
    %v284 = vld [vmem:[%s1 + $0x400] sm:$0xff]
    %v285 = vld [vmem:[%s1 + $0x408] sm:$0xff]
    %v286 = vld [vmem:[%s1 + $0x410] sm:$0xff]
    %v287 = vld [vmem:[%s1 + $0x418] sm:$0xff]
    %v288 = vld [vmem:[%s1 + $0x420] sm:$0xff]
    %v289 = vld [vmem:[%s1 + $0x428] sm:$0xff]
    %v290 = vld [vmem:[%s1 + $0x430] sm:$0xff]
    %v291 = vld [vmem:[%s1 + $0x438] sm:$0xff]
    %v292 = vld [vmem:[%s1 + $0x440] sm:$0xff]
    %v293 = vld [vmem:[%s1 + $0x448] sm:$0xff]
    %v294 = vld [vmem:[%s1 + $0x450] sm:$0xff]
    %v295 = vld [vmem:[%s1 + $0x458] sm:$0xff]
    %v296 = vld [vmem:[%s1 + $0x460] sm:$0xff]
    %v297 = vld [vmem:[%s1 + $0x468] sm:$0xff]
    %v298 = vld [vmem:[%s1 + $0x470] sm:$0xff]
    %v299 = vld [vmem:[%s1 + $0x478] sm:$0xff]
    %v300 = vld [vmem:[%s1 + $0x480] sm:$0xff]
    %v301 = vld [vmem:[%s1 + $0x488] sm:$0xff]
    %v302 = vld [vmem:[%s1 + $0x490] sm:$0xff]
    %v303 = vld [vmem:[%s1 + $0x498] sm:$0xff]
    %v304 = vld [vmem:[%s1 + $0x4a0] sm:$0xff]
    %v305 = vld [vmem:[%s1 + $0x4a8] sm:$0xff]
    %v306 = vld [vmem:[%s1 + $0x4b0] sm:$0xff]
    %v307 = vld [vmem:[%s1 + $0x4b8] sm:$0xff]
    %v308 = vld [vmem:[%s1 + $0x4c0] sm:$0xff]
    %v309 = vld [vmem:[%s1 + $0x4c8] sm:$0xff]
    %v310 = vld [vmem:[%s1 + $0x4d0] sm:$0xff]
    %v311 = vld [vmem:[%s1 + $0x4d8] sm:$0xff]
    %v312 = vld [vmem:[%s1 + $0x4e0] sm:$0xff]
    %v313 = vld [vmem:[%s1 + $0x4e8] sm:$0xff]
    %v314 = vld [vmem:[%s1 + $0x4f0] sm:$0xff]
    %v315 = vld [vmem:[%s1 + $0x4f8] sm:$0xff]
    %v316 = vld [vmem:[%s1 + $0x500] sm:$0xff]
    %v317 = vld [vmem:[%s1 + $0x508] sm:$0xff]
    %v318 = vld [vmem:[%s1 + $0x510] sm:$0xff]
    %v319 = vld [vmem:[%s1 + $0x518] sm:$0xff]
    %v320 = vld [vmem:[%s1 + $0x520] sm:$0xff]
    %v321 = vld [vmem:[%s1 + $0x528] sm:$0xff]
    %v322 = vld [vmem:[%s1 + $0x530] sm:$0xff]
    %v323 = vld [vmem:[%s1 + $0x538] sm:$0xff]
    %v324 = vld [vmem:[%s1 + $0x540] sm:$0xff]
    %v325 = vld [vmem:[%s1 + $0x548] sm:$0xff]
    %v326 = vld [vmem:[%s1 + $0x550] sm:$0xff]
    %v327 = vld [vmem:[%s1 + $0x558] sm:$0xff]
    %v328 = vld [vmem:[%s1 + $0x560] sm:$0xff]
    %v329 = vld [vmem:[%s1 + $0x568] sm:$0xff]
    %v330 = vld [vmem:[%s1 + $0x570] sm:$0xff]
    %v331 = vld [vmem:[%s1 + $0x578] sm:$0xff]
    %v332 = vld [vmem:[%s1 + $0x580] sm:$0xff]
    %v333 = vld [vmem:[%s1 + $0x588] sm:$0xff]
    %v334 = vld [vmem:[%s1 + $0x590] sm:$0xff]
    %v335 = vld [vmem:[%s1 + $0x598] sm:$0xff]
    %v336 = vld [vmem:[%s1 + $0x5a0] sm:$0xff]
    %v337 = vld [vmem:[%s1 + $0x5a8] sm:$0xff]
    %v338 = vld [vmem:[%s1 + $0x5b0] sm:$0xff]
    %v339 = vld [vmem:[%s1 + $0x5b8] sm:$0xff]
    %v340 = vld [vmem:[%s1 + $0x5c0] sm:$0xff]
    %v341 = vld [vmem:[%s1 + $0x5c8] sm:$0xff]
    %v342 = vld [vmem:[%s1 + $0x5d0] sm:$0xff]
    %v343 = vld [vmem:[%s1 + $0x5d8] sm:$0xff]
    %v344 = vld [vmem:[%s1 + $0x5e0] sm:$0xff]
    %v345 = vld [vmem:[%s1 + $0x5e8] sm:$0xff]
    %v346 = vld [vmem:[%s1 + $0x5f0] sm:$0xff]
    %v347 = vld [vmem:[%s1 + $0x5f8] sm:$0xff]
    %v348 = vld [vmem:[%s1 + $0x600] sm:$0xff]
    %v349 = vld [vmem:[%s1 + $0x608] sm:$0xff]
    %v350 = vld [vmem:[%s1 + $0x610] sm:$0xff]
    %v351 = vld [vmem:[%s1 + $0x618] sm:$0xff]
    %v352 = vld [vmem:[%s1 + $0x620] sm:$0xff]
    %v353 = vld [vmem:[%s1 + $0x628] sm:$0xff]
    %v354 = vld [vmem:[%s1 + $0x630] sm:$0xff]
    %v355 = vld [vmem:[%s1 + $0x638] sm:$0xff]
    %v356 = vld [vmem:[%s1 + $0x640] sm:$0xff]
    %v357 = vld [vmem:[%s1 + $0x648] sm:$0xff]
    %v358 = vld [vmem:[%s1 + $0x650] sm:$0xff]
    %v359 = vld [vmem:[%s1 + $0x658] sm:$0xff]
    %v360 = vld [vmem:[%s1 + $0x660] sm:$0xff]
    %v361 = vld [vmem:[%s1 + $0x668] sm:$0xff]
    %v362 = vld [vmem:[%s1 + $0x670] sm:$0xff]
    %v363 = vld [vmem:[%s1 + $0x678] sm:$0xff]
    %v364 = vld [vmem:[%s1 + $0x680] sm:$0xff]
    %v365 = vld [vmem:[%s1 + $0x688] sm:$0xff]
    %v366 = vld [vmem:[%s1 + $0x690] sm:$0xff]
    %v367 = vld [vmem:[%s1 + $0x698] sm:$0xff]
    %v368 = vld [vmem:[%s1 + $0x6a0] sm:$0xff]
    %v369 = vld [vmem:[%s1 + $0x6a8] sm:$0xff]
    %v370 = vld [vmem:[%s1 + $0x6b0] sm:$0xff]
    %v371 = vld [vmem:[%s1 + $0x6b8] sm:$0xff]
    %v372 = vld [vmem:[%s1 + $0x6c0] sm:$0xff]
    %v373 = vld [vmem:[%s1 + $0x6c8] sm:$0xff]
    %v374 = vld [vmem:[%s1 + $0x6d0] sm:$0xff]
    %v375 = vld [vmem:[%s1 + $0x6d8] sm:$0xff]
    %v376 = vld [vmem:[%s1 + $0x6e0] sm:$0xff]
    %v377 = vld [vmem:[%s1 + $0x6e8] sm:$0xff]
    %v378 = vld [vmem:[%s1 + $0x6f0] sm:$0xff]
    %v379 = vld [vmem:[%s1 + $0x6f8] sm:$0xff]
    %v380 = vld [vmem:[%s1 + $0x700] sm:$0xff]
    %v381 = vld [vmem:[%s1 + $0x708] sm:$0xff]
    %v382 = vld [vmem:[%s1 + $0x710] sm:$0xff]
    %v383 = vld [vmem:[%s1 + $0x718] sm:$0xff]
    %v384 = vld [vmem:[%s1 + $0x720] sm:$0xff]
    %v385 = vld [vmem:[%s1 + $0x728] sm:$0xff]
    %v386 = vld [vmem:[%s1 + $0x730] sm:$0xff]
    %v387 = vld [vmem:[%s1 + $0x738] sm:$0xff]
    %v388 = vld [vmem:[%s1 + $0x740] sm:$0xff]
    %v389 = vld [vmem:[%s1 + $0x748] sm:$0xff]
    %v390 = vld [vmem:[%s1 + $0x750] sm:$0xff]
    %v391 = vld [vmem:[%s1 + $0x758] sm:$0xff]
    %v392 = vld [vmem:[%s1 + $0x760] sm:$0xff]
    %v393 = vld [vmem:[%s1 + $0x768] sm:$0xff]
    %v394 = vld [vmem:[%s1 + $0x770] sm:$0xff]
    %v395 = vld [vmem:[%s1 + $0x778] sm:$0xff]
    %v396 = vld [vmem:[%s1 + $0x780] sm:$0xff]
    %v397 = vld [vmem:[%s1 + $0x788] sm:$0xff]
    %v398 = vld [vmem:[%s1 + $0x790] sm:$0xff]
    %v399 = vld [vmem:[%s1 + $0x798] sm:$0xff]
    %v400 = vld [vmem:[%s1 + $0x7a0] sm:$0xff]
    %v401 = vld [vmem:[%s1 + $0x7a8] sm:$0xff]
    %v402 = vld [vmem:[%s1 + $0x7b0] sm:$0xff]
    %v403 = vld [vmem:[%s1 + $0x7b8] sm:$0xff]
    %v404 = vld [vmem:[%s1 + $0x7c0] sm:$0xff]
    %v405 = vld [vmem:[%s1 + $0x7c8] sm:$0xff]
    %v406 = vld [vmem:[%s1 + $0x7d0] sm:$0xff]
    %v407 = vld [vmem:[%s1 + $0x7d8] sm:$0xff]
    %v408 = vld [vmem:[%s1 + $0x7e0] sm:$0xff]
    %v409 = vld [vmem:[%s1 + $0x7e8] sm:$0xff]
    %v410 = vld [vmem:[%s1 + $0x7f0] sm:$0xff]
    %v411 = vld [vmem:[%s1 + $0x7f8] sm:$0xff]
    %v412 = vld [vmem:[%s1 + $0x800] sm:$0xff]
    %v413 = vld [vmem:[%s1 + $0x808] sm:$0xff]
    %v414 = vld [vmem:[%s1 + $0x810] sm:$0xff]
    %v415 = vld [vmem:[%s1 + $0x818] sm:$0xff]
    %v416 = vld [vmem:[%s1 + $0x820] sm:$0xff]
    %v417 = vld [vmem:[%s1 + $0x828] sm:$0xff]
    %v418 = vld [vmem:[%s1 + $0x830] sm:$0xff]
    %v419 = vld [vmem:[%s1 + $0x838] sm:$0xff]
    %v420 = vld [vmem:[%s1 + $0x840] sm:$0xff]
    %v421 = vld [vmem:[%s1 + $0x848] sm:$0xff]
    %v422 = vld [vmem:[%s1 + $0x850] sm:$0xff]
    %v423 = vld [vmem:[%s1 + $0x858] sm:$0xff]
    %v424 = vld [vmem:[%s1 + $0x860] sm:$0xff]
    %v425 = vld [vmem:[%s1 + $0x868] sm:$0xff]
    %v426 = vld [vmem:[%s1 + $0x870] sm:$0xff]
    %v427 = vld [vmem:[%s1 + $0x878] sm:$0xff]
    %v428 = vld [vmem:[%s1 + $0x880] sm:$0xff]
    %v429 = vld [vmem:[%s1 + $0x888] sm:$0xff]
    %v430 = vld [vmem:[%s1 + $0x890] sm:$0xff]
    %v431 = vld [vmem:[%s1 + $0x898] sm:$0xff]
    %v432 = vld [vmem:[%s1 + $0x8a0] sm:$0xff]
    %v433 = vld [vmem:[%s1 + $0x8a8] sm:$0xff]
    %v434 = vld [vmem:[%s1 + $0x8b0] sm:$0xff]
    %v435 = vld [vmem:[%s1 + $0x8b8] sm:$0xff]
    %v436 = vld [vmem:[%s1 + $0x8c0] sm:$0xff]
    %v437 = vld [vmem:[%s1 + $0x8c8] sm:$0xff]
    %v438 = vld [vmem:[%s1 + $0x8d0] sm:$0xff]
    %v439 = vld [vmem:[%s1 + $0x8d8] sm:$0xff]
    %v440 = vld [vmem:[%s1 + $0x8e0] sm:$0xff]
    %v441 = vld [vmem:[%s1 + $0x8e8] sm:$0xff]
    %v442 = vld [vmem:[%s1 + $0x8f0] sm:$0xff]
    %v443 = vld [vmem:[%s1 + $0x8f8] sm:$0xff]
    %v444 = vld [vmem:[%s1 + $0x900] sm:$0xff]
    %v445 = vld [vmem:[%s1 + $0x908] sm:$0xff]
    %v446 = vld [vmem:[%s1 + $0x910] sm:$0xff]
    %v447 = vld [vmem:[%s1 + $0x918] sm:$0xff]
    %v448 = vld [vmem:[%s1 + $0x920] sm:$0xff]
    %v449 = vld [vmem:[%s1 + $0x928] sm:$0xff]
    %v450 = vld [vmem:[%s1 + $0x930] sm:$0xff]
    %v451 = vld [vmem:[%s1 + $0x938] sm:$0xff]
    %v452 = vld [vmem:[%s1 + $0x940] sm:$0xff]
    %v453 = vld [vmem:[%s1 + $0x948] sm:$0xff]
    %v454 = vld [vmem:[%s1 + $0x950] sm:$0xff]
    %v455 = vld [vmem:[%s1 + $0x958] sm:$0xff]
    %v456 = vld [vmem:[%s1 + $0x960] sm:$0xff]
    %v457 = vld [vmem:[%s1 + $0x968] sm:$0xff]
    %v458 = vld [vmem:[%s1 + $0x970] sm:$0xff]
    %v459 = vld [vmem:[%s1 + $0x978] sm:$0xff]
    %v460 = vld [vmem:[%s1 + $0x980] sm:$0xff]
    %v461 = vld [vmem:[%s1 + $0x988] sm:$0xff]
    %v462 = vld [vmem:[%s1 + $0x990] sm:$0xff]
    %v463 = vld [vmem:[%s1 + $0x998] sm:$0xff]
    %v464 = vld [vmem:[%s1 + $0x9a0] sm:$0xff]
    %v465 = vld [vmem:[%s1 + $0x9a8] sm:$0xff]
    %v466 = vld [vmem:[%s1 + $0x9b0] sm:$0xff]
    %v467 = vld [vmem:[%s1 + $0x9b8] sm:$0xff]
    %v468 = vld [vmem:[%s1 + $0x9c0] sm:$0xff]
    %v469 = vld [vmem:[%s1 + $0x9c8] sm:$0xff]
    %v470 = vld [vmem:[%s1 + $0x9d0] sm:$0xff]
    %v471 = vld [vmem:[%s1 + $0x9d8] sm:$0xff]
    %v472 = vld [vmem:[%s1 + $0x9e0] sm:$0xff]
    %v473 = vld [vmem:[%s1 + $0x9e8] sm:$0xff]
    %v474 = vld [vmem:[%s1 + $0x9f0] sm:$0xff]
    %v475 = vld [vmem:[%s1 + $0x9f8] sm:$0xff]
    %v476 = vld [vmem:[%s1 + $0xa00] sm:$0xff]
    %v477 = vld [vmem:[%s1 + $0xa08] sm:$0xff]
    %v478 = vld [vmem:[%s1 + $0xa10] sm:$0xff]
    %v479 = vld [vmem:[%s1 + $0xa18] sm:$0xff]
    %v480 = vld [vmem:[%s1 + $0xa20] sm:$0xff]
    %v481 = vld [vmem:[%s1 + $0xa28] sm:$0xff]
    %v482 = vld [vmem:[%s1 + $0xa30] sm:$0xff]
    %v483 = vld [vmem:[%s1 + $0xa38] sm:$0xff]
    %v484 = vld [vmem:[%s1 + $0xa40] sm:$0xff]
    %v485 = vld [vmem:[%s1 + $0xa48] sm:$0xff]
    %v486 = vld [vmem:[%s1 + $0xa50] sm:$0xff]
    %v487 = vld [vmem:[%s1 + $0xa58] sm:$0xff]
    %v488 = vld [vmem:[%s1 + $0xa60] sm:$0xff]
    %v489 = vld [vmem:[%s1 + $0xa68] sm:$0xff]
    %v490 = vld [vmem:[%s1 + $0xa70] sm:$0xff]
    %v491 = vld [vmem:[%s1 + $0xa78] sm:$0xff]
    %v492 = vld [vmem:[%s1 + $0xa80] sm:$0xff]
    %v493 = vld [vmem:[%s1 + $0xa88] sm:$0xff]
    %v494 = vld [vmem:[%s1 + $0xa90] sm:$0xff]
    %v495 = vld [vmem:[%s1 + $0xa98] sm:$0xff]
    %v496 = vld [vmem:[%s1 + $0xaa0] sm:$0xff]
    %v497 = vld [vmem:[%s1 + $0xaa8] sm:$0xff]
    %v498 = vld [vmem:[%s1 + $0xab0] sm:$0xff]
    %v499 = vld [vmem:[%s1 + $0xab8] sm:$0xff]
    %v500 = vld [vmem:[%s1 + $0xac0] sm:$0xff]
    %v501 = vld [vmem:[%s1 + $0xac8] sm:$0xff]
    %v502 = vld [vmem:[%s1 + $0xad0] sm:$0xff]
    %v503 = vld [vmem:[%s1 + $0xad8] sm:$0xff]
    %v504 = vld [vmem:[%s1 + $0xae0] sm:$0xff]
    %v505 = vld [vmem:[%s1 + $0xae8] sm:$0xff]
    %v506 = vld [vmem:[%s1 + $0xaf0] sm:$0xff]
    %v507 = vld [vmem:[%s1 + $0xaf8] sm:$0xff]
    %v508 = vld [vmem:[%s1 + $0xb00] sm:$0xff]
    %v509 = vld [vmem:[%s1 + $0xb08] sm:$0xff]
    %v510 = vld [vmem:[%s1 + $0xb10] sm:$0xff]
    %v511 = vld [vmem:[%s1 + $0xb18] sm:$0xff]
    %v512 = vld [vmem:[%s1 + $0xb20] sm:$0xff]
    %v513 = vld [vmem:[%s1 + $0xb28] sm:$0xff]
    %v514 = vld [vmem:[%s1 + $0xb30] sm:$0xff]
    %v515 = vld [vmem:[%s1 + $0xb38] sm:$0xff]
    %v516 = vld [vmem:[%s1 + $0xb40] sm:$0xff]
    %v517 = vld [vmem:[%s1 + $0xb48] sm:$0xff]
    %v518 = vld [vmem:[%s1 + $0xb50] sm:$0xff]
    %v519 = vld [vmem:[%s1 + $0xb58] sm:$0xff]
    %v520 = vld [vmem:[%s1 + $0xb60] sm:$0xff]
    %v521 = vld [vmem:[%s1 + $0xb68] sm:$0xff]
    %v522 = vld [vmem:[%s1 + $0xb70] sm:$0xff]
    %v523 = vld [vmem:[%s1 + $0xb78] sm:$0xff]
    %v524 = vld [vmem:[%s1 + $0xb80] sm:$0xff]
    %v525 = vld [vmem:[%s1 + $0xb88] sm:$0xff]
    %v526 = vld [vmem:[%s1 + $0xb90] sm:$0xff]
    %v527 = vld [vmem:[%s1 + $0xb98] sm:$0xff]
    %v528 = vld [vmem:[%s1 + $0xba0] sm:$0xff]
    %v529 = vld [vmem:[%s1 + $0xba8] sm:$0xff]
    %v530 = vld [vmem:[%s1 + $0xbb0] sm:$0xff]
    %v531 = vld [vmem:[%s1 + $0xbb8] sm:$0xff]
    %v532 = vld [vmem:[%s1 + $0xbc0] sm:$0xff]
    %v533 = vld [vmem:[%s1 + $0xbc8] sm:$0xff]
    %v534 = vld [vmem:[%s1 + $0xbd0] sm:$0xff]
    %v535 = vld [vmem:[%s1 + $0xbd8] sm:$0xff]
    %v536 = vld [vmem:[%s1 + $0xbe0] sm:$0xff]
    %v537 = vld [vmem:[%s1 + $0xbe8] sm:$0xff]
    %v538 = vld [vmem:[%s1 + $0xbf0] sm:$0xff]
    %v539 = vld [vmem:[%s1 + $0xbf8] sm:$0xff]
    %v540 = vld [vmem:[%s1 + $0xc00] sm:$0xff]
    %v541 = vld [vmem:[%s1 + $0xc08] sm:$0xff]
    %v542 = vld [vmem:[%s1 + $0xc10] sm:$0xff]
    %v543 = vld [vmem:[%s1 + $0xc18] sm:$0xff]
    %v544 = vld [vmem:[%s1 + $0xc20] sm:$0xff]
    %v545 = vld [vmem:[%s1 + $0xc28] sm:$0xff]
    %v546 = vld [vmem:[%s1 + $0xc30] sm:$0xff]
    %v547 = vld [vmem:[%s1 + $0xc38] sm:$0xff]
    %v548 = vld [vmem:[%s1 + $0xc40] sm:$0xff]
    %v549 = vld [vmem:[%s1 + $0xc48] sm:$0xff]
    %v550 = vld [vmem:[%s1 + $0xc50] sm:$0xff]
    %v551 = vld [vmem:[%s1 + $0xc58] sm:$0xff]
    %v552 = vld [vmem:[%s1 + $0xc60] sm:$0xff]
    %v553 = vld [vmem:[%s1 + $0xc68] sm:$0xff]
    %v554 = vld [vmem:[%s1 + $0xc70] sm:$0xff]
    %v555 = vld [vmem:[%s1 + $0xc78] sm:$0xff]
    %v556 = vld [vmem:[%s1 + $0xc80] sm:$0xff]
    %v557 = vld [vmem:[%s1 + $0xc88] sm:$0xff]
    %v558 = vld [vmem:[%s1 + $0xc90] sm:$0xff]
    %v559 = vld [vmem:[%s1 + $0xc98] sm:$0xff]
    %v560 = vld [vmem:[%s1 + $0xca0] sm:$0xff]
    %v561 = vld [vmem:[%s1 + $0xca8] sm:$0xff]
    %v562 = vld [vmem:[%s1 + $0xcb0] sm:$0xff]
    %v563 = vld [vmem:[%s1 + $0xcb8] sm:$0xff]
    %v564 = vld [vmem:[%s1 + $0xcc0] sm:$0xff]
    %v565 = vld [vmem:[%s1 + $0xcc8] sm:$0xff]
    %v566 = vld [vmem:[%s1 + $0xcd0] sm:$0xff]
    %v567 = vld [vmem:[%s1 + $0xcd8] sm:$0xff]
    %v568 = vld [vmem:[%s1 + $0xce0] sm:$0xff]
    %v569 = vld [vmem:[%s1 + $0xce8] sm:$0xff]
    %v570 = vld [vmem:[%s1 + $0xcf0] sm:$0xff]
    %v571 = vld [vmem:[%s1 + $0xcf8] sm:$0xff]
    %v572 = vld [vmem:[%s1 + $0xd00] sm:$0xff]
    %v573 = vld [vmem:[%s1 + $0xd08] sm:$0xff]
    %v574 = vld [vmem:[%s1 + $0xd10] sm:$0xff]
    %v575 = vld [vmem:[%s1 + $0xd18] sm:$0xff]
    %v576 = vld [vmem:[%s1 + $0xd20] sm:$0xff]
    %v577 = vld [vmem:[%s1 + $0xd28] sm:$0xff]
    %v578 = vld [vmem:[%s1 + $0xd30] sm:$0xff]
    %v579 = vld [vmem:[%s1 + $0xd38] sm:$0xff]
    %v580 = vld [vmem:[%s1 + $0xd40] sm:$0xff]
    %v581 = vld [vmem:[%s1 + $0xd48] sm:$0xff]
    %v582 = vld [vmem:[%s1 + $0xd50] sm:$0xff]
    %v583 = vld [vmem:[%s1 + $0xd58] sm:$0xff]
    %v584 = vld [vmem:[%s1 + $0xd60] sm:$0xff]
    %v585 = vld [vmem:[%s1 + $0xd68] sm:$0xff]
    %v586 = vld [vmem:[%s1 + $0xd70] sm:$0xff]
    %v587 = vld [vmem:[%s1 + $0xd78] sm:$0xff]
    %v588 = vld [vmem:[%s1 + $0xd80] sm:$0xff]
    %v589 = vld [vmem:[%s1 + $0xd88] sm:$0xff]
    %v590 = vld [vmem:[%s1 + $0xd90] sm:$0xff]
    %v591 = vld [vmem:[%s1 + $0xd98] sm:$0xff]
    %v592 = vld [vmem:[%s1 + $0xda0] sm:$0xff]
    %v593 = vld [vmem:[%s1 + $0xda8] sm:$0xff]
    %v594 = vld [vmem:[%s1 + $0xdb0] sm:$0xff]
    %v595 = vld [vmem:[%s1 + $0xdb8] sm:$0xff]
    %v596 = vld [vmem:[%s1 + $0xdc0] sm:$0xff]
    %v597 = vld [vmem:[%s1 + $0xdc8] sm:$0xff]
    %v598 = vld [vmem:[%s1 + $0xdd0] sm:$0xff]
    %v599 = vld [vmem:[%s1 + $0xdd8] sm:$0xff]
    %v600 = vld [vmem:[%s1 + $0xde0] sm:$0xff]
    %v601 = vld [vmem:[%s1 + $0xde8] sm:$0xff]
    %v602 = vld [vmem:[%s1 + $0xdf0] sm:$0xff]
    %v603 = vld [vmem:[%s1 + $0xdf8] sm:$0xff]
    %v604 = vld [vmem:[%s1 + $0xe00] sm:$0xff]
    %v605 = vld [vmem:[%s1 + $0xe08] sm:$0xff]
    %v606 = vld [vmem:[%s1 + $0xe10] sm:$0xff]
    %v607 = vld [vmem:[%s1 + $0xe18] sm:$0xff]
    %v608 = vld [vmem:[%s1 + $0xe20] sm:$0xff]
    %v609 = vld [vmem:[%s1 + $0xe28] sm:$0xff]
    %v610 = vld [vmem:[%s1 + $0xe30] sm:$0xff]
    %v611 = vld [vmem:[%s1 + $0xe38] sm:$0xff]
    %v612 = vld [vmem:[%s1 + $0xe40] sm:$0xff]
    %v613 = vld [vmem:[%s1 + $0xe48] sm:$0xff]
    %v614 = vld [vmem:[%s1 + $0xe50] sm:$0xff]
    %v615 = vld [vmem:[%s1 + $0xe58] sm:$0xff]
    %v616 = vld [vmem:[%s1 + $0xe60] sm:$0xff]
    %v617 = vld [vmem:[%s1 + $0xe68] sm:$0xff]
    %v618 = vld [vmem:[%s1 + $0xe70] sm:$0xff]
    %v619 = vld [vmem:[%s1 + $0xe78] sm:$0xff]
    %v620 = vld [vmem:[%s1 + $0xe80] sm:$0xff]
    %v621 = vld [vmem:[%s1 + $0xe88] sm:$0xff]
    %v622 = vld [vmem:[%s1 + $0xe90] sm:$0xff]
    %v623 = vld [vmem:[%s1 + $0xe98] sm:$0xff]
    %v624 = vld [vmem:[%s1 + $0xea0] sm:$0xff]
    %v625 = vld [vmem:[%s1 + $0xea8] sm:$0xff]
    %v626 = vld [vmem:[%s1 + $0xeb0] sm:$0xff]
    %v627 = vld [vmem:[%s1 + $0xeb8] sm:$0xff]
    %v628 = vld [vmem:[%s1 + $0xec0] sm:$0xff]
    %v629 = vld [vmem:[%s1 + $0xec8] sm:$0xff]
    %v630 = vld [vmem:[%s1 + $0xed0] sm:$0xff]
    %v631 = vld [vmem:[%s1 + $0xed8] sm:$0xff]
    %v632 = vld [vmem:[%s1 + $0xee0] sm:$0xff]
    %v633 = vld [vmem:[%s1 + $0xee8] sm:$0xff]
    %v634 = vld [vmem:[%s1 + $0xef0] sm:$0xff]
    %v635 = vld [vmem:[%s1 + $0xef8] sm:$0xff]
    %v636 = vld [vmem:[%s1 + $0xf00] sm:$0xff]
    %v637 = vld [vmem:[%s1 + $0xf08] sm:$0xff]
    %v638 = vld [vmem:[%s1 + $0xf10] sm:$0xff]
    %v639 = vld [vmem:[%s1 + $0xf18] sm:$0xff]
    %v640 = vld [vmem:[%s1 + $0xf20] sm:$0xff]
    %v641 = vld [vmem:[%s1 + $0xf28] sm:$0xff]
    %v642 = vld [vmem:[%s1 + $0xf30] sm:$0xff]
    %v643 = vld [vmem:[%s1 + $0xf38] sm:$0xff]
    %v644 = vld [vmem:[%s1 + $0xf40] sm:$0xff]
    %v645 = vld [vmem:[%s1 + $0xf48] sm:$0xff]
    %v646 = vld [vmem:[%s1 + $0xf50] sm:$0xff]
    %v647 = vld [vmem:[%s1 + $0xf58] sm:$0xff]
    %v648 = vld [vmem:[%s1 + $0xf60] sm:$0xff]
    %v649 = vld [vmem:[%s1 + $0xf68] sm:$0xff]
    %v650 = vld [vmem:[%s1 + $0xf70] sm:$0xff]
    %v651 = vld [vmem:[%s1 + $0xf78] sm:$0xff]
    %v652 = vld [vmem:[%s1 + $0xf80] sm:$0xff]
    %v653 = vld [vmem:[%s1 + $0xf88] sm:$0xff]
    %v654 = vld [vmem:[%s1 + $0xf90] sm:$0xff]
    %v655 = vld [vmem:[%s1 + $0xf98] sm:$0xff]
    %v656 = vld [vmem:[%s1 + $0xfa0] sm:$0xff]
    %v657 = vld [vmem:[%s1 + $0xfa8] sm:$0xff]
    %v658 = vld [vmem:[%s1 + $0xfb0] sm:$0xff]
    %v659 = vld [vmem:[%s1 + $0xfb8] sm:$0xff]
    %v660 = vld [vmem:[%s1 + $0xfc0] sm:$0xff]
    %v661 = vld [vmem:[%s1 + $0xfc8] sm:$0xff]
    %v662 = vld [vmem:[%s1 + $0xfd0] sm:$0xff]
    %v663 = vld [vmem:[%s1 + $0xfd8] sm:$0xff]
    %v664 = vld [vmem:[%s1 + $0xfe0] sm:$0xff]
    %v665 = vld [vmem:[%s1 + $0xfe8] sm:$0xff]
    %v666 = vld [vmem:[%s1 + $0xff0] sm:$0xff]
    %v667 = vld [vmem:[%s1 + $0xff8] sm:$0xff]
    %v796 = vunpack.c.l.b16 %v28
    %v797 = vunpack.c.h.b16 %v28
    %v798 = vunpack.c.l.b16 %v29
    %v799 = vunpack.c.h.b16 %v29
    %v800 = vunpack.c.l.b16 %v30
    %v801 = vunpack.c.h.b16 %v30
    %v802 = vunpack.c.l.b16 %v31
    %v803 = vunpack.c.h.b16 %v31
    %v804 = vunpack.c.l.b16 %v32
    %v805 = vunpack.c.h.b16 %v32
    %v806 = vunpack.c.l.b16 %v33
    %v807 = vunpack.c.h.b16 %v33
    %v808 = vunpack.c.l.b16 %v34
    %v809 = vunpack.c.h.b16 %v34
    %v810 = vunpack.c.l.b16 %v35
    %v811 = vunpack.c.h.b16 %v35
    %v812 = vunpack.c.l.b16 %v36
    %v813 = vunpack.c.h.b16 %v36
    %v814 = vunpack.c.l.b16 %v37
    %v815 = vunpack.c.h.b16 %v37
    %v816 = vunpack.c.l.b16 %v38
    %v817 = vunpack.c.h.b16 %v38
    %v818 = vunpack.c.l.b16 %v39
    %v819 = vunpack.c.h.b16 %v39
    %v820 = vunpack.c.l.b16 %v40
    %v821 = vunpack.c.h.b16 %v40
    %v822 = vunpack.c.l.b16 %v41
    %v823 = vunpack.c.h.b16 %v41
    %v824 = vunpack.c.l.b16 %v42
    %v825 = vunpack.c.h.b16 %v42
    %v826 = vunpack.c.l.b16 %v43
    %v827 = vunpack.c.h.b16 %v43
    %v828 = vunpack.c.l.b16 %v44
    %v829 = vunpack.c.h.b16 %v44
    %v830 = vunpack.c.l.b16 %v45
    %v831 = vunpack.c.h.b16 %v45
    %v832 = vunpack.c.l.b16 %v46
    %v833 = vunpack.c.h.b16 %v46
    %v834 = vunpack.c.l.b16 %v47
    %v835 = vunpack.c.h.b16 %v47
    %v836 = vunpack.c.l.b16 %v48
    %v837 = vunpack.c.h.b16 %v48
    %v838 = vunpack.c.l.b16 %v49
    %v839 = vunpack.c.h.b16 %v49
    %v840 = vunpack.c.l.b16 %v50
    %v841 = vunpack.c.h.b16 %v50
    %v842 = vunpack.c.l.b16 %v51
    %v843 = vunpack.c.h.b16 %v51
    %v844 = vunpack.c.l.b16 %v52
    %v845 = vunpack.c.h.b16 %v52
    %v846 = vunpack.c.l.b16 %v53
    %v847 = vunpack.c.h.b16 %v53
    %v848 = vunpack.c.l.b16 %v54
    %v849 = vunpack.c.h.b16 %v54
    %v850 = vunpack.c.l.b16 %v55
    %v851 = vunpack.c.h.b16 %v55
    %v852 = vunpack.c.l.b16 %v56
    %v853 = vunpack.c.h.b16 %v56
    %v854 = vunpack.c.l.b16 %v57
    %v855 = vunpack.c.h.b16 %v57
    %v856 = vunpack.c.l.b16 %v58
    %v857 = vunpack.c.h.b16 %v58
    %v858 = vunpack.c.l.b16 %v59
    %v859 = vunpack.c.h.b16 %v59
    %v860 = vunpack.c.l.b16 %v60
    %v861 = vunpack.c.h.b16 %v60
    %v862 = vunpack.c.l.b16 %v61
    %v863 = vunpack.c.h.b16 %v61
    %v864 = vunpack.c.l.b16 %v62
    %v865 = vunpack.c.h.b16 %v62
    %v866 = vunpack.c.l.b16 %v63
    %v867 = vunpack.c.h.b16 %v63
    %v868 = vunpack.c.l.b16 %v64
    %v869 = vunpack.c.h.b16 %v64
    %v870 = vunpack.c.l.b16 %v65
    %v871 = vunpack.c.h.b16 %v65
    %v872 = vunpack.c.l.b16 %v66
    %v873 = vunpack.c.h.b16 %v66
    %v874 = vunpack.c.l.b16 %v67
    %v875 = vunpack.c.h.b16 %v67
    %v876 = vunpack.c.l.b16 %v68
    %v877 = vunpack.c.h.b16 %v68
    %v878 = vunpack.c.l.b16 %v69
    %v879 = vunpack.c.h.b16 %v69
    %v880 = vunpack.c.l.b16 %v70
    %v881 = vunpack.c.h.b16 %v70
    %v882 = vunpack.c.l.b16 %v71
    %v883 = vunpack.c.h.b16 %v71
    %v884 = vunpack.c.l.b16 %v72
    %v885 = vunpack.c.h.b16 %v72
    %v886 = vunpack.c.l.b16 %v73
    %v887 = vunpack.c.h.b16 %v73
    %v888 = vunpack.c.l.b16 %v74
    %v889 = vunpack.c.h.b16 %v74
    %v890 = vunpack.c.l.b16 %v75
    %v891 = vunpack.c.h.b16 %v75
    %v892 = vunpack.c.l.b16 %v76
    %v893 = vunpack.c.h.b16 %v76
    %v894 = vunpack.c.l.b16 %v77
    %v895 = vunpack.c.h.b16 %v77
    %v896 = vunpack.c.l.b16 %v78
    %v897 = vunpack.c.h.b16 %v78
    %v898 = vunpack.c.l.b16 %v79
    %v899 = vunpack.c.h.b16 %v79
    %v900 = vunpack.c.l.b16 %v80
    %v901 = vunpack.c.h.b16 %v80
    %v902 = vunpack.c.l.b16 %v81
    %v903 = vunpack.c.h.b16 %v81
    %v904 = vunpack.c.l.b16 %v82
    %v905 = vunpack.c.h.b16 %v82
    %v906 = vunpack.c.l.b16 %v83
    %v907 = vunpack.c.h.b16 %v83
    %v908 = vunpack.c.l.b16 %v84
    %v909 = vunpack.c.h.b16 %v84
    %v910 = vunpack.c.l.b16 %v85
    %v911 = vunpack.c.h.b16 %v85
    %v912 = vunpack.c.l.b16 %v86
    %v913 = vunpack.c.h.b16 %v86
    %v914 = vunpack.c.l.b16 %v87
    %v915 = vunpack.c.h.b16 %v87
    %v916 = vunpack.c.l.b16 %v88
    %v917 = vunpack.c.h.b16 %v88
    %v918 = vunpack.c.l.b16 %v89
    %v919 = vunpack.c.h.b16 %v89
    %v920 = vunpack.c.l.b16 %v90
    %v921 = vunpack.c.h.b16 %v90
    %v922 = vunpack.c.l.b16 %v91
    %v923 = vunpack.c.h.b16 %v91
    %v924 = vunpack.c.l.b16 %v92
    %v925 = vunpack.c.h.b16 %v92
    %v926 = vunpack.c.l.b16 %v93
    %v927 = vunpack.c.h.b16 %v93
    %v928 = vunpack.c.l.b16 %v94
    %v929 = vunpack.c.h.b16 %v94
    %v930 = vunpack.c.l.b16 %v95
    %v931 = vunpack.c.h.b16 %v95
    %v932 = vunpack.c.l.b16 %v96
    %v933 = vunpack.c.h.b16 %v96
    %v934 = vunpack.c.l.b16 %v97
    %v935 = vunpack.c.h.b16 %v97
    %v936 = vunpack.c.l.b16 %v98
    %v937 = vunpack.c.h.b16 %v98
    %v938 = vunpack.c.l.b16 %v99
    %v939 = vunpack.c.h.b16 %v99
    %v940 = vunpack.c.l.b16 %v100
    %v941 = vunpack.c.h.b16 %v100
    %v942 = vunpack.c.l.b16 %v101
    %v943 = vunpack.c.h.b16 %v101
    %v944 = vunpack.c.l.b16 %v102
    %v945 = vunpack.c.h.b16 %v102
    %v946 = vunpack.c.l.b16 %v103
    %v947 = vunpack.c.h.b16 %v103
    %v948 = vunpack.c.l.b16 %v104
    %v949 = vunpack.c.h.b16 %v104
    %v950 = vunpack.c.l.b16 %v105
    %v951 = vunpack.c.h.b16 %v105
    %v952 = vunpack.c.l.b16 %v106
    %v953 = vunpack.c.h.b16 %v106
    %v954 = vunpack.c.l.b16 %v107
    %v955 = vunpack.c.h.b16 %v107
    %v956 = vunpack.c.l.b16 %v108
    %v957 = vunpack.c.h.b16 %v108
    %v958 = vunpack.c.l.b16 %v109
    %v959 = vunpack.c.h.b16 %v109
    %v960 = vunpack.c.l.b16 %v110
    %v961 = vunpack.c.h.b16 %v110
    %v962 = vunpack.c.l.b16 %v111
    %v963 = vunpack.c.h.b16 %v111
    %v964 = vunpack.c.l.b16 %v112
    %v965 = vunpack.c.h.b16 %v112
    %v966 = vunpack.c.l.b16 %v113
    %v967 = vunpack.c.h.b16 %v113
    %v968 = vunpack.c.l.b16 %v114
    %v969 = vunpack.c.h.b16 %v114
    %v970 = vunpack.c.l.b16 %v115
    %v971 = vunpack.c.h.b16 %v115
    %v972 = vunpack.c.l.b16 %v116
    %v973 = vunpack.c.h.b16 %v116
    %v974 = vunpack.c.l.b16 %v117
    %v975 = vunpack.c.h.b16 %v117
    %v976 = vunpack.c.l.b16 %v118
    %v977 = vunpack.c.h.b16 %v118
    %v978 = vunpack.c.l.b16 %v119
    %v979 = vunpack.c.h.b16 %v119
    %v980 = vunpack.c.l.b16 %v120
    %v981 = vunpack.c.h.b16 %v120
    %v982 = vunpack.c.l.b16 %v121
    %v983 = vunpack.c.h.b16 %v121
    %v984 = vunpack.c.l.b16 %v122
    %v985 = vunpack.c.h.b16 %v122
    %v986 = vunpack.c.l.b16 %v123
    %v987 = vunpack.c.h.b16 %v123
    %v988 = vunpack.c.l.b16 %v124
    %v989 = vunpack.c.h.b16 %v124
    %v990 = vunpack.c.l.b16 %v125
    %v991 = vunpack.c.h.b16 %v125
    %v992 = vunpack.c.l.b16 %v126
    %v993 = vunpack.c.h.b16 %v126
    %v994 = vunpack.c.l.b16 %v127
    %v995 = vunpack.c.h.b16 %v127
    %v996 = vunpack.c.l.b16 %v128
    %v997 = vunpack.c.h.b16 %v128
    %v998 = vunpack.c.l.b16 %v129
    %v999 = vunpack.c.h.b16 %v129
    %v1000 = vunpack.c.l.b16 %v130
    %v1001 = vunpack.c.h.b16 %v130
    %v1002 = vunpack.c.l.b16 %v131
    %v1003 = vunpack.c.h.b16 %v131
    %v1004 = vunpack.c.l.b16 %v132
    %v1005 = vunpack.c.h.b16 %v132
    %v1006 = vunpack.c.l.b16 %v133
    %v1007 = vunpack.c.h.b16 %v133
    %v1008 = vunpack.c.l.b16 %v134
    %v1009 = vunpack.c.h.b16 %v134
    %v1010 = vunpack.c.l.b16 %v135
    %v1011 = vunpack.c.h.b16 %v135
    %v1012 = vunpack.c.l.b16 %v136
    %v1013 = vunpack.c.h.b16 %v136
    %v1014 = vunpack.c.l.b16 %v137
    %v1015 = vunpack.c.h.b16 %v137
    %v1016 = vunpack.c.l.b16 %v138
    %v1017 = vunpack.c.h.b16 %v138
    %v1018 = vunpack.c.l.b16 %v139
    %v1019 = vunpack.c.h.b16 %v139
    %v1020 = vunpack.c.l.b16 %v140
    %v1021 = vunpack.c.h.b16 %v140
    %v1022 = vunpack.c.l.b16 %v141
    %v1023 = vunpack.c.h.b16 %v141
    %v1024 = vunpack.c.l.b16 %v142
    %v1025 = vunpack.c.h.b16 %v142
    %v1026 = vunpack.c.l.b16 %v143
    %v1027 = vunpack.c.h.b16 %v143
    %v1028 = vunpack.c.l.b16 %v144
    %v1029 = vunpack.c.h.b16 %v144
    %v1030 = vunpack.c.l.b16 %v145
    %v1031 = vunpack.c.h.b16 %v145
    %v1032 = vunpack.c.l.b16 %v146
    %v1033 = vunpack.c.h.b16 %v146
    %v1034 = vunpack.c.l.b16 %v147
    %v1035 = vunpack.c.h.b16 %v147
    %v1036 = vunpack.c.l.b16 %v148
    %v1037 = vunpack.c.h.b16 %v148
    %v1038 = vunpack.c.l.b16 %v149
    %v1039 = vunpack.c.h.b16 %v149
    %v1040 = vunpack.c.l.b16 %v150
    %v1041 = vunpack.c.h.b16 %v150
    %v1042 = vunpack.c.l.b16 %v151
    %v1043 = vunpack.c.h.b16 %v151
    %v1044 = vunpack.c.l.b16 %v152
    %v1045 = vunpack.c.h.b16 %v152
    %v1046 = vunpack.c.l.b16 %v153
    %v1047 = vunpack.c.h.b16 %v153
    %v1048 = vunpack.c.l.b16 %v154
    %v1049 = vunpack.c.h.b16 %v154
    %v1050 = vunpack.c.l.b16 %v155
    %v1051 = vunpack.c.h.b16 %v155
    %v1052 = vpack.c.b16 %v812, %v796
    %v1053 = vpack.c.b16 %v813, %v797
    %v1054 = vpack.c.b16 %v814, %v798
    %v1055 = vpack.c.b16 %v815, %v799
    %v1056 = vpack.c.b16 %v816, %v800
    %v1057 = vpack.c.b16 %v817, %v801
    %v1058 = vpack.c.b16 %v818, %v802
    %v1059 = vpack.c.b16 %v819, %v803
    %v1060 = vpack.c.b16 %v820, %v804
    %v1061 = vpack.c.b16 %v821, %v805
    %v1062 = vpack.c.b16 %v822, %v806
    %v1063 = vpack.c.b16 %v823, %v807
    %v1064 = vpack.c.b16 %v824, %v808
    %v1065 = vpack.c.b16 %v825, %v809
    %v1066 = vpack.c.b16 %v826, %v810
    %v1067 = vpack.c.b16 %v827, %v811
    %v1068 = vpack.c.b16 %v844, %v828
    %v1069 = vpack.c.b16 %v845, %v829
    %v1070 = vpack.c.b16 %v846, %v830
    %v1071 = vpack.c.b16 %v847, %v831
    %v1072 = vpack.c.b16 %v848, %v832
    %v1073 = vpack.c.b16 %v849, %v833
    %v1074 = vpack.c.b16 %v850, %v834
    %v1075 = vpack.c.b16 %v851, %v835
    %v1076 = vpack.c.b16 %v852, %v836
    %v1077 = vpack.c.b16 %v853, %v837
    %v1078 = vpack.c.b16 %v854, %v838
    %v1079 = vpack.c.b16 %v855, %v839
    %v1080 = vpack.c.b16 %v856, %v840
    %v1081 = vpack.c.b16 %v857, %v841
    %v1082 = vpack.c.b16 %v858, %v842
    %v1083 = vpack.c.b16 %v859, %v843
    %v1084 = vpack.c.b16 %v876, %v860
    %v1085 = vpack.c.b16 %v877, %v861
    %v1086 = vpack.c.b16 %v878, %v862
    %v1087 = vpack.c.b16 %v879, %v863
    %v1088 = vpack.c.b16 %v880, %v864
    %v1089 = vpack.c.b16 %v881, %v865
    %v1090 = vpack.c.b16 %v882, %v866
    %v1091 = vpack.c.b16 %v883, %v867
    %v1092 = vpack.c.b16 %v884, %v868
    %v1093 = vpack.c.b16 %v885, %v869
    %v1094 = vpack.c.b16 %v886, %v870
    %v1095 = vpack.c.b16 %v887, %v871
    %v1096 = vpack.c.b16 %v888, %v872
    %v1097 = vpack.c.b16 %v889, %v873
    %v1098 = vpack.c.b16 %v890, %v874
    %v1099 = vpack.c.b16 %v891, %v875
    %v1100 = vpack.c.b16 %v908, %v892
    %v1101 = vpack.c.b16 %v909, %v893
    %v1102 = vpack.c.b16 %v910, %v894
    %v1103 = vpack.c.b16 %v911, %v895
    %v1104 = vpack.c.b16 %v912, %v896
    %v1105 = vpack.c.b16 %v913, %v897
    %v1106 = vpack.c.b16 %v914, %v898
    %v1107 = vpack.c.b16 %v915, %v899
    %v1108 = vpack.c.b16 %v916, %v900
    %v1109 = vpack.c.b16 %v917, %v901
    %v1110 = vpack.c.b16 %v918, %v902
    %v1111 = vpack.c.b16 %v919, %v903
    %v1112 = vpack.c.b16 %v920, %v904
    %v1113 = vpack.c.b16 %v921, %v905
    %v1114 = vpack.c.b16 %v922, %v906
    %v1115 = vpack.c.b16 %v923, %v907
    %v1116 = vpack.c.b16 %v940, %v924
    %v1117 = vpack.c.b16 %v941, %v925
    %v1118 = vpack.c.b16 %v942, %v926
    %v1119 = vpack.c.b16 %v943, %v927
    %v1120 = vpack.c.b16 %v944, %v928
    %v1121 = vpack.c.b16 %v945, %v929
    %v1122 = vpack.c.b16 %v946, %v930
    %v1123 = vpack.c.b16 %v947, %v931
    %v1124 = vpack.c.b16 %v948, %v932
    %v1125 = vpack.c.b16 %v949, %v933
    %v1126 = vpack.c.b16 %v950, %v934
    %v1127 = vpack.c.b16 %v951, %v935
    %v1128 = vpack.c.b16 %v952, %v936
    %v1129 = vpack.c.b16 %v953, %v937
    %v1130 = vpack.c.b16 %v954, %v938
    %v1131 = vpack.c.b16 %v955, %v939
    %v1132 = vpack.c.b16 %v972, %v956
    %v1133 = vpack.c.b16 %v973, %v957
    %v1134 = vpack.c.b16 %v974, %v958
    %v1135 = vpack.c.b16 %v975, %v959
    %v1136 = vpack.c.b16 %v976, %v960
    %v1137 = vpack.c.b16 %v977, %v961
    %v1138 = vpack.c.b16 %v978, %v962
    %v1139 = vpack.c.b16 %v979, %v963
    %v1140 = vpack.c.b16 %v980, %v964
    %v1141 = vpack.c.b16 %v981, %v965
    %v1142 = vpack.c.b16 %v982, %v966
    %v1143 = vpack.c.b16 %v983, %v967
    %v1144 = vpack.c.b16 %v984, %v968
    %v1145 = vpack.c.b16 %v985, %v969
    %v1146 = vpack.c.b16 %v986, %v970
    %v1147 = vpack.c.b16 %v987, %v971
    %v1148 = vpack.c.b16 %v1004, %v988
    %v1149 = vpack.c.b16 %v1005, %v989
    %v1150 = vpack.c.b16 %v1006, %v990
    %v1151 = vpack.c.b16 %v1007, %v991
    %v1152 = vpack.c.b16 %v1008, %v992
    %v1153 = vpack.c.b16 %v1009, %v993
    %v1154 = vpack.c.b16 %v1010, %v994
    %v1155 = vpack.c.b16 %v1011, %v995
    %v1156 = vpack.c.b16 %v1012, %v996
    %v1157 = vpack.c.b16 %v1013, %v997
    %v1158 = vpack.c.b16 %v1014, %v998
    %v1159 = vpack.c.b16 %v1015, %v999
    %v1160 = vpack.c.b16 %v1016, %v1000
    %v1161 = vpack.c.b16 %v1017, %v1001
    %v1162 = vpack.c.b16 %v1018, %v1002
    %v1163 = vpack.c.b16 %v1019, %v1003
    %v1164 = vpack.c.b16 %v1036, %v1020
    %v1165 = vpack.c.b16 %v1037, %v1021
    %v1166 = vpack.c.b16 %v1038, %v1022
    %v1167 = vpack.c.b16 %v1039, %v1023
    %v1168 = vpack.c.b16 %v1040, %v1024
    %v1169 = vpack.c.b16 %v1041, %v1025
    %v1170 = vpack.c.b16 %v1042, %v1026
    %v1171 = vpack.c.b16 %v1043, %v1027
    %v1172 = vpack.c.b16 %v1044, %v1028
    %v1173 = vpack.c.b16 %v1045, %v1029
    %v1174 = vpack.c.b16 %v1046, %v1030
    %v1175 = vpack.c.b16 %v1047, %v1031
    %v1176 = vpack.c.b16 %v1048, %v1032
    %v1177 = vpack.c.b16 %v1049, %v1033
    %v1178 = vpack.c.b16 %v1050, %v1034
    %v1179 = vpack.c.b16 %v1051, %v1035
    %v1820 = vunpack.c.l.b16 %v156
    %v1821 = vunpack.c.h.b16 %v156
    %v1822 = vunpack.c.l.b16 %v157
    %v1823 = vunpack.c.h.b16 %v157
    %v1824 = vunpack.c.l.b16 %v158
    %v1825 = vunpack.c.h.b16 %v158
    %v1826 = vunpack.c.l.b16 %v159
    %v1827 = vunpack.c.h.b16 %v159
    %v1828 = vunpack.c.l.b16 %v160
    %v1829 = vunpack.c.h.b16 %v160
    %v1830 = vunpack.c.l.b16 %v161
    %v1831 = vunpack.c.h.b16 %v161
    %v1832 = vunpack.c.l.b16 %v162
    %v1833 = vunpack.c.h.b16 %v162
    %v1834 = vunpack.c.l.b16 %v163
    %v1835 = vunpack.c.h.b16 %v163
    %v1836 = vunpack.c.l.b16 %v164
    %v1837 = vunpack.c.h.b16 %v164
    %v1838 = vunpack.c.l.b16 %v165
    %v1839 = vunpack.c.h.b16 %v165
    %v1840 = vunpack.c.l.b16 %v166
    %v1841 = vunpack.c.h.b16 %v166
    %v1842 = vunpack.c.l.b16 %v167
    %v1843 = vunpack.c.h.b16 %v167
    %v1844 = vunpack.c.l.b16 %v168
    %v1845 = vunpack.c.h.b16 %v168
    %v1846 = vunpack.c.l.b16 %v169
    %v1847 = vunpack.c.h.b16 %v169
    %v1848 = vunpack.c.l.b16 %v170
    %v1849 = vunpack.c.h.b16 %v170
    %v1850 = vunpack.c.l.b16 %v171
    %v1851 = vunpack.c.h.b16 %v171
    %v1852 = vunpack.c.l.b16 %v172
    %v1853 = vunpack.c.h.b16 %v172
    %v1854 = vunpack.c.l.b16 %v173
    %v1855 = vunpack.c.h.b16 %v173
    %v1856 = vunpack.c.l.b16 %v174
    %v1857 = vunpack.c.h.b16 %v174
    %v1858 = vunpack.c.l.b16 %v175
    %v1859 = vunpack.c.h.b16 %v175
    %v1860 = vunpack.c.l.b16 %v176
    %v1861 = vunpack.c.h.b16 %v176
    %v1862 = vunpack.c.l.b16 %v177
    %v1863 = vunpack.c.h.b16 %v177
    %v1864 = vunpack.c.l.b16 %v178
    %v1865 = vunpack.c.h.b16 %v178
    %v1866 = vunpack.c.l.b16 %v179
    %v1867 = vunpack.c.h.b16 %v179
    %v1868 = vunpack.c.l.b16 %v180
    %v1869 = vunpack.c.h.b16 %v180
    %v1870 = vunpack.c.l.b16 %v181
    %v1871 = vunpack.c.h.b16 %v181
    %v1872 = vunpack.c.l.b16 %v182
    %v1873 = vunpack.c.h.b16 %v182
    %v1874 = vunpack.c.l.b16 %v183
    %v1875 = vunpack.c.h.b16 %v183
    %v1876 = vunpack.c.l.b16 %v184
    %v1877 = vunpack.c.h.b16 %v184
    %v1878 = vunpack.c.l.b16 %v185
    %v1879 = vunpack.c.h.b16 %v185
    %v1880 = vunpack.c.l.b16 %v186
    %v1881 = vunpack.c.h.b16 %v186
    %v1882 = vunpack.c.l.b16 %v187
    %v1883 = vunpack.c.h.b16 %v187
    %v1884 = vunpack.c.l.b16 %v188
    %v1885 = vunpack.c.h.b16 %v188
    %v1886 = vunpack.c.l.b16 %v189
    %v1887 = vunpack.c.h.b16 %v189
    %v1888 = vunpack.c.l.b16 %v190
    %v1889 = vunpack.c.h.b16 %v190
    %v1890 = vunpack.c.l.b16 %v191
    %v1891 = vunpack.c.h.b16 %v191
    %v1892 = vunpack.c.l.b16 %v192
    %v1893 = vunpack.c.h.b16 %v192
    %v1894 = vunpack.c.l.b16 %v193
    %v1895 = vunpack.c.h.b16 %v193
    %v1896 = vunpack.c.l.b16 %v194
    %v1897 = vunpack.c.h.b16 %v194
    %v1898 = vunpack.c.l.b16 %v195
    %v1899 = vunpack.c.h.b16 %v195
    %v1900 = vunpack.c.l.b16 %v196
    %v1901 = vunpack.c.h.b16 %v196
    %v1902 = vunpack.c.l.b16 %v197
    %v1903 = vunpack.c.h.b16 %v197
    %v1904 = vunpack.c.l.b16 %v198
    %v1905 = vunpack.c.h.b16 %v198
    %v1906 = vunpack.c.l.b16 %v199
    %v1907 = vunpack.c.h.b16 %v199
    %v1908 = vunpack.c.l.b16 %v200
    %v1909 = vunpack.c.h.b16 %v200
    %v1910 = vunpack.c.l.b16 %v201
    %v1911 = vunpack.c.h.b16 %v201
    %v1912 = vunpack.c.l.b16 %v202
    %v1913 = vunpack.c.h.b16 %v202
    %v1914 = vunpack.c.l.b16 %v203
    %v1915 = vunpack.c.h.b16 %v203
    %v1916 = vunpack.c.l.b16 %v204
    %v1917 = vunpack.c.h.b16 %v204
    %v1918 = vunpack.c.l.b16 %v205
    %v1919 = vunpack.c.h.b16 %v205
    %v1920 = vunpack.c.l.b16 %v206
    %v1921 = vunpack.c.h.b16 %v206
    %v1922 = vunpack.c.l.b16 %v207
    %v1923 = vunpack.c.h.b16 %v207
    %v1924 = vunpack.c.l.b16 %v208
    %v1925 = vunpack.c.h.b16 %v208
    %v1926 = vunpack.c.l.b16 %v209
    %v1927 = vunpack.c.h.b16 %v209
    %v1928 = vunpack.c.l.b16 %v210
    %v1929 = vunpack.c.h.b16 %v210
    %v1930 = vunpack.c.l.b16 %v211
    %v1931 = vunpack.c.h.b16 %v211
    %v1932 = vunpack.c.l.b16 %v212
    %v1933 = vunpack.c.h.b16 %v212
    %v1934 = vunpack.c.l.b16 %v213
    %v1935 = vunpack.c.h.b16 %v213
    %v1936 = vunpack.c.l.b16 %v214
    %v1937 = vunpack.c.h.b16 %v214
    %v1938 = vunpack.c.l.b16 %v215
    %v1939 = vunpack.c.h.b16 %v215
    %v1940 = vunpack.c.l.b16 %v216
    %v1941 = vunpack.c.h.b16 %v216
    %v1942 = vunpack.c.l.b16 %v217
    %v1943 = vunpack.c.h.b16 %v217
    %v1944 = vunpack.c.l.b16 %v218
    %v1945 = vunpack.c.h.b16 %v218
    %v1946 = vunpack.c.l.b16 %v219
    %v1947 = vunpack.c.h.b16 %v219
    %v1948 = vunpack.c.l.b16 %v220
    %v1949 = vunpack.c.h.b16 %v220
    %v1950 = vunpack.c.l.b16 %v221
    %v1951 = vunpack.c.h.b16 %v221
    %v1952 = vunpack.c.l.b16 %v222
    %v1953 = vunpack.c.h.b16 %v222
    %v1954 = vunpack.c.l.b16 %v223
    %v1955 = vunpack.c.h.b16 %v223
    %v1956 = vunpack.c.l.b16 %v224
    %v1957 = vunpack.c.h.b16 %v224
    %v1958 = vunpack.c.l.b16 %v225
    %v1959 = vunpack.c.h.b16 %v225
    %v1960 = vunpack.c.l.b16 %v226
    %v1961 = vunpack.c.h.b16 %v226
    %v1962 = vunpack.c.l.b16 %v227
    %v1963 = vunpack.c.h.b16 %v227
    %v1964 = vunpack.c.l.b16 %v228
    %v1965 = vunpack.c.h.b16 %v228
    %v1966 = vunpack.c.l.b16 %v229
    %v1967 = vunpack.c.h.b16 %v229
    %v1968 = vunpack.c.l.b16 %v230
    %v1969 = vunpack.c.h.b16 %v230
    %v1970 = vunpack.c.l.b16 %v231
    %v1971 = vunpack.c.h.b16 %v231
    %v1972 = vunpack.c.l.b16 %v232
    %v1973 = vunpack.c.h.b16 %v232
    %v1974 = vunpack.c.l.b16 %v233
    %v1975 = vunpack.c.h.b16 %v233
    %v1976 = vunpack.c.l.b16 %v234
    %v1977 = vunpack.c.h.b16 %v234
    %v1978 = vunpack.c.l.b16 %v235
    %v1979 = vunpack.c.h.b16 %v235
    %v1980 = vunpack.c.l.b16 %v236
    %v1981 = vunpack.c.h.b16 %v236
    %v1982 = vunpack.c.l.b16 %v237
    %v1983 = vunpack.c.h.b16 %v237
    %v1984 = vunpack.c.l.b16 %v238
    %v1985 = vunpack.c.h.b16 %v238
    %v1986 = vunpack.c.l.b16 %v239
    %v1987 = vunpack.c.h.b16 %v239
    %v1988 = vunpack.c.l.b16 %v240
    %v1989 = vunpack.c.h.b16 %v240
    %v1990 = vunpack.c.l.b16 %v241
    %v1991 = vunpack.c.h.b16 %v241
    %v1992 = vunpack.c.l.b16 %v242
    %v1993 = vunpack.c.h.b16 %v242
    %v1994 = vunpack.c.l.b16 %v243
    %v1995 = vunpack.c.h.b16 %v243
    %v1996 = vunpack.c.l.b16 %v244
    %v1997 = vunpack.c.h.b16 %v244
    %v1998 = vunpack.c.l.b16 %v245
    %v1999 = vunpack.c.h.b16 %v245
    %v2000 = vunpack.c.l.b16 %v246
    %v2001 = vunpack.c.h.b16 %v246
    %v2002 = vunpack.c.l.b16 %v247
    %v2003 = vunpack.c.h.b16 %v247
    %v2004 = vunpack.c.l.b16 %v248
    %v2005 = vunpack.c.h.b16 %v248
    %v2006 = vunpack.c.l.b16 %v249
    %v2007 = vunpack.c.h.b16 %v249
    %v2008 = vunpack.c.l.b16 %v250
    %v2009 = vunpack.c.h.b16 %v250
    %v2010 = vunpack.c.l.b16 %v251
    %v2011 = vunpack.c.h.b16 %v251
    %v2012 = vunpack.c.l.b16 %v252
    %v2013 = vunpack.c.h.b16 %v252
    %v2014 = vunpack.c.l.b16 %v253
    %v2015 = vunpack.c.h.b16 %v253
    %v2016 = vunpack.c.l.b16 %v254
    %v2017 = vunpack.c.h.b16 %v254
    %v2018 = vunpack.c.l.b16 %v255
    %v2019 = vunpack.c.h.b16 %v255
    %v2020 = vunpack.c.l.b16 %v256
    %v2021 = vunpack.c.h.b16 %v256
    %v2022 = vunpack.c.l.b16 %v257
    %v2023 = vunpack.c.h.b16 %v257
    %v2024 = vunpack.c.l.b16 %v258
    %v2025 = vunpack.c.h.b16 %v258
    %v2026 = vunpack.c.l.b16 %v259
    %v2027 = vunpack.c.h.b16 %v259
    %v2028 = vunpack.c.l.b16 %v260
    %v2029 = vunpack.c.h.b16 %v260
    %v2030 = vunpack.c.l.b16 %v261
    %v2031 = vunpack.c.h.b16 %v261
    %v2032 = vunpack.c.l.b16 %v262
    %v2033 = vunpack.c.h.b16 %v262
    %v2034 = vunpack.c.l.b16 %v263
    %v2035 = vunpack.c.h.b16 %v263
    %v2036 = vunpack.c.l.b16 %v264
    %v2037 = vunpack.c.h.b16 %v264
    %v2038 = vunpack.c.l.b16 %v265
    %v2039 = vunpack.c.h.b16 %v265
    %v2040 = vunpack.c.l.b16 %v266
    %v2041 = vunpack.c.h.b16 %v266
    %v2042 = vunpack.c.l.b16 %v267
    %v2043 = vunpack.c.h.b16 %v267
    %v2044 = vunpack.c.l.b16 %v268
    %v2045 = vunpack.c.h.b16 %v268
    %v2046 = vunpack.c.l.b16 %v269
    %v2047 = vunpack.c.h.b16 %v269
    %v2048 = vunpack.c.l.b16 %v270
    %v2049 = vunpack.c.h.b16 %v270
    %v2050 = vunpack.c.l.b16 %v271
    %v2051 = vunpack.c.h.b16 %v271
    %v2052 = vunpack.c.l.b16 %v272
    %v2053 = vunpack.c.h.b16 %v272
    %v2054 = vunpack.c.l.b16 %v273
    %v2055 = vunpack.c.h.b16 %v273
    %v2056 = vunpack.c.l.b16 %v274
    %v2057 = vunpack.c.h.b16 %v274
    %v2058 = vunpack.c.l.b16 %v275
    %v2059 = vunpack.c.h.b16 %v275
    %v2060 = vunpack.c.l.b16 %v276
    %v2061 = vunpack.c.h.b16 %v276
    %v2062 = vunpack.c.l.b16 %v277
    %v2063 = vunpack.c.h.b16 %v277
    %v2064 = vunpack.c.l.b16 %v278
    %v2065 = vunpack.c.h.b16 %v278
    %v2066 = vunpack.c.l.b16 %v279
    %v2067 = vunpack.c.h.b16 %v279
    %v2068 = vunpack.c.l.b16 %v280
    %v2069 = vunpack.c.h.b16 %v280
    %v2070 = vunpack.c.l.b16 %v281
    %v2071 = vunpack.c.h.b16 %v281
    %v2072 = vunpack.c.l.b16 %v282
    %v2073 = vunpack.c.h.b16 %v282
    %v2074 = vunpack.c.l.b16 %v283
    %v2075 = vunpack.c.h.b16 %v283
    %v2076 = vunpack.c.l.b16 %v284
    %v2077 = vunpack.c.h.b16 %v284
    %v2078 = vunpack.c.l.b16 %v285
    %v2079 = vunpack.c.h.b16 %v285
    %v2080 = vunpack.c.l.b16 %v286
    %v2081 = vunpack.c.h.b16 %v286
    %v2082 = vunpack.c.l.b16 %v287
    %v2083 = vunpack.c.h.b16 %v287
    %v2084 = vunpack.c.l.b16 %v288
    %v2085 = vunpack.c.h.b16 %v288
    %v2086 = vunpack.c.l.b16 %v289
    %v2087 = vunpack.c.h.b16 %v289
    %v2088 = vunpack.c.l.b16 %v290
    %v2089 = vunpack.c.h.b16 %v290
    %v2090 = vunpack.c.l.b16 %v291
    %v2091 = vunpack.c.h.b16 %v291
    %v2092 = vunpack.c.l.b16 %v292
    %v2093 = vunpack.c.h.b16 %v292
    %v2094 = vunpack.c.l.b16 %v293
    %v2095 = vunpack.c.h.b16 %v293
    %v2096 = vunpack.c.l.b16 %v294
    %v2097 = vunpack.c.h.b16 %v294
    %v2098 = vunpack.c.l.b16 %v295
    %v2099 = vunpack.c.h.b16 %v295
    %v2100 = vunpack.c.l.b16 %v296
    %v2101 = vunpack.c.h.b16 %v296
    %v2102 = vunpack.c.l.b16 %v297
    %v2103 = vunpack.c.h.b16 %v297
    %v2104 = vunpack.c.l.b16 %v298
    %v2105 = vunpack.c.h.b16 %v298
    %v2106 = vunpack.c.l.b16 %v299
    %v2107 = vunpack.c.h.b16 %v299
    %v2108 = vunpack.c.l.b16 %v300
    %v2109 = vunpack.c.h.b16 %v300
    %v2110 = vunpack.c.l.b16 %v301
    %v2111 = vunpack.c.h.b16 %v301
    %v2112 = vunpack.c.l.b16 %v302
    %v2113 = vunpack.c.h.b16 %v302
    %v2114 = vunpack.c.l.b16 %v303
    %v2115 = vunpack.c.h.b16 %v303
    %v2116 = vunpack.c.l.b16 %v304
    %v2117 = vunpack.c.h.b16 %v304
    %v2118 = vunpack.c.l.b16 %v305
    %v2119 = vunpack.c.h.b16 %v305
    %v2120 = vunpack.c.l.b16 %v306
    %v2121 = vunpack.c.h.b16 %v306
    %v2122 = vunpack.c.l.b16 %v307
    %v2123 = vunpack.c.h.b16 %v307
    %v2124 = vunpack.c.l.b16 %v308
    %v2125 = vunpack.c.h.b16 %v308
    %v2126 = vunpack.c.l.b16 %v309
    %v2127 = vunpack.c.h.b16 %v309
    %v2128 = vunpack.c.l.b16 %v310
    %v2129 = vunpack.c.h.b16 %v310
    %v2130 = vunpack.c.l.b16 %v311
    %v2131 = vunpack.c.h.b16 %v311
    %v2132 = vunpack.c.l.b16 %v312
    %v2133 = vunpack.c.h.b16 %v312
    %v2134 = vunpack.c.l.b16 %v313
    %v2135 = vunpack.c.h.b16 %v313
    %v2136 = vunpack.c.l.b16 %v314
    %v2137 = vunpack.c.h.b16 %v314
    %v2138 = vunpack.c.l.b16 %v315
    %v2139 = vunpack.c.h.b16 %v315
    %v2140 = vunpack.c.l.b16 %v316
    %v2141 = vunpack.c.h.b16 %v316
    %v2142 = vunpack.c.l.b16 %v317
    %v2143 = vunpack.c.h.b16 %v317
    %v2144 = vunpack.c.l.b16 %v318
    %v2145 = vunpack.c.h.b16 %v318
    %v2146 = vunpack.c.l.b16 %v319
    %v2147 = vunpack.c.h.b16 %v319
    %v2148 = vunpack.c.l.b16 %v320
    %v2149 = vunpack.c.h.b16 %v320
    %v2150 = vunpack.c.l.b16 %v321
    %v2151 = vunpack.c.h.b16 %v321
    %v2152 = vunpack.c.l.b16 %v322
    %v2153 = vunpack.c.h.b16 %v322
    %v2154 = vunpack.c.l.b16 %v323
    %v2155 = vunpack.c.h.b16 %v323
    %v2156 = vunpack.c.l.b16 %v324
    %v2157 = vunpack.c.h.b16 %v324
    %v2158 = vunpack.c.l.b16 %v325
    %v2159 = vunpack.c.h.b16 %v325
    %v2160 = vunpack.c.l.b16 %v326
    %v2161 = vunpack.c.h.b16 %v326
    %v2162 = vunpack.c.l.b16 %v327
    %v2163 = vunpack.c.h.b16 %v327
    %v2164 = vunpack.c.l.b16 %v328
    %v2165 = vunpack.c.h.b16 %v328
    %v2166 = vunpack.c.l.b16 %v329
    %v2167 = vunpack.c.h.b16 %v329
    %v2168 = vunpack.c.l.b16 %v330
    %v2169 = vunpack.c.h.b16 %v330
    %v2170 = vunpack.c.l.b16 %v331
    %v2171 = vunpack.c.h.b16 %v331
    %v2172 = vunpack.c.l.b16 %v332
    %v2173 = vunpack.c.h.b16 %v332
    %v2174 = vunpack.c.l.b16 %v333
    %v2175 = vunpack.c.h.b16 %v333
    %v2176 = vunpack.c.l.b16 %v334
    %v2177 = vunpack.c.h.b16 %v334
    %v2178 = vunpack.c.l.b16 %v335
    %v2179 = vunpack.c.h.b16 %v335
    %v2180 = vunpack.c.l.b16 %v336
    %v2181 = vunpack.c.h.b16 %v336
    %v2182 = vunpack.c.l.b16 %v337
    %v2183 = vunpack.c.h.b16 %v337
    %v2184 = vunpack.c.l.b16 %v338
    %v2185 = vunpack.c.h.b16 %v338
    %v2186 = vunpack.c.l.b16 %v339
    %v2187 = vunpack.c.h.b16 %v339
    %v2188 = vunpack.c.l.b16 %v340
    %v2189 = vunpack.c.h.b16 %v340
    %v2190 = vunpack.c.l.b16 %v341
    %v2191 = vunpack.c.h.b16 %v341
    %v2192 = vunpack.c.l.b16 %v342
    %v2193 = vunpack.c.h.b16 %v342
    %v2194 = vunpack.c.l.b16 %v343
    %v2195 = vunpack.c.h.b16 %v343
    %v2196 = vunpack.c.l.b16 %v344
    %v2197 = vunpack.c.h.b16 %v344
    %v2198 = vunpack.c.l.b16 %v345
    %v2199 = vunpack.c.h.b16 %v345
    %v2200 = vunpack.c.l.b16 %v346
    %v2201 = vunpack.c.h.b16 %v346
    %v2202 = vunpack.c.l.b16 %v347
    %v2203 = vunpack.c.h.b16 %v347
    %v2204 = vunpack.c.l.b16 %v348
    %v2205 = vunpack.c.h.b16 %v348
    %v2206 = vunpack.c.l.b16 %v349
    %v2207 = vunpack.c.h.b16 %v349
    %v2208 = vunpack.c.l.b16 %v350
    %v2209 = vunpack.c.h.b16 %v350
    %v2210 = vunpack.c.l.b16 %v351
    %v2211 = vunpack.c.h.b16 %v351
    %v2212 = vunpack.c.l.b16 %v352
    %v2213 = vunpack.c.h.b16 %v352
    %v2214 = vunpack.c.l.b16 %v353
    %v2215 = vunpack.c.h.b16 %v353
    %v2216 = vunpack.c.l.b16 %v354
    %v2217 = vunpack.c.h.b16 %v354
    %v2218 = vunpack.c.l.b16 %v355
    %v2219 = vunpack.c.h.b16 %v355
    %v2220 = vunpack.c.l.b16 %v356
    %v2221 = vunpack.c.h.b16 %v356
    %v2222 = vunpack.c.l.b16 %v357
    %v2223 = vunpack.c.h.b16 %v357
    %v2224 = vunpack.c.l.b16 %v358
    %v2225 = vunpack.c.h.b16 %v358
    %v2226 = vunpack.c.l.b16 %v359
    %v2227 = vunpack.c.h.b16 %v359
    %v2228 = vunpack.c.l.b16 %v360
    %v2229 = vunpack.c.h.b16 %v360
    %v2230 = vunpack.c.l.b16 %v361
    %v2231 = vunpack.c.h.b16 %v361
    %v2232 = vunpack.c.l.b16 %v362
    %v2233 = vunpack.c.h.b16 %v362
    %v2234 = vunpack.c.l.b16 %v363
    %v2235 = vunpack.c.h.b16 %v363
    %v2236 = vunpack.c.l.b16 %v364
    %v2237 = vunpack.c.h.b16 %v364
    %v2238 = vunpack.c.l.b16 %v365
    %v2239 = vunpack.c.h.b16 %v365
    %v2240 = vunpack.c.l.b16 %v366
    %v2241 = vunpack.c.h.b16 %v366
    %v2242 = vunpack.c.l.b16 %v367
    %v2243 = vunpack.c.h.b16 %v367
    %v2244 = vunpack.c.l.b16 %v368
    %v2245 = vunpack.c.h.b16 %v368
    %v2246 = vunpack.c.l.b16 %v369
    %v2247 = vunpack.c.h.b16 %v369
    %v2248 = vunpack.c.l.b16 %v370
    %v2249 = vunpack.c.h.b16 %v370
    %v2250 = vunpack.c.l.b16 %v371
    %v2251 = vunpack.c.h.b16 %v371
    %v2252 = vunpack.c.l.b16 %v372
    %v2253 = vunpack.c.h.b16 %v372
    %v2254 = vunpack.c.l.b16 %v373
    %v2255 = vunpack.c.h.b16 %v373
    %v2256 = vunpack.c.l.b16 %v374
    %v2257 = vunpack.c.h.b16 %v374
    %v2258 = vunpack.c.l.b16 %v375
    %v2259 = vunpack.c.h.b16 %v375
    %v2260 = vunpack.c.l.b16 %v376
    %v2261 = vunpack.c.h.b16 %v376
    %v2262 = vunpack.c.l.b16 %v377
    %v2263 = vunpack.c.h.b16 %v377
    %v2264 = vunpack.c.l.b16 %v378
    %v2265 = vunpack.c.h.b16 %v378
    %v2266 = vunpack.c.l.b16 %v379
    %v2267 = vunpack.c.h.b16 %v379
    %v2268 = vunpack.c.l.b16 %v380
    %v2269 = vunpack.c.h.b16 %v380
    %v2270 = vunpack.c.l.b16 %v381
    %v2271 = vunpack.c.h.b16 %v381
    %v2272 = vunpack.c.l.b16 %v382
    %v2273 = vunpack.c.h.b16 %v382
    %v2274 = vunpack.c.l.b16 %v383
    %v2275 = vunpack.c.h.b16 %v383
    %v2276 = vunpack.c.l.b16 %v384
    %v2277 = vunpack.c.h.b16 %v384
    %v2278 = vunpack.c.l.b16 %v385
    %v2279 = vunpack.c.h.b16 %v385
    %v2280 = vunpack.c.l.b16 %v386
    %v2281 = vunpack.c.h.b16 %v386
    %v2282 = vunpack.c.l.b16 %v387
    %v2283 = vunpack.c.h.b16 %v387
    %v2284 = vunpack.c.l.b16 %v388
    %v2285 = vunpack.c.h.b16 %v388
    %v2286 = vunpack.c.l.b16 %v389
    %v2287 = vunpack.c.h.b16 %v389
    %v2288 = vunpack.c.l.b16 %v390
    %v2289 = vunpack.c.h.b16 %v390
    %v2290 = vunpack.c.l.b16 %v391
    %v2291 = vunpack.c.h.b16 %v391
    %v2292 = vunpack.c.l.b16 %v392
    %v2293 = vunpack.c.h.b16 %v392
    %v2294 = vunpack.c.l.b16 %v393
    %v2295 = vunpack.c.h.b16 %v393
    %v2296 = vunpack.c.l.b16 %v394
    %v2297 = vunpack.c.h.b16 %v394
    %v2298 = vunpack.c.l.b16 %v395
    %v2299 = vunpack.c.h.b16 %v395
    %v2300 = vunpack.c.l.b16 %v396
    %v2301 = vunpack.c.h.b16 %v396
    %v2302 = vunpack.c.l.b16 %v397
    %v2303 = vunpack.c.h.b16 %v397
    %v2304 = vunpack.c.l.b16 %v398
    %v2305 = vunpack.c.h.b16 %v398
    %v2306 = vunpack.c.l.b16 %v399
    %v2307 = vunpack.c.h.b16 %v399
    %v2308 = vunpack.c.l.b16 %v400
    %v2309 = vunpack.c.h.b16 %v400
    %v2310 = vunpack.c.l.b16 %v401
    %v2311 = vunpack.c.h.b16 %v401
    %v2312 = vunpack.c.l.b16 %v402
    %v2313 = vunpack.c.h.b16 %v402
    %v2314 = vunpack.c.l.b16 %v403
    %v2315 = vunpack.c.h.b16 %v403
    %v2316 = vunpack.c.l.b16 %v404
    %v2317 = vunpack.c.h.b16 %v404
    %v2318 = vunpack.c.l.b16 %v405
    %v2319 = vunpack.c.h.b16 %v405
    %v2320 = vunpack.c.l.b16 %v406
    %v2321 = vunpack.c.h.b16 %v406
    %v2322 = vunpack.c.l.b16 %v407
    %v2323 = vunpack.c.h.b16 %v407
    %v2324 = vunpack.c.l.b16 %v408
    %v2325 = vunpack.c.h.b16 %v408
    %v2326 = vunpack.c.l.b16 %v409
    %v2327 = vunpack.c.h.b16 %v409
    %v2328 = vunpack.c.l.b16 %v410
    %v2329 = vunpack.c.h.b16 %v410
    %v2330 = vunpack.c.l.b16 %v411
    %v2331 = vunpack.c.h.b16 %v411
    %v2332 = vunpack.c.l.b16 %v412
    %v2333 = vunpack.c.h.b16 %v412
    %v2334 = vunpack.c.l.b16 %v413
    %v2335 = vunpack.c.h.b16 %v413
    %v2336 = vunpack.c.l.b16 %v414
    %v2337 = vunpack.c.h.b16 %v414
    %v2338 = vunpack.c.l.b16 %v415
    %v2339 = vunpack.c.h.b16 %v415
    %v2340 = vunpack.c.l.b16 %v416
    %v2341 = vunpack.c.h.b16 %v416
    %v2342 = vunpack.c.l.b16 %v417
    %v2343 = vunpack.c.h.b16 %v417
    %v2344 = vunpack.c.l.b16 %v418
    %v2345 = vunpack.c.h.b16 %v418
    %v2346 = vunpack.c.l.b16 %v419
    %v2347 = vunpack.c.h.b16 %v419
    %v2348 = vunpack.c.l.b16 %v420
    %v2349 = vunpack.c.h.b16 %v420
    %v2350 = vunpack.c.l.b16 %v421
    %v2351 = vunpack.c.h.b16 %v421
    %v2352 = vunpack.c.l.b16 %v422
    %v2353 = vunpack.c.h.b16 %v422
    %v2354 = vunpack.c.l.b16 %v423
    %v2355 = vunpack.c.h.b16 %v423
    %v2356 = vunpack.c.l.b16 %v424
    %v2357 = vunpack.c.h.b16 %v424
    %v2358 = vunpack.c.l.b16 %v425
    %v2359 = vunpack.c.h.b16 %v425
    %v2360 = vunpack.c.l.b16 %v426
    %v2361 = vunpack.c.h.b16 %v426
    %v2362 = vunpack.c.l.b16 %v427
    %v2363 = vunpack.c.h.b16 %v427
    %v2364 = vunpack.c.l.b16 %v428
    %v2365 = vunpack.c.h.b16 %v428
    %v2366 = vunpack.c.l.b16 %v429
    %v2367 = vunpack.c.h.b16 %v429
    %v2368 = vunpack.c.l.b16 %v430
    %v2369 = vunpack.c.h.b16 %v430
    %v2370 = vunpack.c.l.b16 %v431
    %v2371 = vunpack.c.h.b16 %v431
    %v2372 = vunpack.c.l.b16 %v432
    %v2373 = vunpack.c.h.b16 %v432
    %v2374 = vunpack.c.l.b16 %v433
    %v2375 = vunpack.c.h.b16 %v433
    %v2376 = vunpack.c.l.b16 %v434
    %v2377 = vunpack.c.h.b16 %v434
    %v2378 = vunpack.c.l.b16 %v435
    %v2379 = vunpack.c.h.b16 %v435
    %v2380 = vunpack.c.l.b16 %v436
    %v2381 = vunpack.c.h.b16 %v436
    %v2382 = vunpack.c.l.b16 %v437
    %v2383 = vunpack.c.h.b16 %v437
    %v2384 = vunpack.c.l.b16 %v438
    %v2385 = vunpack.c.h.b16 %v438
    %v2386 = vunpack.c.l.b16 %v439
    %v2387 = vunpack.c.h.b16 %v439
    %v2388 = vunpack.c.l.b16 %v440
    %v2389 = vunpack.c.h.b16 %v440
    %v2390 = vunpack.c.l.b16 %v441
    %v2391 = vunpack.c.h.b16 %v441
    %v2392 = vunpack.c.l.b16 %v442
    %v2393 = vunpack.c.h.b16 %v442
    %v2394 = vunpack.c.l.b16 %v443
    %v2395 = vunpack.c.h.b16 %v443
    %v2396 = vunpack.c.l.b16 %v444
    %v2397 = vunpack.c.h.b16 %v444
    %v2398 = vunpack.c.l.b16 %v445
    %v2399 = vunpack.c.h.b16 %v445
    %v2400 = vunpack.c.l.b16 %v446
    %v2401 = vunpack.c.h.b16 %v446
    %v2402 = vunpack.c.l.b16 %v447
    %v2403 = vunpack.c.h.b16 %v447
    %v2404 = vunpack.c.l.b16 %v448
    %v2405 = vunpack.c.h.b16 %v448
    %v2406 = vunpack.c.l.b16 %v449
    %v2407 = vunpack.c.h.b16 %v449
    %v2408 = vunpack.c.l.b16 %v450
    %v2409 = vunpack.c.h.b16 %v450
    %v2410 = vunpack.c.l.b16 %v451
    %v2411 = vunpack.c.h.b16 %v451
    %v2412 = vunpack.c.l.b16 %v452
    %v2413 = vunpack.c.h.b16 %v452
    %v2414 = vunpack.c.l.b16 %v453
    %v2415 = vunpack.c.h.b16 %v453
    %v2416 = vunpack.c.l.b16 %v454
    %v2417 = vunpack.c.h.b16 %v454
    %v2418 = vunpack.c.l.b16 %v455
    %v2419 = vunpack.c.h.b16 %v455
    %v2420 = vunpack.c.l.b16 %v456
    %v2421 = vunpack.c.h.b16 %v456
    %v2422 = vunpack.c.l.b16 %v457
    %v2423 = vunpack.c.h.b16 %v457
    %v2424 = vunpack.c.l.b16 %v458
    %v2425 = vunpack.c.h.b16 %v458
    %v2426 = vunpack.c.l.b16 %v459
    %v2427 = vunpack.c.h.b16 %v459
    %v2428 = vunpack.c.l.b16 %v460
    %v2429 = vunpack.c.h.b16 %v460
    %v2430 = vunpack.c.l.b16 %v461
    %v2431 = vunpack.c.h.b16 %v461
    %v2432 = vunpack.c.l.b16 %v462
    %v2433 = vunpack.c.h.b16 %v462
    %v2434 = vunpack.c.l.b16 %v463
    %v2435 = vunpack.c.h.b16 %v463
    %v2436 = vunpack.c.l.b16 %v464
    %v2437 = vunpack.c.h.b16 %v464
    %v2438 = vunpack.c.l.b16 %v465
    %v2439 = vunpack.c.h.b16 %v465
    %v2440 = vunpack.c.l.b16 %v466
    %v2441 = vunpack.c.h.b16 %v466
    %v2442 = vunpack.c.l.b16 %v467
    %v2443 = vunpack.c.h.b16 %v467
    %v2444 = vunpack.c.l.b16 %v468
    %v2445 = vunpack.c.h.b16 %v468
    %v2446 = vunpack.c.l.b16 %v469
    %v2447 = vunpack.c.h.b16 %v469
    %v2448 = vunpack.c.l.b16 %v470
    %v2449 = vunpack.c.h.b16 %v470
    %v2450 = vunpack.c.l.b16 %v471
    %v2451 = vunpack.c.h.b16 %v471
    %v2452 = vunpack.c.l.b16 %v472
    %v2453 = vunpack.c.h.b16 %v472
    %v2454 = vunpack.c.l.b16 %v473
    %v2455 = vunpack.c.h.b16 %v473
    %v2456 = vunpack.c.l.b16 %v474
    %v2457 = vunpack.c.h.b16 %v474
    %v2458 = vunpack.c.l.b16 %v475
    %v2459 = vunpack.c.h.b16 %v475
    %v2460 = vunpack.c.l.b16 %v476
    %v2461 = vunpack.c.h.b16 %v476
    %v2462 = vunpack.c.l.b16 %v477
    %v2463 = vunpack.c.h.b16 %v477
    %v2464 = vunpack.c.l.b16 %v478
    %v2465 = vunpack.c.h.b16 %v478
    %v2466 = vunpack.c.l.b16 %v479
    %v2467 = vunpack.c.h.b16 %v479
    %v2468 = vunpack.c.l.b16 %v480
    %v2469 = vunpack.c.h.b16 %v480
    %v2470 = vunpack.c.l.b16 %v481
    %v2471 = vunpack.c.h.b16 %v481
    %v2472 = vunpack.c.l.b16 %v482
    %v2473 = vunpack.c.h.b16 %v482
    %v2474 = vunpack.c.l.b16 %v483
    %v2475 = vunpack.c.h.b16 %v483
    %v2476 = vunpack.c.l.b16 %v484
    %v2477 = vunpack.c.h.b16 %v484
    %v2478 = vunpack.c.l.b16 %v485
    %v2479 = vunpack.c.h.b16 %v485
    %v2480 = vunpack.c.l.b16 %v486
    %v2481 = vunpack.c.h.b16 %v486
    %v2482 = vunpack.c.l.b16 %v487
    %v2483 = vunpack.c.h.b16 %v487
    %v2484 = vunpack.c.l.b16 %v488
    %v2485 = vunpack.c.h.b16 %v488
    %v2486 = vunpack.c.l.b16 %v489
    %v2487 = vunpack.c.h.b16 %v489
    %v2488 = vunpack.c.l.b16 %v490
    %v2489 = vunpack.c.h.b16 %v490
    %v2490 = vunpack.c.l.b16 %v491
    %v2491 = vunpack.c.h.b16 %v491
    %v2492 = vunpack.c.l.b16 %v492
    %v2493 = vunpack.c.h.b16 %v492
    %v2494 = vunpack.c.l.b16 %v493
    %v2495 = vunpack.c.h.b16 %v493
    %v2496 = vunpack.c.l.b16 %v494
    %v2497 = vunpack.c.h.b16 %v494
    %v2498 = vunpack.c.l.b16 %v495
    %v2499 = vunpack.c.h.b16 %v495
    %v2500 = vunpack.c.l.b16 %v496
    %v2501 = vunpack.c.h.b16 %v496
    %v2502 = vunpack.c.l.b16 %v497
    %v2503 = vunpack.c.h.b16 %v497
    %v2504 = vunpack.c.l.b16 %v498
    %v2505 = vunpack.c.h.b16 %v498
    %v2506 = vunpack.c.l.b16 %v499
    %v2507 = vunpack.c.h.b16 %v499
    %v2508 = vunpack.c.l.b16 %v500
    %v2509 = vunpack.c.h.b16 %v500
    %v2510 = vunpack.c.l.b16 %v501
    %v2511 = vunpack.c.h.b16 %v501
    %v2512 = vunpack.c.l.b16 %v502
    %v2513 = vunpack.c.h.b16 %v502
    %v2514 = vunpack.c.l.b16 %v503
    %v2515 = vunpack.c.h.b16 %v503
    %v2516 = vunpack.c.l.b16 %v504
    %v2517 = vunpack.c.h.b16 %v504
    %v2518 = vunpack.c.l.b16 %v505
    %v2519 = vunpack.c.h.b16 %v505
    %v2520 = vunpack.c.l.b16 %v506
    %v2521 = vunpack.c.h.b16 %v506
    %v2522 = vunpack.c.l.b16 %v507
    %v2523 = vunpack.c.h.b16 %v507
    %v2524 = vunpack.c.l.b16 %v508
    %v2525 = vunpack.c.h.b16 %v508
    %v2526 = vunpack.c.l.b16 %v509
    %v2527 = vunpack.c.h.b16 %v509
    %v2528 = vunpack.c.l.b16 %v510
    %v2529 = vunpack.c.h.b16 %v510
    %v2530 = vunpack.c.l.b16 %v511
    %v2531 = vunpack.c.h.b16 %v511
    %v2532 = vunpack.c.l.b16 %v512
    %v2533 = vunpack.c.h.b16 %v512
    %v2534 = vunpack.c.l.b16 %v513
    %v2535 = vunpack.c.h.b16 %v513
    %v2536 = vunpack.c.l.b16 %v514
    %v2537 = vunpack.c.h.b16 %v514
    %v2538 = vunpack.c.l.b16 %v515
    %v2539 = vunpack.c.h.b16 %v515
    %v2540 = vunpack.c.l.b16 %v516
    %v2541 = vunpack.c.h.b16 %v516
    %v2542 = vunpack.c.l.b16 %v517
    %v2543 = vunpack.c.h.b16 %v517
    %v2544 = vunpack.c.l.b16 %v518
    %v2545 = vunpack.c.h.b16 %v518
    %v2546 = vunpack.c.l.b16 %v519
    %v2547 = vunpack.c.h.b16 %v519
    %v2548 = vunpack.c.l.b16 %v520
    %v2549 = vunpack.c.h.b16 %v520
    %v2550 = vunpack.c.l.b16 %v521
    %v2551 = vunpack.c.h.b16 %v521
    %v2552 = vunpack.c.l.b16 %v522
    %v2553 = vunpack.c.h.b16 %v522
    %v2554 = vunpack.c.l.b16 %v523
    %v2555 = vunpack.c.h.b16 %v523
    %v2556 = vunpack.c.l.b16 %v524
    %v2557 = vunpack.c.h.b16 %v524
    %v2558 = vunpack.c.l.b16 %v525
    %v2559 = vunpack.c.h.b16 %v525
    %v2560 = vunpack.c.l.b16 %v526
    %v2561 = vunpack.c.h.b16 %v526
    %v2562 = vunpack.c.l.b16 %v527
    %v2563 = vunpack.c.h.b16 %v527
    %v2564 = vunpack.c.l.b16 %v528
    %v2565 = vunpack.c.h.b16 %v528
    %v2566 = vunpack.c.l.b16 %v529
    %v2567 = vunpack.c.h.b16 %v529
    %v2568 = vunpack.c.l.b16 %v530
    %v2569 = vunpack.c.h.b16 %v530
    %v2570 = vunpack.c.l.b16 %v531
    %v2571 = vunpack.c.h.b16 %v531
    %v2572 = vunpack.c.l.b16 %v532
    %v2573 = vunpack.c.h.b16 %v532
    %v2574 = vunpack.c.l.b16 %v533
    %v2575 = vunpack.c.h.b16 %v533
    %v2576 = vunpack.c.l.b16 %v534
    %v2577 = vunpack.c.h.b16 %v534
    %v2578 = vunpack.c.l.b16 %v535
    %v2579 = vunpack.c.h.b16 %v535
    %v2580 = vunpack.c.l.b16 %v536
    %v2581 = vunpack.c.h.b16 %v536
    %v2582 = vunpack.c.l.b16 %v537
    %v2583 = vunpack.c.h.b16 %v537
    %v2584 = vunpack.c.l.b16 %v538
    %v2585 = vunpack.c.h.b16 %v538
    %v2586 = vunpack.c.l.b16 %v539
    %v2587 = vunpack.c.h.b16 %v539
    %v2588 = vunpack.c.l.b16 %v540
    %v2589 = vunpack.c.h.b16 %v540
    %v2590 = vunpack.c.l.b16 %v541
    %v2591 = vunpack.c.h.b16 %v541
    %v2592 = vunpack.c.l.b16 %v542
    %v2593 = vunpack.c.h.b16 %v542
    %v2594 = vunpack.c.l.b16 %v543
    %v2595 = vunpack.c.h.b16 %v543
    %v2596 = vunpack.c.l.b16 %v544
    %v2597 = vunpack.c.h.b16 %v544
    %v2598 = vunpack.c.l.b16 %v545
    %v2599 = vunpack.c.h.b16 %v545
    %v2600 = vunpack.c.l.b16 %v546
    %v2601 = vunpack.c.h.b16 %v546
    %v2602 = vunpack.c.l.b16 %v547
    %v2603 = vunpack.c.h.b16 %v547
    %v2604 = vunpack.c.l.b16 %v548
    %v2605 = vunpack.c.h.b16 %v548
    %v2606 = vunpack.c.l.b16 %v549
    %v2607 = vunpack.c.h.b16 %v549
    %v2608 = vunpack.c.l.b16 %v550
    %v2609 = vunpack.c.h.b16 %v550
    %v2610 = vunpack.c.l.b16 %v551
    %v2611 = vunpack.c.h.b16 %v551
    %v2612 = vunpack.c.l.b16 %v552
    %v2613 = vunpack.c.h.b16 %v552
    %v2614 = vunpack.c.l.b16 %v553
    %v2615 = vunpack.c.h.b16 %v553
    %v2616 = vunpack.c.l.b16 %v554
    %v2617 = vunpack.c.h.b16 %v554
    %v2618 = vunpack.c.l.b16 %v555
    %v2619 = vunpack.c.h.b16 %v555
    %v2620 = vunpack.c.l.b16 %v556
    %v2621 = vunpack.c.h.b16 %v556
    %v2622 = vunpack.c.l.b16 %v557
    %v2623 = vunpack.c.h.b16 %v557
    %v2624 = vunpack.c.l.b16 %v558
    %v2625 = vunpack.c.h.b16 %v558
    %v2626 = vunpack.c.l.b16 %v559
    %v2627 = vunpack.c.h.b16 %v559
    %v2628 = vunpack.c.l.b16 %v560
    %v2629 = vunpack.c.h.b16 %v560
    %v2630 = vunpack.c.l.b16 %v561
    %v2631 = vunpack.c.h.b16 %v561
    %v2632 = vunpack.c.l.b16 %v562
    %v2633 = vunpack.c.h.b16 %v562
    %v2634 = vunpack.c.l.b16 %v563
    %v2635 = vunpack.c.h.b16 %v563
    %v2636 = vunpack.c.l.b16 %v564
    %v2637 = vunpack.c.h.b16 %v564
    %v2638 = vunpack.c.l.b16 %v565
    %v2639 = vunpack.c.h.b16 %v565
    %v2640 = vunpack.c.l.b16 %v566
    %v2641 = vunpack.c.h.b16 %v566
    %v2642 = vunpack.c.l.b16 %v567
    %v2643 = vunpack.c.h.b16 %v567
    %v2644 = vunpack.c.l.b16 %v568
    %v2645 = vunpack.c.h.b16 %v568
    %v2646 = vunpack.c.l.b16 %v569
    %v2647 = vunpack.c.h.b16 %v569
    %v2648 = vunpack.c.l.b16 %v570
    %v2649 = vunpack.c.h.b16 %v570
    %v2650 = vunpack.c.l.b16 %v571
    %v2651 = vunpack.c.h.b16 %v571
    %v2652 = vunpack.c.l.b16 %v572
    %v2653 = vunpack.c.h.b16 %v572
    %v2654 = vunpack.c.l.b16 %v573
    %v2655 = vunpack.c.h.b16 %v573
    %v2656 = vunpack.c.l.b16 %v574
    %v2657 = vunpack.c.h.b16 %v574
    %v2658 = vunpack.c.l.b16 %v575
    %v2659 = vunpack.c.h.b16 %v575
    %v2660 = vunpack.c.l.b16 %v576
    %v2661 = vunpack.c.h.b16 %v576
    %v2662 = vunpack.c.l.b16 %v577
    %v2663 = vunpack.c.h.b16 %v577
    %v2664 = vunpack.c.l.b16 %v578
    %v2665 = vunpack.c.h.b16 %v578
    %v2666 = vunpack.c.l.b16 %v579
    %v2667 = vunpack.c.h.b16 %v579
    %v2668 = vunpack.c.l.b16 %v580
    %v2669 = vunpack.c.h.b16 %v580
    %v2670 = vunpack.c.l.b16 %v581
    %v2671 = vunpack.c.h.b16 %v581
    %v2672 = vunpack.c.l.b16 %v582
    %v2673 = vunpack.c.h.b16 %v582
    %v2674 = vunpack.c.l.b16 %v583
    %v2675 = vunpack.c.h.b16 %v583
    %v2676 = vunpack.c.l.b16 %v584
    %v2677 = vunpack.c.h.b16 %v584
    %v2678 = vunpack.c.l.b16 %v585
    %v2679 = vunpack.c.h.b16 %v585
    %v2680 = vunpack.c.l.b16 %v586
    %v2681 = vunpack.c.h.b16 %v586
    %v2682 = vunpack.c.l.b16 %v587
    %v2683 = vunpack.c.h.b16 %v587
    %v2684 = vunpack.c.l.b16 %v588
    %v2685 = vunpack.c.h.b16 %v588
    %v2686 = vunpack.c.l.b16 %v589
    %v2687 = vunpack.c.h.b16 %v589
    %v2688 = vunpack.c.l.b16 %v590
    %v2689 = vunpack.c.h.b16 %v590
    %v2690 = vunpack.c.l.b16 %v591
    %v2691 = vunpack.c.h.b16 %v591
    %v2692 = vunpack.c.l.b16 %v592
    %v2693 = vunpack.c.h.b16 %v592
    %v2694 = vunpack.c.l.b16 %v593
    %v2695 = vunpack.c.h.b16 %v593
    %v2696 = vunpack.c.l.b16 %v594
    %v2697 = vunpack.c.h.b16 %v594
    %v2698 = vunpack.c.l.b16 %v595
    %v2699 = vunpack.c.h.b16 %v595
    %v2700 = vunpack.c.l.b16 %v596
    %v2701 = vunpack.c.h.b16 %v596
    %v2702 = vunpack.c.l.b16 %v597
    %v2703 = vunpack.c.h.b16 %v597
    %v2704 = vunpack.c.l.b16 %v598
    %v2705 = vunpack.c.h.b16 %v598
    %v2706 = vunpack.c.l.b16 %v599
    %v2707 = vunpack.c.h.b16 %v599
    %v2708 = vunpack.c.l.b16 %v600
    %v2709 = vunpack.c.h.b16 %v600
    %v2710 = vunpack.c.l.b16 %v601
    %v2711 = vunpack.c.h.b16 %v601
    %v2712 = vunpack.c.l.b16 %v602
    %v2713 = vunpack.c.h.b16 %v602
    %v2714 = vunpack.c.l.b16 %v603
    %v2715 = vunpack.c.h.b16 %v603
    %v2716 = vunpack.c.l.b16 %v604
    %v2717 = vunpack.c.h.b16 %v604
    %v2718 = vunpack.c.l.b16 %v605
    %v2719 = vunpack.c.h.b16 %v605
    %v2720 = vunpack.c.l.b16 %v606
    %v2721 = vunpack.c.h.b16 %v606
    %v2722 = vunpack.c.l.b16 %v607
    %v2723 = vunpack.c.h.b16 %v607
    %v2724 = vunpack.c.l.b16 %v608
    %v2725 = vunpack.c.h.b16 %v608
    %v2726 = vunpack.c.l.b16 %v609
    %v2727 = vunpack.c.h.b16 %v609
    %v2728 = vunpack.c.l.b16 %v610
    %v2729 = vunpack.c.h.b16 %v610
    %v2730 = vunpack.c.l.b16 %v611
    %v2731 = vunpack.c.h.b16 %v611
    %v2732 = vunpack.c.l.b16 %v612
    %v2733 = vunpack.c.h.b16 %v612
    %v2734 = vunpack.c.l.b16 %v613
    %v2735 = vunpack.c.h.b16 %v613
    %v2736 = vunpack.c.l.b16 %v614
    %v2737 = vunpack.c.h.b16 %v614
    %v2738 = vunpack.c.l.b16 %v615
    %v2739 = vunpack.c.h.b16 %v615
    %v2740 = vunpack.c.l.b16 %v616
    %v2741 = vunpack.c.h.b16 %v616
    %v2742 = vunpack.c.l.b16 %v617
    %v2743 = vunpack.c.h.b16 %v617
    %v2744 = vunpack.c.l.b16 %v618
    %v2745 = vunpack.c.h.b16 %v618
    %v2746 = vunpack.c.l.b16 %v619
    %v2747 = vunpack.c.h.b16 %v619
    %v2748 = vunpack.c.l.b16 %v620
    %v2749 = vunpack.c.h.b16 %v620
    %v2750 = vunpack.c.l.b16 %v621
    %v2751 = vunpack.c.h.b16 %v621
    %v2752 = vunpack.c.l.b16 %v622
    %v2753 = vunpack.c.h.b16 %v622
    %v2754 = vunpack.c.l.b16 %v623
    %v2755 = vunpack.c.h.b16 %v623
    %v2756 = vunpack.c.l.b16 %v624
    %v2757 = vunpack.c.h.b16 %v624
    %v2758 = vunpack.c.l.b16 %v625
    %v2759 = vunpack.c.h.b16 %v625
    %v2760 = vunpack.c.l.b16 %v626
    %v2761 = vunpack.c.h.b16 %v626
    %v2762 = vunpack.c.l.b16 %v627
    %v2763 = vunpack.c.h.b16 %v627
    %v2764 = vunpack.c.l.b16 %v628
    %v2765 = vunpack.c.h.b16 %v628
    %v2766 = vunpack.c.l.b16 %v629
    %v2767 = vunpack.c.h.b16 %v629
    %v2768 = vunpack.c.l.b16 %v630
    %v2769 = vunpack.c.h.b16 %v630
    %v2770 = vunpack.c.l.b16 %v631
    %v2771 = vunpack.c.h.b16 %v631
    %v2772 = vunpack.c.l.b16 %v632
    %v2773 = vunpack.c.h.b16 %v632
    %v2774 = vunpack.c.l.b16 %v633
    %v2775 = vunpack.c.h.b16 %v633
    %v2776 = vunpack.c.l.b16 %v634
    %v2777 = vunpack.c.h.b16 %v634
    %v2778 = vunpack.c.l.b16 %v635
    %v2779 = vunpack.c.h.b16 %v635
    %v2780 = vunpack.c.l.b16 %v636
    %v2781 = vunpack.c.h.b16 %v636
    %v2782 = vunpack.c.l.b16 %v637
    %v2783 = vunpack.c.h.b16 %v637
    %v2784 = vunpack.c.l.b16 %v638
    %v2785 = vunpack.c.h.b16 %v638
    %v2786 = vunpack.c.l.b16 %v639
    %v2787 = vunpack.c.h.b16 %v639
    %v2788 = vunpack.c.l.b16 %v640
    %v2789 = vunpack.c.h.b16 %v640
    %v2790 = vunpack.c.l.b16 %v641
    %v2791 = vunpack.c.h.b16 %v641
    %v2792 = vunpack.c.l.b16 %v642
    %v2793 = vunpack.c.h.b16 %v642
    %v2794 = vunpack.c.l.b16 %v643
    %v2795 = vunpack.c.h.b16 %v643
    %v2796 = vunpack.c.l.b16 %v644
    %v2797 = vunpack.c.h.b16 %v644
    %v2798 = vunpack.c.l.b16 %v645
    %v2799 = vunpack.c.h.b16 %v645
    %v2800 = vunpack.c.l.b16 %v646
    %v2801 = vunpack.c.h.b16 %v646
    %v2802 = vunpack.c.l.b16 %v647
    %v2803 = vunpack.c.h.b16 %v647
    %v2804 = vunpack.c.l.b16 %v648
    %v2805 = vunpack.c.h.b16 %v648
    %v2806 = vunpack.c.l.b16 %v649
    %v2807 = vunpack.c.h.b16 %v649
    %v2808 = vunpack.c.l.b16 %v650
    %v2809 = vunpack.c.h.b16 %v650
    %v2810 = vunpack.c.l.b16 %v651
    %v2811 = vunpack.c.h.b16 %v651
    %v2812 = vunpack.c.l.b16 %v652
    %v2813 = vunpack.c.h.b16 %v652
    %v2814 = vunpack.c.l.b16 %v653
    %v2815 = vunpack.c.h.b16 %v653
    %v2816 = vunpack.c.l.b16 %v654
    %v2817 = vunpack.c.h.b16 %v654
    %v2818 = vunpack.c.l.b16 %v655
    %v2819 = vunpack.c.h.b16 %v655
    %v2820 = vunpack.c.l.b16 %v656
    %v2821 = vunpack.c.h.b16 %v656
    %v2822 = vunpack.c.l.b16 %v657
    %v2823 = vunpack.c.h.b16 %v657
    %v2824 = vunpack.c.l.b16 %v658
    %v2825 = vunpack.c.h.b16 %v658
    %v2826 = vunpack.c.l.b16 %v659
    %v2827 = vunpack.c.h.b16 %v659
    %v2828 = vunpack.c.l.b16 %v660
    %v2829 = vunpack.c.h.b16 %v660
    %v2830 = vunpack.c.l.b16 %v661
    %v2831 = vunpack.c.h.b16 %v661
    %v2832 = vunpack.c.l.b16 %v662
    %v2833 = vunpack.c.h.b16 %v662
    %v2834 = vunpack.c.l.b16 %v663
    %v2835 = vunpack.c.h.b16 %v663
    %v2836 = vunpack.c.l.b16 %v664
    %v2837 = vunpack.c.h.b16 %v664
    %v2838 = vunpack.c.l.b16 %v665
    %v2839 = vunpack.c.h.b16 %v665
    %v2840 = vunpack.c.l.b16 %v666
    %v2841 = vunpack.c.h.b16 %v666
    %v2842 = vunpack.c.l.b16 %v667
    %v2843 = vunpack.c.h.b16 %v667
    %v2844 = vpack.c.b16 %v1824, %v1820
    %v2845 = vpack.c.b16 %v1825, %v1821
    %v2846 = vpack.c.b16 %v1826, %v1822
    %v2847 = vpack.c.b16 %v1827, %v1823
    %v2848 = vpack.c.b16 %v1832, %v1828
    %v2849 = vpack.c.b16 %v1833, %v1829
    %v2850 = vpack.c.b16 %v1834, %v1830
    %v2851 = vpack.c.b16 %v1835, %v1831
    %v2852 = vpack.c.b16 %v1840, %v1836
    %v2853 = vpack.c.b16 %v1841, %v1837
    %v2854 = vpack.c.b16 %v1842, %v1838
    %v2855 = vpack.c.b16 %v1843, %v1839
    %v2856 = vpack.c.b16 %v1848, %v1844
    %v2857 = vpack.c.b16 %v1849, %v1845
    %v2858 = vpack.c.b16 %v1850, %v1846
    %v2859 = vpack.c.b16 %v1851, %v1847
    %v2860 = vpack.c.b16 %v1856, %v1852
    %v2861 = vpack.c.b16 %v1857, %v1853
    %v2862 = vpack.c.b16 %v1858, %v1854
    %v2863 = vpack.c.b16 %v1859, %v1855
    %v2864 = vpack.c.b16 %v1864, %v1860
    %v2865 = vpack.c.b16 %v1865, %v1861
    %v2866 = vpack.c.b16 %v1866, %v1862
    %v2867 = vpack.c.b16 %v1867, %v1863
    %v2868 = vpack.c.b16 %v1872, %v1868
    %v2869 = vpack.c.b16 %v1873, %v1869
    %v2870 = vpack.c.b16 %v1874, %v1870
    %v2871 = vpack.c.b16 %v1875, %v1871
    %v2872 = vpack.c.b16 %v1880, %v1876
    %v2873 = vpack.c.b16 %v1881, %v1877
    %v2874 = vpack.c.b16 %v1882, %v1878
    %v2875 = vpack.c.b16 %v1883, %v1879
    %v2876 = vpack.c.b16 %v1888, %v1884
    %v2877 = vpack.c.b16 %v1889, %v1885
    %v2878 = vpack.c.b16 %v1890, %v1886
    %v2879 = vpack.c.b16 %v1891, %v1887
    %v2880 = vpack.c.b16 %v1896, %v1892
    %v2881 = vpack.c.b16 %v1897, %v1893
    %v2882 = vpack.c.b16 %v1898, %v1894
    %v2883 = vpack.c.b16 %v1899, %v1895
    %v2884 = vpack.c.b16 %v1904, %v1900
    %v2885 = vpack.c.b16 %v1905, %v1901
    %v2886 = vpack.c.b16 %v1906, %v1902
    %v2887 = vpack.c.b16 %v1907, %v1903
    %v2888 = vpack.c.b16 %v1912, %v1908
    %v2889 = vpack.c.b16 %v1913, %v1909
    %v2890 = vpack.c.b16 %v1914, %v1910
    %v2891 = vpack.c.b16 %v1915, %v1911
    %v2892 = vpack.c.b16 %v1920, %v1916
    %v2893 = vpack.c.b16 %v1921, %v1917
    %v2894 = vpack.c.b16 %v1922, %v1918
    %v2895 = vpack.c.b16 %v1923, %v1919
    %v2896 = vpack.c.b16 %v1928, %v1924
    %v2897 = vpack.c.b16 %v1929, %v1925
    %v2898 = vpack.c.b16 %v1930, %v1926
    %v2899 = vpack.c.b16 %v1931, %v1927
    %v2900 = vpack.c.b16 %v1936, %v1932
    %v2901 = vpack.c.b16 %v1937, %v1933
    %v2902 = vpack.c.b16 %v1938, %v1934
    %v2903 = vpack.c.b16 %v1939, %v1935
    %v2904 = vpack.c.b16 %v1944, %v1940
    %v2905 = vpack.c.b16 %v1945, %v1941
    %v2906 = vpack.c.b16 %v1946, %v1942
    %v2907 = vpack.c.b16 %v1947, %v1943
    %v2908 = vpack.c.b16 %v1952, %v1948
    %v2909 = vpack.c.b16 %v1953, %v1949
    %v2910 = vpack.c.b16 %v1954, %v1950
    %v2911 = vpack.c.b16 %v1955, %v1951
    %v2912 = vpack.c.b16 %v1960, %v1956
    %v2913 = vpack.c.b16 %v1961, %v1957
    %v2914 = vpack.c.b16 %v1962, %v1958
    %v2915 = vpack.c.b16 %v1963, %v1959
    %v2916 = vpack.c.b16 %v1968, %v1964
    %v2917 = vpack.c.b16 %v1969, %v1965
    %v2918 = vpack.c.b16 %v1970, %v1966
    %v2919 = vpack.c.b16 %v1971, %v1967
    %v2920 = vpack.c.b16 %v1976, %v1972
    %v2921 = vpack.c.b16 %v1977, %v1973
    %v2922 = vpack.c.b16 %v1978, %v1974
    %v2923 = vpack.c.b16 %v1979, %v1975
    %v2924 = vpack.c.b16 %v1984, %v1980
    %v2925 = vpack.c.b16 %v1985, %v1981
    %v2926 = vpack.c.b16 %v1986, %v1982
    %v2927 = vpack.c.b16 %v1987, %v1983
    %v2928 = vpack.c.b16 %v1992, %v1988
    %v2929 = vpack.c.b16 %v1993, %v1989
    %v2930 = vpack.c.b16 %v1994, %v1990
    %v2931 = vpack.c.b16 %v1995, %v1991
    %v2932 = vpack.c.b16 %v2000, %v1996
    %v2933 = vpack.c.b16 %v2001, %v1997
    %v2934 = vpack.c.b16 %v2002, %v1998
    %v2935 = vpack.c.b16 %v2003, %v1999
    %v2936 = vpack.c.b16 %v2008, %v2004
    %v2937 = vpack.c.b16 %v2009, %v2005
    %v2938 = vpack.c.b16 %v2010, %v2006
    %v2939 = vpack.c.b16 %v2011, %v2007
    %v2940 = vpack.c.b16 %v2016, %v2012
    %v2941 = vpack.c.b16 %v2017, %v2013
    %v2942 = vpack.c.b16 %v2018, %v2014
    %v2943 = vpack.c.b16 %v2019, %v2015
    %v2944 = vpack.c.b16 %v2024, %v2020
    %v2945 = vpack.c.b16 %v2025, %v2021
    %v2946 = vpack.c.b16 %v2026, %v2022
    %v2947 = vpack.c.b16 %v2027, %v2023
    %v2948 = vpack.c.b16 %v2032, %v2028
    %v2949 = vpack.c.b16 %v2033, %v2029
    %v2950 = vpack.c.b16 %v2034, %v2030
    %v2951 = vpack.c.b16 %v2035, %v2031
    %v2952 = vpack.c.b16 %v2040, %v2036
    %v2953 = vpack.c.b16 %v2041, %v2037
    %v2954 = vpack.c.b16 %v2042, %v2038
    %v2955 = vpack.c.b16 %v2043, %v2039
    %v2956 = vpack.c.b16 %v2048, %v2044
    %v2957 = vpack.c.b16 %v2049, %v2045
    %v2958 = vpack.c.b16 %v2050, %v2046
    %v2959 = vpack.c.b16 %v2051, %v2047
    %v2960 = vpack.c.b16 %v2056, %v2052
    %v2961 = vpack.c.b16 %v2057, %v2053
    %v2962 = vpack.c.b16 %v2058, %v2054
    %v2963 = vpack.c.b16 %v2059, %v2055
    %v2964 = vpack.c.b16 %v2064, %v2060
    %v2965 = vpack.c.b16 %v2065, %v2061
    %v2966 = vpack.c.b16 %v2066, %v2062
    %v2967 = vpack.c.b16 %v2067, %v2063
    %v2968 = vpack.c.b16 %v2072, %v2068
    %v2969 = vpack.c.b16 %v2073, %v2069
    %v2970 = vpack.c.b16 %v2074, %v2070
    %v2971 = vpack.c.b16 %v2075, %v2071
    %v2972 = vpack.c.b16 %v2080, %v2076
    %v2973 = vpack.c.b16 %v2081, %v2077
    %v2974 = vpack.c.b16 %v2082, %v2078
    %v2975 = vpack.c.b16 %v2083, %v2079
    %v2976 = vpack.c.b16 %v2088, %v2084
    %v2977 = vpack.c.b16 %v2089, %v2085
    %v2978 = vpack.c.b16 %v2090, %v2086
    %v2979 = vpack.c.b16 %v2091, %v2087
    %v2980 = vpack.c.b16 %v2096, %v2092
    %v2981 = vpack.c.b16 %v2097, %v2093
    %v2982 = vpack.c.b16 %v2098, %v2094
    %v2983 = vpack.c.b16 %v2099, %v2095
    %v2984 = vpack.c.b16 %v2104, %v2100
    %v2985 = vpack.c.b16 %v2105, %v2101
    %v2986 = vpack.c.b16 %v2106, %v2102
    %v2987 = vpack.c.b16 %v2107, %v2103
    %v2988 = vpack.c.b16 %v2112, %v2108
    %v2989 = vpack.c.b16 %v2113, %v2109
    %v2990 = vpack.c.b16 %v2114, %v2110
    %v2991 = vpack.c.b16 %v2115, %v2111
    %v2992 = vpack.c.b16 %v2120, %v2116
    %v2993 = vpack.c.b16 %v2121, %v2117
    %v2994 = vpack.c.b16 %v2122, %v2118
    %v2995 = vpack.c.b16 %v2123, %v2119
    %v2996 = vpack.c.b16 %v2128, %v2124
    %v2997 = vpack.c.b16 %v2129, %v2125
    %v2998 = vpack.c.b16 %v2130, %v2126
    %v2999 = vpack.c.b16 %v2131, %v2127
    %v3000 = vpack.c.b16 %v2136, %v2132
    %v3001 = vpack.c.b16 %v2137, %v2133
    %v3002 = vpack.c.b16 %v2138, %v2134
    %v3003 = vpack.c.b16 %v2139, %v2135
    %v3004 = vpack.c.b16 %v2144, %v2140
    %v3005 = vpack.c.b16 %v2145, %v2141
    %v3006 = vpack.c.b16 %v2146, %v2142
    %v3007 = vpack.c.b16 %v2147, %v2143
    %v3008 = vpack.c.b16 %v2152, %v2148
    %v3009 = vpack.c.b16 %v2153, %v2149
    %v3010 = vpack.c.b16 %v2154, %v2150
    %v3011 = vpack.c.b16 %v2155, %v2151
    %v3012 = vpack.c.b16 %v2160, %v2156
    %v3013 = vpack.c.b16 %v2161, %v2157
    %v3014 = vpack.c.b16 %v2162, %v2158
    %v3015 = vpack.c.b16 %v2163, %v2159
    %v3016 = vpack.c.b16 %v2168, %v2164
    %v3017 = vpack.c.b16 %v2169, %v2165
    %v3018 = vpack.c.b16 %v2170, %v2166
    %v3019 = vpack.c.b16 %v2171, %v2167
    %v3020 = vpack.c.b16 %v2176, %v2172
    %v3021 = vpack.c.b16 %v2177, %v2173
    %v3022 = vpack.c.b16 %v2178, %v2174
    %v3023 = vpack.c.b16 %v2179, %v2175
    %v3024 = vpack.c.b16 %v2184, %v2180
    %v3025 = vpack.c.b16 %v2185, %v2181
    %v3026 = vpack.c.b16 %v2186, %v2182
    %v3027 = vpack.c.b16 %v2187, %v2183
    %v3028 = vpack.c.b16 %v2192, %v2188
    %v3029 = vpack.c.b16 %v2193, %v2189
    %v3030 = vpack.c.b16 %v2194, %v2190
    %v3031 = vpack.c.b16 %v2195, %v2191
    %v3032 = vpack.c.b16 %v2200, %v2196
    %v3033 = vpack.c.b16 %v2201, %v2197
    %v3034 = vpack.c.b16 %v2202, %v2198
    %v3035 = vpack.c.b16 %v2203, %v2199
    %v3036 = vpack.c.b16 %v2208, %v2204
    %v3037 = vpack.c.b16 %v2209, %v2205
    %v3038 = vpack.c.b16 %v2210, %v2206
    %v3039 = vpack.c.b16 %v2211, %v2207
    %v3040 = vpack.c.b16 %v2216, %v2212
    %v3041 = vpack.c.b16 %v2217, %v2213
    %v3042 = vpack.c.b16 %v2218, %v2214
    %v3043 = vpack.c.b16 %v2219, %v2215
    %v3044 = vpack.c.b16 %v2224, %v2220
    %v3045 = vpack.c.b16 %v2225, %v2221
    %v3046 = vpack.c.b16 %v2226, %v2222
    %v3047 = vpack.c.b16 %v2227, %v2223
    %v3048 = vpack.c.b16 %v2232, %v2228
    %v3049 = vpack.c.b16 %v2233, %v2229
    %v3050 = vpack.c.b16 %v2234, %v2230
    %v3051 = vpack.c.b16 %v2235, %v2231
    %v3052 = vpack.c.b16 %v2240, %v2236
    %v3053 = vpack.c.b16 %v2241, %v2237
    %v3054 = vpack.c.b16 %v2242, %v2238
    %v3055 = vpack.c.b16 %v2243, %v2239
    %v3056 = vpack.c.b16 %v2248, %v2244
    %v3057 = vpack.c.b16 %v2249, %v2245
    %v3058 = vpack.c.b16 %v2250, %v2246
    %v3059 = vpack.c.b16 %v2251, %v2247
    %v3060 = vpack.c.b16 %v2256, %v2252
    %v3061 = vpack.c.b16 %v2257, %v2253
    %v3062 = vpack.c.b16 %v2258, %v2254
    %v3063 = vpack.c.b16 %v2259, %v2255
    %v3064 = vpack.c.b16 %v2264, %v2260
    %v3065 = vpack.c.b16 %v2265, %v2261
    %v3066 = vpack.c.b16 %v2266, %v2262
    %v3067 = vpack.c.b16 %v2267, %v2263
    %v3068 = vpack.c.b16 %v2272, %v2268
    %v3069 = vpack.c.b16 %v2273, %v2269
    %v3070 = vpack.c.b16 %v2274, %v2270
    %v3071 = vpack.c.b16 %v2275, %v2271
    %v3072 = vpack.c.b16 %v2280, %v2276
    %v3073 = vpack.c.b16 %v2281, %v2277
    %v3074 = vpack.c.b16 %v2282, %v2278
    %v3075 = vpack.c.b16 %v2283, %v2279
    %v3076 = vpack.c.b16 %v2288, %v2284
    %v3077 = vpack.c.b16 %v2289, %v2285
    %v3078 = vpack.c.b16 %v2290, %v2286
    %v3079 = vpack.c.b16 %v2291, %v2287
    %v3080 = vpack.c.b16 %v2296, %v2292
    %v3081 = vpack.c.b16 %v2297, %v2293
    %v3082 = vpack.c.b16 %v2298, %v2294
    %v3083 = vpack.c.b16 %v2299, %v2295
    %v3084 = vpack.c.b16 %v2304, %v2300
    %v3085 = vpack.c.b16 %v2305, %v2301
    %v3086 = vpack.c.b16 %v2306, %v2302
    %v3087 = vpack.c.b16 %v2307, %v2303
    %v3088 = vpack.c.b16 %v2312, %v2308
    %v3089 = vpack.c.b16 %v2313, %v2309
    %v3090 = vpack.c.b16 %v2314, %v2310
    %v3091 = vpack.c.b16 %v2315, %v2311
    %v3092 = vpack.c.b16 %v2320, %v2316
    %v3093 = vpack.c.b16 %v2321, %v2317
    %v3094 = vpack.c.b16 %v2322, %v2318
    %v3095 = vpack.c.b16 %v2323, %v2319
    %v3096 = vpack.c.b16 %v2328, %v2324
    %v3097 = vpack.c.b16 %v2329, %v2325
    %v3098 = vpack.c.b16 %v2330, %v2326
    %v3099 = vpack.c.b16 %v2331, %v2327
    %v3100 = vpack.c.b16 %v2336, %v2332
    %v3101 = vpack.c.b16 %v2337, %v2333
    %v3102 = vpack.c.b16 %v2338, %v2334
    %v3103 = vpack.c.b16 %v2339, %v2335
    %v3104 = vpack.c.b16 %v2344, %v2340
    %v3105 = vpack.c.b16 %v2345, %v2341
    %v3106 = vpack.c.b16 %v2346, %v2342
    %v3107 = vpack.c.b16 %v2347, %v2343
    %v3108 = vpack.c.b16 %v2352, %v2348
    %v3109 = vpack.c.b16 %v2353, %v2349
    %v3110 = vpack.c.b16 %v2354, %v2350
    %v3111 = vpack.c.b16 %v2355, %v2351
    %v3112 = vpack.c.b16 %v2360, %v2356
    %v3113 = vpack.c.b16 %v2361, %v2357
    %v3114 = vpack.c.b16 %v2362, %v2358
    %v3115 = vpack.c.b16 %v2363, %v2359
    %v3116 = vpack.c.b16 %v2368, %v2364
    %v3117 = vpack.c.b16 %v2369, %v2365
    %v3118 = vpack.c.b16 %v2370, %v2366
    %v3119 = vpack.c.b16 %v2371, %v2367
    %v3120 = vpack.c.b16 %v2376, %v2372
    %v3121 = vpack.c.b16 %v2377, %v2373
    %v3122 = vpack.c.b16 %v2378, %v2374
    %v3123 = vpack.c.b16 %v2379, %v2375
    %v3124 = vpack.c.b16 %v2384, %v2380
    %v3125 = vpack.c.b16 %v2385, %v2381
    %v3126 = vpack.c.b16 %v2386, %v2382
    %v3127 = vpack.c.b16 %v2387, %v2383
    %v3128 = vpack.c.b16 %v2392, %v2388
    %v3129 = vpack.c.b16 %v2393, %v2389
    %v3130 = vpack.c.b16 %v2394, %v2390
    %v3131 = vpack.c.b16 %v2395, %v2391
    %v3132 = vpack.c.b16 %v2400, %v2396
    %v3133 = vpack.c.b16 %v2401, %v2397
    %v3134 = vpack.c.b16 %v2402, %v2398
    %v3135 = vpack.c.b16 %v2403, %v2399
    %v3136 = vpack.c.b16 %v2408, %v2404
    %v3137 = vpack.c.b16 %v2409, %v2405
    %v3138 = vpack.c.b16 %v2410, %v2406
    %v3139 = vpack.c.b16 %v2411, %v2407
    %v3140 = vpack.c.b16 %v2416, %v2412
    %v3141 = vpack.c.b16 %v2417, %v2413
    %v3142 = vpack.c.b16 %v2418, %v2414
    %v3143 = vpack.c.b16 %v2419, %v2415
    %v3144 = vpack.c.b16 %v2424, %v2420
    %v3145 = vpack.c.b16 %v2425, %v2421
    %v3146 = vpack.c.b16 %v2426, %v2422
    %v3147 = vpack.c.b16 %v2427, %v2423
    %v3148 = vpack.c.b16 %v2432, %v2428
    %v3149 = vpack.c.b16 %v2433, %v2429
    %v3150 = vpack.c.b16 %v2434, %v2430
    %v3151 = vpack.c.b16 %v2435, %v2431
    %v3152 = vpack.c.b16 %v2440, %v2436
    %v3153 = vpack.c.b16 %v2441, %v2437
    %v3154 = vpack.c.b16 %v2442, %v2438
    %v3155 = vpack.c.b16 %v2443, %v2439
    %v3156 = vpack.c.b16 %v2448, %v2444
    %v3157 = vpack.c.b16 %v2449, %v2445
    %v3158 = vpack.c.b16 %v2450, %v2446
    %v3159 = vpack.c.b16 %v2451, %v2447
    %v3160 = vpack.c.b16 %v2456, %v2452
    %v3161 = vpack.c.b16 %v2457, %v2453
    %v3162 = vpack.c.b16 %v2458, %v2454
    %v3163 = vpack.c.b16 %v2459, %v2455
    %v3164 = vpack.c.b16 %v2464, %v2460
    %v3165 = vpack.c.b16 %v2465, %v2461
    %v3166 = vpack.c.b16 %v2466, %v2462
    %v3167 = vpack.c.b16 %v2467, %v2463
    %v3168 = vpack.c.b16 %v2472, %v2468
    %v3169 = vpack.c.b16 %v2473, %v2469
    %v3170 = vpack.c.b16 %v2474, %v2470
    %v3171 = vpack.c.b16 %v2475, %v2471
    %v3172 = vpack.c.b16 %v2480, %v2476
    %v3173 = vpack.c.b16 %v2481, %v2477
    %v3174 = vpack.c.b16 %v2482, %v2478
    %v3175 = vpack.c.b16 %v2483, %v2479
    %v3176 = vpack.c.b16 %v2488, %v2484
    %v3177 = vpack.c.b16 %v2489, %v2485
    %v3178 = vpack.c.b16 %v2490, %v2486
    %v3179 = vpack.c.b16 %v2491, %v2487
    %v3180 = vpack.c.b16 %v2496, %v2492
    %v3181 = vpack.c.b16 %v2497, %v2493
    %v3182 = vpack.c.b16 %v2498, %v2494
    %v3183 = vpack.c.b16 %v2499, %v2495
    %v3184 = vpack.c.b16 %v2504, %v2500
    %v3185 = vpack.c.b16 %v2505, %v2501
    %v3186 = vpack.c.b16 %v2506, %v2502
    %v3187 = vpack.c.b16 %v2507, %v2503
    %v3188 = vpack.c.b16 %v2512, %v2508
    %v3189 = vpack.c.b16 %v2513, %v2509
    %v3190 = vpack.c.b16 %v2514, %v2510
    %v3191 = vpack.c.b16 %v2515, %v2511
    %v3192 = vpack.c.b16 %v2520, %v2516
    %v3193 = vpack.c.b16 %v2521, %v2517
    %v3194 = vpack.c.b16 %v2522, %v2518
    %v3195 = vpack.c.b16 %v2523, %v2519
    %v3196 = vpack.c.b16 %v2528, %v2524
    %v3197 = vpack.c.b16 %v2529, %v2525
    %v3198 = vpack.c.b16 %v2530, %v2526
    %v3199 = vpack.c.b16 %v2531, %v2527
    %v3200 = vpack.c.b16 %v2536, %v2532
    %v3201 = vpack.c.b16 %v2537, %v2533
    %v3202 = vpack.c.b16 %v2538, %v2534
    %v3203 = vpack.c.b16 %v2539, %v2535
    %v3204 = vpack.c.b16 %v2544, %v2540
    %v3205 = vpack.c.b16 %v2545, %v2541
    %v3206 = vpack.c.b16 %v2546, %v2542
    %v3207 = vpack.c.b16 %v2547, %v2543
    %v3208 = vpack.c.b16 %v2552, %v2548
    %v3209 = vpack.c.b16 %v2553, %v2549
    %v3210 = vpack.c.b16 %v2554, %v2550
    %v3211 = vpack.c.b16 %v2555, %v2551
    %v3212 = vpack.c.b16 %v2560, %v2556
    %v3213 = vpack.c.b16 %v2561, %v2557
    %v3214 = vpack.c.b16 %v2562, %v2558
    %v3215 = vpack.c.b16 %v2563, %v2559
    %v3216 = vpack.c.b16 %v2568, %v2564
    %v3217 = vpack.c.b16 %v2569, %v2565
    %v3218 = vpack.c.b16 %v2570, %v2566
    %v3219 = vpack.c.b16 %v2571, %v2567
    %v3220 = vpack.c.b16 %v2576, %v2572
    %v3221 = vpack.c.b16 %v2577, %v2573
    %v3222 = vpack.c.b16 %v2578, %v2574
    %v3223 = vpack.c.b16 %v2579, %v2575
    %v3224 = vpack.c.b16 %v2584, %v2580
    %v3225 = vpack.c.b16 %v2585, %v2581
    %v3226 = vpack.c.b16 %v2586, %v2582
    %v3227 = vpack.c.b16 %v2587, %v2583
    %v3228 = vpack.c.b16 %v2592, %v2588
    %v3229 = vpack.c.b16 %v2593, %v2589
    %v3230 = vpack.c.b16 %v2594, %v2590
    %v3231 = vpack.c.b16 %v2595, %v2591
    %v3232 = vpack.c.b16 %v2600, %v2596
    %v3233 = vpack.c.b16 %v2601, %v2597
    %v3234 = vpack.c.b16 %v2602, %v2598
    %v3235 = vpack.c.b16 %v2603, %v2599
    %v3236 = vpack.c.b16 %v2608, %v2604
    %v3237 = vpack.c.b16 %v2609, %v2605
    %v3238 = vpack.c.b16 %v2610, %v2606
    %v3239 = vpack.c.b16 %v2611, %v2607
    %v3240 = vpack.c.b16 %v2616, %v2612
    %v3241 = vpack.c.b16 %v2617, %v2613
    %v3242 = vpack.c.b16 %v2618, %v2614
    %v3243 = vpack.c.b16 %v2619, %v2615
    %v3244 = vpack.c.b16 %v2624, %v2620
    %v3245 = vpack.c.b16 %v2625, %v2621
    %v3246 = vpack.c.b16 %v2626, %v2622
    %v3247 = vpack.c.b16 %v2627, %v2623
    %v3248 = vpack.c.b16 %v2632, %v2628
    %v3249 = vpack.c.b16 %v2633, %v2629
    %v3250 = vpack.c.b16 %v2634, %v2630
    %v3251 = vpack.c.b16 %v2635, %v2631
    %v3252 = vpack.c.b16 %v2640, %v2636
    %v3253 = vpack.c.b16 %v2641, %v2637
    %v3254 = vpack.c.b16 %v2642, %v2638
    %v3255 = vpack.c.b16 %v2643, %v2639
    %v3256 = vpack.c.b16 %v2648, %v2644
    %v3257 = vpack.c.b16 %v2649, %v2645
    %v3258 = vpack.c.b16 %v2650, %v2646
    %v3259 = vpack.c.b16 %v2651, %v2647
    %v3260 = vpack.c.b16 %v2656, %v2652
    %v3261 = vpack.c.b16 %v2657, %v2653
    %v3262 = vpack.c.b16 %v2658, %v2654
    %v3263 = vpack.c.b16 %v2659, %v2655
    %v3264 = vpack.c.b16 %v2664, %v2660
    %v3265 = vpack.c.b16 %v2665, %v2661
    %v3266 = vpack.c.b16 %v2666, %v2662
    %v3267 = vpack.c.b16 %v2667, %v2663
    %v3268 = vpack.c.b16 %v2672, %v2668
    %v3269 = vpack.c.b16 %v2673, %v2669
    %v3270 = vpack.c.b16 %v2674, %v2670
    %v3271 = vpack.c.b16 %v2675, %v2671
    %v3272 = vpack.c.b16 %v2680, %v2676
    %v3273 = vpack.c.b16 %v2681, %v2677
    %v3274 = vpack.c.b16 %v2682, %v2678
    %v3275 = vpack.c.b16 %v2683, %v2679
    %v3276 = vpack.c.b16 %v2688, %v2684
    %v3277 = vpack.c.b16 %v2689, %v2685
    %v3278 = vpack.c.b16 %v2690, %v2686
    %v3279 = vpack.c.b16 %v2691, %v2687
    %v3280 = vpack.c.b16 %v2696, %v2692
    %v3281 = vpack.c.b16 %v2697, %v2693
    %v3282 = vpack.c.b16 %v2698, %v2694
    %v3283 = vpack.c.b16 %v2699, %v2695
    %v3284 = vpack.c.b16 %v2704, %v2700
    %v3285 = vpack.c.b16 %v2705, %v2701
    %v3286 = vpack.c.b16 %v2706, %v2702
    %v3287 = vpack.c.b16 %v2707, %v2703
    %v3288 = vpack.c.b16 %v2712, %v2708
    %v3289 = vpack.c.b16 %v2713, %v2709
    %v3290 = vpack.c.b16 %v2714, %v2710
    %v3291 = vpack.c.b16 %v2715, %v2711
    %v3292 = vpack.c.b16 %v2720, %v2716
    %v3293 = vpack.c.b16 %v2721, %v2717
    %v3294 = vpack.c.b16 %v2722, %v2718
    %v3295 = vpack.c.b16 %v2723, %v2719
    %v3296 = vpack.c.b16 %v2728, %v2724
    %v3297 = vpack.c.b16 %v2729, %v2725
    %v3298 = vpack.c.b16 %v2730, %v2726
    %v3299 = vpack.c.b16 %v2731, %v2727
    %v3300 = vpack.c.b16 %v2736, %v2732
    %v3301 = vpack.c.b16 %v2737, %v2733
    %v3302 = vpack.c.b16 %v2738, %v2734
    %v3303 = vpack.c.b16 %v2739, %v2735
    %v3304 = vpack.c.b16 %v2744, %v2740
    %v3305 = vpack.c.b16 %v2745, %v2741
    %v3306 = vpack.c.b16 %v2746, %v2742
    %v3307 = vpack.c.b16 %v2747, %v2743
    %v3308 = vpack.c.b16 %v2752, %v2748
    %v3309 = vpack.c.b16 %v2753, %v2749
    %v3310 = vpack.c.b16 %v2754, %v2750
    %v3311 = vpack.c.b16 %v2755, %v2751
    %v3312 = vpack.c.b16 %v2760, %v2756
    %v3313 = vpack.c.b16 %v2761, %v2757
    %v3314 = vpack.c.b16 %v2762, %v2758
    %v3315 = vpack.c.b16 %v2763, %v2759
    %v3316 = vpack.c.b16 %v2768, %v2764
    %v3317 = vpack.c.b16 %v2769, %v2765
    %v3318 = vpack.c.b16 %v2770, %v2766
    %v3319 = vpack.c.b16 %v2771, %v2767
    %v3320 = vpack.c.b16 %v2776, %v2772
    %v3321 = vpack.c.b16 %v2777, %v2773
    %v3322 = vpack.c.b16 %v2778, %v2774
    %v3323 = vpack.c.b16 %v2779, %v2775
    %v3324 = vpack.c.b16 %v2784, %v2780
    %v3325 = vpack.c.b16 %v2785, %v2781
    %v3326 = vpack.c.b16 %v2786, %v2782
    %v3327 = vpack.c.b16 %v2787, %v2783
    %v3328 = vpack.c.b16 %v2792, %v2788
    %v3329 = vpack.c.b16 %v2793, %v2789
    %v3330 = vpack.c.b16 %v2794, %v2790
    %v3331 = vpack.c.b16 %v2795, %v2791
    %v3332 = vpack.c.b16 %v2800, %v2796
    %v3333 = vpack.c.b16 %v2801, %v2797
    %v3334 = vpack.c.b16 %v2802, %v2798
    %v3335 = vpack.c.b16 %v2803, %v2799
    %v3336 = vpack.c.b16 %v2808, %v2804
    %v3337 = vpack.c.b16 %v2809, %v2805
    %v3338 = vpack.c.b16 %v2810, %v2806
    %v3339 = vpack.c.b16 %v2811, %v2807
    %v3340 = vpack.c.b16 %v2816, %v2812
    %v3341 = vpack.c.b16 %v2817, %v2813
    %v3342 = vpack.c.b16 %v2818, %v2814
    %v3343 = vpack.c.b16 %v2819, %v2815
    %v3344 = vpack.c.b16 %v2824, %v2820
    %v3345 = vpack.c.b16 %v2825, %v2821
    %v3346 = vpack.c.b16 %v2826, %v2822
    %v3347 = vpack.c.b16 %v2827, %v2823
    %v3348 = vpack.c.b16 %v2832, %v2828
    %v3349 = vpack.c.b16 %v2833, %v2829
    %v3350 = vpack.c.b16 %v2834, %v2830
    %v3351 = vpack.c.b16 %v2835, %v2831
    %v3352 = vpack.c.b16 %v2840, %v2836
    %v3353 = vpack.c.b16 %v2841, %v2837
    %v3354 = vpack.c.b16 %v2842, %v2838
    %v3355 = vpack.c.b16 %v2843, %v2839
    %3868 = vmatprep.subr.bf16.mxu0 %v2845
    %3869 = vmatpush1.bf16.msra.mxu0 %v2844
    %3870 = vmatprep.subr.bf16.mxu0 %v2849
    %3871 = vmatpush1.bf16.msra.mxu0 %v2848
    %3872 = vmatprep.subr.bf16.mxu0 %v2853
    %3873 = vmatpush1.bf16.msra.mxu0 %v2852
    %3874 = vmatprep.subr.bf16.mxu0 %v2857
    %3875 = vmatpush1.bf16.msra.mxu0 %v2856
    %3876 = vmatprep.subr.bf16.mxu0 %v2861
    %3877 = vmatpush1.bf16.msra.mxu0 %v2860
    %3878 = vmatprep.subr.bf16.mxu0 %v2865
    %3879 = vmatpush1.bf16.msra.mxu0 %v2864
    %3880 = vmatprep.subr.bf16.mxu0 %v2869
    %3881 = vmatpush1.bf16.msra.mxu0 %v2868
    %3882 = vmatprep.subr.bf16.mxu0 %v2873
    %3883 = vmatpush1.bf16.msra.mxu0 %v2872
    %3884 = vmatprep.subr.bf16.mxu0 %v2877
    %3885 = vmatpush1.bf16.msra.mxu0 %v2876
    %3886 = vmatprep.subr.bf16.mxu0 %v2881
    %3887 = vmatpush1.bf16.msra.mxu0 %v2880
    %3888 = vmatprep.subr.bf16.mxu0 %v2885
    %3889 = vmatpush1.bf16.msra.mxu0 %v2884
    %3890 = vmatprep.subr.bf16.mxu0 %v2889
    %3891 = vmatpush1.bf16.msra.mxu0 %v2888
    %3892 = vmatprep.subr.bf16.mxu0 %v2893
    %3893 = vmatpush1.bf16.msra.mxu0 %v2892
    %3894 = vmatprep.subr.bf16.mxu0 %v2897
    %3895 = vmatpush1.bf16.msra.mxu0 %v2896
    %3896 = vmatprep.subr.bf16.mxu0 %v2901
    %3897 = vmatpush1.bf16.msra.mxu0 %v2900
    %3898 = vmatprep.subr.bf16.mxu0 %v2905
    %3899 = vmatpush1.bf16.msra.mxu0 %v2904
    %3900 = vmatprep.mubr.bf16.mxu0 %v1053
    %3901 = vmatmul.mubr.bf16.gmra.mrb[0].mxu0 %v1052
    %v3902 = vpop.f32.mrb[0].mxu0
    %v3903 = vadd.f32 0.0, %v3902
    %v3904 = vpop.f32.mrb[0].mxu0
    %v3905 = vadd.f32 0.0, %v3904
    %v3906 = vpop.f32.mrb[0].mxu0
    %v3907 = vadd.f32 0.0, %v3906
    %v3908 = vpop.f32.mrb[0].mxu0
    %v3909 = vadd.f32 0.0, %v3908
    %3910 = vmatprep.mubr.bf16.mxu0 %v1069
    %3911 = vmatmul.mubr.bf16.gmra.mrb[0].mxu0 %v1068
    %v3912 = vpop.f32.mrb[0].mxu0
    %v3913 = vadd.f32 0.0, %v3912
    %v3914 = vpop.f32.mrb[0].mxu0
    %v3915 = vadd.f32 0.0, %v3914
    %v3916 = vpop.f32.mrb[0].mxu0
    %v3917 = vadd.f32 0.0, %v3916
    %v3918 = vpop.f32.mrb[0].mxu0
    %v3919 = vadd.f32 0.0, %v3918
    %3920 = vmatprep.mubr.bf16.mxu0 %v1085
    %3921 = vmatmul.mubr.bf16.gmra.mrb[0].mxu0 %v1084
    %v3922 = vpop.f32.mrb[0].mxu0
    %v3923 = vadd.f32 0.0, %v3922
    %v3924 = vpop.f32.mrb[0].mxu0
    %v3925 = vadd.f32 0.0, %v3924
    %v3926 = vpop.f32.mrb[0].mxu0
    %v3927 = vadd.f32 0.0, %v3926
    %v3928 = vpop.f32.mrb[0].mxu0
    %v3929 = vadd.f32 0.0, %v3928
    %3930 = vmatprep.mubr.bf16.mxu0 %v1101
    %3931 = vmatmul.mubr.bf16.gmra.mrb[0].mxu0 %v1100
    %v3932 = vpop.f32.mrb[0].mxu0
    %v3933 = vadd.f32 0.0, %v3932
    %v3934 = vpop.f32.mrb[0].mxu0
    %v3935 = vadd.f32 0.0, %v3934
    %v3936 = vpop.f32.mrb[0].mxu0
    %v3937 = vadd.f32 0.0, %v3936
    %v3938 = vpop.f32.mrb[0].mxu0
    %v3939 = vadd.f32 0.0, %v3938
    %3940 = vmatprep.mubr.bf16.mxu0 %v1117
    %3941 = vmatmul.mubr.bf16.gmra.mrb[0].mxu0 %v1116
    %v3942 = vpop.f32.mrb[0].mxu0
    %v3943 = vadd.f32 0.0, %v3942
    %v3944 = vpop.f32.mrb[0].mxu0
    %v3945 = vadd.f32 0.0, %v3944
    %v3946 = vpop.f32.mrb[0].mxu0
    %v3947 = vadd.f32 0.0, %v3946
    %v3948 = vpop.f32.mrb[0].mxu0
    %v3949 = vadd.f32 0.0, %v3948
    %3950 = vmatprep.mubr.bf16.mxu0 %v1133
    %3951 = vmatmul.mubr.bf16.gmra.mrb[0].mxu0 %v1132
    %v3952 = vpop.f32.mrb[0].mxu0
    %v3953 = vadd.f32 0.0, %v3952
    %v3954 = vpop.f32.mrb[0].mxu0
    %v3955 = vadd.f32 0.0, %v3954
    %v3956 = vpop.f32.mrb[0].mxu0
    %v3957 = vadd.f32 0.0, %v3956
    %v3958 = vpop.f32.mrb[0].mxu0
    %v3959 = vadd.f32 0.0, %v3958
    %3960 = vmatprep.mubr.bf16.mxu0 %v1149
    %3961 = vmatmul.mubr.bf16.gmra.mrb[0].mxu0 %v1148
    %v3962 = vpop.f32.mrb[0].mxu0
    %v3963 = vadd.f32 0.0, %v3962
    %v3964 = vpop.f32.mrb[0].mxu0
    %v3965 = vadd.f32 0.0, %v3964
    %v3966 = vpop.f32.mrb[0].mxu0
    %v3967 = vadd.f32 0.0, %v3966
    %v3968 = vpop.f32.mrb[0].mxu0
    %v3969 = vadd.f32 0.0, %v3968
    %3970 = vmatprep.mubr.bf16.mxu0 %v1165
    %3971 = vmatmul.mubr.bf16.gmra.mrb[0].mxu0 %v1164
    %v3972 = vpop.f32.mrb[0].mxu0
    %v3973 = vadd.f32 0.0, %v3972
    %v3974 = vpop.f32.mrb[0].mxu0
    %v3975 = vadd.f32 0.0, %v3974
    %v3976 = vpop.f32.mrb[0].mxu0
    %v3977 = vadd.f32 0.0, %v3976
    %v3978 = vpop.f32.mrb[0].mxu0
    %v3979 = vadd.f32 0.0, %v3978
    %3980 = vdwg.mxu0
    %3981 = vmatprep.subr.bf16.mxu0 %v2909
    %3982 = vmatpush1.bf16.msra.mxu0 %v2908
    %3983 = vmatprep.subr.bf16.mxu0 %v2913
    %3984 = vmatpush1.bf16.msra.mxu0 %v2912
    %3985 = vmatprep.subr.bf16.mxu0 %v2917
    %3986 = vmatpush1.bf16.msra.mxu0 %v2916
    %3987 = vmatprep.subr.bf16.mxu0 %v2921
    %3988 = vmatpush1.bf16.msra.mxu0 %v2920
    %3989 = vmatprep.subr.bf16.mxu0 %v2925
    %3990 = vmatpush1.bf16.msra.mxu0 %v2924
    %3991 = vmatprep.subr.bf16.mxu0 %v2929
    %3992 = vmatpush1.bf16.msra.mxu0 %v2928
    %3993 = vmatprep.subr.bf16.mxu0 %v2933
    %3994 = vmatpush1.bf16.msra.mxu0 %v2932
    %3995 = vmatprep.subr.bf16.mxu0 %v2937
    %3996 = vmatpush1.bf16.msra.mxu0 %v2936
    %3997 = vmatprep.subr.bf16.mxu0 %v2941
    %3998 = vmatpush1.bf16.msra.mxu0 %v2940
    %3999 = vmatprep.subr.bf16.mxu0 %v2945
    %4000 = vmatpush1.bf16.msra.mxu0 %v2944
    %4001 = vmatprep.subr.bf16.mxu0 %v2949
    %4002 = vmatpush1.bf16.msra.mxu0 %v2948
    %4003 = vmatprep.subr.bf16.mxu0 %v2953
    %4004 = vmatpush1.bf16.msra.mxu0 %v2952
    %4005 = vmatprep.subr.bf16.mxu0 %v2957
    %4006 = vmatpush1.bf16.msra.mxu0 %v2956
    %4007 = vmatprep.subr.bf16.mxu0 %v2961
    %4008 = vmatpush1.bf16.msra.mxu0 %v2960
    %4009 = vmatprep.subr.bf16.mxu0 %v2965
    %4010 = vmatpush1.bf16.msra.mxu0 %v2964
    %4011 = vmatprep.subr.bf16.mxu0 %v2969
    %4012 = vmatpush1.bf16.msra.mxu0 %v2968
    %4013 = vmatprep.mubr.bf16.mxu0 %v1055
    %4014 = vmatmul.mubr.bf16.gmra.mrb[0].mxu0 %v1054
    %v4015 = vpop.f32.mrb[0].mxu0
    %v4016 = vadd.f32 %v3903, %v4015
    %v4017 = vpop.f32.mrb[0].mxu0
    %v4018 = vadd.f32 %v3905, %v4017
    %v4019 = vpop.f32.mrb[0].mxu0
    %v4020 = vadd.f32 %v3907, %v4019
    %v4021 = vpop.f32.mrb[0].mxu0
    %v4022 = vadd.f32 %v3909, %v4021
    %4023 = vmatprep.mubr.bf16.mxu0 %v1071
    %4024 = vmatmul.mubr.bf16.gmra.mrb[0].mxu0 %v1070
    %v4025 = vpop.f32.mrb[0].mxu0
    %v4026 = vadd.f32 %v3913, %v4025
    %v4027 = vpop.f32.mrb[0].mxu0
    %v4028 = vadd.f32 %v3915, %v4027
    %v4029 = vpop.f32.mrb[0].mxu0
    %v4030 = vadd.f32 %v3917, %v4029
    %v4031 = vpop.f32.mrb[0].mxu0
    %v4032 = vadd.f32 %v3919, %v4031
    %4033 = vmatprep.mubr.bf16.mxu0 %v1087
    %4034 = vmatmul.mubr.bf16.gmra.mrb[0].mxu0 %v1086
    %v4035 = vpop.f32.mrb[0].mxu0
    %v4036 = vadd.f32 %v3923, %v4035
    %v4037 = vpop.f32.mrb[0].mxu0
    %v4038 = vadd.f32 %v3925, %v4037
    %v4039 = vpop.f32.mrb[0].mxu0
    %v4040 = vadd.f32 %v3927, %v4039
    %v4041 = vpop.f32.mrb[0].mxu0
    %v4042 = vadd.f32 %v3929, %v4041
    %4043 = vmatprep.mubr.bf16.mxu0 %v1103
    %4044 = vmatmul.mubr.bf16.gmra.mrb[0].mxu0 %v1102
    %v4045 = vpop.f32.mrb[0].mxu0
    %v4046 = vadd.f32 %v3933, %v4045
    %v4047 = vpop.f32.mrb[0].mxu0
    %v4048 = vadd.f32 %v3935, %v4047
    %v4049 = vpop.f32.mrb[0].mxu0
    %v4050 = vadd.f32 %v3937, %v4049
    %v4051 = vpop.f32.mrb[0].mxu0
    %v4052 = vadd.f32 %v3939, %v4051
    %4053 = vmatprep.mubr.bf16.mxu0 %v1119
    %4054 = vmatmul.mubr.bf16.gmra.mrb[0].mxu0 %v1118
    %v4055 = vpop.f32.mrb[0].mxu0
    %v4056 = vadd.f32 %v3943, %v4055
    %v4057 = vpop.f32.mrb[0].mxu0
    %v4058 = vadd.f32 %v3945, %v4057
    %v4059 = vpop.f32.mrb[0].mxu0
    %v4060 = vadd.f32 %v3947, %v4059
    %v4061 = vpop.f32.mrb[0].mxu0
    %v4062 = vadd.f32 %v3949, %v4061
    %4063 = vmatprep.mubr.bf16.mxu0 %v1135
    %4064 = vmatmul.mubr.bf16.gmra.mrb[0].mxu0 %v1134
    %v4065 = vpop.f32.mrb[0].mxu0
    %v4066 = vadd.f32 %v3953, %v4065
    %v4067 = vpop.f32.mrb[0].mxu0
    %v4068 = vadd.f32 %v3955, %v4067
    %v4069 = vpop.f32.mrb[0].mxu0
    %v4070 = vadd.f32 %v3957, %v4069
    %v4071 = vpop.f32.mrb[0].mxu0
    %v4072 = vadd.f32 %v3959, %v4071
    %4073 = vmatprep.mubr.bf16.mxu0 %v1151
    %4074 = vmatmul.mubr.bf16.gmra.mrb[0].mxu0 %v1150
    %v4075 = vpop.f32.mrb[0].mxu0
    %v4076 = vadd.f32 %v3963, %v4075
    %v4077 = vpop.f32.mrb[0].mxu0
    %v4078 = vadd.f32 %v3965, %v4077
    %v4079 = vpop.f32.mrb[0].mxu0
    %v4080 = vadd.f32 %v3967, %v4079
    %v4081 = vpop.f32.mrb[0].mxu0
    %v4082 = vadd.f32 %v3969, %v4081
    %4083 = vmatprep.mubr.bf16.mxu0 %v1167
    %4084 = vmatmul.mubr.bf16.gmra.mrb[0].mxu0 %v1166
    %v4085 = vpop.f32.mrb[0].mxu0
    %v4086 = vadd.f32 %v3973, %v4085
    %v4087 = vpop.f32.mrb[0].mxu0
    %v4088 = vadd.f32 %v3975, %v4087
    %v4089 = vpop.f32.mrb[0].mxu0
    %v4090 = vadd.f32 %v3977, %v4089
    %v4091 = vpop.f32.mrb[0].mxu0
    %v4092 = vadd.f32 %v3979, %v4091
    %4093 = vdwg.mxu0
    %4094 = vmatprep.subr.bf16.mxu0 %v2973
    %4095 = vmatpush1.bf16.msra.mxu0 %v2972
    %4096 = vmatprep.subr.bf16.mxu0 %v2977
    %4097 = vmatpush1.bf16.msra.mxu0 %v2976
    %4098 = vmatprep.subr.bf16.mxu0 %v2981
    %4099 = vmatpush1.bf16.msra.mxu0 %v2980
    %4100 = vmatprep.subr.bf16.mxu0 %v2985
    %4101 = vmatpush1.bf16.msra.mxu0 %v2984
    %4102 = vmatprep.subr.bf16.mxu0 %v2989
    %4103 = vmatpush1.bf16.msra.mxu0 %v2988
    %4104 = vmatprep.subr.bf16.mxu0 %v2993
    %4105 = vmatpush1.bf16.msra.mxu0 %v2992
    %4106 = vmatprep.subr.bf16.mxu0 %v2997
    %4107 = vmatpush1.bf16.msra.mxu0 %v2996
    %4108 = vmatprep.subr.bf16.mxu0 %v3001
    %4109 = vmatpush1.bf16.msra.mxu0 %v3000
    %4110 = vmatprep.subr.bf16.mxu0 %v3005
    %4111 = vmatpush1.bf16.msra.mxu0 %v3004
    %4112 = vmatprep.subr.bf16.mxu0 %v3009
    %4113 = vmatpush1.bf16.msra.mxu0 %v3008
    %4114 = vmatprep.subr.bf16.mxu0 %v3013
    %4115 = vmatpush1.bf16.msra.mxu0 %v3012
    %4116 = vmatprep.subr.bf16.mxu0 %v3017
    %4117 = vmatpush1.bf16.msra.mxu0 %v3016
    %4118 = vmatprep.subr.bf16.mxu0 %v3021
    %4119 = vmatpush1.bf16.msra.mxu0 %v3020
    %4120 = vmatprep.subr.bf16.mxu0 %v3025
    %4121 = vmatpush1.bf16.msra.mxu0 %v3024
    %4122 = vmatprep.subr.bf16.mxu0 %v3029
    %4123 = vmatpush1.bf16.msra.mxu0 %v3028
    %4124 = vmatprep.subr.bf16.mxu0 %v3033
    %4125 = vmatpush1.bf16.msra.mxu0 %v3032
    %4126 = vmatprep.mubr.bf16.mxu0 %v1057
    %4127 = vmatmul.mubr.bf16.gmra.mrb[0].mxu0 %v1056
    %v4128 = vpop.f32.mrb[0].mxu0
    %v4129 = vadd.f32 %v4016, %v4128
    %v4130 = vpop.f32.mrb[0].mxu0
    %v4131 = vadd.f32 %v4018, %v4130
    %v4132 = vpop.f32.mrb[0].mxu0
    %v4133 = vadd.f32 %v4020, %v4132
    %v4134 = vpop.f32.mrb[0].mxu0
    %v4135 = vadd.f32 %v4022, %v4134
    %4136 = vmatprep.mubr.bf16.mxu0 %v1073
    %4137 = vmatmul.mubr.bf16.gmra.mrb[0].mxu0 %v1072
    %v4138 = vpop.f32.mrb[0].mxu0
    %v4139 = vadd.f32 %v4026, %v4138
    %v4140 = vpop.f32.mrb[0].mxu0
    %v4141 = vadd.f32 %v4028, %v4140
    %v4142 = vpop.f32.mrb[0].mxu0
    %v4143 = vadd.f32 %v4030, %v4142
    %v4144 = vpop.f32.mrb[0].mxu0
    %v4145 = vadd.f32 %v4032, %v4144
    %4146 = vmatprep.mubr.bf16.mxu0 %v1089
    %4147 = vmatmul.mubr.bf16.gmra.mrb[0].mxu0 %v1088
    %v4148 = vpop.f32.mrb[0].mxu0
    %v4149 = vadd.f32 %v4036, %v4148
    %v4150 = vpop.f32.mrb[0].mxu0
    %v4151 = vadd.f32 %v4038, %v4150
    %v4152 = vpop.f32.mrb[0].mxu0
    %v4153 = vadd.f32 %v4040, %v4152
    %v4154 = vpop.f32.mrb[0].mxu0
    %v4155 = vadd.f32 %v4042, %v4154
    %4156 = vmatprep.mubr.bf16.mxu0 %v1105
    %4157 = vmatmul.mubr.bf16.gmra.mrb[0].mxu0 %v1104
    %v4158 = vpop.f32.mrb[0].mxu0
    %v4159 = vadd.f32 %v4046, %v4158
    %v4160 = vpop.f32.mrb[0].mxu0
    %v4161 = vadd.f32 %v4048, %v4160
    %v4162 = vpop.f32.mrb[0].mxu0
    %v4163 = vadd.f32 %v4050, %v4162
    %v4164 = vpop.f32.mrb[0].mxu0
    %v4165 = vadd.f32 %v4052, %v4164
    %4166 = vmatprep.mubr.bf16.mxu0 %v1121
    %4167 = vmatmul.mubr.bf16.gmra.mrb[0].mxu0 %v1120
    %v4168 = vpop.f32.mrb[0].mxu0
    %v4169 = vadd.f32 %v4056, %v4168
    %v4170 = vpop.f32.mrb[0].mxu0
    %v4171 = vadd.f32 %v4058, %v4170
    %v4172 = vpop.f32.mrb[0].mxu0
    %v4173 = vadd.f32 %v4060, %v4172
    %v4174 = vpop.f32.mrb[0].mxu0
    %v4175 = vadd.f32 %v4062, %v4174
    %4176 = vmatprep.mubr.bf16.mxu0 %v1137
    %4177 = vmatmul.mubr.bf16.gmra.mrb[0].mxu0 %v1136
    %v4178 = vpop.f32.mrb[0].mxu0
    %v4179 = vadd.f32 %v4066, %v4178
    %v4180 = vpop.f32.mrb[0].mxu0
    %v4181 = vadd.f32 %v4068, %v4180
    %v4182 = vpop.f32.mrb[0].mxu0
    %v4183 = vadd.f32 %v4070, %v4182
    %v4184 = vpop.f32.mrb[0].mxu0
    %v4185 = vadd.f32 %v4072, %v4184
    %4186 = vmatprep.mubr.bf16.mxu0 %v1153
    %4187 = vmatmul.mubr.bf16.gmra.mrb[0].mxu0 %v1152
    %v4188 = vpop.f32.mrb[0].mxu0
    %v4189 = vadd.f32 %v4076, %v4188
    %v4190 = vpop.f32.mrb[0].mxu0
    %v4191 = vadd.f32 %v4078, %v4190
    %v4192 = vpop.f32.mrb[0].mxu0
    %v4193 = vadd.f32 %v4080, %v4192
    %v4194 = vpop.f32.mrb[0].mxu0
    %v4195 = vadd.f32 %v4082, %v4194
    %4196 = vmatprep.mubr.bf16.mxu0 %v1169
    %4197 = vmatmul.mubr.bf16.gmra.mrb[0].mxu0 %v1168
    %v4198 = vpop.f32.mrb[0].mxu0
    %v4199 = vadd.f32 %v4086, %v4198
    %v4200 = vpop.f32.mrb[0].mxu0
    %v4201 = vadd.f32 %v4088, %v4200
    %v4202 = vpop.f32.mrb[0].mxu0
    %v4203 = vadd.f32 %v4090, %v4202
    %v4204 = vpop.f32.mrb[0].mxu0
    %v4205 = vadd.f32 %v4092, %v4204
    %4206 = vdwg.mxu0
    %4207 = vmatprep.subr.bf16.mxu0 %v3037
    %4208 = vmatpush1.bf16.msra.mxu0 %v3036
    %4209 = vmatprep.subr.bf16.mxu0 %v3041
    %4210 = vmatpush1.bf16.msra.mxu0 %v3040
    %4211 = vmatprep.subr.bf16.mxu0 %v3045
    %4212 = vmatpush1.bf16.msra.mxu0 %v3044
    %4213 = vmatprep.subr.bf16.mxu0 %v3049
    %4214 = vmatpush1.bf16.msra.mxu0 %v3048
    %4215 = vmatprep.subr.bf16.mxu0 %v3053
    %4216 = vmatpush1.bf16.msra.mxu0 %v3052
    %4217 = vmatprep.subr.bf16.mxu0 %v3057
    %4218 = vmatpush1.bf16.msra.mxu0 %v3056
    %4219 = vmatprep.subr.bf16.mxu0 %v3061
    %4220 = vmatpush1.bf16.msra.mxu0 %v3060
    %4221 = vmatprep.subr.bf16.mxu0 %v3065
    %4222 = vmatpush1.bf16.msra.mxu0 %v3064
    %4223 = vmatprep.subr.bf16.mxu0 %v3069
    %4224 = vmatpush1.bf16.msra.mxu0 %v3068
    %4225 = vmatprep.subr.bf16.mxu0 %v3073
    %4226 = vmatpush1.bf16.msra.mxu0 %v3072
    %4227 = vmatprep.subr.bf16.mxu0 %v3077
    %4228 = vmatpush1.bf16.msra.mxu0 %v3076
    %4229 = vmatprep.subr.bf16.mxu0 %v3081
    %4230 = vmatpush1.bf16.msra.mxu0 %v3080
    %4231 = vmatprep.subr.bf16.mxu0 %v3085
    %4232 = vmatpush1.bf16.msra.mxu0 %v3084
    %4233 = vmatprep.subr.bf16.mxu0 %v3089
    %4234 = vmatpush1.bf16.msra.mxu0 %v3088
    %4235 = vmatprep.subr.bf16.mxu0 %v3093
    %4236 = vmatpush1.bf16.msra.mxu0 %v3092
    %4237 = vmatprep.subr.bf16.mxu0 %v3097
    %4238 = vmatpush1.bf16.msra.mxu0 %v3096
    %4239 = vmatprep.mubr.bf16.mxu0 %v1059
    %4240 = vmatmul.mubr.bf16.gmra.mrb[0].mxu0 %v1058
    %v4241 = vpop.f32.mrb[0].mxu0
    %v4242 = vadd.f32 %v4129, %v4241
    %v4243 = vpop.f32.mrb[0].mxu0
    %v4244 = vadd.f32 %v4131, %v4243
    %v4245 = vpop.f32.mrb[0].mxu0
    %v4246 = vadd.f32 %v4133, %v4245
    %v4247 = vpop.f32.mrb[0].mxu0
    %v4248 = vadd.f32 %v4135, %v4247
    %4249 = vmatprep.mubr.bf16.mxu0 %v1075
    %4250 = vmatmul.mubr.bf16.gmra.mrb[0].mxu0 %v1074
    %v4251 = vpop.f32.mrb[0].mxu0
    %v4252 = vadd.f32 %v4139, %v4251
    %v4253 = vpop.f32.mrb[0].mxu0
    %v4254 = vadd.f32 %v4141, %v4253
    %v4255 = vpop.f32.mrb[0].mxu0
    %v4256 = vadd.f32 %v4143, %v4255
    %v4257 = vpop.f32.mrb[0].mxu0
    %v4258 = vadd.f32 %v4145, %v4257
    %4259 = vmatprep.mubr.bf16.mxu0 %v1091
    %4260 = vmatmul.mubr.bf16.gmra.mrb[0].mxu0 %v1090
    %v4261 = vpop.f32.mrb[0].mxu0
    %v4262 = vadd.f32 %v4149, %v4261
    %v4263 = vpop.f32.mrb[0].mxu0
    %v4264 = vadd.f32 %v4151, %v4263
    %v4265 = vpop.f32.mrb[0].mxu0
    %v4266 = vadd.f32 %v4153, %v4265
    %v4267 = vpop.f32.mrb[0].mxu0
    %v4268 = vadd.f32 %v4155, %v4267
    %4269 = vmatprep.mubr.bf16.mxu0 %v1107
    %4270 = vmatmul.mubr.bf16.gmra.mrb[0].mxu0 %v1106
    %v4271 = vpop.f32.mrb[0].mxu0
    %v4272 = vadd.f32 %v4159, %v4271
    %v4273 = vpop.f32.mrb[0].mxu0
    %v4274 = vadd.f32 %v4161, %v4273
    %v4275 = vpop.f32.mrb[0].mxu0
    %v4276 = vadd.f32 %v4163, %v4275
    %v4277 = vpop.f32.mrb[0].mxu0
    %v4278 = vadd.f32 %v4165, %v4277
    %4279 = vmatprep.mubr.bf16.mxu0 %v1123
    %4280 = vmatmul.mubr.bf16.gmra.mrb[0].mxu0 %v1122
    %v4281 = vpop.f32.mrb[0].mxu0
    %v4282 = vadd.f32 %v4169, %v4281
    %v4283 = vpop.f32.mrb[0].mxu0
    %v4284 = vadd.f32 %v4171, %v4283
    %v4285 = vpop.f32.mrb[0].mxu0
    %v4286 = vadd.f32 %v4173, %v4285
    %v4287 = vpop.f32.mrb[0].mxu0
    %v4288 = vadd.f32 %v4175, %v4287
    %4289 = vmatprep.mubr.bf16.mxu0 %v1139
    %4290 = vmatmul.mubr.bf16.gmra.mrb[0].mxu0 %v1138
    %v4291 = vpop.f32.mrb[0].mxu0
    %v4292 = vadd.f32 %v4179, %v4291
    %v4293 = vpop.f32.mrb[0].mxu0
    %v4294 = vadd.f32 %v4181, %v4293
    %v4295 = vpop.f32.mrb[0].mxu0
    %v4296 = vadd.f32 %v4183, %v4295
    %v4297 = vpop.f32.mrb[0].mxu0
    %v4298 = vadd.f32 %v4185, %v4297
    %4299 = vmatprep.mubr.bf16.mxu0 %v1155
    %4300 = vmatmul.mubr.bf16.gmra.mrb[0].mxu0 %v1154
    %v4301 = vpop.f32.mrb[0].mxu0
    %v4302 = vadd.f32 %v4189, %v4301
    %v4303 = vpop.f32.mrb[0].mxu0
    %v4304 = vadd.f32 %v4191, %v4303
    %v4305 = vpop.f32.mrb[0].mxu0
    %v4306 = vadd.f32 %v4193, %v4305
    %v4307 = vpop.f32.mrb[0].mxu0
    %v4308 = vadd.f32 %v4195, %v4307
    %4309 = vmatprep.mubr.bf16.mxu0 %v1171
    %4310 = vmatmul.mubr.bf16.gmra.mrb[0].mxu0 %v1170
    %v4311 = vpop.f32.mrb[0].mxu0
    %v4312 = vadd.f32 %v4199, %v4311
    %v4313 = vpop.f32.mrb[0].mxu0
    %v4314 = vadd.f32 %v4201, %v4313
    %v4315 = vpop.f32.mrb[0].mxu0
    %v4316 = vadd.f32 %v4203, %v4315
    %v4317 = vpop.f32.mrb[0].mxu0
    %v4318 = vadd.f32 %v4205, %v4317
    %4319 = vdwg.mxu0
    %4320 = vmatprep.subr.bf16.mxu0 %v3101
    %4321 = vmatpush1.bf16.msra.mxu0 %v3100
    %4322 = vmatprep.subr.bf16.mxu0 %v3105
    %4323 = vmatpush1.bf16.msra.mxu0 %v3104
    %4324 = vmatprep.subr.bf16.mxu0 %v3109
    %4325 = vmatpush1.bf16.msra.mxu0 %v3108
    %4326 = vmatprep.subr.bf16.mxu0 %v3113
    %4327 = vmatpush1.bf16.msra.mxu0 %v3112
    %4328 = vmatprep.subr.bf16.mxu0 %v3117
    %4329 = vmatpush1.bf16.msra.mxu0 %v3116
    %4330 = vmatprep.subr.bf16.mxu0 %v3121
    %4331 = vmatpush1.bf16.msra.mxu0 %v3120
    %4332 = vmatprep.subr.bf16.mxu0 %v3125
    %4333 = vmatpush1.bf16.msra.mxu0 %v3124
    %4334 = vmatprep.subr.bf16.mxu0 %v3129
    %4335 = vmatpush1.bf16.msra.mxu0 %v3128
    %4336 = vmatprep.subr.bf16.mxu0 %v3133
    %4337 = vmatpush1.bf16.msra.mxu0 %v3132
    %4338 = vmatprep.subr.bf16.mxu0 %v3137
    %4339 = vmatpush1.bf16.msra.mxu0 %v3136
    %4340 = vmatprep.subr.bf16.mxu0 %v3141
    %4341 = vmatpush1.bf16.msra.mxu0 %v3140
    %4342 = vmatprep.subr.bf16.mxu0 %v3145
    %4343 = vmatpush1.bf16.msra.mxu0 %v3144
    %4344 = vmatprep.subr.bf16.mxu0 %v3149
    %4345 = vmatpush1.bf16.msra.mxu0 %v3148
    %4346 = vmatprep.subr.bf16.mxu0 %v3153
    %4347 = vmatpush1.bf16.msra.mxu0 %v3152
    %4348 = vmatprep.subr.bf16.mxu0 %v3157
    %4349 = vmatpush1.bf16.msra.mxu0 %v3156
    %4350 = vmatprep.subr.bf16.mxu0 %v3161
    %4351 = vmatpush1.bf16.msra.mxu0 %v3160
    %4352 = vmatprep.mubr.bf16.mxu0 %v1061
    %4353 = vmatmul.mubr.bf16.gmra.mrb[0].mxu0 %v1060
    %v4354 = vpop.f32.mrb[0].mxu0
    %v4355 = vadd.f32 %v4242, %v4354
    %v4356 = vpop.f32.mrb[0].mxu0
    %v4357 = vadd.f32 %v4244, %v4356
    %v4358 = vpop.f32.mrb[0].mxu0
    %v4359 = vadd.f32 %v4246, %v4358
    %v4360 = vpop.f32.mrb[0].mxu0
    %v4361 = vadd.f32 %v4248, %v4360
    %4362 = vmatprep.mubr.bf16.mxu0 %v1077
    %4363 = vmatmul.mubr.bf16.gmra.mrb[0].mxu0 %v1076
    %v4364 = vpop.f32.mrb[0].mxu0
    %v4365 = vadd.f32 %v4252, %v4364
    %v4366 = vpop.f32.mrb[0].mxu0
    %v4367 = vadd.f32 %v4254, %v4366
    %v4368 = vpop.f32.mrb[0].mxu0
    %v4369 = vadd.f32 %v4256, %v4368
    %v4370 = vpop.f32.mrb[0].mxu0
    %v4371 = vadd.f32 %v4258, %v4370
    %4372 = vmatprep.mubr.bf16.mxu0 %v1093
    %4373 = vmatmul.mubr.bf16.gmra.mrb[0].mxu0 %v1092
    %v4374 = vpop.f32.mrb[0].mxu0
    %v4375 = vadd.f32 %v4262, %v4374
    %v4376 = vpop.f32.mrb[0].mxu0
    %v4377 = vadd.f32 %v4264, %v4376
    %v4378 = vpop.f32.mrb[0].mxu0
    %v4379 = vadd.f32 %v4266, %v4378
    %v4380 = vpop.f32.mrb[0].mxu0
    %v4381 = vadd.f32 %v4268, %v4380
    %4382 = vmatprep.mubr.bf16.mxu0 %v1109
    %4383 = vmatmul.mubr.bf16.gmra.mrb[0].mxu0 %v1108
    %v4384 = vpop.f32.mrb[0].mxu0
    %v4385 = vadd.f32 %v4272, %v4384
    %v4386 = vpop.f32.mrb[0].mxu0
    %v4387 = vadd.f32 %v4274, %v4386
    %v4388 = vpop.f32.mrb[0].mxu0
    %v4389 = vadd.f32 %v4276, %v4388
    %v4390 = vpop.f32.mrb[0].mxu0
    %v4391 = vadd.f32 %v4278, %v4390
    %4392 = vmatprep.mubr.bf16.mxu0 %v1125
    %4393 = vmatmul.mubr.bf16.gmra.mrb[0].mxu0 %v1124
    %v4394 = vpop.f32.mrb[0].mxu0
    %v4395 = vadd.f32 %v4282, %v4394
    %v4396 = vpop.f32.mrb[0].mxu0
    %v4397 = vadd.f32 %v4284, %v4396
    %v4398 = vpop.f32.mrb[0].mxu0
    %v4399 = vadd.f32 %v4286, %v4398
    %v4400 = vpop.f32.mrb[0].mxu0
    %v4401 = vadd.f32 %v4288, %v4400
    %4402 = vmatprep.mubr.bf16.mxu0 %v1141
    %4403 = vmatmul.mubr.bf16.gmra.mrb[0].mxu0 %v1140
    %v4404 = vpop.f32.mrb[0].mxu0
    %v4405 = vadd.f32 %v4292, %v4404
    %v4406 = vpop.f32.mrb[0].mxu0
    %v4407 = vadd.f32 %v4294, %v4406
    %v4408 = vpop.f32.mrb[0].mxu0
    %v4409 = vadd.f32 %v4296, %v4408
    %v4410 = vpop.f32.mrb[0].mxu0
    %v4411 = vadd.f32 %v4298, %v4410
    %4412 = vmatprep.mubr.bf16.mxu0 %v1157
    %4413 = vmatmul.mubr.bf16.gmra.mrb[0].mxu0 %v1156
    %v4414 = vpop.f32.mrb[0].mxu0
    %v4415 = vadd.f32 %v4302, %v4414
    %v4416 = vpop.f32.mrb[0].mxu0
    %v4417 = vadd.f32 %v4304, %v4416
    %v4418 = vpop.f32.mrb[0].mxu0
    %v4419 = vadd.f32 %v4306, %v4418
    %v4420 = vpop.f32.mrb[0].mxu0
    %v4421 = vadd.f32 %v4308, %v4420
    %4422 = vmatprep.mubr.bf16.mxu0 %v1173
    %4423 = vmatmul.mubr.bf16.gmra.mrb[0].mxu0 %v1172
    %v4424 = vpop.f32.mrb[0].mxu0
    %v4425 = vadd.f32 %v4312, %v4424
    %v4426 = vpop.f32.mrb[0].mxu0
    %v4427 = vadd.f32 %v4314, %v4426
    %v4428 = vpop.f32.mrb[0].mxu0
    %v4429 = vadd.f32 %v4316, %v4428
    %v4430 = vpop.f32.mrb[0].mxu0
    %v4431 = vadd.f32 %v4318, %v4430
    %4432 = vdwg.mxu0
    %4433 = vmatprep.subr.bf16.mxu0 %v3165
    %4434 = vmatpush1.bf16.msra.mxu0 %v3164
    %4435 = vmatprep.subr.bf16.mxu0 %v3169
    %4436 = vmatpush1.bf16.msra.mxu0 %v3168
    %4437 = vmatprep.subr.bf16.mxu0 %v3173
    %4438 = vmatpush1.bf16.msra.mxu0 %v3172
    %4439 = vmatprep.subr.bf16.mxu0 %v3177
    %4440 = vmatpush1.bf16.msra.mxu0 %v3176
    %4441 = vmatprep.subr.bf16.mxu0 %v3181
    %4442 = vmatpush1.bf16.msra.mxu0 %v3180
    %4443 = vmatprep.subr.bf16.mxu0 %v3185
    %4444 = vmatpush1.bf16.msra.mxu0 %v3184
    %4445 = vmatprep.subr.bf16.mxu0 %v3189
    %4446 = vmatpush1.bf16.msra.mxu0 %v3188
    %4447 = vmatprep.subr.bf16.mxu0 %v3193
    %4448 = vmatpush1.bf16.msra.mxu0 %v3192
    %4449 = vmatprep.subr.bf16.mxu0 %v3197
    %4450 = vmatpush1.bf16.msra.mxu0 %v3196
    %4451 = vmatprep.subr.bf16.mxu0 %v3201
    %4452 = vmatpush1.bf16.msra.mxu0 %v3200
    %4453 = vmatprep.subr.bf16.mxu0 %v3205
    %4454 = vmatpush1.bf16.msra.mxu0 %v3204
    %4455 = vmatprep.subr.bf16.mxu0 %v3209
    %4456 = vmatpush1.bf16.msra.mxu0 %v3208
    %4457 = vmatprep.subr.bf16.mxu0 %v3213
    %4458 = vmatpush1.bf16.msra.mxu0 %v3212
    %4459 = vmatprep.subr.bf16.mxu0 %v3217
    %4460 = vmatpush1.bf16.msra.mxu0 %v3216
    %4461 = vmatprep.subr.bf16.mxu0 %v3221
    %4462 = vmatpush1.bf16.msra.mxu0 %v3220
    %4463 = vmatprep.subr.bf16.mxu0 %v3225
    %4464 = vmatpush1.bf16.msra.mxu0 %v3224
    %4465 = vmatprep.mubr.bf16.mxu0 %v1063
    %4466 = vmatmul.mubr.bf16.gmra.mrb[0].mxu0 %v1062
    %v4467 = vpop.f32.mrb[0].mxu0
    %v4468 = vadd.f32 %v4355, %v4467
    %v4469 = vpop.f32.mrb[0].mxu0
    %v4470 = vadd.f32 %v4357, %v4469
    %v4471 = vpop.f32.mrb[0].mxu0
    %v4472 = vadd.f32 %v4359, %v4471
    %v4473 = vpop.f32.mrb[0].mxu0
    %v4474 = vadd.f32 %v4361, %v4473
    %4475 = vmatprep.mubr.bf16.mxu0 %v1079
    %4476 = vmatmul.mubr.bf16.gmra.mrb[0].mxu0 %v1078
    %v4477 = vpop.f32.mrb[0].mxu0
    %v4478 = vadd.f32 %v4365, %v4477
    %v4479 = vpop.f32.mrb[0].mxu0
    %v4480 = vadd.f32 %v4367, %v4479
    %v4481 = vpop.f32.mrb[0].mxu0
    %v4482 = vadd.f32 %v4369, %v4481
    %v4483 = vpop.f32.mrb[0].mxu0
    %v4484 = vadd.f32 %v4371, %v4483
    %4485 = vmatprep.mubr.bf16.mxu0 %v1095
    %4486 = vmatmul.mubr.bf16.gmra.mrb[0].mxu0 %v1094
    %v4487 = vpop.f32.mrb[0].mxu0
    %v4488 = vadd.f32 %v4375, %v4487
    %v4489 = vpop.f32.mrb[0].mxu0
    %v4490 = vadd.f32 %v4377, %v4489
    %v4491 = vpop.f32.mrb[0].mxu0
    %v4492 = vadd.f32 %v4379, %v4491
    %v4493 = vpop.f32.mrb[0].mxu0
    %v4494 = vadd.f32 %v4381, %v4493
    %4495 = vmatprep.mubr.bf16.mxu0 %v1111
    %4496 = vmatmul.mubr.bf16.gmra.mrb[0].mxu0 %v1110
    %v4497 = vpop.f32.mrb[0].mxu0
    %v4498 = vadd.f32 %v4385, %v4497
    %v4499 = vpop.f32.mrb[0].mxu0
    %v4500 = vadd.f32 %v4387, %v4499
    %v4501 = vpop.f32.mrb[0].mxu0
    %v4502 = vadd.f32 %v4389, %v4501
    %v4503 = vpop.f32.mrb[0].mxu0
    %v4504 = vadd.f32 %v4391, %v4503
    %4505 = vmatprep.mubr.bf16.mxu0 %v1127
    %4506 = vmatmul.mubr.bf16.gmra.mrb[0].mxu0 %v1126
    %v4507 = vpop.f32.mrb[0].mxu0
    %v4508 = vadd.f32 %v4395, %v4507
    %v4509 = vpop.f32.mrb[0].mxu0
    %v4510 = vadd.f32 %v4397, %v4509
    %v4511 = vpop.f32.mrb[0].mxu0
    %v4512 = vadd.f32 %v4399, %v4511
    %v4513 = vpop.f32.mrb[0].mxu0
    %v4514 = vadd.f32 %v4401, %v4513
    %4515 = vmatprep.mubr.bf16.mxu0 %v1143
    %4516 = vmatmul.mubr.bf16.gmra.mrb[0].mxu0 %v1142
    %v4517 = vpop.f32.mrb[0].mxu0
    %v4518 = vadd.f32 %v4405, %v4517
    %v4519 = vpop.f32.mrb[0].mxu0
    %v4520 = vadd.f32 %v4407, %v4519
    %v4521 = vpop.f32.mrb[0].mxu0
    %v4522 = vadd.f32 %v4409, %v4521
    %v4523 = vpop.f32.mrb[0].mxu0
    %v4524 = vadd.f32 %v4411, %v4523
    %4525 = vmatprep.mubr.bf16.mxu0 %v1159
    %4526 = vmatmul.mubr.bf16.gmra.mrb[0].mxu0 %v1158
    %v4527 = vpop.f32.mrb[0].mxu0
    %v4528 = vadd.f32 %v4415, %v4527
    %v4529 = vpop.f32.mrb[0].mxu0
    %v4530 = vadd.f32 %v4417, %v4529
    %v4531 = vpop.f32.mrb[0].mxu0
    %v4532 = vadd.f32 %v4419, %v4531
    %v4533 = vpop.f32.mrb[0].mxu0
    %v4534 = vadd.f32 %v4421, %v4533
    %4535 = vmatprep.mubr.bf16.mxu0 %v1175
    %4536 = vmatmul.mubr.bf16.gmra.mrb[0].mxu0 %v1174
    %v4537 = vpop.f32.mrb[0].mxu0
    %v4538 = vadd.f32 %v4425, %v4537
    %v4539 = vpop.f32.mrb[0].mxu0
    %v4540 = vadd.f32 %v4427, %v4539
    %v4541 = vpop.f32.mrb[0].mxu0
    %v4542 = vadd.f32 %v4429, %v4541
    %v4543 = vpop.f32.mrb[0].mxu0
    %v4544 = vadd.f32 %v4431, %v4543
    %4545 = vdwg.mxu0
    %4546 = vmatprep.subr.bf16.mxu0 %v3229
    %4547 = vmatpush1.bf16.msra.mxu0 %v3228
    %4548 = vmatprep.subr.bf16.mxu0 %v3233
    %4549 = vmatpush1.bf16.msra.mxu0 %v3232
    %4550 = vmatprep.subr.bf16.mxu0 %v3237
    %4551 = vmatpush1.bf16.msra.mxu0 %v3236
    %4552 = vmatprep.subr.bf16.mxu0 %v3241
    %4553 = vmatpush1.bf16.msra.mxu0 %v3240
    %4554 = vmatprep.subr.bf16.mxu0 %v3245
    %4555 = vmatpush1.bf16.msra.mxu0 %v3244
    %4556 = vmatprep.subr.bf16.mxu0 %v3249
    %4557 = vmatpush1.bf16.msra.mxu0 %v3248
    %4558 = vmatprep.subr.bf16.mxu0 %v3253
    %4559 = vmatpush1.bf16.msra.mxu0 %v3252
    %4560 = vmatprep.subr.bf16.mxu0 %v3257
    %4561 = vmatpush1.bf16.msra.mxu0 %v3256
    %4562 = vmatprep.subr.bf16.mxu0 %v3261
    %4563 = vmatpush1.bf16.msra.mxu0 %v3260
    %4564 = vmatprep.subr.bf16.mxu0 %v3265
    %4565 = vmatpush1.bf16.msra.mxu0 %v3264
    %4566 = vmatprep.subr.bf16.mxu0 %v3269
    %4567 = vmatpush1.bf16.msra.mxu0 %v3268
    %4568 = vmatprep.subr.bf16.mxu0 %v3273
    %4569 = vmatpush1.bf16.msra.mxu0 %v3272
    %4570 = vmatprep.subr.bf16.mxu0 %v3277
    %4571 = vmatpush1.bf16.msra.mxu0 %v3276
    %4572 = vmatprep.subr.bf16.mxu0 %v3281
    %4573 = vmatpush1.bf16.msra.mxu0 %v3280
    %4574 = vmatprep.subr.bf16.mxu0 %v3285
    %4575 = vmatpush1.bf16.msra.mxu0 %v3284
    %4576 = vmatprep.subr.bf16.mxu0 %v3289
    %4577 = vmatpush1.bf16.msra.mxu0 %v3288
    %4578 = vmatprep.mubr.bf16.mxu0 %v1065
    %4579 = vmatmul.mubr.bf16.gmra.mrb[0].mxu0 %v1064
    %v4580 = vpop.f32.mrb[0].mxu0
    %v4581 = vadd.f32 %v4468, %v4580
    %v4582 = vpop.f32.mrb[0].mxu0
    %v4583 = vadd.f32 %v4470, %v4582
    %v4584 = vpop.f32.mrb[0].mxu0
    %v4585 = vadd.f32 %v4472, %v4584
    %v4586 = vpop.f32.mrb[0].mxu0
    %v4587 = vadd.f32 %v4474, %v4586
    %4588 = vmatprep.mubr.bf16.mxu0 %v1081
    %4589 = vmatmul.mubr.bf16.gmra.mrb[0].mxu0 %v1080
    %v4590 = vpop.f32.mrb[0].mxu0
    %v4591 = vadd.f32 %v4478, %v4590
    %v4592 = vpop.f32.mrb[0].mxu0
    %v4593 = vadd.f32 %v4480, %v4592
    %v4594 = vpop.f32.mrb[0].mxu0
    %v4595 = vadd.f32 %v4482, %v4594
    %v4596 = vpop.f32.mrb[0].mxu0
    %v4597 = vadd.f32 %v4484, %v4596
    %4598 = vmatprep.mubr.bf16.mxu0 %v1097
    %4599 = vmatmul.mubr.bf16.gmra.mrb[0].mxu0 %v1096
    %v4600 = vpop.f32.mrb[0].mxu0
    %v4601 = vadd.f32 %v4488, %v4600
    %v4602 = vpop.f32.mrb[0].mxu0
    %v4603 = vadd.f32 %v4490, %v4602
    %v4604 = vpop.f32.mrb[0].mxu0
    %v4605 = vadd.f32 %v4492, %v4604
    %v4606 = vpop.f32.mrb[0].mxu0
    %v4607 = vadd.f32 %v4494, %v4606
    %4608 = vmatprep.mubr.bf16.mxu0 %v1113
    %4609 = vmatmul.mubr.bf16.gmra.mrb[0].mxu0 %v1112
    %v4610 = vpop.f32.mrb[0].mxu0
    %v4611 = vadd.f32 %v4498, %v4610
    %v4612 = vpop.f32.mrb[0].mxu0
    %v4613 = vadd.f32 %v4500, %v4612
    %v4614 = vpop.f32.mrb[0].mxu0
    %v4615 = vadd.f32 %v4502, %v4614
    %v4616 = vpop.f32.mrb[0].mxu0
    %v4617 = vadd.f32 %v4504, %v4616
    %4618 = vmatprep.mubr.bf16.mxu0 %v1129
    %4619 = vmatmul.mubr.bf16.gmra.mrb[0].mxu0 %v1128
    %v4620 = vpop.f32.mrb[0].mxu0
    %v4621 = vadd.f32 %v4508, %v4620
    %v4622 = vpop.f32.mrb[0].mxu0
    %v4623 = vadd.f32 %v4510, %v4622
    %v4624 = vpop.f32.mrb[0].mxu0
    %v4625 = vadd.f32 %v4512, %v4624
    %v4626 = vpop.f32.mrb[0].mxu0
    %v4627 = vadd.f32 %v4514, %v4626
    %4628 = vmatprep.mubr.bf16.mxu0 %v1145
    %4629 = vmatmul.mubr.bf16.gmra.mrb[0].mxu0 %v1144
    %v4630 = vpop.f32.mrb[0].mxu0
    %v4631 = vadd.f32 %v4518, %v4630
    %v4632 = vpop.f32.mrb[0].mxu0
    %v4633 = vadd.f32 %v4520, %v4632
    %v4634 = vpop.f32.mrb[0].mxu0
    %v4635 = vadd.f32 %v4522, %v4634
    %v4636 = vpop.f32.mrb[0].mxu0
    %v4637 = vadd.f32 %v4524, %v4636
    %4638 = vmatprep.mubr.bf16.mxu0 %v1161
    %4639 = vmatmul.mubr.bf16.gmra.mrb[0].mxu0 %v1160
    %v4640 = vpop.f32.mrb[0].mxu0
    %v4641 = vadd.f32 %v4528, %v4640
    %v4642 = vpop.f32.mrb[0].mxu0
    %v4643 = vadd.f32 %v4530, %v4642
    %v4644 = vpop.f32.mrb[0].mxu0
    %v4645 = vadd.f32 %v4532, %v4644
    %v4646 = vpop.f32.mrb[0].mxu0
    %v4647 = vadd.f32 %v4534, %v4646
    %4648 = vmatprep.mubr.bf16.mxu0 %v1177
    %4649 = vmatmul.mubr.bf16.gmra.mrb[0].mxu0 %v1176
    %v4650 = vpop.f32.mrb[0].mxu0
    %v4651 = vadd.f32 %v4538, %v4650
    %v4652 = vpop.f32.mrb[0].mxu0
    %v4653 = vadd.f32 %v4540, %v4652
    %v4654 = vpop.f32.mrb[0].mxu0
    %v4655 = vadd.f32 %v4542, %v4654
    %v4656 = vpop.f32.mrb[0].mxu0
    %v4657 = vadd.f32 %v4544, %v4656
    %4658 = vdwg.mxu0
    %4659 = vmatprep.subr.bf16.mxu0 %v3293
    %4660 = vmatpush1.bf16.msra.mxu0 %v3292
    %4661 = vmatprep.subr.bf16.mxu0 %v3297
    %4662 = vmatpush1.bf16.msra.mxu0 %v3296
    %4663 = vmatprep.subr.bf16.mxu0 %v3301
    %4664 = vmatpush1.bf16.msra.mxu0 %v3300
    %4665 = vmatprep.subr.bf16.mxu0 %v3305
    %4666 = vmatpush1.bf16.msra.mxu0 %v3304
    %4667 = vmatprep.subr.bf16.mxu0 %v3309
    %4668 = vmatpush1.bf16.msra.mxu0 %v3308
    %4669 = vmatprep.subr.bf16.mxu0 %v3313
    %4670 = vmatpush1.bf16.msra.mxu0 %v3312
    %4671 = vmatprep.subr.bf16.mxu0 %v3317
    %4672 = vmatpush1.bf16.msra.mxu0 %v3316
    %4673 = vmatprep.subr.bf16.mxu0 %v3321
    %4674 = vmatpush1.bf16.msra.mxu0 %v3320
    %4675 = vmatprep.subr.bf16.mxu0 %v3325
    %4676 = vmatpush1.bf16.msra.mxu0 %v3324
    %4677 = vmatprep.subr.bf16.mxu0 %v3329
    %4678 = vmatpush1.bf16.msra.mxu0 %v3328
    %4679 = vmatprep.subr.bf16.mxu0 %v3333
    %4680 = vmatpush1.bf16.msra.mxu0 %v3332
    %4681 = vmatprep.subr.bf16.mxu0 %v3337
    %4682 = vmatpush1.bf16.msra.mxu0 %v3336
    %4683 = vmatprep.subr.bf16.mxu0 %v3341
    %4684 = vmatpush1.bf16.msra.mxu0 %v3340
    %4685 = vmatprep.subr.bf16.mxu0 %v3345
    %4686 = vmatpush1.bf16.msra.mxu0 %v3344
    %4687 = vmatprep.subr.bf16.mxu0 %v3349
    %4688 = vmatpush1.bf16.msra.mxu0 %v3348
    %4689 = vmatprep.subr.bf16.mxu0 %v3353
    %4690 = vmatpush1.bf16.msra.mxu0 %v3352
    %4691 = vmatprep.mubr.bf16.mxu0 %v1067
    %4692 = vmatmul.mubr.bf16.gmra.mrb[0].mxu0 %v1066
    %v4693 = vpop.f32.mrb[0].mxu0
    %v4694 = vadd.f32 %v4581, %v4693
    %v4695 = vpop.f32.mrb[0].mxu0
    %v4696 = vadd.f32 %v4583, %v4695
    %v4697 = vpop.f32.mrb[0].mxu0
    %v4698 = vadd.f32 %v4585, %v4697
    %v4699 = vpop.f32.mrb[0].mxu0
    %v4700 = vadd.f32 %v4587, %v4699
    %4701 = vmatprep.mubr.bf16.mxu0 %v1083
    %4702 = vmatmul.mubr.bf16.gmra.mrb[0].mxu0 %v1082
    %v4703 = vpop.f32.mrb[0].mxu0
    %v4704 = vadd.f32 %v4591, %v4703
    %v4705 = vpop.f32.mrb[0].mxu0
    %v4706 = vadd.f32 %v4593, %v4705
    %v4707 = vpop.f32.mrb[0].mxu0
    %v4708 = vadd.f32 %v4595, %v4707
    %v4709 = vpop.f32.mrb[0].mxu0
    %v4710 = vadd.f32 %v4597, %v4709
    %4711 = vmatprep.mubr.bf16.mxu0 %v1099
    %4712 = vmatmul.mubr.bf16.gmra.mrb[0].mxu0 %v1098
    %v4713 = vpop.f32.mrb[0].mxu0
    %v4714 = vadd.f32 %v4601, %v4713
    %v4715 = vpop.f32.mrb[0].mxu0
    %v4716 = vadd.f32 %v4603, %v4715
    %v4717 = vpop.f32.mrb[0].mxu0
    %v4718 = vadd.f32 %v4605, %v4717
    %v4719 = vpop.f32.mrb[0].mxu0
    %v4720 = vadd.f32 %v4607, %v4719
    %4721 = vmatprep.mubr.bf16.mxu0 %v1115
    %4722 = vmatmul.mubr.bf16.gmra.mrb[0].mxu0 %v1114
    %v4723 = vpop.f32.mrb[0].mxu0
    %v4724 = vadd.f32 %v4611, %v4723
    %v4725 = vpop.f32.mrb[0].mxu0
    %v4726 = vadd.f32 %v4613, %v4725
    %v4727 = vpop.f32.mrb[0].mxu0
    %v4728 = vadd.f32 %v4615, %v4727
    %v4729 = vpop.f32.mrb[0].mxu0
    %v4730 = vadd.f32 %v4617, %v4729
    %4731 = vmatprep.mubr.bf16.mxu0 %v1131
    %4732 = vmatmul.mubr.bf16.gmra.mrb[0].mxu0 %v1130
    %v4733 = vpop.f32.mrb[0].mxu0
    %v4734 = vadd.f32 %v4621, %v4733
    %v4735 = vpop.f32.mrb[0].mxu0
    %v4736 = vadd.f32 %v4623, %v4735
    %v4737 = vpop.f32.mrb[0].mxu0
    %v4738 = vadd.f32 %v4625, %v4737
    %v4739 = vpop.f32.mrb[0].mxu0
    %v4740 = vadd.f32 %v4627, %v4739
    %4741 = vmatprep.mubr.bf16.mxu0 %v1147
    %4742 = vmatmul.mubr.bf16.gmra.mrb[0].mxu0 %v1146
    %v4743 = vpop.f32.mrb[0].mxu0
    %v4744 = vadd.f32 %v4631, %v4743
    %v4745 = vpop.f32.mrb[0].mxu0
    %v4746 = vadd.f32 %v4633, %v4745
    %v4747 = vpop.f32.mrb[0].mxu0
    %v4748 = vadd.f32 %v4635, %v4747
    %v4749 = vpop.f32.mrb[0].mxu0
    %v4750 = vadd.f32 %v4637, %v4749
    %4751 = vmatprep.mubr.bf16.mxu0 %v1163
    %4752 = vmatmul.mubr.bf16.gmra.mrb[0].mxu0 %v1162
    %v4753 = vpop.f32.mrb[0].mxu0
    %v4754 = vadd.f32 %v4641, %v4753
    %v4755 = vpop.f32.mrb[0].mxu0
    %v4756 = vadd.f32 %v4643, %v4755
    %v4757 = vpop.f32.mrb[0].mxu0
    %v4758 = vadd.f32 %v4645, %v4757
    %v4759 = vpop.f32.mrb[0].mxu0
    %v4760 = vadd.f32 %v4647, %v4759
    %4761 = vmatprep.mubr.bf16.mxu0 %v1179
    %4762 = vmatmul.mubr.bf16.gmra.mrb[0].mxu0 %v1178
    %v4763 = vpop.f32.mrb[0].mxu0
    %v4764 = vadd.f32 %v4651, %v4763
    %v4765 = vpop.f32.mrb[0].mxu0
    %v4766 = vadd.f32 %v4653, %v4765
    %v4767 = vpop.f32.mrb[0].mxu0
    %v4768 = vadd.f32 %v4655, %v4767
    %v4769 = vpop.f32.mrb[0].mxu0
    %v4770 = vadd.f32 %v4657, %v4769
    %4771 = vdwg.mxu0
    %4772 = vmatprep.subr.bf16.mxu0 %v2847
    %4773 = vmatpush1.bf16.msra.mxu0 %v2846
    %4774 = vmatprep.subr.bf16.mxu0 %v2851
    %4775 = vmatpush1.bf16.msra.mxu0 %v2850
    %4776 = vmatprep.subr.bf16.mxu0 %v2855
    %4777 = vmatpush1.bf16.msra.mxu0 %v2854
    %4778 = vmatprep.subr.bf16.mxu0 %v2859
    %4779 = vmatpush1.bf16.msra.mxu0 %v2858
    %4780 = vmatprep.subr.bf16.mxu0 %v2863
    %4781 = vmatpush1.bf16.msra.mxu0 %v2862
    %4782 = vmatprep.subr.bf16.mxu0 %v2867
    %4783 = vmatpush1.bf16.msra.mxu0 %v2866
    %4784 = vmatprep.subr.bf16.mxu0 %v2871
    %4785 = vmatpush1.bf16.msra.mxu0 %v2870
    %4786 = vmatprep.subr.bf16.mxu0 %v2875
    %4787 = vmatpush1.bf16.msra.mxu0 %v2874
    %4788 = vmatprep.subr.bf16.mxu0 %v2879
    %4789 = vmatpush1.bf16.msra.mxu0 %v2878
    %4790 = vmatprep.subr.bf16.mxu0 %v2883
    %4791 = vmatpush1.bf16.msra.mxu0 %v2882
    %4792 = vmatprep.subr.bf16.mxu0 %v2887
    %4793 = vmatpush1.bf16.msra.mxu0 %v2886
    %4794 = vmatprep.subr.bf16.mxu0 %v2891
    %4795 = vmatpush1.bf16.msra.mxu0 %v2890
    %4796 = vmatprep.subr.bf16.mxu0 %v2895
    %4797 = vmatpush1.bf16.msra.mxu0 %v2894
    %4798 = vmatprep.subr.bf16.mxu0 %v2899
    %4799 = vmatpush1.bf16.msra.mxu0 %v2898
    %4800 = vmatprep.subr.bf16.mxu0 %v2903
    %4801 = vmatpush1.bf16.msra.mxu0 %v2902
    %4802 = vmatprep.subr.bf16.mxu0 %v2907
    %4803 = vmatpush1.bf16.msra.mxu0 %v2906
    %4804 = vmatprep.mubr.bf16.mxu0 %v1053
    %4805 = vmatmul.mubr.bf16.gmra.mrb[0].mxu0 %v1052
    %v4806 = vpop.f32.mrb[0].mxu0
    %v4807 = vadd.f32 0.0, %v4806
    %v4808 = vpop.f32.mrb[0].mxu0
    %v4809 = vadd.f32 0.0, %v4808
    %v4810 = vpop.f32.mrb[0].mxu0
    %v4811 = vadd.f32 0.0, %v4810
    %v4812 = vpop.f32.mrb[0].mxu0
    %v4813 = vadd.f32 0.0, %v4812
    %4814 = vmatprep.mubr.bf16.mxu0 %v1069
    %4815 = vmatmul.mubr.bf16.gmra.mrb[0].mxu0 %v1068
    %v4816 = vpop.f32.mrb[0].mxu0
    %v4817 = vadd.f32 0.0, %v4816
    %v4818 = vpop.f32.mrb[0].mxu0
    %v4819 = vadd.f32 0.0, %v4818
    %v4820 = vpop.f32.mrb[0].mxu0
    %v4821 = vadd.f32 0.0, %v4820
    %v4822 = vpop.f32.mrb[0].mxu0
    %v4823 = vadd.f32 0.0, %v4822
    %4824 = vmatprep.mubr.bf16.mxu0 %v1085
    %4825 = vmatmul.mubr.bf16.gmra.mrb[0].mxu0 %v1084
    %v4826 = vpop.f32.mrb[0].mxu0
    %v4827 = vadd.f32 0.0, %v4826
    %v4828 = vpop.f32.mrb[0].mxu0
    %v4829 = vadd.f32 0.0, %v4828
    %v4830 = vpop.f32.mrb[0].mxu0
    %v4831 = vadd.f32 0.0, %v4830
    %v4832 = vpop.f32.mrb[0].mxu0
    %v4833 = vadd.f32 0.0, %v4832
    %4834 = vmatprep.mubr.bf16.mxu0 %v1101
    %4835 = vmatmul.mubr.bf16.gmra.mrb[0].mxu0 %v1100
    %v4836 = vpop.f32.mrb[0].mxu0
    %v4837 = vadd.f32 0.0, %v4836
    %v4838 = vpop.f32.mrb[0].mxu0
    %v4839 = vadd.f32 0.0, %v4838
    %v4840 = vpop.f32.mrb[0].mxu0
    %v4841 = vadd.f32 0.0, %v4840
    %v4842 = vpop.f32.mrb[0].mxu0
    %v4843 = vadd.f32 0.0, %v4842
    %4844 = vmatprep.mubr.bf16.mxu0 %v1117
    %4845 = vmatmul.mubr.bf16.gmra.mrb[0].mxu0 %v1116
    %v4846 = vpop.f32.mrb[0].mxu0
    %v4847 = vadd.f32 0.0, %v4846
    %v4848 = vpop.f32.mrb[0].mxu0
    %v4849 = vadd.f32 0.0, %v4848
    %v4850 = vpop.f32.mrb[0].mxu0
    %v4851 = vadd.f32 0.0, %v4850
    %v4852 = vpop.f32.mrb[0].mxu0
    %v4853 = vadd.f32 0.0, %v4852
    %4854 = vmatprep.mubr.bf16.mxu0 %v1133
    %4855 = vmatmul.mubr.bf16.gmra.mrb[0].mxu0 %v1132
    %v4856 = vpop.f32.mrb[0].mxu0
    %v4857 = vadd.f32 0.0, %v4856
    %v4858 = vpop.f32.mrb[0].mxu0
    %v4859 = vadd.f32 0.0, %v4858
    %v4860 = vpop.f32.mrb[0].mxu0
    %v4861 = vadd.f32 0.0, %v4860
    %v4862 = vpop.f32.mrb[0].mxu0
    %v4863 = vadd.f32 0.0, %v4862
    %4864 = vmatprep.mubr.bf16.mxu0 %v1149
    %4865 = vmatmul.mubr.bf16.gmra.mrb[0].mxu0 %v1148
    %v4866 = vpop.f32.mrb[0].mxu0
    %v4867 = vadd.f32 0.0, %v4866
    %v4868 = vpop.f32.mrb[0].mxu0
    %v4869 = vadd.f32 0.0, %v4868
    %v4870 = vpop.f32.mrb[0].mxu0
    %v4871 = vadd.f32 0.0, %v4870
    %v4872 = vpop.f32.mrb[0].mxu0
    %v4873 = vadd.f32 0.0, %v4872
    %4874 = vmatprep.mubr.bf16.mxu0 %v1165
    %4875 = vmatmul.mubr.bf16.gmra.mrb[0].mxu0 %v1164
    %v4876 = vpop.f32.mrb[0].mxu0
    %v4877 = vadd.f32 0.0, %v4876
    %v4878 = vpop.f32.mrb[0].mxu0
    %v4879 = vadd.f32 0.0, %v4878
    %v4880 = vpop.f32.mrb[0].mxu0
    %v4881 = vadd.f32 0.0, %v4880
    %v4882 = vpop.f32.mrb[0].mxu0
    %v4883 = vadd.f32 0.0, %v4882
    %4884 = vdwg.mxu0
    %4885 = vmatprep.subr.bf16.mxu0 %v2911
    %4886 = vmatpush1.bf16.msra.mxu0 %v2910
    %4887 = vmatprep.subr.bf16.mxu0 %v2915
    %4888 = vmatpush1.bf16.msra.mxu0 %v2914
    %4889 = vmatprep.subr.bf16.mxu0 %v2919
    %4890 = vmatpush1.bf16.msra.mxu0 %v2918
    %4891 = vmatprep.subr.bf16.mxu0 %v2923
    %4892 = vmatpush1.bf16.msra.mxu0 %v2922
    %4893 = vmatprep.subr.bf16.mxu0 %v2927
    %4894 = vmatpush1.bf16.msra.mxu0 %v2926
    %4895 = vmatprep.subr.bf16.mxu0 %v2931
    %4896 = vmatpush1.bf16.msra.mxu0 %v2930
    %4897 = vmatprep.subr.bf16.mxu0 %v2935
    %4898 = vmatpush1.bf16.msra.mxu0 %v2934
    %4899 = vmatprep.subr.bf16.mxu0 %v2939
    %4900 = vmatpush1.bf16.msra.mxu0 %v2938
    %4901 = vmatprep.subr.bf16.mxu0 %v2943
    %4902 = vmatpush1.bf16.msra.mxu0 %v2942
    %4903 = vmatprep.subr.bf16.mxu0 %v2947
    %4904 = vmatpush1.bf16.msra.mxu0 %v2946
    %4905 = vmatprep.subr.bf16.mxu0 %v2951
    %4906 = vmatpush1.bf16.msra.mxu0 %v2950
    %4907 = vmatprep.subr.bf16.mxu0 %v2955
    %4908 = vmatpush1.bf16.msra.mxu0 %v2954
    %4909 = vmatprep.subr.bf16.mxu0 %v2959
    %4910 = vmatpush1.bf16.msra.mxu0 %v2958
    %4911 = vmatprep.subr.bf16.mxu0 %v2963
    %4912 = vmatpush1.bf16.msra.mxu0 %v2962
    %4913 = vmatprep.subr.bf16.mxu0 %v2967
    %4914 = vmatpush1.bf16.msra.mxu0 %v2966
    %4915 = vmatprep.subr.bf16.mxu0 %v2971
    %4916 = vmatpush1.bf16.msra.mxu0 %v2970
    %4917 = vmatprep.mubr.bf16.mxu0 %v1055
    %4918 = vmatmul.mubr.bf16.gmra.mrb[0].mxu0 %v1054
    %v4919 = vpop.f32.mrb[0].mxu0
    %v4920 = vadd.f32 %v4807, %v4919
    %v4921 = vpop.f32.mrb[0].mxu0
    %v4922 = vadd.f32 %v4809, %v4921
    %v4923 = vpop.f32.mrb[0].mxu0
    %v4924 = vadd.f32 %v4811, %v4923
    %v4925 = vpop.f32.mrb[0].mxu0
    %v4926 = vadd.f32 %v4813, %v4925
    %4927 = vmatprep.mubr.bf16.mxu0 %v1071
    %4928 = vmatmul.mubr.bf16.gmra.mrb[0].mxu0 %v1070
    %v4929 = vpop.f32.mrb[0].mxu0
    %v4930 = vadd.f32 %v4817, %v4929
    %v4931 = vpop.f32.mrb[0].mxu0
    %v4932 = vadd.f32 %v4819, %v4931
    %v4933 = vpop.f32.mrb[0].mxu0
    %v4934 = vadd.f32 %v4821, %v4933
    %v4935 = vpop.f32.mrb[0].mxu0
    %v4936 = vadd.f32 %v4823, %v4935
    %4937 = vmatprep.mubr.bf16.mxu0 %v1087
    %4938 = vmatmul.mubr.bf16.gmra.mrb[0].mxu0 %v1086
    %v4939 = vpop.f32.mrb[0].mxu0
    %v4940 = vadd.f32 %v4827, %v4939
    %v4941 = vpop.f32.mrb[0].mxu0
    %v4942 = vadd.f32 %v4829, %v4941
    %v4943 = vpop.f32.mrb[0].mxu0
    %v4944 = vadd.f32 %v4831, %v4943
    %v4945 = vpop.f32.mrb[0].mxu0
    %v4946 = vadd.f32 %v4833, %v4945
    %4947 = vmatprep.mubr.bf16.mxu0 %v1103
    %4948 = vmatmul.mubr.bf16.gmra.mrb[0].mxu0 %v1102
    %v4949 = vpop.f32.mrb[0].mxu0
    %v4950 = vadd.f32 %v4837, %v4949
    %v4951 = vpop.f32.mrb[0].mxu0
    %v4952 = vadd.f32 %v4839, %v4951
    %v4953 = vpop.f32.mrb[0].mxu0
    %v4954 = vadd.f32 %v4841, %v4953
    %v4955 = vpop.f32.mrb[0].mxu0
    %v4956 = vadd.f32 %v4843, %v4955
    %4957 = vmatprep.mubr.bf16.mxu0 %v1119
    %4958 = vmatmul.mubr.bf16.gmra.mrb[0].mxu0 %v1118
    %v4959 = vpop.f32.mrb[0].mxu0
    %v4960 = vadd.f32 %v4847, %v4959
    %v4961 = vpop.f32.mrb[0].mxu0
    %v4962 = vadd.f32 %v4849, %v4961
    %v4963 = vpop.f32.mrb[0].mxu0
    %v4964 = vadd.f32 %v4851, %v4963
    %v4965 = vpop.f32.mrb[0].mxu0
    %v4966 = vadd.f32 %v4853, %v4965
    %4967 = vmatprep.mubr.bf16.mxu0 %v1135
    %4968 = vmatmul.mubr.bf16.gmra.mrb[0].mxu0 %v1134
    %v4969 = vpop.f32.mrb[0].mxu0
    %v4970 = vadd.f32 %v4857, %v4969
    %v4971 = vpop.f32.mrb[0].mxu0
    %v4972 = vadd.f32 %v4859, %v4971
    %v4973 = vpop.f32.mrb[0].mxu0
    %v4974 = vadd.f32 %v4861, %v4973
    %v4975 = vpop.f32.mrb[0].mxu0
    %v4976 = vadd.f32 %v4863, %v4975
    %4977 = vmatprep.mubr.bf16.mxu0 %v1151
    %4978 = vmatmul.mubr.bf16.gmra.mrb[0].mxu0 %v1150
    %v4979 = vpop.f32.mrb[0].mxu0
    %v4980 = vadd.f32 %v4867, %v4979
    %v4981 = vpop.f32.mrb[0].mxu0
    %v4982 = vadd.f32 %v4869, %v4981
    %v4983 = vpop.f32.mrb[0].mxu0
    %v4984 = vadd.f32 %v4871, %v4983
    %v4985 = vpop.f32.mrb[0].mxu0
    %v4986 = vadd.f32 %v4873, %v4985
    %4987 = vmatprep.mubr.bf16.mxu0 %v1167
    %4988 = vmatmul.mubr.bf16.gmra.mrb[0].mxu0 %v1166
    %v4989 = vpop.f32.mrb[0].mxu0
    %v4990 = vadd.f32 %v4877, %v4989
    %v4991 = vpop.f32.mrb[0].mxu0
    %v4992 = vadd.f32 %v4879, %v4991
    %v4993 = vpop.f32.mrb[0].mxu0
    %v4994 = vadd.f32 %v4881, %v4993
    %v4995 = vpop.f32.mrb[0].mxu0
    %v4996 = vadd.f32 %v4883, %v4995
    %4997 = vdwg.mxu0
    %4998 = vmatprep.subr.bf16.mxu0 %v2975
    %4999 = vmatpush1.bf16.msra.mxu0 %v2974
    %5000 = vmatprep.subr.bf16.mxu0 %v2979
    %5001 = vmatpush1.bf16.msra.mxu0 %v2978
    %5002 = vmatprep.subr.bf16.mxu0 %v2983
    %5003 = vmatpush1.bf16.msra.mxu0 %v2982
    %5004 = vmatprep.subr.bf16.mxu0 %v2987
    %5005 = vmatpush1.bf16.msra.mxu0 %v2986
    %5006 = vmatprep.subr.bf16.mxu0 %v2991
    %5007 = vmatpush1.bf16.msra.mxu0 %v2990
    %5008 = vmatprep.subr.bf16.mxu0 %v2995
    %5009 = vmatpush1.bf16.msra.mxu0 %v2994
    %5010 = vmatprep.subr.bf16.mxu0 %v2999
    %5011 = vmatpush1.bf16.msra.mxu0 %v2998
    %5012 = vmatprep.subr.bf16.mxu0 %v3003
    %5013 = vmatpush1.bf16.msra.mxu0 %v3002
    %5014 = vmatprep.subr.bf16.mxu0 %v3007
    %5015 = vmatpush1.bf16.msra.mxu0 %v3006
    %5016 = vmatprep.subr.bf16.mxu0 %v3011
    %5017 = vmatpush1.bf16.msra.mxu0 %v3010
    %5018 = vmatprep.subr.bf16.mxu0 %v3015
    %5019 = vmatpush1.bf16.msra.mxu0 %v3014
    %5020 = vmatprep.subr.bf16.mxu0 %v3019
    %5021 = vmatpush1.bf16.msra.mxu0 %v3018
    %5022 = vmatprep.subr.bf16.mxu0 %v3023
    %5023 = vmatpush1.bf16.msra.mxu0 %v3022
    %5024 = vmatprep.subr.bf16.mxu0 %v3027
    %5025 = vmatpush1.bf16.msra.mxu0 %v3026
    %5026 = vmatprep.subr.bf16.mxu0 %v3031
    %5027 = vmatpush1.bf16.msra.mxu0 %v3030
    %5028 = vmatprep.subr.bf16.mxu0 %v3035
    %5029 = vmatpush1.bf16.msra.mxu0 %v3034
    %5030 = vmatprep.mubr.bf16.mxu0 %v1057
    %5031 = vmatmul.mubr.bf16.gmra.mrb[0].mxu0 %v1056
    %v5032 = vpop.f32.mrb[0].mxu0
    %v5033 = vadd.f32 %v4920, %v5032
    %v5034 = vpop.f32.mrb[0].mxu0
    %v5035 = vadd.f32 %v4922, %v5034
    %v5036 = vpop.f32.mrb[0].mxu0
    %v5037 = vadd.f32 %v4924, %v5036
    %v5038 = vpop.f32.mrb[0].mxu0
    %v5039 = vadd.f32 %v4926, %v5038
    %5040 = vmatprep.mubr.bf16.mxu0 %v1073
    %5041 = vmatmul.mubr.bf16.gmra.mrb[0].mxu0 %v1072
    %v5042 = vpop.f32.mrb[0].mxu0
    %v5043 = vadd.f32 %v4930, %v5042
    %v5044 = vpop.f32.mrb[0].mxu0
    %v5045 = vadd.f32 %v4932, %v5044
    %v5046 = vpop.f32.mrb[0].mxu0
    %v5047 = vadd.f32 %v4934, %v5046
    %v5048 = vpop.f32.mrb[0].mxu0
    %v5049 = vadd.f32 %v4936, %v5048
    %5050 = vmatprep.mubr.bf16.mxu0 %v1089
    %5051 = vmatmul.mubr.bf16.gmra.mrb[0].mxu0 %v1088
    %v5052 = vpop.f32.mrb[0].mxu0
    %v5053 = vadd.f32 %v4940, %v5052
    %v5054 = vpop.f32.mrb[0].mxu0
    %v5055 = vadd.f32 %v4942, %v5054
    %v5056 = vpop.f32.mrb[0].mxu0
    %v5057 = vadd.f32 %v4944, %v5056
    %v5058 = vpop.f32.mrb[0].mxu0
    %v5059 = vadd.f32 %v4946, %v5058
    %5060 = vmatprep.mubr.bf16.mxu0 %v1105
    %5061 = vmatmul.mubr.bf16.gmra.mrb[0].mxu0 %v1104
    %v5062 = vpop.f32.mrb[0].mxu0
    %v5063 = vadd.f32 %v4950, %v5062
    %v5064 = vpop.f32.mrb[0].mxu0
    %v5065 = vadd.f32 %v4952, %v5064
    %v5066 = vpop.f32.mrb[0].mxu0
    %v5067 = vadd.f32 %v4954, %v5066
    %v5068 = vpop.f32.mrb[0].mxu0
    %v5069 = vadd.f32 %v4956, %v5068
    %5070 = vmatprep.mubr.bf16.mxu0 %v1121
    %5071 = vmatmul.mubr.bf16.gmra.mrb[0].mxu0 %v1120
    %v5072 = vpop.f32.mrb[0].mxu0
    %v5073 = vadd.f32 %v4960, %v5072
    %v5074 = vpop.f32.mrb[0].mxu0
    %v5075 = vadd.f32 %v4962, %v5074
    %v5076 = vpop.f32.mrb[0].mxu0
    %v5077 = vadd.f32 %v4964, %v5076
    %v5078 = vpop.f32.mrb[0].mxu0
    %v5079 = vadd.f32 %v4966, %v5078
    %5080 = vmatprep.mubr.bf16.mxu0 %v1137
    %5081 = vmatmul.mubr.bf16.gmra.mrb[0].mxu0 %v1136
    %v5082 = vpop.f32.mrb[0].mxu0
    %v5083 = vadd.f32 %v4970, %v5082
    %v5084 = vpop.f32.mrb[0].mxu0
    %v5085 = vadd.f32 %v4972, %v5084
    %v5086 = vpop.f32.mrb[0].mxu0
    %v5087 = vadd.f32 %v4974, %v5086
    %v5088 = vpop.f32.mrb[0].mxu0
    %v5089 = vadd.f32 %v4976, %v5088
    %5090 = vmatprep.mubr.bf16.mxu0 %v1153
    %5091 = vmatmul.mubr.bf16.gmra.mrb[0].mxu0 %v1152
    %v5092 = vpop.f32.mrb[0].mxu0
    %v5093 = vadd.f32 %v4980, %v5092
    %v5094 = vpop.f32.mrb[0].mxu0
    %v5095 = vadd.f32 %v4982, %v5094
    %v5096 = vpop.f32.mrb[0].mxu0
    %v5097 = vadd.f32 %v4984, %v5096
    %v5098 = vpop.f32.mrb[0].mxu0
    %v5099 = vadd.f32 %v4986, %v5098
    %5100 = vmatprep.mubr.bf16.mxu0 %v1169
    %5101 = vmatmul.mubr.bf16.gmra.mrb[0].mxu0 %v1168
    %v5102 = vpop.f32.mrb[0].mxu0
    %v5103 = vadd.f32 %v4990, %v5102
    %v5104 = vpop.f32.mrb[0].mxu0
    %v5105 = vadd.f32 %v4992, %v5104
    %v5106 = vpop.f32.mrb[0].mxu0
    %v5107 = vadd.f32 %v4994, %v5106
    %v5108 = vpop.f32.mrb[0].mxu0
    %v5109 = vadd.f32 %v4996, %v5108
    %5110 = vdwg.mxu0
    %5111 = vmatprep.subr.bf16.mxu0 %v3039
    %5112 = vmatpush1.bf16.msra.mxu0 %v3038
    %5113 = vmatprep.subr.bf16.mxu0 %v3043
    %5114 = vmatpush1.bf16.msra.mxu0 %v3042
    %5115 = vmatprep.subr.bf16.mxu0 %v3047
    %5116 = vmatpush1.bf16.msra.mxu0 %v3046
    %5117 = vmatprep.subr.bf16.mxu0 %v3051
    %5118 = vmatpush1.bf16.msra.mxu0 %v3050
    %5119 = vmatprep.subr.bf16.mxu0 %v3055
    %5120 = vmatpush1.bf16.msra.mxu0 %v3054
    %5121 = vmatprep.subr.bf16.mxu0 %v3059
    %5122 = vmatpush1.bf16.msra.mxu0 %v3058
    %5123 = vmatprep.subr.bf16.mxu0 %v3063
    %5124 = vmatpush1.bf16.msra.mxu0 %v3062
    %5125 = vmatprep.subr.bf16.mxu0 %v3067
    %5126 = vmatpush1.bf16.msra.mxu0 %v3066
    %5127 = vmatprep.subr.bf16.mxu0 %v3071
    %5128 = vmatpush1.bf16.msra.mxu0 %v3070
    %5129 = vmatprep.subr.bf16.mxu0 %v3075
    %5130 = vmatpush1.bf16.msra.mxu0 %v3074
    %5131 = vmatprep.subr.bf16.mxu0 %v3079
    %5132 = vmatpush1.bf16.msra.mxu0 %v3078
    %5133 = vmatprep.subr.bf16.mxu0 %v3083
    %5134 = vmatpush1.bf16.msra.mxu0 %v3082
    %5135 = vmatprep.subr.bf16.mxu0 %v3087
    %5136 = vmatpush1.bf16.msra.mxu0 %v3086
    %5137 = vmatprep.subr.bf16.mxu0 %v3091
    %5138 = vmatpush1.bf16.msra.mxu0 %v3090
    %5139 = vmatprep.subr.bf16.mxu0 %v3095
    %5140 = vmatpush1.bf16.msra.mxu0 %v3094
    %5141 = vmatprep.subr.bf16.mxu0 %v3099
    %5142 = vmatpush1.bf16.msra.mxu0 %v3098
    %5143 = vmatprep.mubr.bf16.mxu0 %v1059
    %5144 = vmatmul.mubr.bf16.gmra.mrb[0].mxu0 %v1058
    %v5145 = vpop.f32.mrb[0].mxu0
    %v5146 = vadd.f32 %v5033, %v5145
    %v5147 = vpop.f32.mrb[0].mxu0
    %v5148 = vadd.f32 %v5035, %v5147
    %v5149 = vpop.f32.mrb[0].mxu0
    %v5150 = vadd.f32 %v5037, %v5149
    %v5151 = vpop.f32.mrb[0].mxu0
    %v5152 = vadd.f32 %v5039, %v5151
    %5153 = vmatprep.mubr.bf16.mxu0 %v1075
    %5154 = vmatmul.mubr.bf16.gmra.mrb[0].mxu0 %v1074
    %v5155 = vpop.f32.mrb[0].mxu0
    %v5156 = vadd.f32 %v5043, %v5155
    %v5157 = vpop.f32.mrb[0].mxu0
    %v5158 = vadd.f32 %v5045, %v5157
    %v5159 = vpop.f32.mrb[0].mxu0
    %v5160 = vadd.f32 %v5047, %v5159
    %v5161 = vpop.f32.mrb[0].mxu0
    %v5162 = vadd.f32 %v5049, %v5161
    %5163 = vmatprep.mubr.bf16.mxu0 %v1091
    %5164 = vmatmul.mubr.bf16.gmra.mrb[0].mxu0 %v1090
    %v5165 = vpop.f32.mrb[0].mxu0
    %v5166 = vadd.f32 %v5053, %v5165
    %v5167 = vpop.f32.mrb[0].mxu0
    %v5168 = vadd.f32 %v5055, %v5167
    %v5169 = vpop.f32.mrb[0].mxu0
    %v5170 = vadd.f32 %v5057, %v5169
    %v5171 = vpop.f32.mrb[0].mxu0
    %v5172 = vadd.f32 %v5059, %v5171
    %5173 = vmatprep.mubr.bf16.mxu0 %v1107
    %5174 = vmatmul.mubr.bf16.gmra.mrb[0].mxu0 %v1106
    %v5175 = vpop.f32.mrb[0].mxu0
    %v5176 = vadd.f32 %v5063, %v5175
    %v5177 = vpop.f32.mrb[0].mxu0
    %v5178 = vadd.f32 %v5065, %v5177
    %v5179 = vpop.f32.mrb[0].mxu0
    %v5180 = vadd.f32 %v5067, %v5179
    %v5181 = vpop.f32.mrb[0].mxu0
    %v5182 = vadd.f32 %v5069, %v5181
    %5183 = vmatprep.mubr.bf16.mxu0 %v1123
    %5184 = vmatmul.mubr.bf16.gmra.mrb[0].mxu0 %v1122
    %v5185 = vpop.f32.mrb[0].mxu0
    %v5186 = vadd.f32 %v5073, %v5185
    %v5187 = vpop.f32.mrb[0].mxu0
    %v5188 = vadd.f32 %v5075, %v5187
    %v5189 = vpop.f32.mrb[0].mxu0
    %v5190 = vadd.f32 %v5077, %v5189
    %v5191 = vpop.f32.mrb[0].mxu0
    %v5192 = vadd.f32 %v5079, %v5191
    %5193 = vmatprep.mubr.bf16.mxu0 %v1139
    %5194 = vmatmul.mubr.bf16.gmra.mrb[0].mxu0 %v1138
    %v5195 = vpop.f32.mrb[0].mxu0
    %v5196 = vadd.f32 %v5083, %v5195
    %v5197 = vpop.f32.mrb[0].mxu0
    %v5198 = vadd.f32 %v5085, %v5197
    %v5199 = vpop.f32.mrb[0].mxu0
    %v5200 = vadd.f32 %v5087, %v5199
    %v5201 = vpop.f32.mrb[0].mxu0
    %v5202 = vadd.f32 %v5089, %v5201
    %5203 = vmatprep.mubr.bf16.mxu0 %v1155
    %5204 = vmatmul.mubr.bf16.gmra.mrb[0].mxu0 %v1154
    %v5205 = vpop.f32.mrb[0].mxu0
    %v5206 = vadd.f32 %v5093, %v5205
    %v5207 = vpop.f32.mrb[0].mxu0
    %v5208 = vadd.f32 %v5095, %v5207
    %v5209 = vpop.f32.mrb[0].mxu0
    %v5210 = vadd.f32 %v5097, %v5209
    %v5211 = vpop.f32.mrb[0].mxu0
    %v5212 = vadd.f32 %v5099, %v5211
    %5213 = vmatprep.mubr.bf16.mxu0 %v1171
    %5214 = vmatmul.mubr.bf16.gmra.mrb[0].mxu0 %v1170
    %v5215 = vpop.f32.mrb[0].mxu0
    %v5216 = vadd.f32 %v5103, %v5215
    %v5217 = vpop.f32.mrb[0].mxu0
    %v5218 = vadd.f32 %v5105, %v5217
    %v5219 = vpop.f32.mrb[0].mxu0
    %v5220 = vadd.f32 %v5107, %v5219
    %v5221 = vpop.f32.mrb[0].mxu0
    %v5222 = vadd.f32 %v5109, %v5221
    %5223 = vdwg.mxu0
    %5224 = vmatprep.subr.bf16.mxu0 %v3103
    %5225 = vmatpush1.bf16.msra.mxu0 %v3102
    %5226 = vmatprep.subr.bf16.mxu0 %v3107
    %5227 = vmatpush1.bf16.msra.mxu0 %v3106
    %5228 = vmatprep.subr.bf16.mxu0 %v3111
    %5229 = vmatpush1.bf16.msra.mxu0 %v3110
    %5230 = vmatprep.subr.bf16.mxu0 %v3115
    %5231 = vmatpush1.bf16.msra.mxu0 %v3114
    %5232 = vmatprep.subr.bf16.mxu0 %v3119
    %5233 = vmatpush1.bf16.msra.mxu0 %v3118
    %5234 = vmatprep.subr.bf16.mxu0 %v3123
    %5235 = vmatpush1.bf16.msra.mxu0 %v3122
    %5236 = vmatprep.subr.bf16.mxu0 %v3127
    %5237 = vmatpush1.bf16.msra.mxu0 %v3126
    %5238 = vmatprep.subr.bf16.mxu0 %v3131
    %5239 = vmatpush1.bf16.msra.mxu0 %v3130
    %5240 = vmatprep.subr.bf16.mxu0 %v3135
    %5241 = vmatpush1.bf16.msra.mxu0 %v3134
    %5242 = vmatprep.subr.bf16.mxu0 %v3139
    %5243 = vmatpush1.bf16.msra.mxu0 %v3138
    %5244 = vmatprep.subr.bf16.mxu0 %v3143
    %5245 = vmatpush1.bf16.msra.mxu0 %v3142
    %5246 = vmatprep.subr.bf16.mxu0 %v3147
    %5247 = vmatpush1.bf16.msra.mxu0 %v3146
    %5248 = vmatprep.subr.bf16.mxu0 %v3151
    %5249 = vmatpush1.bf16.msra.mxu0 %v3150
    %5250 = vmatprep.subr.bf16.mxu0 %v3155
    %5251 = vmatpush1.bf16.msra.mxu0 %v3154
    %5252 = vmatprep.subr.bf16.mxu0 %v3159
    %5253 = vmatpush1.bf16.msra.mxu0 %v3158
    %5254 = vmatprep.subr.bf16.mxu0 %v3163
    %5255 = vmatpush1.bf16.msra.mxu0 %v3162
    %5256 = vmatprep.mubr.bf16.mxu0 %v1061
    %5257 = vmatmul.mubr.bf16.gmra.mrb[0].mxu0 %v1060
    %v5258 = vpop.f32.mrb[0].mxu0
    %v5259 = vadd.f32 %v5146, %v5258
    %v5260 = vpop.f32.mrb[0].mxu0
    %v5261 = vadd.f32 %v5148, %v5260
    %v5262 = vpop.f32.mrb[0].mxu0
    %v5263 = vadd.f32 %v5150, %v5262
    %v5264 = vpop.f32.mrb[0].mxu0
    %v5265 = vadd.f32 %v5152, %v5264
    %5266 = vmatprep.mubr.bf16.mxu0 %v1077
    %5267 = vmatmul.mubr.bf16.gmra.mrb[0].mxu0 %v1076
    %v5268 = vpop.f32.mrb[0].mxu0
    %v5269 = vadd.f32 %v5156, %v5268
    %v5270 = vpop.f32.mrb[0].mxu0
    %v5271 = vadd.f32 %v5158, %v5270
    %v5272 = vpop.f32.mrb[0].mxu0
    %v5273 = vadd.f32 %v5160, %v5272
    %v5274 = vpop.f32.mrb[0].mxu0
    %v5275 = vadd.f32 %v5162, %v5274
    %5276 = vmatprep.mubr.bf16.mxu0 %v1093
    %5277 = vmatmul.mubr.bf16.gmra.mrb[0].mxu0 %v1092
    %v5278 = vpop.f32.mrb[0].mxu0
    %v5279 = vadd.f32 %v5166, %v5278
    %v5280 = vpop.f32.mrb[0].mxu0
    %v5281 = vadd.f32 %v5168, %v5280
    %v5282 = vpop.f32.mrb[0].mxu0
    %v5283 = vadd.f32 %v5170, %v5282
    %v5284 = vpop.f32.mrb[0].mxu0
    %v5285 = vadd.f32 %v5172, %v5284
    %5286 = vmatprep.mubr.bf16.mxu0 %v1109
    %5287 = vmatmul.mubr.bf16.gmra.mrb[0].mxu0 %v1108
    %v5288 = vpop.f32.mrb[0].mxu0
    %v5289 = vadd.f32 %v5176, %v5288
    %v5290 = vpop.f32.mrb[0].mxu0
    %v5291 = vadd.f32 %v5178, %v5290
    %v5292 = vpop.f32.mrb[0].mxu0
    %v5293 = vadd.f32 %v5180, %v5292
    %v5294 = vpop.f32.mrb[0].mxu0
    %v5295 = vadd.f32 %v5182, %v5294
    %5296 = vmatprep.mubr.bf16.mxu0 %v1125
    %5297 = vmatmul.mubr.bf16.gmra.mrb[0].mxu0 %v1124
    %v5298 = vpop.f32.mrb[0].mxu0
    %v5299 = vadd.f32 %v5186, %v5298
    %v5300 = vpop.f32.mrb[0].mxu0
    %v5301 = vadd.f32 %v5188, %v5300
    %v5302 = vpop.f32.mrb[0].mxu0
    %v5303 = vadd.f32 %v5190, %v5302
    %v5304 = vpop.f32.mrb[0].mxu0
    %v5305 = vadd.f32 %v5192, %v5304
    %5306 = vmatprep.mubr.bf16.mxu0 %v1141
    %5307 = vmatmul.mubr.bf16.gmra.mrb[0].mxu0 %v1140
    %v5308 = vpop.f32.mrb[0].mxu0
    %v5309 = vadd.f32 %v5196, %v5308
    %v5310 = vpop.f32.mrb[0].mxu0
    %v5311 = vadd.f32 %v5198, %v5310
    %v5312 = vpop.f32.mrb[0].mxu0
    %v5313 = vadd.f32 %v5200, %v5312
    %v5314 = vpop.f32.mrb[0].mxu0
    %v5315 = vadd.f32 %v5202, %v5314
    %5316 = vmatprep.mubr.bf16.mxu0 %v1157
    %5317 = vmatmul.mubr.bf16.gmra.mrb[0].mxu0 %v1156
    %v5318 = vpop.f32.mrb[0].mxu0
    %v5319 = vadd.f32 %v5206, %v5318
    %v5320 = vpop.f32.mrb[0].mxu0
    %v5321 = vadd.f32 %v5208, %v5320
    %v5322 = vpop.f32.mrb[0].mxu0
    %v5323 = vadd.f32 %v5210, %v5322
    %v5324 = vpop.f32.mrb[0].mxu0
    %v5325 = vadd.f32 %v5212, %v5324
    %5326 = vmatprep.mubr.bf16.mxu0 %v1173
    %5327 = vmatmul.mubr.bf16.gmra.mrb[0].mxu0 %v1172
    %v5328 = vpop.f32.mrb[0].mxu0
    %v5329 = vadd.f32 %v5216, %v5328
    %v5330 = vpop.f32.mrb[0].mxu0
    %v5331 = vadd.f32 %v5218, %v5330
    %v5332 = vpop.f32.mrb[0].mxu0
    %v5333 = vadd.f32 %v5220, %v5332
    %v5334 = vpop.f32.mrb[0].mxu0
    %v5335 = vadd.f32 %v5222, %v5334
    %5336 = vdwg.mxu0
    %5337 = vmatprep.subr.bf16.mxu0 %v3167
    %5338 = vmatpush1.bf16.msra.mxu0 %v3166
    %5339 = vmatprep.subr.bf16.mxu0 %v3171
    %5340 = vmatpush1.bf16.msra.mxu0 %v3170
    %5341 = vmatprep.subr.bf16.mxu0 %v3175
    %5342 = vmatpush1.bf16.msra.mxu0 %v3174
    %5343 = vmatprep.subr.bf16.mxu0 %v3179
    %5344 = vmatpush1.bf16.msra.mxu0 %v3178
    %5345 = vmatprep.subr.bf16.mxu0 %v3183
    %5346 = vmatpush1.bf16.msra.mxu0 %v3182
    %5347 = vmatprep.subr.bf16.mxu0 %v3187
    %5348 = vmatpush1.bf16.msra.mxu0 %v3186
    %5349 = vmatprep.subr.bf16.mxu0 %v3191
    %5350 = vmatpush1.bf16.msra.mxu0 %v3190
    %5351 = vmatprep.subr.bf16.mxu0 %v3195
    %5352 = vmatpush1.bf16.msra.mxu0 %v3194
    %5353 = vmatprep.subr.bf16.mxu0 %v3199
    %5354 = vmatpush1.bf16.msra.mxu0 %v3198
    %5355 = vmatprep.subr.bf16.mxu0 %v3203
    %5356 = vmatpush1.bf16.msra.mxu0 %v3202
    %5357 = vmatprep.subr.bf16.mxu0 %v3207
    %5358 = vmatpush1.bf16.msra.mxu0 %v3206
    %5359 = vmatprep.subr.bf16.mxu0 %v3211
    %5360 = vmatpush1.bf16.msra.mxu0 %v3210
    %5361 = vmatprep.subr.bf16.mxu0 %v3215
    %5362 = vmatpush1.bf16.msra.mxu0 %v3214
    %5363 = vmatprep.subr.bf16.mxu0 %v3219
    %5364 = vmatpush1.bf16.msra.mxu0 %v3218
    %5365 = vmatprep.subr.bf16.mxu0 %v3223
    %5366 = vmatpush1.bf16.msra.mxu0 %v3222
    %5367 = vmatprep.subr.bf16.mxu0 %v3227
    %5368 = vmatpush1.bf16.msra.mxu0 %v3226
    %5369 = vmatprep.mubr.bf16.mxu0 %v1063
    %5370 = vmatmul.mubr.bf16.gmra.mrb[0].mxu0 %v1062
    %v5371 = vpop.f32.mrb[0].mxu0
    %v5372 = vadd.f32 %v5259, %v5371
    %v5373 = vpop.f32.mrb[0].mxu0
    %v5374 = vadd.f32 %v5261, %v5373
    %v5375 = vpop.f32.mrb[0].mxu0
    %v5376 = vadd.f32 %v5263, %v5375
    %v5377 = vpop.f32.mrb[0].mxu0
    %v5378 = vadd.f32 %v5265, %v5377
    %5379 = vmatprep.mubr.bf16.mxu0 %v1079
    %5380 = vmatmul.mubr.bf16.gmra.mrb[0].mxu0 %v1078
    %v5381 = vpop.f32.mrb[0].mxu0
    %v5382 = vadd.f32 %v5269, %v5381
    %v5383 = vpop.f32.mrb[0].mxu0
    %v5384 = vadd.f32 %v5271, %v5383
    %v5385 = vpop.f32.mrb[0].mxu0
    %v5386 = vadd.f32 %v5273, %v5385
    %v5387 = vpop.f32.mrb[0].mxu0
    %v5388 = vadd.f32 %v5275, %v5387
    %5389 = vmatprep.mubr.bf16.mxu0 %v1095
    %5390 = vmatmul.mubr.bf16.gmra.mrb[0].mxu0 %v1094
    %v5391 = vpop.f32.mrb[0].mxu0
    %v5392 = vadd.f32 %v5279, %v5391
    %v5393 = vpop.f32.mrb[0].mxu0
    %v5394 = vadd.f32 %v5281, %v5393
    %v5395 = vpop.f32.mrb[0].mxu0
    %v5396 = vadd.f32 %v5283, %v5395
    %v5397 = vpop.f32.mrb[0].mxu0
    %v5398 = vadd.f32 %v5285, %v5397
    %5399 = vmatprep.mubr.bf16.mxu0 %v1111
    %5400 = vmatmul.mubr.bf16.gmra.mrb[0].mxu0 %v1110
    %v5401 = vpop.f32.mrb[0].mxu0
    %v5402 = vadd.f32 %v5289, %v5401
    %v5403 = vpop.f32.mrb[0].mxu0
    %v5404 = vadd.f32 %v5291, %v5403
    %v5405 = vpop.f32.mrb[0].mxu0
    %v5406 = vadd.f32 %v5293, %v5405
    %v5407 = vpop.f32.mrb[0].mxu0
    %v5408 = vadd.f32 %v5295, %v5407
    %5409 = vmatprep.mubr.bf16.mxu0 %v1127
    %5410 = vmatmul.mubr.bf16.gmra.mrb[0].mxu0 %v1126
    %v5411 = vpop.f32.mrb[0].mxu0
    %v5412 = vadd.f32 %v5299, %v5411
    %v5413 = vpop.f32.mrb[0].mxu0
    %v5414 = vadd.f32 %v5301, %v5413
    %v5415 = vpop.f32.mrb[0].mxu0
    %v5416 = vadd.f32 %v5303, %v5415
    %v5417 = vpop.f32.mrb[0].mxu0
    %v5418 = vadd.f32 %v5305, %v5417
    %5419 = vmatprep.mubr.bf16.mxu0 %v1143
    %5420 = vmatmul.mubr.bf16.gmra.mrb[0].mxu0 %v1142
    %v5421 = vpop.f32.mrb[0].mxu0
    %v5422 = vadd.f32 %v5309, %v5421
    %v5423 = vpop.f32.mrb[0].mxu0
    %v5424 = vadd.f32 %v5311, %v5423
    %v5425 = vpop.f32.mrb[0].mxu0
    %v5426 = vadd.f32 %v5313, %v5425
    %v5427 = vpop.f32.mrb[0].mxu0
    %v5428 = vadd.f32 %v5315, %v5427
    %5429 = vmatprep.mubr.bf16.mxu0 %v1159
    %5430 = vmatmul.mubr.bf16.gmra.mrb[0].mxu0 %v1158
    %v5431 = vpop.f32.mrb[0].mxu0
    %v5432 = vadd.f32 %v5319, %v5431
    %v5433 = vpop.f32.mrb[0].mxu0
    %v5434 = vadd.f32 %v5321, %v5433
    %v5435 = vpop.f32.mrb[0].mxu0
    %v5436 = vadd.f32 %v5323, %v5435
    %v5437 = vpop.f32.mrb[0].mxu0
    %v5438 = vadd.f32 %v5325, %v5437
    %5439 = vmatprep.mubr.bf16.mxu0 %v1175
    %5440 = vmatmul.mubr.bf16.gmra.mrb[0].mxu0 %v1174
    %v5441 = vpop.f32.mrb[0].mxu0
    %v5442 = vadd.f32 %v5329, %v5441
    %v5443 = vpop.f32.mrb[0].mxu0
    %v5444 = vadd.f32 %v5331, %v5443
    %v5445 = vpop.f32.mrb[0].mxu0
    %v5446 = vadd.f32 %v5333, %v5445
    %v5447 = vpop.f32.mrb[0].mxu0
    %v5448 = vadd.f32 %v5335, %v5447
    %5449 = vdwg.mxu0
    %5450 = vmatprep.subr.bf16.mxu0 %v3231
    %5451 = vmatpush1.bf16.msra.mxu0 %v3230
    %5452 = vmatprep.subr.bf16.mxu0 %v3235
    %5453 = vmatpush1.bf16.msra.mxu0 %v3234
    %5454 = vmatprep.subr.bf16.mxu0 %v3239
    %5455 = vmatpush1.bf16.msra.mxu0 %v3238
    %5456 = vmatprep.subr.bf16.mxu0 %v3243
    %5457 = vmatpush1.bf16.msra.mxu0 %v3242
    %5458 = vmatprep.subr.bf16.mxu0 %v3247
    %5459 = vmatpush1.bf16.msra.mxu0 %v3246
    %5460 = vmatprep.subr.bf16.mxu0 %v3251
    %5461 = vmatpush1.bf16.msra.mxu0 %v3250
    %5462 = vmatprep.subr.bf16.mxu0 %v3255
    %5463 = vmatpush1.bf16.msra.mxu0 %v3254
    %5464 = vmatprep.subr.bf16.mxu0 %v3259
    %5465 = vmatpush1.bf16.msra.mxu0 %v3258
    %5466 = vmatprep.subr.bf16.mxu0 %v3263
    %5467 = vmatpush1.bf16.msra.mxu0 %v3262
    %5468 = vmatprep.subr.bf16.mxu0 %v3267
    %5469 = vmatpush1.bf16.msra.mxu0 %v3266
    %5470 = vmatprep.subr.bf16.mxu0 %v3271
    %5471 = vmatpush1.bf16.msra.mxu0 %v3270
    %5472 = vmatprep.subr.bf16.mxu0 %v3275
    %5473 = vmatpush1.bf16.msra.mxu0 %v3274
    %5474 = vmatprep.subr.bf16.mxu0 %v3279
    %5475 = vmatpush1.bf16.msra.mxu0 %v3278
    %5476 = vmatprep.subr.bf16.mxu0 %v3283
    %5477 = vmatpush1.bf16.msra.mxu0 %v3282
    %5478 = vmatprep.subr.bf16.mxu0 %v3287
    %5479 = vmatpush1.bf16.msra.mxu0 %v3286
    %5480 = vmatprep.subr.bf16.mxu0 %v3291
    %5481 = vmatpush1.bf16.msra.mxu0 %v3290
    %5482 = vmatprep.mubr.bf16.mxu0 %v1065
    %5483 = vmatmul.mubr.bf16.gmra.mrb[0].mxu0 %v1064
    %v5484 = vpop.f32.mrb[0].mxu0
    %v5485 = vadd.f32 %v5372, %v5484
    %v5486 = vpop.f32.mrb[0].mxu0
    %v5487 = vadd.f32 %v5374, %v5486
    %v5488 = vpop.f32.mrb[0].mxu0
    %v5489 = vadd.f32 %v5376, %v5488
    %v5490 = vpop.f32.mrb[0].mxu0
    %v5491 = vadd.f32 %v5378, %v5490
    %5492 = vmatprep.mubr.bf16.mxu0 %v1081
    %5493 = vmatmul.mubr.bf16.gmra.mrb[0].mxu0 %v1080
    %v5494 = vpop.f32.mrb[0].mxu0
    %v5495 = vadd.f32 %v5382, %v5494
    %v5496 = vpop.f32.mrb[0].mxu0
    %v5497 = vadd.f32 %v5384, %v5496
    %v5498 = vpop.f32.mrb[0].mxu0
    %v5499 = vadd.f32 %v5386, %v5498
    %v5500 = vpop.f32.mrb[0].mxu0
    %v5501 = vadd.f32 %v5388, %v5500
    %5502 = vmatprep.mubr.bf16.mxu0 %v1097
    %5503 = vmatmul.mubr.bf16.gmra.mrb[0].mxu0 %v1096
    %v5504 = vpop.f32.mrb[0].mxu0
    %v5505 = vadd.f32 %v5392, %v5504
    %v5506 = vpop.f32.mrb[0].mxu0
    %v5507 = vadd.f32 %v5394, %v5506
    %v5508 = vpop.f32.mrb[0].mxu0
    %v5509 = vadd.f32 %v5396, %v5508
    %v5510 = vpop.f32.mrb[0].mxu0
    %v5511 = vadd.f32 %v5398, %v5510
    %5512 = vmatprep.mubr.bf16.mxu0 %v1113
    %5513 = vmatmul.mubr.bf16.gmra.mrb[0].mxu0 %v1112
    %v5514 = vpop.f32.mrb[0].mxu0
    %v5515 = vadd.f32 %v5402, %v5514
    %v5516 = vpop.f32.mrb[0].mxu0
    %v5517 = vadd.f32 %v5404, %v5516
    %v5518 = vpop.f32.mrb[0].mxu0
    %v5519 = vadd.f32 %v5406, %v5518
    %v5520 = vpop.f32.mrb[0].mxu0
    %v5521 = vadd.f32 %v5408, %v5520
    %5522 = vmatprep.mubr.bf16.mxu0 %v1129
    %5523 = vmatmul.mubr.bf16.gmra.mrb[0].mxu0 %v1128
    %v5524 = vpop.f32.mrb[0].mxu0
    %v5525 = vadd.f32 %v5412, %v5524
    %v5526 = vpop.f32.mrb[0].mxu0
    %v5527 = vadd.f32 %v5414, %v5526
    %v5528 = vpop.f32.mrb[0].mxu0
    %v5529 = vadd.f32 %v5416, %v5528
    %v5530 = vpop.f32.mrb[0].mxu0
    %v5531 = vadd.f32 %v5418, %v5530
    %5532 = vmatprep.mubr.bf16.mxu0 %v1145
    %5533 = vmatmul.mubr.bf16.gmra.mrb[0].mxu0 %v1144
    %v5534 = vpop.f32.mrb[0].mxu0
    %v5535 = vadd.f32 %v5422, %v5534
    %v5536 = vpop.f32.mrb[0].mxu0
    %v5537 = vadd.f32 %v5424, %v5536
    %v5538 = vpop.f32.mrb[0].mxu0
    %v5539 = vadd.f32 %v5426, %v5538
    %v5540 = vpop.f32.mrb[0].mxu0
    %v5541 = vadd.f32 %v5428, %v5540
    %5542 = vmatprep.mubr.bf16.mxu0 %v1161
    %5543 = vmatmul.mubr.bf16.gmra.mrb[0].mxu0 %v1160
    %v5544 = vpop.f32.mrb[0].mxu0
    %v5545 = vadd.f32 %v5432, %v5544
    %v5546 = vpop.f32.mrb[0].mxu0
    %v5547 = vadd.f32 %v5434, %v5546
    %v5548 = vpop.f32.mrb[0].mxu0
    %v5549 = vadd.f32 %v5436, %v5548
    %v5550 = vpop.f32.mrb[0].mxu0
    %v5551 = vadd.f32 %v5438, %v5550
    %5552 = vmatprep.mubr.bf16.mxu0 %v1177
    %5553 = vmatmul.mubr.bf16.gmra.mrb[0].mxu0 %v1176
    %v5554 = vpop.f32.mrb[0].mxu0
    %v5555 = vadd.f32 %v5442, %v5554
    %v5556 = vpop.f32.mrb[0].mxu0
    %v5557 = vadd.f32 %v5444, %v5556
    %v5558 = vpop.f32.mrb[0].mxu0
    %v5559 = vadd.f32 %v5446, %v5558
    %v5560 = vpop.f32.mrb[0].mxu0
    %v5561 = vadd.f32 %v5448, %v5560
    %5562 = vdwg.mxu0
    %5563 = vmatprep.subr.bf16.mxu0 %v3295
    %5564 = vmatpush1.bf16.msra.mxu0 %v3294
    %5565 = vmatprep.subr.bf16.mxu0 %v3299
    %5566 = vmatpush1.bf16.msra.mxu0 %v3298
    %5567 = vmatprep.subr.bf16.mxu0 %v3303
    %5568 = vmatpush1.bf16.msra.mxu0 %v3302
    %5569 = vmatprep.subr.bf16.mxu0 %v3307
    %5570 = vmatpush1.bf16.msra.mxu0 %v3306
    %5571 = vmatprep.subr.bf16.mxu0 %v3311
    %5572 = vmatpush1.bf16.msra.mxu0 %v3310
    %5573 = vmatprep.subr.bf16.mxu0 %v3315
    %5574 = vmatpush1.bf16.msra.mxu0 %v3314
    %5575 = vmatprep.subr.bf16.mxu0 %v3319
    %5576 = vmatpush1.bf16.msra.mxu0 %v3318
    %5577 = vmatprep.subr.bf16.mxu0 %v3323
    %5578 = vmatpush1.bf16.msra.mxu0 %v3322
    %5579 = vmatprep.subr.bf16.mxu0 %v3327
    %5580 = vmatpush1.bf16.msra.mxu0 %v3326
    %5581 = vmatprep.subr.bf16.mxu0 %v3331
    %5582 = vmatpush1.bf16.msra.mxu0 %v3330
    %5583 = vmatprep.subr.bf16.mxu0 %v3335
    %5584 = vmatpush1.bf16.msra.mxu0 %v3334
    %5585 = vmatprep.subr.bf16.mxu0 %v3339
    %5586 = vmatpush1.bf16.msra.mxu0 %v3338
    %5587 = vmatprep.subr.bf16.mxu0 %v3343
    %5588 = vmatpush1.bf16.msra.mxu0 %v3342
    %5589 = vmatprep.subr.bf16.mxu0 %v3347
    %5590 = vmatpush1.bf16.msra.mxu0 %v3346
    %5591 = vmatprep.subr.bf16.mxu0 %v3351
    %5592 = vmatpush1.bf16.msra.mxu0 %v3350
    %5593 = vmatprep.subr.bf16.mxu0 %v3355
    %5594 = vmatpush1.bf16.msra.mxu0 %v3354
    %5595 = vmatprep.mubr.bf16.mxu0 %v1067
    %5596 = vmatmul.mubr.bf16.gmra.mrb[0].mxu0 %v1066
    %v5597 = vpop.f32.mrb[0].mxu0
    %v5598 = vadd.f32 %v5485, %v5597
    %v5599 = vpop.f32.mrb[0].mxu0
    %v5600 = vadd.f32 %v5487, %v5599
    %v5601 = vpop.f32.mrb[0].mxu0
    %v5602 = vadd.f32 %v5489, %v5601
    %v5603 = vpop.f32.mrb[0].mxu0
    %v5604 = vadd.f32 %v5491, %v5603
    %5605 = vmatprep.mubr.bf16.mxu0 %v1083
    %5606 = vmatmul.mubr.bf16.gmra.mrb[0].mxu0 %v1082
    %v5607 = vpop.f32.mrb[0].mxu0
    %v5608 = vadd.f32 %v5495, %v5607
    %v5609 = vpop.f32.mrb[0].mxu0
    %v5610 = vadd.f32 %v5497, %v5609
    %v5611 = vpop.f32.mrb[0].mxu0
    %v5612 = vadd.f32 %v5499, %v5611
    %v5613 = vpop.f32.mrb[0].mxu0
    %v5614 = vadd.f32 %v5501, %v5613
    %5615 = vmatprep.mubr.bf16.mxu0 %v1099
    %5616 = vmatmul.mubr.bf16.gmra.mrb[0].mxu0 %v1098
    %v5617 = vpop.f32.mrb[0].mxu0
    %v5618 = vadd.f32 %v5505, %v5617
    %v5619 = vpop.f32.mrb[0].mxu0
    %v5620 = vadd.f32 %v5507, %v5619
    %v5621 = vpop.f32.mrb[0].mxu0
    %v5622 = vadd.f32 %v5509, %v5621
    %v5623 = vpop.f32.mrb[0].mxu0
    %v5624 = vadd.f32 %v5511, %v5623
    %5625 = vmatprep.mubr.bf16.mxu0 %v1115
    %5626 = vmatmul.mubr.bf16.gmra.mrb[0].mxu0 %v1114
    %v5627 = vpop.f32.mrb[0].mxu0
    %v5628 = vadd.f32 %v5515, %v5627
    %v5629 = vpop.f32.mrb[0].mxu0
    %v5630 = vadd.f32 %v5517, %v5629
    %v5631 = vpop.f32.mrb[0].mxu0
    %v5632 = vadd.f32 %v5519, %v5631
    %v5633 = vpop.f32.mrb[0].mxu0
    %v5634 = vadd.f32 %v5521, %v5633
    %5635 = vmatprep.mubr.bf16.mxu0 %v1131
    %5636 = vmatmul.mubr.bf16.gmra.mrb[0].mxu0 %v1130
    %v5637 = vpop.f32.mrb[0].mxu0
    %v5638 = vadd.f32 %v5525, %v5637
    %v5639 = vpop.f32.mrb[0].mxu0
    %v5640 = vadd.f32 %v5527, %v5639
    %v5641 = vpop.f32.mrb[0].mxu0
    %v5642 = vadd.f32 %v5529, %v5641
    %v5643 = vpop.f32.mrb[0].mxu0
    %v5644 = vadd.f32 %v5531, %v5643
    %5645 = vmatprep.mubr.bf16.mxu0 %v1147
    %5646 = vmatmul.mubr.bf16.gmra.mrb[0].mxu0 %v1146
    %v5647 = vpop.f32.mrb[0].mxu0
    %v5648 = vadd.f32 %v5535, %v5647
    %v5649 = vpop.f32.mrb[0].mxu0
    %v5650 = vadd.f32 %v5537, %v5649
    %v5651 = vpop.f32.mrb[0].mxu0
    %v5652 = vadd.f32 %v5539, %v5651
    %v5653 = vpop.f32.mrb[0].mxu0
    %v5654 = vadd.f32 %v5541, %v5653
    %5655 = vmatprep.mubr.bf16.mxu0 %v1163
    %5656 = vmatmul.mubr.bf16.gmra.mrb[0].mxu0 %v1162
    %v5657 = vpop.f32.mrb[0].mxu0
    %v5658 = vadd.f32 %v5545, %v5657
    %v5659 = vpop.f32.mrb[0].mxu0
    %v5660 = vadd.f32 %v5547, %v5659
    %v5661 = vpop.f32.mrb[0].mxu0
    %v5662 = vadd.f32 %v5549, %v5661
    %v5663 = vpop.f32.mrb[0].mxu0
    %v5664 = vadd.f32 %v5551, %v5663
    %5665 = vmatprep.mubr.bf16.mxu0 %v1179
    %5666 = vmatmul.mubr.bf16.gmra.mrb[0].mxu0 %v1178
    %v5667 = vpop.f32.mrb[0].mxu0
    %v5668 = vadd.f32 %v5555, %v5667
    %v5669 = vpop.f32.mrb[0].mxu0
    %v5670 = vadd.f32 %v5557, %v5669
    %v5671 = vpop.f32.mrb[0].mxu0
    %v5672 = vadd.f32 %v5559, %v5671
    %v5673 = vpop.f32.mrb[0].mxu0
    %v5674 = vadd.f32 %v5561, %v5673
    %5675 = vdwg.mxu0
    %5676 = vst [vmem:[#allocation2] sm:$0xff] %v4694
    %5677 = vst [vmem:[#allocation2 + $0x8] sm:$0xff] %v4696
    %5678 = vst [vmem:[#allocation2 + $0x10] sm:$0xff] %v5598
    %5679 = vst [vmem:[#allocation2 + $0x18] sm:$0xff] %v5600
    %5680 = vst [vmem:[#allocation2 + $0x20] sm:$0xff] %v4698
    %5681 = vst [vmem:[#allocation2 + $0x28] sm:$0xff] %v4700
    %5682 = vst [vmem:[#allocation2 + $0x30] sm:$0xff] %v5602
    %5683 = vst [vmem:[#allocation2 + $0x38] sm:$0xff] %v5604
    %5684 = vst [vmem:[#allocation2 + $0x40] sm:$0xff] %v4704
    %5685 = vst [vmem:[#allocation2 + $0x48] sm:$0xff] %v4706
    %5686 = vst [vmem:[#allocation2 + $0x50] sm:$0xff] %v5608
    %5687 = vst [vmem:[#allocation2 + $0x58] sm:$0xff] %v5610
    %5688 = vst [vmem:[#allocation2 + $0x60] sm:$0xff] %v4708
    %5689 = vst [vmem:[#allocation2 + $0x68] sm:$0xff] %v4710
    %5690 = vst [vmem:[#allocation2 + $0x70] sm:$0xff] %v5612
    %5691 = vst [vmem:[#allocation2 + $0x78] sm:$0xff] %v5614
    %5692 = vst [vmem:[#allocation2 + $0x80] sm:$0xff] %v4714
    %5693 = vst [vmem:[#allocation2 + $0x88] sm:$0xff] %v4716
    %5694 = vst [vmem:[#allocation2 + $0x90] sm:$0xff] %v5618
    %5695 = vst [vmem:[#allocation2 + $0x98] sm:$0xff] %v5620
    %5696 = vst [vmem:[#allocation2 + $0xa0] sm:$0xff] %v4718
    %5697 = vst [vmem:[#allocation2 + $0xa8] sm:$0xff] %v4720
    %5698 = vst [vmem:[#allocation2 + $0xb0] sm:$0xff] %v5622
    %5699 = vst [vmem:[#allocation2 + $0xb8] sm:$0xff] %v5624
    %5700 = vst [vmem:[#allocation2 + $0xc0] sm:$0xff] %v4724
    %5701 = vst [vmem:[#allocation2 + $0xc8] sm:$0xff] %v4726
    %5702 = vst [vmem:[#allocation2 + $0xd0] sm:$0xff] %v5628
    %5703 = vst [vmem:[#allocation2 + $0xd8] sm:$0xff] %v5630
    %5704 = vst [vmem:[#allocation2 + $0xe0] sm:$0xff] %v4728
    %5705 = vst [vmem:[#allocation2 + $0xe8] sm:$0xff] %v4730
    %5706 = vst [vmem:[#allocation2 + $0xf0] sm:$0xff] %v5632
    %5707 = vst [vmem:[#allocation2 + $0xf8] sm:$0xff] %v5634
    %5708 = vst [vmem:[#allocation2 + $0x100] sm:$0xff] %v4734
    %5709 = vst [vmem:[#allocation2 + $0x108] sm:$0xff] %v4736
    %5710 = vst [vmem:[#allocation2 + $0x110] sm:$0xff] %v5638
    %5711 = vst [vmem:[#allocation2 + $0x118] sm:$0xff] %v5640
    %5712 = vst [vmem:[#allocation2 + $0x120] sm:$0xff] %v4738
    %5713 = vst [vmem:[#allocation2 + $0x128] sm:$0xff] %v4740
    %5714 = vst [vmem:[#allocation2 + $0x130] sm:$0xff] %v5642
    %5715 = vst [vmem:[#allocation2 + $0x138] sm:$0xff] %v5644
    %5716 = vst [vmem:[#allocation2 + $0x140] sm:$0xff] %v4744
    %5717 = vst [vmem:[#allocation2 + $0x148] sm:$0xff] %v4746
    %5718 = vst [vmem:[#allocation2 + $0x150] sm:$0xff] %v5648
    %5719 = vst [vmem:[#allocation2 + $0x158] sm:$0xff] %v5650
    %5720 = vst [vmem:[#allocation2 + $0x160] sm:$0xff] %v4748
    %5721 = vst [vmem:[#allocation2 + $0x168] sm:$0xff] %v4750
    %5722 = vst [vmem:[#allocation2 + $0x170] sm:$0xff] %v5652
    %5723 = vst [vmem:[#allocation2 + $0x178] sm:$0xff] %v5654
    %5724 = vst [vmem:[#allocation2 + $0x180] sm:$0xff] %v4754
    %5725 = vst [vmem:[#allocation2 + $0x188] sm:$0xff] %v4756
    %5726 = vst [vmem:[#allocation2 + $0x190] sm:$0xff] %v5658
    %5727 = vst [vmem:[#allocation2 + $0x198] sm:$0xff] %v5660
    %5728 = vst [vmem:[#allocation2 + $0x1a0] sm:$0xff] %v4758
    %5729 = vst [vmem:[#allocation2 + $0x1a8] sm:$0xff] %v4760
    %5730 = vst [vmem:[#allocation2 + $0x1b0] sm:$0xff] %v5662
    %5731 = vst [vmem:[#allocation2 + $0x1b8] sm:$0xff] %v5664
    %5732 = vst [vmem:[#allocation2 + $0x1c0] sm:$0xff] %v4764
    %5733 = vst [vmem:[#allocation2 + $0x1c8] sm:$0xff] %v4766
    %5734 = vst [vmem:[#allocation2 + $0x1d0] sm:$0xff] %v5668
    %5735 = vst [vmem:[#allocation2 + $0x1d8] sm:$0xff] %v5670
    %5736 = vst [vmem:[#allocation2 + $0x1e0] sm:$0xff] %v4768
    %5737 = vst [vmem:[#allocation2 + $0x1e8] sm:$0xff] %v4770
    %5738 = vst [vmem:[#allocation2 + $0x1f0] sm:$0xff] %v5672
    %5739 = vst [vmem:[#allocation2 + $0x1f8] sm:$0xff] %v5674
    %v5740 = vadd.f32 %v4694, %v4698
    %v5741 = vadd.f32 %v5740, %v4704
    %v5742 = vadd.f32 %v5741, %v4708
    %v5743 = vadd.f32 %v5742, %v4714
    %v5744 = vadd.f32 %v5743, %v4718
    %v5745 = vadd.f32 %v5744, %v4724
    %v5746 = vadd.f32 %v5745, %v4728
    %v5747 = vrot.slane %v5746, 4
    %v5748 = vadd.f32 %v5746, %v5747
    %v5749 = vrot.slane %v5748, 2
    %v5750 = vadd.f32 %v5748, %v5749
    %v5751 = vrot.slane %v5750, 1
    %v5752 = vadd.f32 %v5750, %v5751
    %v5753 = vadd.f32 %v4696, %v4700
    %v5754 = vadd.f32 %v5753, %v4706
    %v5755 = vadd.f32 %v5754, %v4710
    %v5756 = vadd.f32 %v5755, %v4716
    %v5757 = vadd.f32 %v5756, %v4720
    %v5758 = vadd.f32 %v5757, %v4726
    %v5759 = vadd.f32 %v5758, %v4730
    %v5760 = vrot.slane %v5759, 4
    %v5761 = vadd.f32 %v5759, %v5760
    %v5762 = vrot.slane %v5761, 2
    %v5763 = vadd.f32 %v5761, %v5762
    %v5764 = vrot.slane %v5763, 1
    %v5765 = vadd.f32 %v5763, %v5764
    %v5766 = vadd.f32 %v5598, %v5602
    %v5767 = vadd.f32 %v5766, %v5608
    %v5768 = vadd.f32 %v5767, %v5612
    %v5769 = vadd.f32 %v5768, %v5618
    %v5770 = vadd.f32 %v5769, %v5622
    %v5771 = vadd.f32 %v5770, %v5628
    %v5772 = vadd.f32 %v5771, %v5632
    %v5773 = vrot.slane %v5772, 4
    %v5774 = vadd.f32 %v5772, %v5773
    %v5775 = vrot.slane %v5774, 2
    %v5776 = vadd.f32 %v5774, %v5775
    %v5777 = vrot.slane %v5776, 1
    %v5778 = vadd.f32 %v5776, %v5777
    %v5779 = vadd.f32 %v5600, %v5604
    %v5780 = vadd.f32 %v5779, %v5610
    %v5781 = vadd.f32 %v5780, %v5614
    %v5782 = vadd.f32 %v5781, %v5620
    %v5783 = vadd.f32 %v5782, %v5624
    %v5784 = vadd.f32 %v5783, %v5630
    %v5785 = vadd.f32 %v5784, %v5634
    %v5786 = vrot.slane %v5785, 4
    %v5787 = vadd.f32 %v5785, %v5786
    %v5788 = vrot.slane %v5787, 2
    %v5789 = vadd.f32 %v5787, %v5788
    %v5790 = vrot.slane %v5789, 1
    %v5791 = vadd.f32 %v5789, %v5790
    %v5792 = vrcp.pop 64.0
    %v5793 = vmul.f32 %v5752, %v5792
    %v5794 = vmul.f32 %v5765, %v5792
    %v5795 = vmul.f32 %v5778, %v5792
    %v5796 = vmul.f32 %v5791, %v5792
    %v5797 = vmax.f32 %v4694, %v4698
    %v5798 = vmax.f32 %v5797, %v4704
    %v5799 = vmax.f32 %v5798, %v4708
    %v5800 = vmax.f32 %v5799, %v4714
    %v5801 = vmax.f32 %v5800, %v4718
    %v5802 = vmax.f32 %v5801, %v4724
    %v5803 = vmax.f32 %v5802, %v4728
    %v5804 = vrot.slane %v5803, 4
    %v5805 = vmax.f32 %v5803, %v5804
    %v5806 = vrot.slane %v5805, 2
    %v5807 = vmax.f32 %v5805, %v5806
    %v5808 = vrot.slane %v5807, 1
    %v5809 = vmax.f32 %v5807, %v5808
    %v5810 = vmax.f32 %v4696, %v4700
    %v5811 = vmax.f32 %v5810, %v4706
    %v5812 = vmax.f32 %v5811, %v4710
    %v5813 = vmax.f32 %v5812, %v4716
    %v5814 = vmax.f32 %v5813, %v4720
    %v5815 = vmax.f32 %v5814, %v4726
    %v5816 = vmax.f32 %v5815, %v4730
    %v5817 = vrot.slane %v5816, 4
    %v5818 = vmax.f32 %v5816, %v5817
    %v5819 = vrot.slane %v5818, 2
    %v5820 = vmax.f32 %v5818, %v5819
    %v5821 = vrot.slane %v5820, 1
    %v5822 = vmax.f32 %v5820, %v5821
    %v5823 = vmax.f32 %v5598, %v5602
    %v5824 = vmax.f32 %v5823, %v5608
    %v5825 = vmax.f32 %v5824, %v5612
    %v5826 = vmax.f32 %v5825, %v5618
    %v5827 = vmax.f32 %v5826, %v5622
    %v5828 = vmax.f32 %v5827, %v5628
    %v5829 = vmax.f32 %v5828, %v5632
    %v5830 = vrot.slane %v5829, 4
    %v5831 = vmax.f32 %v5829, %v5830
    %v5832 = vrot.slane %v5831, 2
    %v5833 = vmax.f32 %v5831, %v5832
    %v5834 = vrot.slane %v5833, 1
    %v5835 = vmax.f32 %v5833, %v5834
    %v5836 = vmax.f32 %v5600, %v5604
    %v5837 = vmax.f32 %v5836, %v5610
    %v5838 = vmax.f32 %v5837, %v5614
    %v5839 = vmax.f32 %v5838, %v5620
    %v5840 = vmax.f32 %v5839, %v5624
    %v5841 = vmax.f32 %v5840, %v5630
    %v5842 = vmax.f32 %v5841, %v5634
    %v5843 = vrot.slane %v5842, 4
    %v5844 = vmax.f32 %v5842, %v5843
    %v5845 = vrot.slane %v5844, 2
    %v5846 = vmax.f32 %v5844, %v5845
    %v5847 = vrot.slane %v5846, 1
    %v5848 = vmax.f32 %v5846, %v5847
    %v5849 = vadd.f32 %v4734, %v4738
    %v5850 = vadd.f32 %v5849, %v4744
    %v5851 = vadd.f32 %v5850, %v4748
    %v5852 = vadd.f32 %v5851, %v4754
    %v5853 = vadd.f32 %v5852, %v4758
    %v5854 = vadd.f32 %v5853, %v4764
    %v5855 = vadd.f32 %v5854, %v4768
    %v5856 = vrot.slane %v5855, 4
    %v5857 = vadd.f32 %v5855, %v5856
    %v5858 = vrot.slane %v5857, 2
    %v5859 = vadd.f32 %v5857, %v5858
    %v5860 = vrot.slane %v5859, 1
    %v5861 = vadd.f32 %v5859, %v5860
    %v5862 = vadd.f32 %v4736, %v4740
    %v5863 = vadd.f32 %v5862, %v4746
    %v5864 = vadd.f32 %v5863, %v4750
    %v5865 = vadd.f32 %v5864, %v4756
    %v5866 = vadd.f32 %v5865, %v4760
    %v5867 = vadd.f32 %v5866, %v4766
    %v5868 = vadd.f32 %v5867, %v4770
    %v5869 = vrot.slane %v5868, 4
    %v5870 = vadd.f32 %v5868, %v5869
    %v5871 = vrot.slane %v5870, 2
    %v5872 = vadd.f32 %v5870, %v5871
    %v5873 = vrot.slane %v5872, 1
    %v5874 = vadd.f32 %v5872, %v5873
    %v5875 = vadd.f32 %v5638, %v5642
    %v5876 = vadd.f32 %v5875, %v5648
    %v5877 = vadd.f32 %v5876, %v5652
    %v5878 = vadd.f32 %v5877, %v5658
    %v5879 = vadd.f32 %v5878, %v5662
    %v5880 = vadd.f32 %v5879, %v5668
    %v5881 = vadd.f32 %v5880, %v5672
    %v5882 = vrot.slane %v5881, 4
    %v5883 = vadd.f32 %v5881, %v5882
    %v5884 = vrot.slane %v5883, 2
    %v5885 = vadd.f32 %v5883, %v5884
    %v5886 = vrot.slane %v5885, 1
    %v5887 = vadd.f32 %v5885, %v5886
    %v5888 = vadd.f32 %v5640, %v5644
    %v5889 = vadd.f32 %v5888, %v5650
    %v5890 = vadd.f32 %v5889, %v5654
    %v5891 = vadd.f32 %v5890, %v5660
    %v5892 = vadd.f32 %v5891, %v5664
    %v5893 = vadd.f32 %v5892, %v5670
    %v5894 = vadd.f32 %v5893, %v5674
    %v5895 = vrot.slane %v5894, 4
    %v5896 = vadd.f32 %v5894, %v5895
    %v5897 = vrot.slane %v5896, 2
    %v5898 = vadd.f32 %v5896, %v5897
    %v5899 = vrot.slane %v5898, 1
    %v5900 = vadd.f32 %v5898, %v5899
    %v5901 = vmul.f32 %v5861, %v5792
    %v5902 = vmul.f32 %v5874, %v5792
    %v5903 = vmul.f32 %v5887, %v5792
    %v5904 = vmul.f32 %v5900, %v5792
    %v5905 = vmax.f32 %v4734, %v4738
    %v5906 = vmax.f32 %v5905, %v4744
    %v5907 = vmax.f32 %v5906, %v4748
    %v5908 = vmax.f32 %v5907, %v4754
    %v5909 = vmax.f32 %v5908, %v4758
    %v5910 = vmax.f32 %v5909, %v4764
    %v5911 = vmax.f32 %v5910, %v4768
    %v5912 = vrot.slane %v5911, 4
    %v5913 = vmax.f32 %v5911, %v5912
    %v5914 = vrot.slane %v5913, 2
    %v5915 = vmax.f32 %v5913, %v5914
    %v5916 = vrot.slane %v5915, 1
    %v5917 = vmax.f32 %v5915, %v5916
    %v5918 = vmax.f32 %v4736, %v4740
    %v5919 = vmax.f32 %v5918, %v4746
    %v5920 = vmax.f32 %v5919, %v4750
    %v5921 = vmax.f32 %v5920, %v4756
    %v5922 = vmax.f32 %v5921, %v4760
    %v5923 = vmax.f32 %v5922, %v4766
    %v5924 = vmax.f32 %v5923, %v4770
    %v5925 = vrot.slane %v5924, 4
    %v5926 = vmax.f32 %v5924, %v5925
    %v5927 = vrot.slane %v5926, 2
    %v5928 = vmax.f32 %v5926, %v5927
    %v5929 = vrot.slane %v5928, 1
    %v5930 = vmax.f32 %v5928, %v5929
    %v5931 = vmax.f32 %v5638, %v5642
    %v5932 = vmax.f32 %v5931, %v5648
    %v5933 = vmax.f32 %v5932, %v5652
    %v5934 = vmax.f32 %v5933, %v5658
    %v5935 = vmax.f32 %v5934, %v5662
    %v5936 = vmax.f32 %v5935, %v5668
    %v5937 = vmax.f32 %v5936, %v5672
    %v5938 = vrot.slane %v5937, 4
    %v5939 = vmax.f32 %v5937, %v5938
    %v5940 = vrot.slane %v5939, 2
    %v5941 = vmax.f32 %v5939, %v5940
    %v5942 = vrot.slane %v5941, 1
    %v5943 = vmax.f32 %v5941, %v5942
    %v5944 = vmax.f32 %v5640, %v5644
    %v5945 = vmax.f32 %v5944, %v5650
    %v5946 = vmax.f32 %v5945, %v5654
    %v5947 = vmax.f32 %v5946, %v5660
    %v5948 = vmax.f32 %v5947, %v5664
    %v5949 = vmax.f32 %v5948, %v5670
    %v5950 = vmax.f32 %v5949, %v5674
    %v5951 = vrot.slane %v5950, 4
    %v5952 = vmax.f32 %v5950, %v5951
    %v5953 = vrot.slane %v5952, 2
    %v5954 = vmax.f32 %v5952, %v5953
    %v5955 = vrot.slane %v5954, 1
    %v5956 = vmax.f32 %v5954, %v5955
    %vm5957 = vcmask 1040384
    %v5958 = vsel %vm5957, %v5793, %v5901
    %v5959 = vsel %vm5957, %v5794, %v5902
    %v5960 = vsel %vm5957, %v5795, %v5903
    %v5961 = vsel %vm5957, %v5796, %v5904
    %vm5962 = vcmask 1041408
    %v5963 = vsel %vm5962, %v5958, %v5809
    %v5964 = vsel %vm5962, %v5959, %v5822
    %v5965 = vsel %vm5962, %v5960, %v5835
    %v5966 = vsel %vm5962, %v5961, %v5848
    %vm5967 = vcmask 1042432
    %v5968 = vsel %vm5967, %v5963, %v5917
    %v5969 = vsel %vm5967, %v5964, %v5930
    %v5970 = vsel %vm5967, %v5965, %v5943
    %v5971 = vsel %vm5967, %v5966, %v5956
    %v5972 = vpack.c.bf16 %v5968, %v5968
    %v5973 = vpack.c.bf16 %v5969, %v5969
    %v5974 = vpack.c.bf16 %v5970, %v5970
    %v5975 = vpack.c.bf16 %v5971, %v5971
    %v5976 = vld [vmem:[%s2] sm:$0xf]
    %v5977 = vld [vmem:[%s2 + $0x4] sm:$0xf]
    %v5978 = vld [vmem:[%s2 + $0x8] sm:$0xf]
    %v5979 = vld [vmem:[%s2 + $0xc] sm:$0xf]
    %v5980 = vld [vmem:[%s2 + $0x10] sm:$0xf]
    %v5981 = vld [vmem:[%s2 + $0x14] sm:$0xf]
    %v5982 = vld [vmem:[%s2 + $0x18] sm:$0xf]
    %v5983 = vld [vmem:[%s2 + $0x1c] sm:$0xf]
    %v5984 = vld [vmem:[%s2 + $0x20] sm:$0xf]
    %v5985 = vld [vmem:[%s2 + $0x24] sm:$0xf]
    %v5986 = vld [vmem:[%s2 + $0x28] sm:$0xf]
    %v5987 = vld [vmem:[%s2 + $0x2c] sm:$0xf]
    %v5988 = vld [vmem:[%s2 + $0x30] sm:$0xf]
    %v5989 = vld [vmem:[%s2 + $0x34] sm:$0xf]
    %v5990 = vld [vmem:[%s2 + $0x38] sm:$0xf]
    %v5991 = vld [vmem:[%s2 + $0x3c] sm:$0xf]
    %v5992 = vld [vmem:[%s2 + $0x40] sm:$0xf]
    %v5993 = vld [vmem:[%s2 + $0x44] sm:$0xf]
    %v5994 = vld [vmem:[%s2 + $0x48] sm:$0xf]
    %v5995 = vld [vmem:[%s2 + $0x4c] sm:$0xf]
    %v5996 = vld [vmem:[%s2 + $0x50] sm:$0xf]
    %v5997 = vld [vmem:[%s2 + $0x54] sm:$0xf]
    %v5998 = vld [vmem:[%s2 + $0x58] sm:$0xf]
    %v5999 = vld [vmem:[%s2 + $0x5c] sm:$0xf]
    %v6000 = vld [vmem:[%s2 + $0x60] sm:$0xf]
    %v6001 = vld [vmem:[%s2 + $0x64] sm:$0xf]
    %v6002 = vld [vmem:[%s2 + $0x68] sm:$0xf]
    %v6003 = vld [vmem:[%s2 + $0x6c] sm:$0xf]
    %v6004 = vld [vmem:[%s2 + $0x70] sm:$0xf]
    %v6005 = vld [vmem:[%s2 + $0x74] sm:$0xf]
    %v6006 = vld [vmem:[%s2 + $0x78] sm:$0xf]
    %v6007 = vld [vmem:[%s2 + $0x7c] sm:$0xf]
    %v6008 = vld [vmem:[%s2 + $0x80] sm:$0xf]
    %v6009 = vld [vmem:[%s2 + $0x84] sm:$0xf]
    %v6010 = vld [vmem:[%s2 + $0x88] sm:$0xf]
    %v6011 = vld [vmem:[%s2 + $0x8c] sm:$0xf]
    %v6012 = vld [vmem:[%s2 + $0x90] sm:$0xf]
    %v6013 = vld [vmem:[%s2 + $0x94] sm:$0xf]
    %v6014 = vld [vmem:[%s2 + $0x98] sm:$0xf]
    %v6015 = vld [vmem:[%s2 + $0x9c] sm:$0xf]
    %v6016 = vld [vmem:[%s2 + $0xa0] sm:$0xf]
    %v6017 = vld [vmem:[%s2 + $0xa4] sm:$0xf]
    %v6018 = vld [vmem:[%s2 + $0xa8] sm:$0xf]
    %v6019 = vld [vmem:[%s2 + $0xac] sm:$0xf]
    %v6020 = vld [vmem:[%s2 + $0xb0] sm:$0xf]
    %v6021 = vld [vmem:[%s2 + $0xb4] sm:$0xf]
    %v6022 = vld [vmem:[%s2 + $0xb8] sm:$0xf]
    %v6023 = vld [vmem:[%s2 + $0xbc] sm:$0xf]
    %v6024 = vld [vmem:[%s2 + $0xc0] sm:$0xf]
    %v6025 = vld [vmem:[%s2 + $0xc4] sm:$0xf]
    %v6026 = vld [vmem:[%s2 + $0xc8] sm:$0xf]
    %v6027 = vld [vmem:[%s2 + $0xcc] sm:$0xf]
    %v6028 = vld [vmem:[%s2 + $0xd0] sm:$0xf]
    %v6029 = vld [vmem:[%s2 + $0xd4] sm:$0xf]
    %v6030 = vld [vmem:[%s2 + $0xd8] sm:$0xf]
    %v6031 = vld [vmem:[%s2 + $0xdc] sm:$0xf]
    %v6032 = vld [vmem:[%s2 + $0xe0] sm:$0xf]
    %v6033 = vld [vmem:[%s2 + $0xe4] sm:$0xf]
    %v6034 = vld [vmem:[%s2 + $0xe8] sm:$0xf]
    %v6035 = vld [vmem:[%s2 + $0xec] sm:$0xf]
    %v6036 = vld [vmem:[%s2 + $0xf0] sm:$0xf]
    %v6037 = vld [vmem:[%s2 + $0xf4] sm:$0xf]
    %v6038 = vld [vmem:[%s2 + $0xf8] sm:$0xf]
    %v6039 = vld [vmem:[%s2 + $0xfc] sm:$0xf]
    %v6104 = vunpack.c.l.b16 %v5976
    %v6105 = vunpack.c.l.b16 %v5977
    %v6106 = vunpack.c.l.b16 %v5978
    %v6107 = vunpack.c.l.b16 %v5979
    %v6108 = vunpack.c.l.b16 %v5980
    %v6109 = vunpack.c.l.b16 %v5981
    %v6110 = vunpack.c.l.b16 %v5982
    %v6111 = vunpack.c.l.b16 %v5983
    %v6112 = vunpack.c.l.b16 %v5984
    %v6113 = vunpack.c.l.b16 %v5985
    %v6114 = vunpack.c.l.b16 %v5986
    %v6115 = vunpack.c.l.b16 %v5987
    %v6116 = vunpack.c.l.b16 %v5988
    %v6117 = vunpack.c.l.b16 %v5989
    %v6118 = vunpack.c.l.b16 %v5990
    %v6119 = vunpack.c.l.b16 %v5991
    %v6120 = vunpack.c.l.b16 %v5992
    %v6121 = vunpack.c.l.b16 %v5993
    %v6122 = vunpack.c.l.b16 %v5994
    %v6123 = vunpack.c.l.b16 %v5995
    %v6124 = vunpack.c.l.b16 %v5996
    %v6125 = vunpack.c.l.b16 %v5997
    %v6126 = vunpack.c.l.b16 %v5998
    %v6127 = vunpack.c.l.b16 %v5999
    %v6128 = vunpack.c.l.b16 %v6000
    %v6129 = vunpack.c.l.b16 %v6001
    %v6130 = vunpack.c.l.b16 %v6002
    %v6131 = vunpack.c.l.b16 %v6003
    %v6132 = vunpack.c.l.b16 %v6004
    %v6133 = vunpack.c.l.b16 %v6005
    %v6134 = vunpack.c.l.b16 %v6006
    %v6135 = vunpack.c.l.b16 %v6007
    %v6136 = vunpack.c.l.b16 %v6008
    %v6137 = vunpack.c.l.b16 %v6009
    %v6138 = vunpack.c.l.b16 %v6010
    %v6139 = vunpack.c.l.b16 %v6011
    %v6140 = vunpack.c.l.b16 %v6012
    %v6141 = vunpack.c.l.b16 %v6013
    %v6142 = vunpack.c.l.b16 %v6014
    %v6143 = vunpack.c.l.b16 %v6015
    %v6144 = vunpack.c.l.b16 %v6016
    %v6145 = vunpack.c.l.b16 %v6017
    %v6146 = vunpack.c.l.b16 %v6018
    %v6147 = vunpack.c.l.b16 %v6019
    %v6148 = vunpack.c.l.b16 %v6020
    %v6149 = vunpack.c.l.b16 %v6021
    %v6150 = vunpack.c.l.b16 %v6022
    %v6151 = vunpack.c.l.b16 %v6023
    %v6152 = vunpack.c.l.b16 %v6024
    %v6153 = vunpack.c.l.b16 %v6025
    %v6154 = vunpack.c.l.b16 %v6026
    %v6155 = vunpack.c.l.b16 %v6027
    %v6156 = vunpack.c.l.b16 %v6028
    %v6157 = vunpack.c.l.b16 %v6029
    %v6158 = vunpack.c.l.b16 %v6030
    %v6159 = vunpack.c.l.b16 %v6031
    %v6160 = vunpack.c.l.b16 %v6032
    %v6161 = vunpack.c.l.b16 %v6033
    %v6162 = vunpack.c.l.b16 %v6034
    %v6163 = vunpack.c.l.b16 %v6035
    %v6164 = vunpack.c.l.b16 %v6036
    %v6165 = vunpack.c.l.b16 %v6037
    %v6166 = vunpack.c.l.b16 %v6038
    %v6167 = vunpack.c.l.b16 %v6039
    %v6168 = vpack.c.b16 %v6105, %v6104
    %v6169 = vpack.c.b16 %v6107, %v6106
    %v6170 = vpack.c.b16 %v6109, %v6108
    %v6171 = vpack.c.b16 %v6111, %v6110
    %v6172 = vpack.c.b16 %v6113, %v6112
    %v6173 = vpack.c.b16 %v6115, %v6114
    %v6174 = vpack.c.b16 %v6117, %v6116
    %v6175 = vpack.c.b16 %v6119, %v6118
    %v6176 = vpack.c.b16 %v6121, %v6120
    %v6177 = vpack.c.b16 %v6123, %v6122
    %v6178 = vpack.c.b16 %v6125, %v6124
    %v6179 = vpack.c.b16 %v6127, %v6126
    %v6180 = vpack.c.b16 %v6129, %v6128
    %v6181 = vpack.c.b16 %v6131, %v6130
    %v6182 = vpack.c.b16 %v6133, %v6132
    %v6183 = vpack.c.b16 %v6135, %v6134
    %v6184 = vpack.c.b16 %v6137, %v6136
    %v6185 = vpack.c.b16 %v6139, %v6138
    %v6186 = vpack.c.b16 %v6141, %v6140
    %v6187 = vpack.c.b16 %v6143, %v6142
    %v6188 = vpack.c.b16 %v6145, %v6144
    %v6189 = vpack.c.b16 %v6147, %v6146
    %v6190 = vpack.c.b16 %v6149, %v6148
    %v6191 = vpack.c.b16 %v6151, %v6150
    %v6192 = vpack.c.b16 %v6153, %v6152
    %v6193 = vpack.c.b16 %v6155, %v6154
    %v6194 = vpack.c.b16 %v6157, %v6156
    %v6195 = vpack.c.b16 %v6159, %v6158
    %v6196 = vpack.c.b16 %v6161, %v6160
    %v6197 = vpack.c.b16 %v6163, %v6162
    %v6198 = vpack.c.b16 %v6165, %v6164
    %v6199 = vpack.c.b16 %v6167, %v6166
    %6232 = vmatprep.subr.bf16.mxu0 0
    %6233 = vmatpush1.bf16.msra.mxu0 %v6168
    %6234 = vmatprep.subr.bf16.mxu0 0
    %6235 = vmatpush1.bf16.msra.mxu0 %v6169
    %6236 = vmatprep.subr.bf16.mxu0 0
    %6237 = vmatpush1.bf16.msra.mxu0 %v6170
    %6238 = vmatprep.subr.bf16.mxu0 0
    %6239 = vmatpush1.bf16.msra.mxu0 %v6171
    %6240 = vmatprep.subr.bf16.mxu0 0
    %6241 = vmatpush1.bf16.msra.mxu0 %v6172
    %6242 = vmatprep.subr.bf16.mxu0 0
    %6243 = vmatpush1.bf16.msra.mxu0 %v6173
    %6244 = vmatprep.subr.bf16.mxu0 0
    %6245 = vmatpush1.bf16.msra.mxu0 %v6174
    %6246 = vmatprep.subr.bf16.mxu0 0
    %6247 = vmatpush1.bf16.msra.mxu0 %v6175
    %6248 = vmatprep.subr.bf16.mxu0 0
    %6249 = vmatpush1.bf16.msra.mxu0 %v6176
    %6250 = vmatprep.subr.bf16.mxu0 0
    %6251 = vmatpush1.bf16.msra.mxu0 %v6177
    %6252 = vmatprep.subr.bf16.mxu0 0
    %6253 = vmatpush1.bf16.msra.mxu0 %v6178
    %6254 = vmatprep.subr.bf16.mxu0 0
    %6255 = vmatpush1.bf16.msra.mxu0 %v6179
    %6256 = vmatprep.subr.bf16.mxu0 0
    %6257 = vmatpush1.bf16.msra.mxu0 %v6180
    %6258 = vmatprep.subr.bf16.mxu0 0
    %6259 = vmatpush1.bf16.msra.mxu0 %v6181
    %6260 = vmatprep.subr.bf16.mxu0 0
    %6261 = vmatpush1.bf16.msra.mxu0 %v6182
    %6262 = vmatprep.subr.bf16.mxu0 0
    %6263 = vmatpush1.bf16.msra.mxu0 %v6183
    %6264 = vmatprep.mubr.bf16.mxu0 %v5973
    %6265 = vmatmul.mubr.bf16.gmra.mrb[0].mxu0 %v5972
    %v6266 = vpop.f32.mrb[0].mxu0
    %v6267 = vadd.f32 0.0, %v6266
    %v6268 = vpop.f32.mrb[0].mxu0
    %v6269 = vpop.f32.mrb[0].mxu0
    %v6270 = vpop.f32.mrb[0].mxu0
    %6271 = vdwg.mxu0
    %6272 = vmatprep.subr.bf16.mxu0 0
    %6273 = vmatpush1.bf16.msra.mxu0 %v6184
    %6274 = vmatprep.subr.bf16.mxu0 0
    %6275 = vmatpush1.bf16.msra.mxu0 %v6185
    %6276 = vmatprep.subr.bf16.mxu0 0
    %6277 = vmatpush1.bf16.msra.mxu0 %v6186
    %6278 = vmatprep.subr.bf16.mxu0 0
    %6279 = vmatpush1.bf16.msra.mxu0 %v6187
    %6280 = vmatprep.subr.bf16.mxu0 0
    %6281 = vmatpush1.bf16.msra.mxu0 %v6188
    %6282 = vmatprep.subr.bf16.mxu0 0
    %6283 = vmatpush1.bf16.msra.mxu0 %v6189
    %6284 = vmatprep.subr.bf16.mxu0 0
    %6285 = vmatpush1.bf16.msra.mxu0 %v6190
    %6286 = vmatprep.subr.bf16.mxu0 0
    %6287 = vmatpush1.bf16.msra.mxu0 %v6191
    %6288 = vmatprep.subr.bf16.mxu0 0
    %6289 = vmatpush1.bf16.msra.mxu0 %v6192
    %6290 = vmatprep.subr.bf16.mxu0 0
    %6291 = vmatpush1.bf16.msra.mxu0 %v6193
    %6292 = vmatprep.subr.bf16.mxu0 0
    %6293 = vmatpush1.bf16.msra.mxu0 %v6194
    %6294 = vmatprep.subr.bf16.mxu0 0
    %6295 = vmatpush1.bf16.msra.mxu0 %v6195
    %6296 = vmatprep.subr.bf16.mxu0 0
    %6297 = vmatpush1.bf16.msra.mxu0 %v6196
    %6298 = vmatprep.subr.bf16.mxu0 0
    %6299 = vmatpush1.bf16.msra.mxu0 %v6197
    %6300 = vmatprep.subr.bf16.mxu0 0
    %6301 = vmatpush1.bf16.msra.mxu0 %v6198
    %6302 = vmatprep.subr.bf16.mxu0 0
    %6303 = vmatpush1.bf16.msra.mxu0 %v6199
    %6304 = vmatprep.mubr.bf16.mxu0 %v5975
    %6305 = vmatmul.mubr.bf16.gmra.mrb[0].mxu0 %v5974
    %v6306 = vpop.f32.mrb[0].mxu0
    %v6307 = vadd.f32 %v6267, %v6306
    %v6308 = vpop.f32.mrb[0].mxu0
    %v6309 = vpop.f32.mrb[0].mxu0
    %v6310 = vpop.f32.mrb[0].mxu0
    %6311 = vdwg.mxu0
    %v6312 = vmax.f32 %v6307, 0.0
    %v6313 = vpack.c.bf16 %v6312, %v6312
    %v6314 = vld [vmem:[%s3] sm:$0xff]
    %v6315 = vld [vmem:[%s3 + $0x8] sm:$0xff]
    %v6316 = vld [vmem:[%s3 + $0x10] sm:$0xff]
    %v6317 = vld [vmem:[%s3 + $0x18] sm:$0xff]
    %v6318 = vld [vmem:[%s3 + $0x20] sm:$0xff]
    %v6319 = vld [vmem:[%s3 + $0x28] sm:$0xff]
    %v6320 = vld [vmem:[%s3 + $0x30] sm:$0xff]
    %v6321 = vld [vmem:[%s3 + $0x38] sm:$0xff]
    %v6330 = vunpack.c.l.b16 %v6314
    %v6331 = vunpack.c.h.b16 %v6314
    %v6332 = vunpack.c.l.b16 %v6315
    %v6333 = vunpack.c.h.b16 %v6315
    %v6334 = vunpack.c.l.b16 %v6316
    %v6335 = vunpack.c.h.b16 %v6316
    %v6336 = vunpack.c.l.b16 %v6317
    %v6337 = vunpack.c.h.b16 %v6317
    %v6338 = vunpack.c.l.b16 %v6318
    %v6339 = vunpack.c.h.b16 %v6318
    %v6340 = vunpack.c.l.b16 %v6319
    %v6341 = vunpack.c.h.b16 %v6319
    %v6342 = vunpack.c.l.b16 %v6320
    %v6343 = vunpack.c.h.b16 %v6320
    %v6344 = vunpack.c.l.b16 %v6321
    %v6345 = vunpack.c.h.b16 %v6321
    %v6346 = vpack.c.b16 %v6334, %v6330
    %v6347 = vpack.c.b16 %v6335, %v6331
    %v6348 = vpack.c.b16 %v6336, %v6332
    %v6349 = vpack.c.b16 %v6337, %v6333
    %v6350 = vpack.c.b16 %v6342, %v6338
    %v6351 = vpack.c.b16 %v6343, %v6339
    %v6352 = vpack.c.b16 %v6344, %v6340
    %v6353 = vpack.c.b16 %v6345, %v6341
    %vm6362 = vcmask 261120
    %v6364 = vsel %vm6362, %v6313, 0
    %6366 = vmatprep.subr.bf16.mxu0 %v6347
    %6367 = vmatpush1.bf16.msra.mxu0 %v6346
    %6368 = vmatprep.subr.bf16.mxu0 %v6351
    %6369 = vmatpush1.bf16.msra.mxu0 %v6350
    %6370 = vmatprep.subr.bf16.mxu0 0
    %6371 = vmatpush1.bf16.msra.mxu0 0
    %6372 = vmatprep.subr.bf16.mxu0 0
    %6373 = vmatpush1.bf16.msra.mxu0 0
    %6374 = vmatprep.subr.bf16.mxu0 0
    %6375 = vmatpush1.bf16.msra.mxu0 0
    %6376 = vmatprep.subr.bf16.mxu0 0
    %6377 = vmatpush1.bf16.msra.mxu0 0
    %6378 = vmatprep.subr.bf16.mxu0 0
    %6379 = vmatpush1.bf16.msra.mxu0 0
    %6380 = vmatprep.subr.bf16.mxu0 0
    %6381 = vmatpush1.bf16.msra.mxu0 0
    %6382 = vmatprep.subr.bf16.mxu0 0
    %6383 = vmatpush1.bf16.msra.mxu0 0
    %6384 = vmatprep.subr.bf16.mxu0 0
    %6385 = vmatpush1.bf16.msra.mxu0 0
    %6386 = vmatprep.subr.bf16.mxu0 0
    %6387 = vmatpush1.bf16.msra.mxu0 0
    %6388 = vmatprep.subr.bf16.mxu0 0
    %6389 = vmatpush1.bf16.msra.mxu0 0
    %6390 = vmatprep.subr.bf16.mxu0 0
    %6391 = vmatpush1.bf16.msra.mxu0 0
    %6392 = vmatprep.subr.bf16.mxu0 0
    %6393 = vmatpush1.bf16.msra.mxu0 0
    %6394 = vmatprep.subr.bf16.mxu0 0
    %6395 = vmatpush1.bf16.msra.mxu0 0
    %6396 = vmatprep.subr.bf16.mxu0 0
    %6397 = vmatpush1.bf16.msra.mxu0 0
    %6398 = vmatprep.mubr.bf16.mxu0 0
    %6399 = vmatmul.mubr.bf16.gmra.mrb[0].mxu0 %v6364
    %v6400 = vpop.f32.mrb[0].mxu0
    %v6401 = vadd.f32 0.0, %v6400
    %v6402 = vpop.f32.mrb[0].mxu0
    %v6403 = vadd.f32 0.0, %v6402
    %v6404 = vpop.f32.mrb[0].mxu0
    %v6405 = vpop.f32.mrb[0].mxu0
    %6406 = vdwg.mxu0
    %6407 = vmatprep.subr.bf16.mxu0 %v6349
    %6408 = vmatpush1.bf16.msra.mxu0 %v6348
    %6409 = vmatprep.subr.bf16.mxu0 %v6353
    %6410 = vmatpush1.bf16.msra.mxu0 %v6352
    %6411 = vmatprep.subr.bf16.mxu0 0
    %6412 = vmatpush1.bf16.msra.mxu0 0
    %6413 = vmatprep.subr.bf16.mxu0 0
    %6414 = vmatpush1.bf16.msra.mxu0 0
    %6415 = vmatprep.subr.bf16.mxu0 0
    %6416 = vmatpush1.bf16.msra.mxu0 0
    %6417 = vmatprep.subr.bf16.mxu0 0
    %6418 = vmatpush1.bf16.msra.mxu0 0
    %6419 = vmatprep.subr.bf16.mxu0 0
    %6420 = vmatpush1.bf16.msra.mxu0 0
    %6421 = vmatprep.subr.bf16.mxu0 0
    %6422 = vmatpush1.bf16.msra.mxu0 0
    %6423 = vmatprep.subr.bf16.mxu0 0
    %6424 = vmatpush1.bf16.msra.mxu0 0
    %6425 = vmatprep.subr.bf16.mxu0 0
    %6426 = vmatpush1.bf16.msra.mxu0 0
    %6427 = vmatprep.subr.bf16.mxu0 0
    %6428 = vmatpush1.bf16.msra.mxu0 0
    %6429 = vmatprep.subr.bf16.mxu0 0
    %6430 = vmatpush1.bf16.msra.mxu0 0
    %6431 = vmatprep.subr.bf16.mxu0 0
    %6432 = vmatpush1.bf16.msra.mxu0 0
    %6433 = vmatprep.subr.bf16.mxu0 0
    %6434 = vmatpush1.bf16.msra.mxu0 0
    %6435 = vmatprep.subr.bf16.mxu0 0
    %6436 = vmatpush1.bf16.msra.mxu0 0
    %6437 = vmatprep.subr.bf16.mxu0 0
    %6438 = vmatpush1.bf16.msra.mxu0 0
    %6439 = vmatprep.mubr.bf16.mxu0 0
    %6440 = vmatmul.mubr.bf16.gmra.mrb[0].mxu0 %v6364
    %v6441 = vpop.f32.mrb[0].mxu0
    %v6442 = vadd.f32 0.0, %v6441
    %v6443 = vpop.f32.mrb[0].mxu0
    %v6444 = vadd.f32 0.0, %v6443
    %v6445 = vpop.f32.mrb[0].mxu0
    %v6446 = vpop.f32.mrb[0].mxu0
    %6447 = vdwg.mxu0
    %v6452 = vrot.slane %v6401, 2
    %v6453 = vrot.slane %v6403, 2
    %v6454 = vrot.slane %v6442, 2
    %v6455 = vrot.slane %v6444, 2
    %v6460 = vadd.f32 %v6401, %v6452
    %v6461 = vadd.f32 %v6403, %v6453
    %v6462 = vadd.f32 %v6442, %v6454
    %v6463 = vadd.f32 %v6444, %v6455
    %v6464 = vxor.u32 %v6460, 2147483648
    %v6465 = vxor.u32 %v6461, 2147483648
    %v6466 = vxor.u32 %v6462, 2147483648
    %v6467 = vxor.u32 %v6463, 2147483648
    %v6468 = vmul.f32 %v6464, 1.442695
    %v6469 = vpow.pop %v6468
    %v6470 = vmul.f32 %v6465, 1.442695
    %v6471 = vpow.pop %v6470
    %v6472 = vmul.f32 %v6466, 1.442695
    %v6473 = vpow.pop %v6472
    %v6474 = vmul.f32 %v6467, 1.442695
    %v6475 = vpow.pop %v6474
    %v6476 = vadd.f32 %v6469, 1.0
    %v6477 = vadd.f32 %v6471, 1.0
    %v6478 = vadd.f32 %v6473, 1.0
    %v6479 = vadd.f32 %v6475, 1.0
    %v6480 = vrcp.pop %v6476
    %v6481 = vmul.f32 1.0, %v6480
    %v6482 = vrcp.pop %v6477
    %v6483 = vmul.f32 1.0, %v6482
    %v6484 = vrcp.pop %v6478
    %v6485 = vmul.f32 1.0, %v6484
    %v6486 = vrcp.pop %v6479
    %v6487 = vmul.f32 1.0, %v6486
    %v6492 = vcombine.low %v6481, %v6483
    %v6493 = vcombine.low %v6485, %v6487
    %v6495 = vunpack.c.l.s4 1966171168
    %v6496 = vunpack.c.0.s8 %v6495
    %v6497 = vlaneseq
    %v6498 = vshrl.u32 %v6497, 7
    %v6499 = vsub.s32 %v6496, %v6498
    %v6500 = vrot.slane %v6492, %v6499
    %v6502 = vunpack.c.l.s4 1966171168
    %v6503 = vunpack.c.0.s8 %v6502
    %v6504 = vlaneseq
    %v6505 = vshrl.u32 %v6504, 7
    %v6506 = vsub.s32 %v6503, %v6505
    %v6507 = vrot.slane %v6493, %v6506
    %v6508 = vcombine.low %v6500, %v6507
    %v6509 = vcombine.high %v6500, %v6507
    %v6511 = vunpack.c.l.s4 1966171168
    %v6512 = vunpack.c.0.s8 %v6511
    %v6513 = vlaneseq
    %v6514 = vshrl.u32 %v6513, 7
    %v6515 = vsub.s32 %v6512, %v6514
    %v6516 = vrot.slane %v6508, %v6515
    %v6518 = vunpack.c.l.s4 1966171168
    %v6519 = vunpack.c.0.s8 %v6518
    %v6520 = vlaneseq
    %v6521 = vshrl.u32 %v6520, 7
    %v6522 = vsub.s32 %v6519, %v6521
    %v6523 = vrot.slane %v6509, %v6522
    %v6526 = vlaneseq
    %vm6527 = vcmp.ge.s32.totalorder %v6526, 0
    %vm6528 = vcmp.lt.s32.totalorder %v6526, 512
    %vm6529 = vmand %vm6527, %vm6528
    %6530 = vst.msk [vmem:[#allocation4] sm:$0xf] %vm6529, %v6516
    %6531 = vst.msk [vmem:[#allocation4 + $0x4] sm:$0xf] %vm6529, %v6523
    %v6532 = vlaneseq
    %v6533 = vshrl.u32 %v6532, 7
    %v6534 = vsub.s32 0, %v6533
    %v6535 = vrot.slane %v6481, %v6534
    %v6536 = vlaneseq
    %v6537 = vshrl.u32 %v6536, 7
    %v6538 = vsub.s32 0, %v6537
    %v6539 = vrot.slane %v6483, %v6538
    %v6540 = vlaneseq
    %v6541 = vshrl.u32 %v6540, 7
    %v6542 = vsub.s32 0, %v6541
    %v6543 = vrot.slane %v6485, %v6542
    %v6544 = vlaneseq
    %v6545 = vshrl.u32 %v6544, 7
    %v6546 = vsub.s32 0, %v6545
    %v6547 = vrot.slane %v6487, %v6546
    %v6548 = vmul.f32 %v4694, %v6535
    %v6549 = vmul.f32 %v4696, %v6539
    %v6550 = vmul.f32 %v5598, %v6543
    %v6551 = vmul.f32 %v5600, %v6547
    %v6552 = vmul.f32 %v4698, %v6535
    %v6553 = vmul.f32 %v4700, %v6539
    %v6554 = vmul.f32 %v5602, %v6543
    %v6555 = vmul.f32 %v5604, %v6547
    %v6556 = vmul.f32 %v4704, %v6535
    %v6557 = vmul.f32 %v4706, %v6539
    %v6558 = vmul.f32 %v5608, %v6543
    %v6559 = vmul.f32 %v5610, %v6547
    %v6560 = vmul.f32 %v4708, %v6535
    %v6561 = vmul.f32 %v4710, %v6539
    %v6562 = vmul.f32 %v5612, %v6543
    %v6563 = vmul.f32 %v5614, %v6547
    %v6564 = vmul.f32 %v4714, %v6535
    %v6565 = vmul.f32 %v4716, %v6539
    %v6566 = vmul.f32 %v5618, %v6543
    %v6567 = vmul.f32 %v5620, %v6547
    %v6568 = vmul.f32 %v4718, %v6535
    %v6569 = vmul.f32 %v4720, %v6539
    %v6570 = vmul.f32 %v5622, %v6543
    %v6571 = vmul.f32 %v5624, %v6547
    %v6572 = vmul.f32 %v4724, %v6535
    %v6573 = vmul.f32 %v4726, %v6539
    %v6574 = vmul.f32 %v5628, %v6543
    %v6575 = vmul.f32 %v5630, %v6547
    %v6576 = vmul.f32 %v4728, %v6535
    %v6577 = vmul.f32 %v4730, %v6539
    %v6578 = vmul.f32 %v5632, %v6543
    %v6579 = vmul.f32 %v5634, %v6547
    %v6580 = vpack.c.bf16 %v6552, %v6548
    %v6581 = vpack.c.bf16 %v6553, %v6549
    %v6582 = vpack.c.bf16 %v6554, %v6550
    %v6583 = vpack.c.bf16 %v6555, %v6551
    %v6584 = vpack.c.bf16 %v6560, %v6556
    %v6585 = vpack.c.bf16 %v6561, %v6557
    %v6586 = vpack.c.bf16 %v6562, %v6558
    %v6587 = vpack.c.bf16 %v6563, %v6559
    %v6588 = vpack.c.bf16 %v6568, %v6564
    %v6589 = vpack.c.bf16 %v6569, %v6565
    %v6590 = vpack.c.bf16 %v6570, %v6566
    %v6591 = vpack.c.bf16 %v6571, %v6567
    %v6592 = vpack.c.bf16 %v6576, %v6572
    %v6593 = vpack.c.bf16 %v6577, %v6573
    %v6594 = vpack.c.bf16 %v6578, %v6574
    %v6595 = vpack.c.bf16 %v6579, %v6575
    %v6596 = vlaneseq
    %v6597 = vshrl.u32 %v6596, 7
    %v6598 = vsub.s32 1, %v6597
    %v6599 = vrot.slane %v6481, %v6598
    %v6600 = vlaneseq
    %v6601 = vshrl.u32 %v6600, 7
    %v6602 = vsub.s32 1, %v6601
    %v6603 = vrot.slane %v6483, %v6602
    %v6604 = vlaneseq
    %v6605 = vshrl.u32 %v6604, 7
    %v6606 = vsub.s32 1, %v6605
    %v6607 = vrot.slane %v6485, %v6606
    %v6608 = vlaneseq
    %v6609 = vshrl.u32 %v6608, 7
    %v6610 = vsub.s32 1, %v6609
    %v6611 = vrot.slane %v6487, %v6610
    %v6612 = vmul.f32 %v4734, %v6599
    %v6613 = vmul.f32 %v4736, %v6603
    %v6614 = vmul.f32 %v5638, %v6607
    %v6615 = vmul.f32 %v5640, %v6611
    %v6616 = vmul.f32 %v4738, %v6599
    %v6617 = vmul.f32 %v4740, %v6603
    %v6618 = vmul.f32 %v5642, %v6607
    %v6619 = vmul.f32 %v5644, %v6611
    %v6620 = vmul.f32 %v4744, %v6599
    %v6621 = vmul.f32 %v4746, %v6603
    %v6622 = vmul.f32 %v5648, %v6607
    %v6623 = vmul.f32 %v5650, %v6611
    %v6624 = vmul.f32 %v4748, %v6599
    %v6625 = vmul.f32 %v4750, %v6603
    %v6626 = vmul.f32 %v5652, %v6607
    %v6627 = vmul.f32 %v5654, %v6611
    %v6628 = vmul.f32 %v4754, %v6599
    %v6629 = vmul.f32 %v4756, %v6603
    %v6630 = vmul.f32 %v5658, %v6607
    %v6631 = vmul.f32 %v5660, %v6611
    %v6632 = vmul.f32 %v4758, %v6599
    %v6633 = vmul.f32 %v4760, %v6603
    %v6634 = vmul.f32 %v5662, %v6607
    %v6635 = vmul.f32 %v5664, %v6611
    %v6636 = vmul.f32 %v4764, %v6599
    %v6637 = vmul.f32 %v4766, %v6603
    %v6638 = vmul.f32 %v5668, %v6607
    %v6639 = vmul.f32 %v5670, %v6611
    %v6640 = vmul.f32 %v4768, %v6599
    %v6641 = vmul.f32 %v4770, %v6603
    %v6642 = vmul.f32 %v5672, %v6607
    %v6643 = vmul.f32 %v5674, %v6611
    %v6644 = vpack.c.bf16 %v6616, %v6612
    %v6645 = vpack.c.bf16 %v6617, %v6613
    %v6646 = vpack.c.bf16 %v6618, %v6614
    %v6647 = vpack.c.bf16 %v6619, %v6615
    %v6648 = vpack.c.bf16 %v6624, %v6620
    %v6649 = vpack.c.bf16 %v6625, %v6621
    %v6650 = vpack.c.bf16 %v6626, %v6622
    %v6651 = vpack.c.bf16 %v6627, %v6623
    %v6652 = vpack.c.bf16 %v6632, %v6628
    %v6653 = vpack.c.bf16 %v6633, %v6629
    %v6654 = vpack.c.bf16 %v6634, %v6630
    %v6655 = vpack.c.bf16 %v6635, %v6631
    %v6656 = vpack.c.bf16 %v6640, %v6636
    %v6657 = vpack.c.bf16 %v6641, %v6637
    %v6658 = vpack.c.bf16 %v6642, %v6638
    %v6659 = vpack.c.bf16 %v6643, %v6639
    %v6660 = vld [vmem:[%s4] sm:$0xff]
    %v6661 = vld [vmem:[%s4 + $0x8] sm:$0xff]
    %v6662 = vld [vmem:[%s4 + $0x10] sm:$0xff]
    %v6663 = vld [vmem:[%s4 + $0x18] sm:$0xff]
    %v6664 = vld [vmem:[%s4 + $0x20] sm:$0xff]
    %v6665 = vld [vmem:[%s4 + $0x28] sm:$0xff]
    %v6666 = vld [vmem:[%s4 + $0x30] sm:$0xff]
    %v6667 = vld [vmem:[%s4 + $0x38] sm:$0xff]
    %v6668 = vld [vmem:[%s4 + $0x40] sm:$0xff]
    %v6669 = vld [vmem:[%s4 + $0x48] sm:$0xff]
    %v6670 = vld [vmem:[%s4 + $0x50] sm:$0xff]
    %v6671 = vld [vmem:[%s4 + $0x58] sm:$0xff]
    %v6672 = vld [vmem:[%s4 + $0x60] sm:$0xff]
    %v6673 = vld [vmem:[%s4 + $0x68] sm:$0xff]
    %v6674 = vld [vmem:[%s4 + $0x70] sm:$0xff]
    %v6675 = vld [vmem:[%s4 + $0x78] sm:$0xff]
    %v6676 = vld [vmem:[%s4 + $0x80] sm:$0xff]
    %v6677 = vld [vmem:[%s4 + $0x88] sm:$0xff]
    %v6678 = vld [vmem:[%s4 + $0x90] sm:$0xff]
    %v6679 = vld [vmem:[%s4 + $0x98] sm:$0xff]
    %v6680 = vld [vmem:[%s4 + $0xa0] sm:$0xff]
    %v6681 = vld [vmem:[%s4 + $0xa8] sm:$0xff]
    %v6682 = vld [vmem:[%s4 + $0xb0] sm:$0xff]
    %v6683 = vld [vmem:[%s4 + $0xb8] sm:$0xff]
    %v6684 = vld [vmem:[%s4 + $0xc0] sm:$0xff]
    %v6685 = vld [vmem:[%s4 + $0xc8] sm:$0xff]
    %v6686 = vld [vmem:[%s4 + $0xd0] sm:$0xff]
    %v6687 = vld [vmem:[%s4 + $0xd8] sm:$0xff]
    %v6688 = vld [vmem:[%s4 + $0xe0] sm:$0xff]
    %v6689 = vld [vmem:[%s4 + $0xe8] sm:$0xff]
    %v6690 = vld [vmem:[%s4 + $0xf0] sm:$0xff]
    %v6691 = vld [vmem:[%s4 + $0xf8] sm:$0xff]
    %v6724 = vunpack.c.l.b16 %v6660
    %v6725 = vunpack.c.h.b16 %v6660
    %v6726 = vunpack.c.l.b16 %v6661
    %v6727 = vunpack.c.h.b16 %v6661
    %v6728 = vunpack.c.l.b16 %v6662
    %v6729 = vunpack.c.h.b16 %v6662
    %v6730 = vunpack.c.l.b16 %v6663
    %v6731 = vunpack.c.h.b16 %v6663
    %v6732 = vunpack.c.l.b16 %v6664
    %v6733 = vunpack.c.h.b16 %v6664
    %v6734 = vunpack.c.l.b16 %v6665
    %v6735 = vunpack.c.h.b16 %v6665
    %v6736 = vunpack.c.l.b16 %v6666
    %v6737 = vunpack.c.h.b16 %v6666
    %v6738 = vunpack.c.l.b16 %v6667
    %v6739 = vunpack.c.h.b16 %v6667
    %v6740 = vunpack.c.l.b16 %v6668
    %v6741 = vunpack.c.h.b16 %v6668
    %v6742 = vunpack.c.l.b16 %v6669
    %v6743 = vunpack.c.h.b16 %v6669
    %v6744 = vunpack.c.l.b16 %v6670
    %v6745 = vunpack.c.h.b16 %v6670
    %v6746 = vunpack.c.l.b16 %v6671
    %v6747 = vunpack.c.h.b16 %v6671
    %v6748 = vunpack.c.l.b16 %v6672
    %v6749 = vunpack.c.h.b16 %v6672
    %v6750 = vunpack.c.l.b16 %v6673
    %v6751 = vunpack.c.h.b16 %v6673
    %v6752 = vunpack.c.l.b16 %v6674
    %v6753 = vunpack.c.h.b16 %v6674
    %v6754 = vunpack.c.l.b16 %v6675
    %v6755 = vunpack.c.h.b16 %v6675
    %v6756 = vunpack.c.l.b16 %v6676
    %v6757 = vunpack.c.h.b16 %v6676
    %v6758 = vunpack.c.l.b16 %v6677
    %v6759 = vunpack.c.h.b16 %v6677
    %v6760 = vunpack.c.l.b16 %v6678
    %v6761 = vunpack.c.h.b16 %v6678
    %v6762 = vunpack.c.l.b16 %v6679
    %v6763 = vunpack.c.h.b16 %v6679
    %v6764 = vunpack.c.l.b16 %v6680
    %v6765 = vunpack.c.h.b16 %v6680
    %v6766 = vunpack.c.l.b16 %v6681
    %v6767 = vunpack.c.h.b16 %v6681
    %v6768 = vunpack.c.l.b16 %v6682
    %v6769 = vunpack.c.h.b16 %v6682
    %v6770 = vunpack.c.l.b16 %v6683
    %v6771 = vunpack.c.h.b16 %v6683
    %v6772 = vunpack.c.l.b16 %v6684
    %v6773 = vunpack.c.h.b16 %v6684
    %v6774 = vunpack.c.l.b16 %v6685
    %v6775 = vunpack.c.h.b16 %v6685
    %v6776 = vunpack.c.l.b16 %v6686
    %v6777 = vunpack.c.h.b16 %v6686
    %v6778 = vunpack.c.l.b16 %v6687
    %v6779 = vunpack.c.h.b16 %v6687
    %v6780 = vunpack.c.l.b16 %v6688
    %v6781 = vunpack.c.h.b16 %v6688
    %v6782 = vunpack.c.l.b16 %v6689
    %v6783 = vunpack.c.h.b16 %v6689
    %v6784 = vunpack.c.l.b16 %v6690
    %v6785 = vunpack.c.h.b16 %v6690
    %v6786 = vunpack.c.l.b16 %v6691
    %v6787 = vunpack.c.h.b16 %v6691
    %v6788 = vpack.c.b16 %v6728, %v6724
    %v6789 = vpack.c.b16 %v6729, %v6725
    %v6790 = vpack.c.b16 %v6730, %v6726
    %v6791 = vpack.c.b16 %v6731, %v6727
    %v6792 = vpack.c.b16 %v6736, %v6732
    %v6793 = vpack.c.b16 %v6737, %v6733
    %v6794 = vpack.c.b16 %v6738, %v6734
    %v6795 = vpack.c.b16 %v6739, %v6735
    %v6796 = vpack.c.b16 %v6744, %v6740
    %v6797 = vpack.c.b16 %v6745, %v6741
    %v6798 = vpack.c.b16 %v6746, %v6742
    %v6799 = vpack.c.b16 %v6747, %v6743
    %v6800 = vpack.c.b16 %v6752, %v6748
    %v6801 = vpack.c.b16 %v6753, %v6749
    %v6802 = vpack.c.b16 %v6754, %v6750
    %v6803 = vpack.c.b16 %v6755, %v6751
    %v6804 = vpack.c.b16 %v6760, %v6756
    %v6805 = vpack.c.b16 %v6761, %v6757
    %v6806 = vpack.c.b16 %v6762, %v6758
    %v6807 = vpack.c.b16 %v6763, %v6759
    %v6808 = vpack.c.b16 %v6768, %v6764
    %v6809 = vpack.c.b16 %v6769, %v6765
    %v6810 = vpack.c.b16 %v6770, %v6766
    %v6811 = vpack.c.b16 %v6771, %v6767
    %v6812 = vpack.c.b16 %v6776, %v6772
    %v6813 = vpack.c.b16 %v6777, %v6773
    %v6814 = vpack.c.b16 %v6778, %v6774
    %v6815 = vpack.c.b16 %v6779, %v6775
    %v6816 = vpack.c.b16 %v6784, %v6780
    %v6817 = vpack.c.b16 %v6785, %v6781
    %v6818 = vpack.c.b16 %v6786, %v6782
    %v6819 = vpack.c.b16 %v6787, %v6783
    %6852 = vmatprep.subr.bf16.mxu0 %v6789
    %6853 = vmatpush1.bf16.xpose.msra.mxu0 %v6788
    %6854 = vmatprep.subr.bf16.mxu0 %v6793
    %6855 = vmatpush1.bf16.xpose.msra.mxu0 %v6792
    %6856 = vmatprep.subr.bf16.mxu0 %v6797
    %6857 = vmatpush1.bf16.xpose.msra.mxu0 %v6796
    %6858 = vmatprep.subr.bf16.mxu0 %v6801
    %6859 = vmatpush1.bf16.xpose.msra.mxu0 %v6800
    %6860 = vmatprep.subr.bf16.mxu0 %v6805
    %6861 = vmatpush1.bf16.xpose.msra.mxu0 %v6804
    %6862 = vmatprep.subr.bf16.mxu0 %v6809
    %6863 = vmatpush1.bf16.xpose.msra.mxu0 %v6808
    %6864 = vmatprep.subr.bf16.mxu0 %v6813
    %6865 = vmatpush1.bf16.xpose.msra.mxu0 %v6812
    %6866 = vmatprep.subr.bf16.mxu0 %v6817
    %6867 = vmatpush1.bf16.xpose.msra.mxu0 %v6816
    %6868 = vmatprep.subr.bf16.mxu0 0
    %6869 = vmatpush1.bf16.xpose.msra.mxu0 0
    %6870 = vmatprep.subr.bf16.mxu0 0
    %6871 = vmatpush1.bf16.xpose.msra.mxu0 0
    %6872 = vmatprep.subr.bf16.mxu0 0
    %6873 = vmatpush1.bf16.xpose.msra.mxu0 0
    %6874 = vmatprep.subr.bf16.mxu0 0
    %6875 = vmatpush1.bf16.xpose.msra.mxu0 0
    %6876 = vmatprep.subr.bf16.mxu0 0
    %6877 = vmatpush1.bf16.xpose.msra.mxu0 0
    %6878 = vmatprep.subr.bf16.mxu0 0
    %6879 = vmatpush1.bf16.xpose.msra.mxu0 0
    %6880 = vmatprep.subr.bf16.mxu0 0
    %6881 = vmatpush1.bf16.xpose.msra.mxu0 0
    %6882 = vmatprep.subr.bf16.mxu0 0
    %6883 = vmatpush1.bf16.xpose.msra.mxu0 0
    %6884 = vmatprep.mubr.bf16.mxu0 %v6581
    %6885 = vmatmul.mubr.bf16.gmra.mrb[0].mxu0 %v6580
    %v6886 = vpop.f32.mrb[0].mxu0
    %v6887 = vadd.f32 0.0, %v6886
    %v6888 = vpop.f32.mrb[0].mxu0
    %v6889 = vpop.f32.mrb[0].mxu0
    %v6890 = vadd.f32 0.0, %v6889
    %v6891 = vpop.f32.mrb[0].mxu0
    %6892 = vmatprep.mubr.bf16.mxu0 %v6585
    %6893 = vmatmul.mubr.bf16.gmra.mrb[0].mxu0 %v6584
    %v6894 = vpop.f32.mrb[0].mxu0
    %v6895 = vadd.f32 0.0, %v6894
    %v6896 = vpop.f32.mrb[0].mxu0
    %v6897 = vpop.f32.mrb[0].mxu0
    %v6898 = vadd.f32 0.0, %v6897
    %v6899 = vpop.f32.mrb[0].mxu0
    %6900 = vmatprep.mubr.bf16.mxu0 %v6589
    %6901 = vmatmul.mubr.bf16.gmra.mrb[0].mxu0 %v6588
    %v6902 = vpop.f32.mrb[0].mxu0
    %v6903 = vadd.f32 0.0, %v6902
    %v6904 = vpop.f32.mrb[0].mxu0
    %v6905 = vpop.f32.mrb[0].mxu0
    %v6906 = vadd.f32 0.0, %v6905
    %v6907 = vpop.f32.mrb[0].mxu0
    %6908 = vmatprep.mubr.bf16.mxu0 %v6593
    %6909 = vmatmul.mubr.bf16.gmra.mrb[0].mxu0 %v6592
    %v6910 = vpop.f32.mrb[0].mxu0
    %v6911 = vadd.f32 0.0, %v6910
    %v6912 = vpop.f32.mrb[0].mxu0
    %v6913 = vpop.f32.mrb[0].mxu0
    %v6914 = vadd.f32 0.0, %v6913
    %v6915 = vpop.f32.mrb[0].mxu0
    %6916 = vmatprep.mubr.bf16.mxu0 %v6645
    %6917 = vmatmul.mubr.bf16.gmra.mrb[0].mxu0 %v6644
    %v6918 = vpop.f32.mrb[0].mxu0
    %v6919 = vadd.f32 0.0, %v6918
    %v6920 = vpop.f32.mrb[0].mxu0
    %v6921 = vpop.f32.mrb[0].mxu0
    %v6922 = vadd.f32 0.0, %v6921
    %v6923 = vpop.f32.mrb[0].mxu0
    %6924 = vmatprep.mubr.bf16.mxu0 %v6649
    %6925 = vmatmul.mubr.bf16.gmra.mrb[0].mxu0 %v6648
    %v6926 = vpop.f32.mrb[0].mxu0
    %v6927 = vadd.f32 0.0, %v6926
    %v6928 = vpop.f32.mrb[0].mxu0
    %v6929 = vpop.f32.mrb[0].mxu0
    %v6930 = vadd.f32 0.0, %v6929
    %v6931 = vpop.f32.mrb[0].mxu0
    %6932 = vmatprep.mubr.bf16.mxu0 %v6653
    %6933 = vmatmul.mubr.bf16.gmra.mrb[0].mxu0 %v6652
    %v6934 = vpop.f32.mrb[0].mxu0
    %v6935 = vadd.f32 0.0, %v6934
    %v6936 = vpop.f32.mrb[0].mxu0
    %v6937 = vpop.f32.mrb[0].mxu0
    %v6938 = vadd.f32 0.0, %v6937
    %v6939 = vpop.f32.mrb[0].mxu0
    %6940 = vmatprep.mubr.bf16.mxu0 %v6657
    %6941 = vmatmul.mubr.bf16.gmra.mrb[0].mxu0 %v6656
    %v6942 = vpop.f32.mrb[0].mxu0
    %v6943 = vadd.f32 0.0, %v6942
    %v6944 = vpop.f32.mrb[0].mxu0
    %v6945 = vpop.f32.mrb[0].mxu0
    %v6946 = vadd.f32 0.0, %v6945
    %v6947 = vpop.f32.mrb[0].mxu0
    %6948 = vdwg.mxu0
    %6949 = vmatprep.subr.bf16.mxu0 %v6791
    %6950 = vmatpush1.bf16.xpose.msra.mxu0 %v6790
    %6951 = vmatprep.subr.bf16.mxu0 %v6795
    %6952 = vmatpush1.bf16.xpose.msra.mxu0 %v6794
    %6953 = vmatprep.subr.bf16.mxu0 %v6799
    %6954 = vmatpush1.bf16.xpose.msra.mxu0 %v6798
    %6955 = vmatprep.subr.bf16.mxu0 %v6803
    %6956 = vmatpush1.bf16.xpose.msra.mxu0 %v6802
    %6957 = vmatprep.subr.bf16.mxu0 %v6807
    %6958 = vmatpush1.bf16.xpose.msra.mxu0 %v6806
    %6959 = vmatprep.subr.bf16.mxu0 %v6811
    %6960 = vmatpush1.bf16.xpose.msra.mxu0 %v6810
    %6961 = vmatprep.subr.bf16.mxu0 %v6815
    %6962 = vmatpush1.bf16.xpose.msra.mxu0 %v6814
    %6963 = vmatprep.subr.bf16.mxu0 %v6819
    %6964 = vmatpush1.bf16.xpose.msra.mxu0 %v6818
    %6965 = vmatprep.subr.bf16.mxu0 0
    %6966 = vmatpush1.bf16.xpose.msra.mxu0 0
    %6967 = vmatprep.subr.bf16.mxu0 0
    %6968 = vmatpush1.bf16.xpose.msra.mxu0 0
    %6969 = vmatprep.subr.bf16.mxu0 0
    %6970 = vmatpush1.bf16.xpose.msra.mxu0 0
    %6971 = vmatprep.subr.bf16.mxu0 0
    %6972 = vmatpush1.bf16.xpose.msra.mxu0 0
    %6973 = vmatprep.subr.bf16.mxu0 0
    %6974 = vmatpush1.bf16.xpose.msra.mxu0 0
    %6975 = vmatprep.subr.bf16.mxu0 0
    %6976 = vmatpush1.bf16.xpose.msra.mxu0 0
    %6977 = vmatprep.subr.bf16.mxu0 0
    %6978 = vmatpush1.bf16.xpose.msra.mxu0 0
    %6979 = vmatprep.subr.bf16.mxu0 0
    %6980 = vmatpush1.bf16.xpose.msra.mxu0 0
    %6981 = vmatprep.mubr.bf16.mxu0 %v6583
    %6982 = vmatmul.mubr.bf16.gmra.mrb[0].mxu0 %v6582
    %v6983 = vpop.f32.mrb[0].mxu0
    %v6984 = vadd.f32 %v6887, %v6983
    %v6985 = vpop.f32.mrb[0].mxu0
    %v6986 = vpop.f32.mrb[0].mxu0
    %v6987 = vadd.f32 %v6890, %v6986
    %v6988 = vpop.f32.mrb[0].mxu0
    %6989 = vmatprep.mubr.bf16.mxu0 %v6587
    %6990 = vmatmul.mubr.bf16.gmra.mrb[0].mxu0 %v6586
    %v6991 = vpop.f32.mrb[0].mxu0
    %v6992 = vadd.f32 %v6895, %v6991
    %v6993 = vpop.f32.mrb[0].mxu0
    %v6994 = vpop.f32.mrb[0].mxu0
    %v6995 = vadd.f32 %v6898, %v6994
    %v6996 = vpop.f32.mrb[0].mxu0
    %6997 = vmatprep.mubr.bf16.mxu0 %v6591
    %6998 = vmatmul.mubr.bf16.gmra.mrb[0].mxu0 %v6590
    %v6999 = vpop.f32.mrb[0].mxu0
    %v7000 = vadd.f32 %v6903, %v6999
    %v7001 = vpop.f32.mrb[0].mxu0
    %v7002 = vpop.f32.mrb[0].mxu0
    %v7003 = vadd.f32 %v6906, %v7002
    %v7004 = vpop.f32.mrb[0].mxu0
    %7005 = vmatprep.mubr.bf16.mxu0 %v6595
    %7006 = vmatmul.mubr.bf16.gmra.mrb[0].mxu0 %v6594
    %v7007 = vpop.f32.mrb[0].mxu0
    %v7008 = vadd.f32 %v6911, %v7007
    %v7009 = vpop.f32.mrb[0].mxu0
    %v7010 = vpop.f32.mrb[0].mxu0
    %v7011 = vadd.f32 %v6914, %v7010
    %v7012 = vpop.f32.mrb[0].mxu0
    %7013 = vmatprep.mubr.bf16.mxu0 %v6647
    %7014 = vmatmul.mubr.bf16.gmra.mrb[0].mxu0 %v6646
    %v7015 = vpop.f32.mrb[0].mxu0
    %v7016 = vadd.f32 %v6919, %v7015
    %v7017 = vpop.f32.mrb[0].mxu0
    %v7018 = vpop.f32.mrb[0].mxu0
    %v7019 = vadd.f32 %v6922, %v7018
    %v7020 = vpop.f32.mrb[0].mxu0
    %7021 = vmatprep.mubr.bf16.mxu0 %v6651
    %7022 = vmatmul.mubr.bf16.gmra.mrb[0].mxu0 %v6650
    %v7023 = vpop.f32.mrb[0].mxu0
    %v7024 = vadd.f32 %v6927, %v7023
    %v7025 = vpop.f32.mrb[0].mxu0
    %v7026 = vpop.f32.mrb[0].mxu0
    %v7027 = vadd.f32 %v6930, %v7026
    %v7028 = vpop.f32.mrb[0].mxu0
    %7029 = vmatprep.mubr.bf16.mxu0 %v6655
    %7030 = vmatmul.mubr.bf16.gmra.mrb[0].mxu0 %v6654
    %v7031 = vpop.f32.mrb[0].mxu0
    %v7032 = vadd.f32 %v6935, %v7031
    %v7033 = vpop.f32.mrb[0].mxu0
    %v7034 = vpop.f32.mrb[0].mxu0
    %v7035 = vadd.f32 %v6938, %v7034
    %v7036 = vpop.f32.mrb[0].mxu0
    %7037 = vmatprep.mubr.bf16.mxu0 %v6659
    %7038 = vmatmul.mubr.bf16.gmra.mrb[0].mxu0 %v6658
    %v7039 = vpop.f32.mrb[0].mxu0
    %v7040 = vadd.f32 %v6943, %v7039
    %v7041 = vpop.f32.mrb[0].mxu0
    %v7042 = vpop.f32.mrb[0].mxu0
    %v7043 = vadd.f32 %v6946, %v7042
    %v7044 = vpop.f32.mrb[0].mxu0
    %7045 = vdwg.mxu0
    %7046 = vmax.xlane.f32.xlu0 %v6984
    %v7047 = vpop.xlane.xlu0 %7046
    %7048 = vmax.xlane.f32.xlu0 %v6987
    %v7049 = vpop.xlane.xlu0 %7048
    %7050 = vmax.xlane.f32.xlu0 %v6992
    %v7051 = vpop.xlane.xlu0 %7050
    %7052 = vmax.xlane.f32.xlu0 %v6995
    %v7053 = vpop.xlane.xlu0 %7052
    %7054 = vmax.xlane.f32.xlu0 %v7000
    %v7055 = vpop.xlane.xlu0 %7054
    %7056 = vmax.xlane.f32.xlu0 %v7003
    %v7057 = vpop.xlane.xlu0 %7056
    %7058 = vmax.xlane.f32.xlu0 %v7008
    %v7059 = vpop.xlane.xlu0 %7058
    %7060 = vmax.xlane.f32.xlu0 %v7011
    %v7061 = vpop.xlane.xlu0 %7060
    %7062 = vmax.xlane.f32.xlu0 %v7016
    %v7063 = vpop.xlane.xlu0 %7062
    %7064 = vmax.xlane.f32.xlu0 %v7019
    %v7065 = vpop.xlane.xlu0 %7064
    %7066 = vmax.xlane.f32.xlu0 %v7024
    %v7067 = vpop.xlane.xlu0 %7066
    %7068 = vmax.xlane.f32.xlu0 %v7027
    %v7069 = vpop.xlane.xlu0 %7068
    %7070 = vmax.xlane.f32.xlu0 %v7032
    %v7071 = vpop.xlane.xlu0 %7070
    %7072 = vmax.xlane.f32.xlu0 %v7035
    %v7073 = vpop.xlane.xlu0 %7072
    %7074 = vmax.xlane.f32.xlu0 %v7040
    %v7075 = vpop.xlane.xlu0 %7074
    %7076 = vmax.xlane.f32.xlu0 %v7043
    %v7077 = vpop.xlane.xlu0 %7076
    %v7078 = vsub.f32 %v6984, %v7047
    %v7079 = vsub.f32 %v6987, %v7049
    %v7080 = vsub.f32 %v6992, %v7051
    %v7081 = vsub.f32 %v6995, %v7053
    %v7082 = vsub.f32 %v7000, %v7055
    %v7083 = vsub.f32 %v7003, %v7057
    %v7084 = vsub.f32 %v7008, %v7059
    %v7085 = vsub.f32 %v7011, %v7061
    %v7086 = vsub.f32 %v7016, %v7063
    %v7087 = vsub.f32 %v7019, %v7065
    %v7088 = vsub.f32 %v7024, %v7067
    %v7089 = vsub.f32 %v7027, %v7069
    %v7090 = vsub.f32 %v7032, %v7071
    %v7091 = vsub.f32 %v7035, %v7073
    %v7092 = vsub.f32 %v7040, %v7075
    %v7093 = vsub.f32 %v7043, %v7077
    %v7094 = vmul.f32 %v7078, 1.442695
    %v7095 = vpow.pop %v7094
    %v7096 = vmul.f32 %v7079, 1.442695
    %v7097 = vpow.pop %v7096
    %v7098 = vmul.f32 %v7080, 1.442695
    %v7099 = vpow.pop %v7098
    %v7100 = vmul.f32 %v7081, 1.442695
    %v7101 = vpow.pop %v7100
    %v7102 = vmul.f32 %v7082, 1.442695
    %v7103 = vpow.pop %v7102
    %v7104 = vmul.f32 %v7083, 1.442695
    %v7105 = vpow.pop %v7104
    %v7106 = vmul.f32 %v7084, 1.442695
    %v7107 = vpow.pop %v7106
    %v7108 = vmul.f32 %v7085, 1.442695
    %v7109 = vpow.pop %v7108
    %v7110 = vmul.f32 %v7086, 1.442695
    %v7111 = vpow.pop %v7110
    %v7112 = vmul.f32 %v7087, 1.442695
    %v7113 = vpow.pop %v7112
    %v7114 = vmul.f32 %v7088, 1.442695
    %v7115 = vpow.pop %v7114
    %v7116 = vmul.f32 %v7089, 1.442695
    %v7117 = vpow.pop %v7116
    %v7118 = vmul.f32 %v7090, 1.442695
    %v7119 = vpow.pop %v7118
    %v7120 = vmul.f32 %v7091, 1.442695
    %v7121 = vpow.pop %v7120
    %v7122 = vmul.f32 %v7092, 1.442695
    %v7123 = vpow.pop %v7122
    %v7124 = vmul.f32 %v7093, 1.442695
    %v7125 = vpow.pop %v7124
    %7126 = vadd.xlane.f32.xlu0 %v7095
    %v7127 = vpop.xlane.xlu0 %7126
    %7128 = vadd.xlane.f32.xlu0 %v7097
    %v7129 = vpop.xlane.xlu0 %7128
    %7130 = vadd.xlane.f32.xlu0 %v7099
    %v7131 = vpop.xlane.xlu0 %7130
    %7132 = vadd.xlane.f32.xlu0 %v7101
    %v7133 = vpop.xlane.xlu0 %7132
    %7134 = vadd.xlane.f32.xlu0 %v7103
    %v7135 = vpop.xlane.xlu0 %7134
    %7136 = vadd.xlane.f32.xlu0 %v7105
    %v7137 = vpop.xlane.xlu0 %7136
    %7138 = vadd.xlane.f32.xlu0 %v7107
    %v7139 = vpop.xlane.xlu0 %7138
    %7140 = vadd.xlane.f32.xlu0 %v7109
    %v7141 = vpop.xlane.xlu0 %7140
    %7142 = vadd.xlane.f32.xlu0 %v7111
    %v7143 = vpop.xlane.xlu0 %7142
    %7144 = vadd.xlane.f32.xlu0 %v7113
    %v7145 = vpop.xlane.xlu0 %7144
    %7146 = vadd.xlane.f32.xlu0 %v7115
    %v7147 = vpop.xlane.xlu0 %7146
    %7148 = vadd.xlane.f32.xlu0 %v7117
    %v7149 = vpop.xlane.xlu0 %7148
    %7150 = vadd.xlane.f32.xlu0 %v7119
    %v7151 = vpop.xlane.xlu0 %7150
    %7152 = vadd.xlane.f32.xlu0 %v7121
    %v7153 = vpop.xlane.xlu0 %7152
    %7154 = vadd.xlane.f32.xlu0 %v7123
    %v7155 = vpop.xlane.xlu0 %7154
    %7156 = vadd.xlane.f32.xlu0 %v7125
    %v7157 = vpop.xlane.xlu0 %7156
    %v7158 = vrcp.pop %v7127
    %v7159 = vrcp.pop %v7129
    %v7160 = vrcp.pop %v7131
    %v7161 = vrcp.pop %v7133
    %v7162 = vrcp.pop %v7135
    %v7163 = vrcp.pop %v7137
    %v7164 = vrcp.pop %v7139
    %v7165 = vrcp.pop %v7141
    %v7166 = vrcp.pop %v7143
    %v7167 = vrcp.pop %v7145
    %v7168 = vrcp.pop %v7147
    %v7169 = vrcp.pop %v7149
    %v7170 = vrcp.pop %v7151
    %v7171 = vrcp.pop %v7153
    %v7172 = vrcp.pop %v7155
    %v7173 = vrcp.pop %v7157
    %v7174 = vmul.f32 %v7095, %v7158
    %v7175 = vmul.f32 %v7097, %v7159
    %v7176 = vmul.f32 %v7099, %v7160
    %v7177 = vmul.f32 %v7101, %v7161
    %v7178 = vmul.f32 %v7103, %v7162
    %v7179 = vmul.f32 %v7105, %v7163
    %v7180 = vmul.f32 %v7107, %v7164
    %v7181 = vmul.f32 %v7109, %v7165
    %v7182 = vmul.f32 %v7111, %v7166
    %v7183 = vmul.f32 %v7113, %v7167
    %v7184 = vmul.f32 %v7115, %v7168
    %v7185 = vmul.f32 %v7117, %v7169
    %v7186 = vmul.f32 %v7119, %v7170
    %v7187 = vmul.f32 %v7121, %v7171
    %v7188 = vmul.f32 %v7123, %v7172
    %v7189 = vmul.f32 %v7125, %v7173
    %7190 = vst [vmem:[#allocation7] sm:$0xff] %v7174
    %7191 = vst [vmem:[#allocation7 + $0x8] sm:$0xff] %v7175
    %7192 = vst [vmem:[#allocation7 + $0x10] sm:$0xff] %v7176
    %7193 = vst [vmem:[#allocation7 + $0x18] sm:$0xff] %v7177
    %7194 = vst [vmem:[#allocation7 + $0x20] sm:$0xff] %v7178
    %7195 = vst [vmem:[#allocation7 + $0x28] sm:$0xff] %v7179
    %7196 = vst [vmem:[#allocation7 + $0x30] sm:$0xff] %v7180
    %7197 = vst [vmem:[#allocation7 + $0x38] sm:$0xff] %v7181
    %7198 = vst [vmem:[#allocation7 + $0x40] sm:$0xff] %v7182
    %7199 = vst [vmem:[#allocation7 + $0x48] sm:$0xff] %v7183
    %7200 = vst [vmem:[#allocation7 + $0x50] sm:$0xff] %v7184
    %7201 = vst [vmem:[#allocation7 + $0x58] sm:$0xff] %v7185
    %7202 = vst [vmem:[#allocation7 + $0x60] sm:$0xff] %v7186
    %7203 = vst [vmem:[#allocation7 + $0x68] sm:$0xff] %v7187
    %7204 = vst [vmem:[#allocation7 + $0x70] sm:$0xff] %v7188
    %7205 = vst [vmem:[#allocation7 + $0x78] sm:$0xff] %v7189
    %v7206 = vpack.c.bf16 %v7175, %v7174
    %v7207 = vpack.c.bf16 %v7177, %v7176
    %v7208 = vpack.c.bf16 %v7179, %v7178
    %v7209 = vpack.c.bf16 %v7181, %v7180
    %v7210 = vpack.c.bf16 %v7183, %v7182
    %v7211 = vpack.c.bf16 %v7185, %v7184
    %v7212 = vpack.c.bf16 %v7187, %v7186
    %v7213 = vpack.c.bf16 %v7189, %v7188
    %7214 = vmatprep.subr.bf16.mxu0 %v6789
    %7215 = vmatpush1.bf16.msra.mxu0 %v6788
    %7216 = vmatprep.subr.bf16.mxu0 %v6793
    %7217 = vmatpush1.bf16.msra.mxu0 %v6792
    %7218 = vmatprep.subr.bf16.mxu0 %v6797
    %7219 = vmatpush1.bf16.msra.mxu0 %v6796
    %7220 = vmatprep.subr.bf16.mxu0 %v6801
    %7221 = vmatpush1.bf16.msra.mxu0 %v6800
    %7222 = vmatprep.subr.bf16.mxu0 %v6805
    %7223 = vmatpush1.bf16.msra.mxu0 %v6804
    %7224 = vmatprep.subr.bf16.mxu0 %v6809
    %7225 = vmatpush1.bf16.msra.mxu0 %v6808
    %7226 = vmatprep.subr.bf16.mxu0 %v6813
    %7227 = vmatpush1.bf16.msra.mxu0 %v6812
    %7228 = vmatprep.subr.bf16.mxu0 %v6817
    %7229 = vmatpush1.bf16.msra.mxu0 %v6816
    %7230 = vmatprep.subr.bf16.mxu0 0
    %7231 = vmatpush1.bf16.msra.mxu0 0
    %7232 = vmatprep.subr.bf16.mxu0 0
    %7233 = vmatpush1.bf16.msra.mxu0 0
    %7234 = vmatprep.subr.bf16.mxu0 0
    %7235 = vmatpush1.bf16.msra.mxu0 0
    %7236 = vmatprep.subr.bf16.mxu0 0
    %7237 = vmatpush1.bf16.msra.mxu0 0
    %7238 = vmatprep.subr.bf16.mxu0 0
    %7239 = vmatpush1.bf16.msra.mxu0 0
    %7240 = vmatprep.subr.bf16.mxu0 0
    %7241 = vmatpush1.bf16.msra.mxu0 0
    %7242 = vmatprep.subr.bf16.mxu0 0
    %7243 = vmatpush1.bf16.msra.mxu0 0
    %7244 = vmatprep.subr.bf16.mxu0 0
    %7245 = vmatpush1.bf16.msra.mxu0 0
    %7246 = vmatprep.mubr.bf16.mxu0 0
    %7247 = vmatmul.mubr.bf16.gmra.mrb[0].mxu0 %v7206
    %v7248 = vpop.f32.mrb[0].mxu0
    %v7249 = vadd.f32 0.0, %v7248
    %v7250 = vpop.f32.mrb[0].mxu0
    %v7251 = vadd.f32 0.0, %v7250
    %v7252 = vpop.f32.mrb[0].mxu0
    %v7253 = vadd.f32 0.0, %v7252
    %v7254 = vpop.f32.mrb[0].mxu0
    %v7255 = vadd.f32 0.0, %v7254
    %7256 = vmatprep.mubr.bf16.mxu0 0
    %7257 = vmatmul.mubr.bf16.gmra.mrb[0].mxu0 %v7207
    %v7258 = vpop.f32.mrb[0].mxu0
    %v7259 = vadd.f32 0.0, %v7258
    %v7260 = vpop.f32.mrb[0].mxu0
    %v7261 = vadd.f32 0.0, %v7260
    %v7262 = vpop.f32.mrb[0].mxu0
    %v7263 = vadd.f32 0.0, %v7262
    %v7264 = vpop.f32.mrb[0].mxu0
    %v7265 = vadd.f32 0.0, %v7264
    %7266 = vmatprep.mubr.bf16.mxu0 0
    %7267 = vmatmul.mubr.bf16.gmra.mrb[0].mxu0 %v7208
    %v7268 = vpop.f32.mrb[0].mxu0
    %v7269 = vadd.f32 0.0, %v7268
    %v7270 = vpop.f32.mrb[0].mxu0
    %v7271 = vadd.f32 0.0, %v7270
    %v7272 = vpop.f32.mrb[0].mxu0
    %v7273 = vadd.f32 0.0, %v7272
    %v7274 = vpop.f32.mrb[0].mxu0
    %v7275 = vadd.f32 0.0, %v7274
    %7276 = vmatprep.mubr.bf16.mxu0 0
    %7277 = vmatmul.mubr.bf16.gmra.mrb[0].mxu0 %v7209
    %v7278 = vpop.f32.mrb[0].mxu0
    %v7279 = vadd.f32 0.0, %v7278
    %v7280 = vpop.f32.mrb[0].mxu0
    %v7281 = vadd.f32 0.0, %v7280
    %v7282 = vpop.f32.mrb[0].mxu0
    %v7283 = vadd.f32 0.0, %v7282
    %v7284 = vpop.f32.mrb[0].mxu0
    %v7285 = vadd.f32 0.0, %v7284
    %7286 = vmatprep.mubr.bf16.mxu0 0
    %7287 = vmatmul.mubr.bf16.gmra.mrb[0].mxu0 %v7210
    %v7288 = vpop.f32.mrb[0].mxu0
    %v7289 = vadd.f32 0.0, %v7288
    %v7290 = vpop.f32.mrb[0].mxu0
    %v7291 = vadd.f32 0.0, %v7290
    %v7292 = vpop.f32.mrb[0].mxu0
    %v7293 = vadd.f32 0.0, %v7292
    %v7294 = vpop.f32.mrb[0].mxu0
    %v7295 = vadd.f32 0.0, %v7294
    %7296 = vmatprep.mubr.bf16.mxu0 0
    %7297 = vmatmul.mubr.bf16.gmra.mrb[0].mxu0 %v7211
    %v7298 = vpop.f32.mrb[0].mxu0
    %v7299 = vadd.f32 0.0, %v7298
    %v7300 = vpop.f32.mrb[0].mxu0
    %v7301 = vadd.f32 0.0, %v7300
    %v7302 = vpop.f32.mrb[0].mxu0
    %v7303 = vadd.f32 0.0, %v7302
    %v7304 = vpop.f32.mrb[0].mxu0
    %v7305 = vadd.f32 0.0, %v7304
    %7306 = vmatprep.mubr.bf16.mxu0 0
    %7307 = vmatmul.mubr.bf16.gmra.mrb[0].mxu0 %v7212
    %v7308 = vpop.f32.mrb[0].mxu0
    %v7309 = vadd.f32 0.0, %v7308
    %v7310 = vpop.f32.mrb[0].mxu0
    %v7311 = vadd.f32 0.0, %v7310
    %v7312 = vpop.f32.mrb[0].mxu0
    %v7313 = vadd.f32 0.0, %v7312
    %v7314 = vpop.f32.mrb[0].mxu0
    %v7315 = vadd.f32 0.0, %v7314
    %7316 = vmatprep.mubr.bf16.mxu0 0
    %7317 = vmatmul.mubr.bf16.gmra.mrb[0].mxu0 %v7213
    %v7318 = vpop.f32.mrb[0].mxu0
    %v7319 = vadd.f32 0.0, %v7318
    %v7320 = vpop.f32.mrb[0].mxu0
    %v7321 = vadd.f32 0.0, %v7320
    %v7322 = vpop.f32.mrb[0].mxu0
    %v7323 = vadd.f32 0.0, %v7322
    %v7324 = vpop.f32.mrb[0].mxu0
    %v7325 = vadd.f32 0.0, %v7324
    %7326 = vdwg.mxu0
    %7327 = vmatprep.subr.bf16.mxu0 %v6791
    %7328 = vmatpush1.bf16.msra.mxu0 %v6790
    %7329 = vmatprep.subr.bf16.mxu0 %v6795
    %7330 = vmatpush1.bf16.msra.mxu0 %v6794
    %7331 = vmatprep.subr.bf16.mxu0 %v6799
    %7332 = vmatpush1.bf16.msra.mxu0 %v6798
    %7333 = vmatprep.subr.bf16.mxu0 %v6803
    %7334 = vmatpush1.bf16.msra.mxu0 %v6802
    %7335 = vmatprep.subr.bf16.mxu0 %v6807
    %7336 = vmatpush1.bf16.msra.mxu0 %v6806
    %7337 = vmatprep.subr.bf16.mxu0 %v6811
    %7338 = vmatpush1.bf16.msra.mxu0 %v6810
    %7339 = vmatprep.subr.bf16.mxu0 %v6815
    %7340 = vmatpush1.bf16.msra.mxu0 %v6814
    %7341 = vmatprep.subr.bf16.mxu0 %v6819
    %7342 = vmatpush1.bf16.msra.mxu0 %v6818
    %7343 = vmatprep.subr.bf16.mxu0 0
    %7344 = vmatpush1.bf16.msra.mxu0 0
    %7345 = vmatprep.subr.bf16.mxu0 0
    %7346 = vmatpush1.bf16.msra.mxu0 0
    %7347 = vmatprep.subr.bf16.mxu0 0
    %7348 = vmatpush1.bf16.msra.mxu0 0
    %7349 = vmatprep.subr.bf16.mxu0 0
    %7350 = vmatpush1.bf16.msra.mxu0 0
    %7351 = vmatprep.subr.bf16.mxu0 0
    %7352 = vmatpush1.bf16.msra.mxu0 0
    %7353 = vmatprep.subr.bf16.mxu0 0
    %7354 = vmatpush1.bf16.msra.mxu0 0
    %7355 = vmatprep.subr.bf16.mxu0 0
    %7356 = vmatpush1.bf16.msra.mxu0 0
    %7357 = vmatprep.subr.bf16.mxu0 0
    %7358 = vmatpush1.bf16.msra.mxu0 0
    %7359 = vmatprep.mubr.bf16.mxu0 0
    %7360 = vmatmul.mubr.bf16.gmra.mrb[0].mxu0 %v7206
    %v7361 = vpop.f32.mrb[0].mxu0
    %v7362 = vadd.f32 0.0, %v7361
    %v7363 = vpop.f32.mrb[0].mxu0
    %v7364 = vadd.f32 0.0, %v7363
    %v7365 = vpop.f32.mrb[0].mxu0
    %v7366 = vadd.f32 0.0, %v7365
    %v7367 = vpop.f32.mrb[0].mxu0
    %v7368 = vadd.f32 0.0, %v7367
    %7369 = vmatprep.mubr.bf16.mxu0 0
    %7370 = vmatmul.mubr.bf16.gmra.mrb[0].mxu0 %v7207
    %v7371 = vpop.f32.mrb[0].mxu0
    %v7372 = vadd.f32 0.0, %v7371
    %v7373 = vpop.f32.mrb[0].mxu0
    %v7374 = vadd.f32 0.0, %v7373
    %v7375 = vpop.f32.mrb[0].mxu0
    %v7376 = vadd.f32 0.0, %v7375
    %v7377 = vpop.f32.mrb[0].mxu0
    %v7378 = vadd.f32 0.0, %v7377
    %7379 = vmatprep.mubr.bf16.mxu0 0
    %7380 = vmatmul.mubr.bf16.gmra.mrb[0].mxu0 %v7208
    %v7381 = vpop.f32.mrb[0].mxu0
    %v7382 = vadd.f32 0.0, %v7381
    %v7383 = vpop.f32.mrb[0].mxu0
    %v7384 = vadd.f32 0.0, %v7383
    %v7385 = vpop.f32.mrb[0].mxu0
    %v7386 = vadd.f32 0.0, %v7385
    %v7387 = vpop.f32.mrb[0].mxu0
    %v7388 = vadd.f32 0.0, %v7387
    %7389 = vmatprep.mubr.bf16.mxu0 0
    %7390 = vmatmul.mubr.bf16.gmra.mrb[0].mxu0 %v7209
    %v7391 = vpop.f32.mrb[0].mxu0
    %v7392 = vadd.f32 0.0, %v7391
    %v7393 = vpop.f32.mrb[0].mxu0
    %v7394 = vadd.f32 0.0, %v7393
    %v7395 = vpop.f32.mrb[0].mxu0
    %v7396 = vadd.f32 0.0, %v7395
    %v7397 = vpop.f32.mrb[0].mxu0
    %v7398 = vadd.f32 0.0, %v7397
    %7399 = vmatprep.mubr.bf16.mxu0 0
    %7400 = vmatmul.mubr.bf16.gmra.mrb[0].mxu0 %v7210
    %v7401 = vpop.f32.mrb[0].mxu0
    %v7402 = vadd.f32 0.0, %v7401
    %v7403 = vpop.f32.mrb[0].mxu0
    %v7404 = vadd.f32 0.0, %v7403
    %v7405 = vpop.f32.mrb[0].mxu0
    %v7406 = vadd.f32 0.0, %v7405
    %v7407 = vpop.f32.mrb[0].mxu0
    %v7408 = vadd.f32 0.0, %v7407
    %7409 = vmatprep.mubr.bf16.mxu0 0
    %7410 = vmatmul.mubr.bf16.gmra.mrb[0].mxu0 %v7211
    %v7411 = vpop.f32.mrb[0].mxu0
    %v7412 = vadd.f32 0.0, %v7411
    %v7413 = vpop.f32.mrb[0].mxu0
    %v7414 = vadd.f32 0.0, %v7413
    %v7415 = vpop.f32.mrb[0].mxu0
    %v7416 = vadd.f32 0.0, %v7415
    %v7417 = vpop.f32.mrb[0].mxu0
    %v7418 = vadd.f32 0.0, %v7417
    %7419 = vmatprep.mubr.bf16.mxu0 0
    %7420 = vmatmul.mubr.bf16.gmra.mrb[0].mxu0 %v7212
    %v7421 = vpop.f32.mrb[0].mxu0
    %v7422 = vadd.f32 0.0, %v7421
    %v7423 = vpop.f32.mrb[0].mxu0
    %v7424 = vadd.f32 0.0, %v7423
    %v7425 = vpop.f32.mrb[0].mxu0
    %v7426 = vadd.f32 0.0, %v7425
    %v7427 = vpop.f32.mrb[0].mxu0
    %v7428 = vadd.f32 0.0, %v7427
    %7429 = vmatprep.mubr.bf16.mxu0 0
    %7430 = vmatmul.mubr.bf16.gmra.mrb[0].mxu0 %v7213
    %v7431 = vpop.f32.mrb[0].mxu0
    %v7432 = vadd.f32 0.0, %v7431
    %v7433 = vpop.f32.mrb[0].mxu0
    %v7434 = vadd.f32 0.0, %v7433
    %v7435 = vpop.f32.mrb[0].mxu0
    %v7436 = vadd.f32 0.0, %v7435
    %v7437 = vpop.f32.mrb[0].mxu0
    %v7438 = vadd.f32 0.0, %v7437
    %7439 = vdwg.mxu0
    %7440 = vst [vmem:[#allocation6] sm:$0xff] %v7249
    %7441 = vst [vmem:[#allocation6 + $0x8] sm:$0xff] %v7251
    %7442 = vst [vmem:[#allocation6 + $0x10] sm:$0xff] %v7362
    %7443 = vst [vmem:[#allocation6 + $0x18] sm:$0xff] %v7364
    %7444 = vst [vmem:[#allocation6 + $0x20] sm:$0xff] %v7253
    %7445 = vst [vmem:[#allocation6 + $0x28] sm:$0xff] %v7255
    %7446 = vst [vmem:[#allocation6 + $0x30] sm:$0xff] %v7366
    %7447 = vst [vmem:[#allocation6 + $0x38] sm:$0xff] %v7368
    %7448 = vst [vmem:[#allocation6 + $0x40] sm:$0xff] %v7259
    %7449 = vst [vmem:[#allocation6 + $0x48] sm:$0xff] %v7261
    %7450 = vst [vmem:[#allocation6 + $0x50] sm:$0xff] %v7372
    %7451 = vst [vmem:[#allocation6 + $0x58] sm:$0xff] %v7374
    %7452 = vst [vmem:[#allocation6 + $0x60] sm:$0xff] %v7263
    %7453 = vst [vmem:[#allocation6 + $0x68] sm:$0xff] %v7265
    %7454 = vst [vmem:[#allocation6 + $0x70] sm:$0xff] %v7376
    %7455 = vst [vmem:[#allocation6 + $0x78] sm:$0xff] %v7378
    %7456 = vst [vmem:[#allocation6 + $0x80] sm:$0xff] %v7269
    %7457 = vst [vmem:[#allocation6 + $0x88] sm:$0xff] %v7271
    %7458 = vst [vmem:[#allocation6 + $0x90] sm:$0xff] %v7382
    %7459 = vst [vmem:[#allocation6 + $0x98] sm:$0xff] %v7384
    %7460 = vst [vmem:[#allocation6 + $0xa0] sm:$0xff] %v7273
    %7461 = vst [vmem:[#allocation6 + $0xa8] sm:$0xff] %v7275
    %7462 = vst [vmem:[#allocation6 + $0xb0] sm:$0xff] %v7386
    %7463 = vst [vmem:[#allocation6 + $0xb8] sm:$0xff] %v7388
    %7464 = vst [vmem:[#allocation6 + $0xc0] sm:$0xff] %v7279
    %7465 = vst [vmem:[#allocation6 + $0xc8] sm:$0xff] %v7281
    %7466 = vst [vmem:[#allocation6 + $0xd0] sm:$0xff] %v7392
    %7467 = vst [vmem:[#allocation6 + $0xd8] sm:$0xff] %v7394
    %7468 = vst [vmem:[#allocation6 + $0xe0] sm:$0xff] %v7283
    %7469 = vst [vmem:[#allocation6 + $0xe8] sm:$0xff] %v7285
    %7470 = vst [vmem:[#allocation6 + $0xf0] sm:$0xff] %v7396
    %7471 = vst [vmem:[#allocation6 + $0xf8] sm:$0xff] %v7398
    %7472 = vst [vmem:[#allocation6 + $0x100] sm:$0xff] %v7289
    %7473 = vst [vmem:[#allocation6 + $0x108] sm:$0xff] %v7291
    %7474 = vst [vmem:[#allocation6 + $0x110] sm:$0xff] %v7402
    %7475 = vst [vmem:[#allocation6 + $0x118] sm:$0xff] %v7404
    %7476 = vst [vmem:[#allocation6 + $0x120] sm:$0xff] %v7293
    %7477 = vst [vmem:[#allocation6 + $0x128] sm:$0xff] %v7295
    %7478 = vst [vmem:[#allocation6 + $0x130] sm:$0xff] %v7406
    %7479 = vst [vmem:[#allocation6 + $0x138] sm:$0xff] %v7408
    %7480 = vst [vmem:[#allocation6 + $0x140] sm:$0xff] %v7299
    %7481 = vst [vmem:[#allocation6 + $0x148] sm:$0xff] %v7301
    %7482 = vst [vmem:[#allocation6 + $0x150] sm:$0xff] %v7412
    %7483 = vst [vmem:[#allocation6 + $0x158] sm:$0xff] %v7414
    %7484 = vst [vmem:[#allocation6 + $0x160] sm:$0xff] %v7303
    %7485 = vst [vmem:[#allocation6 + $0x168] sm:$0xff] %v7305
    %7486 = vst [vmem:[#allocation6 + $0x170] sm:$0xff] %v7416
    %7487 = vst [vmem:[#allocation6 + $0x178] sm:$0xff] %v7418
    %7488 = vst [vmem:[#allocation6 + $0x180] sm:$0xff] %v7309
    %7489 = vst [vmem:[#allocation6 + $0x188] sm:$0xff] %v7311
    %7490 = vst [vmem:[#allocation6 + $0x190] sm:$0xff] %v7422
    %7491 = vst [vmem:[#allocation6 + $0x198] sm:$0xff] %v7424
    %7492 = vst [vmem:[#allocation6 + $0x1a0] sm:$0xff] %v7313
    %7493 = vst [vmem:[#allocation6 + $0x1a8] sm:$0xff] %v7315
    %7494 = vst [vmem:[#allocation6 + $0x1b0] sm:$0xff] %v7426
    %7495 = vst [vmem:[#allocation6 + $0x1b8] sm:$0xff] %v7428
    %7496 = vst [vmem:[#allocation6 + $0x1c0] sm:$0xff] %v7319
    %7497 = vst [vmem:[#allocation6 + $0x1c8] sm:$0xff] %v7321
    %7498 = vst [vmem:[#allocation6 + $0x1d0] sm:$0xff] %v7432
    %7499 = vst [vmem:[#allocation6 + $0x1d8] sm:$0xff] %v7434
    %7500 = vst [vmem:[#allocation6 + $0x1e0] sm:$0xff] %v7323
    %7501 = vst [vmem:[#allocation6 + $0x1e8] sm:$0xff] %v7325
    %7502 = vst [vmem:[#allocation6 + $0x1f0] sm:$0xff] %v7436
    %7503 = vst [vmem:[#allocation6 + $0x1f8] sm:$0xff] %v7438
    // Predicated region
    $region22: #{new_spatial_branch.1} parent=1 // pred_check
      _
    $region23: #{new_spatial_branch.1} parent=1 // pred_check_branch
      %7505 = sbr.rel (0) target = $region25
    $region24: #{new_spatial_branch.1} parent=1 // pred_region
      %s7507 = ssub.s32 8192, 8192
      %7508 = vsyncadd [#allocation3], %s7507
      %s7509 = sshll.u32 [#allocation2], 4
      %s7510 = int_to_ptr.vmem [resolvable:$true] %s7509
      %7515 = dma.vmem_to_hbm [thread:$0]  %s7510, 8192, %s5, [#allocation3], 512, 512, 32
    $region25: #{new_spatial_branch.1} parent=1 // pred_fallthru
      _
    // Predicated region
    $region26: #{new_spatial_branch.1} parent=1 // pred_check
      _
    $region27: #{new_spatial_branch.1} parent=1 // pred_check_branch
      %7517 = sbr.rel (0) target = $region29
    $region28: #{new_spatial_branch.1} parent=1 // pred_region
      %s7519 = ssub.s32 128, 128
      %7520 = vsyncadd [#allocation5], %s7519
      %s7521 = sshll.u32 [#allocation4], 4
      %s7522 = int_to_ptr.vmem [resolvable:$true] %s7521
      %7527 = dma.vmem_to_hbm [thread:$0]  %s7522, 128, %s6, [#allocation5], 64, 64, 4
    $region29: #{new_spatial_branch.1} parent=1 // pred_fallthru
      _
    // Predicated region
    $region30: #{new_spatial_branch.1} parent=1 // pred_check
      _
    $region31: #{new_spatial_branch.1} parent=1 // pred_check_branch
      %7529 = sbr.rel (0) target = $region33
    $region32: #{new_spatial_branch.1} parent=1 // pred_region
      %s7531 = ssub.s32 8192, 8192
      %7532 = vsyncadd [#allocation5], %s7531
      %s7533 = sshll.u32 [#allocation6], 4
      %s7534 = int_to_ptr.vmem [resolvable:$true] %s7533
      %7539 = dma.vmem_to_hbm [thread:$0]  %s7534, 8192, %s7, [#allocation5], 512, 512, 32
    $region33: #{new_spatial_branch.1} parent=1 // pred_fallthru
      _
    // Predicated region
    $region34: #{new_spatial_branch.1} parent=1 // pred_check
      _
    $region35: #{new_spatial_branch.1} parent=1 // pred_check_branch
      %7541 = sbr.rel (0) target = $region37
    $region36: #{new_spatial_branch.1} parent=1 // pred_region
      %s7543 = ssub.s32 2048, 2048
      %7544 = vsyncadd [#allocation8], %s7543
      %s7545 = sshll.u32 [#allocation7], 4
      %s7546 = int_to_ptr.vmem [resolvable:$true] %s7545
      %7551 = dma.vmem_to_hbm [thread:$0]  %s7546, 2048, %s8, [#allocation8], 128, 128, 8
    $region37: #{new_spatial_branch.1} parent=1 // pred_fallthru
      _
    // Predicated region
    $region38: #{new_spatial_branch.1} parent=1 // pred_check
      _
    $region39: #{new_spatial_branch.1} parent=1 // pred_check_branch
      %7553 = sbr.rel (0) target = $region41
    $region40: #{new_spatial_branch.1} parent=1 // pred_region
      %7554 = dma.done [#allocation3], 8192
    $region41: #{new_spatial_branch.1} parent=1 // pred_fallthru
      _
    // Predicated region
    $region42: #{new_spatial_branch.1} parent=1 // pred_check
      _
    $region43: #{new_spatial_branch.1} parent=1 // pred_check_branch
      %7556 = sbr.rel (0) target = $region45
    $region44: #{new_spatial_branch.1} parent=1 // pred_region
      %7557 = dma.done [#allocation5], 128
    $region45: #{new_spatial_branch.1} parent=1 // pred_fallthru
      _
    // Predicated region
    $region46: #{new_spatial_branch.1} parent=1 // pred_check
      _
    $region47: #{new_spatial_branch.1} parent=1 // pred_check_branch
      %7559 = sbr.rel (0) target = $region49
    $region48: #{new_spatial_branch.1} parent=1 // pred_region
      %7560 = dma.done [#allocation5], 8192
    $region49: #{new_spatial_branch.1} parent=1 // pred_fallthru
      _
    // Predicated region
    $region50: #{new_spatial_branch.1} parent=1 // pred_check
      _
    $region51: #{new_spatial_branch.1} parent=1 // pred_check_branch
      %7562 = sbr.rel (0) target = $region53
    $region52: #{new_spatial_branch.1} parent=1 // pred_region
      %7563 = dma.done [#allocation8], 2048
    $region53: #{new_spatial_branch.1} parent=1 // pred_fallthru
      _
    %7564 = vsyncpa [#allocation3], 1
    %7565 = vsyncpa [#allocation5], 1
    %7566 = vsyncpa [#allocation8], 1

</llo_original>
